<compile_context>
chip_gen: v7x
topology: tpu7x:2x2x1
jax: 0.10.0
libtpu: 0.0.40
codegen_flags: <defaults>
</compile_context>

<pallas_src>
import functools

import jax
import jax.numpy as jnp
from jax.experimental import pallas as pl
from jax.experimental.pallas import tpu as pltpu


# (in_channels, out_channels, depthwise stride) for MobileNetV1 (pre-alpha).
_FEATURE_CFG = [(32, 64, 1), (64, 128, 2), (128, 128, 1), (128, 256, 2),
                (256, 256, 1), (256, 512, 2), (512, 512, 1), (512, 512, 1),
                (512, 512, 1), (512, 512, 1), (512, 512, 1), (512, 1024, 2),
                (1024, 1024, 2)]

_LANE = 128
_VMEM_LIMIT = 64 * 1024 * 1024   # fits v7x (64 MiB) and is ample headroom on v5e/v6e


def _round_up(x, m):
    return (x + m - 1) // m * m


# ----------------------------- Pallas kernels -----------------------------

def _relu6(v):
    return jnp.minimum(jnp.maximum(v, 0.0), 6.0)


def _conv1_kernel(x_ref, w_ref, b_ref, o_ref):
    # im2col patches (tm, 27) bf16 @ (27, Co) bf16 -> f32, +bias, ReLU6.
    y = jnp.dot(x_ref[...], w_ref[...], preferred_element_type=jnp.float32)
    o_ref[...] = _relu6(y + b_ref[...]).astype(o_ref.dtype)


def _dwpw_taps_kernel(t_ref, dww_ref, dwb_ref, pww_ref, pwb_ref, o_ref):
    # Fused: 3x3 depthwise MAC (f32) -> bias -> ReLU6 -> 1x1 pointwise matmul
    # (bf16 x bf16 on MXU, f32 acc) -> bias -> ReLU6.  All inside VMEM.
    acc = t_ref[0].astype(jnp.float32) * dww_ref[0]
    for k in range(1, 9):
        acc = acc + t_ref[k].astype(jnp.float32) * dww_ref[k]
    y = _relu6(acc + dwb_ref[...]).astype(jnp.bfloat16)
    z = jnp.dot(y, pww_ref[...], preferred_element_type=jnp.float32)
    o_ref[...] = _relu6(z + pwb_ref[...]).astype(o_ref.dtype)


def _dwpw_flat_kernel(x_ref, dww_ref, dwb_ref, pww_ref, pwb_ref, o_ref, *,
                      offsets, r_out):
    # x_ref holds one zero-padded image flattened to (r_in, Ci); tap (kh, kw)
    # of the stride-1 3x3 depthwise conv is the static flat offset kh*Wp + kw.
    # Junk rows (halo columns / trailing pad) are computed but sliced off in
    # the JAX wrapper, so no 9x tap array ever touches HBM.
    x = x_ref[0]
    d0 = offsets[0]
    acc = x[d0:d0 + r_out, :].astype(jnp.float32) * dww_ref[0]
    for k in range(1, 9):
        d = offsets[k]
        acc = acc + x[d:d + r_out, :].astype(jnp.float32) * dww_ref[k]
    y = _relu6(acc + dwb_ref[...]).astype(jnp.bfloat16)
    z = jnp.dot(y, pww_ref[...], preferred_element_type=jnp.float32)
    o_ref[0] = _relu6(z + pwb_ref[...]).astype(o_ref.dtype)


def _pool_fc_kernel(x_ref, w_ref, b_ref, o_ref):
    # Fused AdaptiveAvgPool2d(1) + Linear.
    pooled = jnp.mean(x_ref[...].astype(jnp.float32), axis=1)
    z = jnp.dot(pooled.astype(jnp.bfloat16), w_ref[...],
                preferred_element_type=jnp.float32)
    o_ref[...] = (z + b_ref[...]).astype(o_ref.dtype)


# ----------------------------- kernel wrappers -----------------------------

def _conv1_matmul(x, w, b, tm_max=1024):
    """(M,27) im2col patches @ (27,Co) folded conv1 weight, +bias, ReLU6."""
    M, K = x.shape
    Co = w.shape[1]
    tm = max(8, min(tm_max, _round_up(M, 8)))
    Mp = _round_up(M, tm)
    xp = jnp.pad(x, ((0, Mp - M), (0, 0)))
    cost = pl.CostEstimate(flops=2 * Mp * K * Co, transcendentals=0,
                           bytes_accessed=(Mp * K + K * Co + Mp * Co) * 2)
    out = pl.pallas_call(
        _conv1_kernel,
        out_shape=jax.ShapeDtypeStruct((Mp, Co), jnp.bfloat16),
        grid_spec=pltpu.PrefetchScalarGridSpec(
            num_scalar_prefetch=0,
            grid=(Mp // tm,),
            in_specs=[
                pl.BlockSpec((tm, K), lambda i: (i, 0)),
                pl.BlockSpec((K, Co), lambda i: (0, 0)),
                pl.BlockSpec((1, Co), lambda i: (0, 0)),
            ],
            out_specs=pl.BlockSpec((tm, Co), lambda i: (i, 0)),
        ),
        compiler_params=pltpu.CompilerParams(
            dimension_semantics=("parallel",),
            vmem_limit_bytes=_VMEM_LIMIT),
        cost_estimate=cost,
    )(xp, w, b)
    return out[:M]


def _dwpw_block_s1(x, dw_w, dw_b, pw_w, pw_b):
    """Fused stride-1 depthwise-separable block, taps derived in-kernel.

    x: (N, H, W, Ci) bf16 -> (N, H, W, Co) bf16.
    """
    N, H, W, Ci = x.shape
    Ho, Wo = H, W
    Hp, Wp = H + 2, W + 2
    Co = pw_w.shape[1]

    xp = jnp.pad(x, ((0, 0), (1, 1), (1, 1), (0, 0)))
    flat = xp.reshape(N, Hp * Wp, Ci)
    r_out = _round_up(Ho * Wp, 8)               # rows the kernel produces
    r_in = _round_up(r_out + 2 * Wp + 2, 8)     # rows the kernel may read
    flat = jnp.pad(flat, ((0, 0), (0, r_in - Hp * Wp), (0, 0)))

    offsets = tuple(kh * Wp + kw for kh in range(3) for kw in range(3))
    cost = pl.CostEstimate(
        flops=N * (18 * r_out * Ci + 2 * r_out * Ci * Co),
        transcendentals=0,
        bytes_accessed=N * (r_in * Ci + r_out * Co) * 2 + Ci * Co * 2)

    out = pl.pallas_call(
        functools.partial(_dwpw_flat_kernel, offsets=offsets, r_out=r_out),
        out_shape=jax.ShapeDtypeStruct((N, r_out, Co), jnp.bfloat16),
        grid_spec=pltpu.PrefetchScalarGridSpec(
            num_scalar_prefetch=0,
            grid=(N,),
            in_specs=[
                pl.BlockSpec((1, r_in, Ci), lambda n: (n, 0, 0)),
                pl.BlockSpec((9, 1, Ci), lambda n: (0, 0, 0)),
                pl.BlockSpec((1, Ci), lambda n: (0, 0)),
                pl.BlockSpec((Ci, Co), lambda n: (0, 0)),
                pl.BlockSpec((1, Co), lambda n: (0, 0)),
            ],
            out_specs=pl.BlockSpec((1, r_out, Co), lambda n: (n, 0, 0)),
        ),
        compiler_params=pltpu.CompilerParams(
            dimension_semantics=("parallel",),
            vmem_limit_bytes=_VMEM_LIMIT),
        cost_estimate=cost,
    )(flat, dw_w, dw_b, pw_w, pw_b)

    # Valid output pixel (h, w) lives at flat row h*Wp + w.
    return out[:, :Ho * Wp, :].reshape(N, Ho, Wp, Co)[:, :, :Wo, :]


def _dwpw_block_s2(x, dw_w, dw_b, pw_w, pw_b):
    """Fused stride-2 depthwise-separable block (quarter-resolution output,
    so a 9-tap layout stays cheap and keeps the kernel simple)."""
    N, H, W, Ci = x.shape
    taps = _extract_taps(x, stride=2)          # (9, N, Ho, Wo, Ci)
    _, _, Ho, Wo, _ = taps.shape
    M = N * Ho * Wo
    Co = pw_w.shape[1]

    tm_max = 256 if Ci >= 1024 else 512        # cap tile for v7x's 64 MiB VMEM
    tm = max(8, min(tm_max, _round_up(M, 8)))
    Mp = _round_up(M, tm)
    t = jnp.pad(taps.reshape(9, M, Ci), ((0, 0), (0, Mp - M), (0, 0)))

    cost = pl.CostEstimate(
        flops=Mp * (18 * Ci + 2 * Ci * Co),
        transcendentals=0,
        bytes_accessed=(9 * Mp * Ci + Mp * Co + Ci * Co) * 2)

    out = pl.pallas_call(
        _dwpw_taps_kernel,
        out_shape=jax.ShapeDtypeStruct((Mp, Co), jnp.bfloat16),
        grid_spec=pltpu.PrefetchScalarGridSpec(
            num_scalar_prefetch=0,
            grid=(Mp // tm,),
            in_specs=[
                pl.BlockSpec((9, tm, Ci), lambda i: (0, i, 0)),
                pl.BlockSpec((9, 1, Ci), lambda i: (0, 0, 0)),
                pl.BlockSpec((1, Ci), lambda i: (0, 0)),
                pl.BlockSpec((Ci, Co), lambda i: (0, 0)),
                pl.BlockSpec((1, Co), lambda i: (0, 0)),
            ],
            out_specs=pl.BlockSpec((tm, Co), lambda i: (i, 0)),
        ),
        compiler_params=pltpu.CompilerParams(
            dimension_semantics=("parallel",),
            vmem_limit_bytes=_VMEM_LIMIT),
        cost_estimate=cost,
    )(t, dw_w, dw_b, pw_w, pw_b)

    return out[:M].reshape(N, Ho, Wo, Co)


def _pool_fc(x, w, b):
    """Fused global average pool + classifier.  x: (N, HW, C) bf16."""
    N, HW, C = x.shape
    Ncls = w.shape[1]
    bn = N if N <= 256 else 256
    Np = _round_up(N, bn)
    xp = jnp.pad(x, ((0, Np - N), (0, 0), (0, 0)))
    out = pl.pallas_call(
        _pool_fc_kernel,
        out_shape=jax.ShapeDtypeStruct((Np, Ncls), jnp.float32),
        grid_spec=pltpu.PrefetchScalarGridSpec(
            num_scalar_prefetch=0,
            grid=(Np // bn,),
            in_specs=[
                pl.BlockSpec((bn, HW, C), lambda i: (i, 0, 0)),
                pl.BlockSpec((C, Ncls), lambda i: (0, 0)),
                pl.BlockSpec((1, Ncls), lambda i: (0, 0)),
            ],
            out_specs=pl.BlockSpec((bn, Ncls), lambda i: (i, 0)),
        ),
        compiler_params=pltpu.CompilerParams(dimension_semantics=("parallel",)),
    )(xp, w, b)
    return out[:N]


# ------------------------------- glue (JAX) --------------------------------

def _extract_taps(x, stride):
    """x: (N, H, W, C) -> (9, N, Ho, Wo, C) taps of a 3x3 conv, padding=1."""
    _, H, W, _ = x.shape
    Ho = (H + 2 - 3) // stride + 1
    Wo = (W + 2 - 3) // stride + 1
    xp = jnp.pad(x, ((0, 0), (1, 1), (1, 1), (0, 0)))
    taps = []
    for kh in range(3):
        for kw in range(3):
            taps.append(xp[:, kh:kh + stride * (Ho - 1) + 1:stride,
                           kw:kw + stride * (Wo - 1) + 1:stride, :])
    return jnp.stack(taps, axis=0)


def mobilenet_v1_forward(params, x_nchw, *, class_num):
    x = jnp.transpose(x_nchw, (0, 2, 3, 1)).astype(jnp.bfloat16)  # NCHW -> NHWC
    N = x.shape[0]

    # conv1: standard 3x3 stride-2 conv via im2col + fused matmul+bias+ReLU6.
    taps = _extract_taps(x, stride=2)                    # (9, N, Ho, Wo, 3)
    _, _, Ho, Wo, Cin = taps.shape
    patches = taps.transpose(1, 2, 3, 0, 4).reshape(N * Ho * Wo, 9 * Cin)
    y = _conv1_matmul(patches, params['conv1_w'], params['conv1_b'])
    x = y.reshape(N, Ho, Wo, -1)

    # 13 fused depthwise-separable blocks.
    for layer, (_, _, stride) in zip(params['features'], _FEATURE_CFG):
        if stride == 1:
            x = _dwpw_block_s1(x, layer['dw_w'], layer['dw_b'],
                               layer['pw_w'], layer['pw_b'])
        else:
            x = _dwpw_block_s2(x, layer['dw_w'], layer['dw_b'],
                               layer['pw_w'], layer['pw_b'])

    Nb, H, W, C = x.shape
    logits = _pool_fc(x.reshape(Nb, H * W, C), params['fc_w'], params['fc_b'])
    return logits[:, :class_num]


# --------------------------- parameter creation ----------------------------

def _fold_bn(key, c):
    # Inference-mode BatchNorm folded into per-channel scale/bias.
    k1, k2, k3, k4 = jax.random.split(key, 4)
    gamma = 1.0 + 0.1 * jax.random.normal(k1, (c,), jnp.float32)
    beta = 0.1 * jax.random.normal(k2, (c,), jnp.float32)
    running_mean = 0.1 * jax.random.normal(k3, (c,), jnp.float32)
    running_var = 1.0 + 0.1 * jnp.abs(jax.random.normal(k4, (c,), jnp.float32))
    scale = gamma / jnp.sqrt(running_var + 1e-5)
    bias = beta - running_mean * scale
    return scale, bias


def _pad2(a, rows, cols):
    return jnp.pad(a, ((0, rows - a.shape[0]), (0, cols - a.shape[1])))


def _pad_row(v, cols):
    return jnp.pad(v, (0, cols - v.shape[0])).reshape(1, cols)


def init_params(key, alpha=1.0, class_num=1000):
    ch = lambda n: int(alpha * n)
    cp = lambda n: _round_up(n, _LANE)    # lane-dense channel padding
    keys = iter(jax.random.split(key, 2 + 4 * len(_FEATURE_CFG) + 2))
    params = {}

    c32 = ch(32)
    w = 0.1 * jax.random.normal(next(keys), (27, c32), jnp.float32)
    s, b = _fold_bn(next(keys), c32)
    params['conv1_w'] = _pad2(w * s[None, :], 27, cp(c32)).astype(jnp.bfloat16)
    params['conv1_b'] = _pad_row(b, cp(c32)).astype(jnp.float32)

    feats = []
    for cin_r, cout_r, _stride in _FEATURE_CFG:
        cin, cout = ch(cin_r), ch(cout_r)
        cin_p, cout_p = cp(cin), cp(cout)
        dw = 0.1 * jax.random.normal(next(keys), (9, cin), jnp.float32)
        dsc, dbi = _fold_bn(next(keys), cin)
        pw = 0.1 * jax.random.normal(next(keys), (cin, cout), jnp.float32)
        psc, pbi = _fold_bn(next(keys), cout)
        feats.append(dict(
            dw_w=_pad2(dw * dsc[None, :], 9, cin_p)
                 .reshape(9, 1, cin_p).astype(jnp.float32),
            dw_b=_pad_row(dbi, cin_p).astype(jnp.float32),
            pw_w=_pad2(pw * psc[None, :], cin_p, cout_p).astype(jnp.bfloat16),
            pw_b=_pad_row(pbi, cout_p).astype(jnp.float32),
        ))
    params['features'] = feats

    c1024 = ch(1024)
    fw = 0.1 * jax.random.normal(next(keys), (c1024, class_num), jnp.float32)
    fb = 0.1 * jax.random.normal(next(keys), (class_num,), jnp.float32)
    params['fc_w'] = _pad2(fw, cp(c1024), cp(class_num)).astype(jnp.bfloat16)
    params['fc_b'] = _pad_row(fb, cp(class_num)).astype(jnp.float32)
    return params


# ----------------------------------- main -----------------------------------

if __name__ == "__main__":
    key = jax.random.PRNGKey(0)
    k_params, k_x = jax.random.split(key)

    alpha = 0.125      # width multiplier -> channels 4 .. 128 (small test size)
    class_num = 10
    params = init_params(k_params, alpha=alpha, class_num=class_num)

    # PyTorch-style NCHW input.
    x = jax.random.normal(k_x, (2, 3, 32, 32), jnp.float32)

    fwd = jax.jit(functools.partial(mobilenet_v1_forward, class_num=class_num))
    out = fwd(params, x)
    jax.block_until_ready(out)
    assert out.shape == (2, class_num)
    assert bool(jnp.all(jnp.isfinite(out)))
    print("KERNEL_OK")
</pallas_src>

<mosaic_0001>
module attributes {stable_mosaic.version = 11 : i64} {
  func.func @_conv1_kernel(%arg0: i32, %arg1: memref<512x27xbf16, #tpu.memory_space<vmem>>, %arg2: memref<27x128xbf16, #tpu.memory_space<vmem>>, %arg3: memref<1x128xf32, #tpu.memory_space<vmem>>, %arg4: memref<512x128xbf16, #tpu.memory_space<vmem>>) attributes {dimension_semantics = [#tpu.dimension_semantics<parallel>], iteration_bounds = array<i64: 1>, scalar_prefetch = 0 : i64, scratch_operands = 0 : i64, tpu.core_type = #tpu.core_type<tc>, window_params = [{transform_indices = @transform_0, window_bounds = array<i64: 512, 27>}, {pipeline_mode = #tpu.pipeline_mode<synchronous>, transform_indices = @transform_1, window_bounds = array<i64: 27, 128>}, {pipeline_mode = #tpu.pipeline_mode<synchronous>, transform_indices = @transform_2, window_bounds = array<i64: 1, 128>}, {transform_indices = @transform_3, window_bounds = array<i64: 512, 128>}]} {
    %c0 = arith.constant 0 : index
    %c0_0 = arith.constant 0 : index
    %0 = vector.load %arg1[%c0, %c0_0] : memref<512x27xbf16, #tpu.memory_space<vmem>>, vector<512x27xbf16>
    %c0_1 = arith.constant 0 : index
    %c0_2 = arith.constant 0 : index
    %1 = vector.load %arg2[%c0_1, %c0_2] : memref<27x128xbf16, #tpu.memory_space<vmem>>, vector<27x128xbf16>
    %cst = arith.constant dense<0.000000e+00> : vector<512x128xf32>
    %2 = tpu.matmul %0, %1, %cst {dimension_numbers = #tpu.dot_dimension_numbers<[1], [0], [0], [1], [0, 0, 1, 1], [], []>} : vector<512x27xbf16>, vector<27x128xbf16>, vector<512x128xf32> -> vector<512x128xf32>
    %c0_3 = arith.constant 0 : index
    %c0_4 = arith.constant 0 : index
    %3 = vector.load %arg3[%c0_3, %c0_4] : memref<1x128xf32, #tpu.memory_space<vmem>>, vector<1x128xf32>
    %4 = vector.broadcast %3 : vector<1x128xf32> to vector<512x128xf32>
    %5 = arith.addf %2, %4 : vector<512x128xf32>
    %cst_5 = arith.constant 0.000000e+00 : f32
    %6 = vector.broadcast %cst_5 : f32 to vector<512x128xf32>
    %7 = arith.maximumf %5, %6 : vector<512x128xf32>
    %cst_6 = arith.constant 6.000000e+00 : f32
    %8 = vector.broadcast %cst_6 : f32 to vector<512x128xf32>
    %9 = arith.minimumf %7, %8 : vector<512x128xf32>
    %10 = arith.truncf %9 : vector<512x128xf32> to vector<512x128xbf16>
    %c0_7 = arith.constant 0 : index
    %c0_8 = arith.constant 0 : index
    %11 = vector.load %arg4[%c0_7, %c0_8] : memref<512x128xbf16, #tpu.memory_space<vmem>>, vector<512x128xbf16>
    tpu.vector_store %arg4[%c0_7, %c0_8], %10 {strides = array<i32>} : memref<512x128xbf16, #tpu.memory_space<vmem>>, vector<512x128xbf16>,
    return
  }
  func.func @transform_0(%arg0: i32) -> (i32, i32) {
    %c0_i32 = arith.constant 0 : i32
    %c0_i32_0 = arith.constant 0 : i32
    return %arg0, %c0_i32 : i32, i32
  }
  func.func @transform_1(%arg0: i32) -> (i32, i32) {
    %c0_i32 = arith.constant 0 : i32
    %c0_i32_0 = arith.constant 0 : i32
    %c0_i32_1 = arith.constant 0 : i32
    return %c0_i32, %c0_i32_0 : i32, i32
  }
  func.func @transform_2(%arg0: i32) -> (i32, i32) {
    %c0_i32 = arith.constant 0 : i32
    %c0_i32_0 = arith.constant 0 : i32
    %c0_i32_1 = arith.constant 0 : i32
    return %c0_i32, %c0_i32_0 : i32, i32
  }
  func.func @transform_3(%arg0: i32) -> (i32, i32) {
    %c0_i32 = arith.constant 0 : i32
    %c0_i32_0 = arith.constant 0 : i32
    return %arg0, %c0_i32 : i32, i32
  }
}

module attributes {stable_mosaic.version = 11 : i64} {
  func.func @_dwpw_flat_kernel(%arg0: i32, %arg1: memref<1x328x128xbf16, #tpu.memory_space<vmem>>, %arg2: memref<9x1x128xf32, #tpu.memory_space<vmem>>, %arg3: memref<1x128xf32, #tpu.memory_space<vmem>>, %arg4: memref<128x128xbf16, #tpu.memory_space<vmem>>, %arg5: memref<1x128xf32, #tpu.memory_space<vmem>>, %arg6: memref<1x288x128xbf16, #tpu.memory_space<vmem>>) attributes {dimension_semantics = [#tpu.dimension_semantics<parallel>], iteration_bounds = array<i64: 2>, scalar_prefetch = 0 : i64, scratch_operands = 0 : i64, tpu.core_type = #tpu.core_type<tc>, window_params = [{transform_indices = @transform_0, window_bounds = array<i64: 1, 328, 128>}, {pipeline_mode = #tpu.pipeline_mode<synchronous>, transform_indices = @transform_1, window_bounds = array<i64: 9, 1, 128>}, {pipeline_mode = #tpu.pipeline_mode<synchronous>, transform_indices = @transform_2, window_bounds = array<i64: 1, 128>}, {pipeline_mode = #tpu.pipeline_mode<synchronous>, transform_indices = @transform_3, window_bounds = array<i64: 128, 128>}, {pipeline_mode = #tpu.pipeline_mode<synchronous>, transform_indices = @transform_4, window_bounds = array<i64: 1, 128>}, {transform_indices = @transform_5, window_bounds = array<i64: 1, 288, 128>}]} {
    %c0 = arith.constant 0 : index
    %c0_0 = arith.constant 0 : index
    %c0_1 = arith.constant 0 : index
    %0 = vector.load %arg1[%c0, %c0_0, %c0_1] : memref<1x328x128xbf16, #tpu.memory_space<vmem>>, vector<1x328x128xbf16>
    %1 = vector.shape_cast %0 : vector<1x328x128xbf16> to vector<328x128xbf16>
    %2 = vector.extract_strided_slice %1 {offsets = [0, 0], sizes = [288, 128], strides = [1, 1]} : vector<328x128xbf16> to vector<288x128xbf16>
    %3 = arith.extf %2 : vector<288x128xbf16> to vector<288x128xf32>
    %c0_2 = arith.constant 0 : index
    %c0_3 = arith.constant 0 : index
    %c0_4 = arith.constant 0 : index
    %4 = vector.load %arg2[%c0_2, %c0_3, %c0_4] : memref<9x1x128xf32, #tpu.memory_space<vmem>>, vector<1x1x128xf32>
    %5 = vector.shape_cast %4 : vector<1x1x128xf32> to vector<1x128xf32>
    %6 = vector.broadcast %5 : vector<1x128xf32> to vector<288x128xf32>
    %7 = arith.mulf %3, %6 : vector<288x128xf32>
    %8 = vector.extract_strided_slice %1 {offsets = [1, 0], sizes = [288, 128], strides = [1, 1]} : vector<328x128xbf16> to vector<288x128xbf16>
    %9 = arith.extf %8 : vector<288x128xbf16> to vector<288x128xf32>
    %c1 = arith.constant 1 : index
    %c0_5 = arith.constant 0 : index
    %c0_6 = arith.constant 0 : index
    %10 = vector.load %arg2[%c1, %c0_5, %c0_6] : memref<9x1x128xf32, #tpu.memory_space<vmem>>, vector<1x1x128xf32>
    %11 = vector.shape_cast %10 : vector<1x1x128xf32> to vector<1x128xf32>
    %12 = vector.broadcast %11 : vector<1x128xf32> to vector<288x128xf32>
    %13 = arith.mulf %9, %12 : vector<288x128xf32>
    %14 = arith.addf %7, %13 : vector<288x128xf32>
    %15 = vector.extract_strided_slice %1 {offsets = [2, 0], sizes = [288, 128], strides = [1, 1]} : vector<328x128xbf16> to vector<288x128xbf16>
    %16 = arith.extf %15 : vector<288x128xbf16> to vector<288x128xf32>
    %c2 = arith.constant 2 : index
    %c0_7 = arith.constant 0 : index
    %c0_8 = arith.constant 0 : index
    %17 = vector.load %arg2[%c2, %c0_7, %c0_8] : memref<9x1x128xf32, #tpu.memory_space<vmem>>, vector<1x1x128xf32>
    %18 = vector.shape_cast %17 : vector<1x1x128xf32> to vector<1x128xf32>
    %19 = vector.broadcast %18 : vector<1x128xf32> to vector<288x128xf32>
    %20 = arith.mulf %16, %19 : vector<288x128xf32>
    %21 = arith.addf %14, %20 : vector<288x128xf32>
    %22 = vector.extract_strided_slice %1 {offsets = [18, 0], sizes = [288, 128], strides = [1, 1]} : vector<328x128xbf16> to vector<288x128xbf16>
    %23 = arith.extf %22 : vector<288x128xbf16> to vector<288x128xf32>
    %c3 = arith.constant 3 : index
    %c0_9 = arith.constant 0 : index
    %c0_10 = arith.constant 0 : index
    %24 = vector.load %arg2[%c3, %c0_9, %c0_10] : memref<9x1x128xf32, #tpu.memory_space<vmem>>, vector<1x1x128xf32>
    %25 = vector.shape_cast %24 : vector<1x1x128xf32> to vector<1x128xf32>
    %26 = vector.broadcast %25 : vector<1x128xf32> to vector<288x128xf32>
    %27 = arith.mulf %23, %26 : vector<288x128xf32>
    %28 = arith.addf %21, %27 : vector<288x128xf32>
    %29 = vector.extract_strided_slice %1 {offsets = [19, 0], sizes = [288, 128], strides = [1, 1]} : vector<328x128xbf16> to vector<288x128xbf16>
    %30 = arith.extf %29 : vector<288x128xbf16> to vector<288x128xf32>
    %c4 = arith.constant 4 : index
    %c0_11 = arith.constant 0 : index
    %c0_12 = arith.constant 0 : index
    %31 = vector.load %arg2[%c4, %c0_11, %c0_12] : memref<9x1x128xf32, #tpu.memory_space<vmem>>, vector<1x1x128xf32>
    %32 = vector.shape_cast %31 : vector<1x1x128xf32> to vector<1x128xf32>
    %33 = vector.broadcast %32 : vector<1x128xf32> to vector<288x128xf32>
    %34 = arith.mulf %30, %33 : vector<288x128xf32>
    %35 = arith.addf %28, %34 : vector<288x128xf32>
    %36 = vector.extract_strided_slice %1 {offsets = [20, 0], sizes = [288, 128], strides = [1, 1]} : vector<328x128xbf16> to vector<288x128xbf16>
    %37 = arith.extf %36 : vector<288x128xbf16> to vector<288x128xf32>
    %c5 = arith.constant 5 : index
    %c0_13 = arith.constant 0 : index
    %c0_14 = arith.constant 0 : index
    %38 = vector.load %arg2[%c5, %c0_13, %c0_14] : memref<9x1x128xf32, #tpu.memory_space<vmem>>, vector<1x1x128xf32>
    %39 = vector.shape_cast %38 : vector<1x1x128xf32> to vector<1x128xf32>
    %40 = vector.broadcast %39 : vector<1x128xf32> to vector<288x128xf32>
    %41 = arith.mulf %37, %40 : vector<288x128xf32>
    %42 = arith.addf %35, %41 : vector<288x128xf32>
    %43 = vector.extract_strided_slice %1 {offsets = [36, 0], sizes = [288, 128], strides = [1, 1]} : vector<328x128xbf16> to vector<288x128xbf16>
    %44 = arith.extf %43 : vector<288x128xbf16> to vector<288x128xf32>
    %c6 = arith.constant 6 : index
    %c0_15 = arith.constant 0 : index
    %c0_16 = arith.constant 0 : index
    %45 = vector.load %arg2[%c6, %c0_15, %c0_16] : memref<9x1x128xf32, #tpu.memory_space<vmem>>, vector<1x1x128xf32>
    %46 = vector.shape_cast %45 : vector<1x1x128xf32> to vector<1x128xf32>
    %47 = vector.broadcast %46 : vector<1x128xf32> to vector<288x128xf32>
    %48 = arith.mulf %44, %47 : vector<288x128xf32>
    %49 = arith.addf %42, %48 : vector<288x128xf32>
    %50 = vector.extract_strided_slice %1 {offsets = [37, 0], sizes = [288, 128], strides = [1, 1]} : vector<328x128xbf16> to vector<288x128xbf16>
    %51 = arith.extf %50 : vector<288x128xbf16> to vector<288x128xf32>
    %c7 = arith.constant 7 : index
    %c0_17 = arith.constant 0 : index
    %c0_18 = arith.constant 0 : index
    %52 = vector.load %arg2[%c7, %c0_17, %c0_18] : memref<9x1x128xf32, #tpu.memory_space<vmem>>, vector<1x1x128xf32>
    %53 = vector.shape_cast %52 : vector<1x1x128xf32> to vector<1x128xf32>
    %54 = vector.broadcast %53 : vector<1x128xf32> to vector<288x128xf32>
    %55 = arith.mulf %51, %54 : vector<288x128xf32>
    %56 = arith.addf %49, %55 : vector<288x128xf32>
    %57 = vector.extract_strided_slice %1 {offsets = [38, 0], sizes = [288, 128], strides = [1, 1]} : vector<328x128xbf16> to vector<288x128xbf16>
    %58 = arith.extf %57 : vector<288x128xbf16> to vector<288x128xf32>
    %c8 = arith.constant 8 : index
    %c0_19 = arith.constant 0 : index
    %c0_20 = arith.constant 0 : index
    %59 = vector.load %arg2[%c8, %c0_19, %c0_20] : memref<9x1x128xf32, #tpu.memory_space<vmem>>, vector<1x1x128xf32>
    %60 = vector.shape_cast %59 : vector<1x1x128xf32> to vector<1x128xf32>
    %61 = vector.broadcast %60 : vector<1x128xf32> to vector<288x128xf32>
    %62 = arith.mulf %58, %61 : vector<288x128xf32>
    %63 = arith.addf %56, %62 : vector<288x128xf32>
    %c0_21 = arith.constant 0 : index
    %c0_22 = arith.constant 0 : index
    %64 = vector.load %arg3[%c0_21, %c0_22] : memref<1x128xf32, #tpu.memory_space<vmem>>, vector<1x128xf32>
    %65 = vector.broadcast %64 : vector<1x128xf32> to vector<288x128xf32>
    %66 = arith.addf %63, %65 : vector<288x128xf32>
    %cst = arith.constant 0.000000e+00 : f32
    %67 = vector.broadcast %cst : f32 to vector<288x128xf32>
    %68 = arith.maximumf %66, %67 : vector<288x128xf32>
    %cst_23 = arith.constant 6.000000e+00 : f32
    %69 = vector.broadcast %cst_23 : f32 to vector<288x128xf32>
    %70 = arith.minimumf %68, %69 : vector<288x128xf32>
    %71 = arith.truncf %70 : vector<288x128xf32> to vector<288x128xbf16>
    %c0_24 = arith.constant 0 : index
    %c0_25 = arith.constant 0 : index
    %72 = vector.load %arg4[%c0_24, %c0_25] : memref<128x128xbf16, #tpu.memory_space<vmem>>, vector<128x128xbf16>
    %cst_26 = arith.constant dense<0.000000e+00> : vector<288x128xf32>
    %73 = tpu.matmul %71, %72, %cst_26 {dimension_numbers = #tpu.dot_dimension_numbers<[1], [0], [0], [1], [0, 0, 1, 1], [], []>} : vector<288x128xbf16>, vector<128x128xbf16>, vector<288x128xf32> -> vector<288x128xf32>
    %c0_27 = arith.constant 0 : index
    %c0_28 = arith.constant 0 : index
    %74 = vector.load %arg5[%c0_27, %c0_28] : memref<1x128xf32, #tpu.memory_space<vmem>>, vector<1x128xf32>
    %75 = vector.broadcast %74 : vector<1x128xf32> to vector<288x128xf32>
    %76 = arith.addf %73, %75 : vector<288x128xf32>
    %cst_29 = arith.constant 0.000000e+00 : f32
    %77 = vector.broadcast %cst_29 : f32 to vector<288x128xf32>
    %78 = arith.maximumf %76, %77 : vector<288x128xf32>
    %cst_30 = arith.constant 6.000000e+00 : f32
    %79 = vector.broadcast %cst_30 : f32 to vector<288x128xf32>
    %80 = arith.minimumf %78, %79 : vector<288x128xf32>
    %81 = arith.truncf %80 : vector<288x128xf32> to vector<288x128xbf16>
    %c0_31 = arith.constant 0 : index
    %c0_32 = arith.constant 0 : index
    %c0_33 = arith.constant 0 : index
    %82 = vector.load %arg6[%c0_31, %c0_32, %c0_33] : memref<1x288x128xbf16, #tpu.memory_space<vmem>>, vector<1x288x128xbf16>
    %83 = vector.shape_cast %82 : vector<1x288x128xbf16> to vector<288x128xbf16>
    %84 = vector.shape_cast %81 : vector<288x128xbf16> to vector<1x288x128xbf16>
    tpu.vector_store %arg6[%c0_31, %c0_32, %c0_33], %84 {strides = array<i32>} : memref<1x288x128xbf16, #tpu.memory_space<vmem>>, vector<1x288x128xbf16>,
    return
  }
  func.func @transform_0(%arg0: i32) -> (i32, i32, i32) {
    %c0_i32 = arith.constant 0 : i32
    %c0_i32_0 = arith.constant 0 : i32
    %c0_i32_1 = arith.constant 0 : i32
    return %arg0, %c0_i32, %c0_i32_0 : i32, i32, i32
  }
  func.func @transform_1(%arg0: i32) -> (i32, i32, i32) {
    %c0_i32 = arith.constant 0 : i32
    %c0_i32_0 = arith.constant 0 : i32
    %c0_i32_1 = arith.constant 0 : i32
    %c0_i32_2 = arith.constant 0 : i32
    return %c0_i32, %c0_i32_0, %c0_i32_1 : i32, i32, i32
  }
  func.func @transform_2(%arg0: i32) -> (i32, i32) {
    %c0_i32 = arith.constant 0 : i32
    %c0_i32_0 = arith.constant 0 : i32
    %c0_i32_1 = arith.constant 0 : i32
    return %c0_i32, %c0_i32_0 : i32, i32
  }
  func.func @transform_3(%arg0: i32) -> (i32, i32) {
    %c0_i32 = arith.constant 0 : i32
    %c0_i32_0 = arith.constant 0 : i32
    %c0_i32_1 = arith.constant 0 : i32
    return %c0_i32, %c0_i32_0 : i32, i32
  }
  func.func @transform_4(%arg0: i32) -> (i32, i32) {
    %c0_i32 = arith.constant 0 : i32
    %c0_i32_0 = arith.constant 0 : i32
    %c0_i32_1 = arith.constant 0 : i32
    return %c0_i32, %c0_i32_0 : i32, i32
  }
  func.func @transform_5(%arg0: i32) -> (i32, i32, i32) {
    %c0_i32 = arith.constant 0 : i32
    %c0_i32_0 = arith.constant 0 : i32
    %c0_i32_1 = arith.constant 0 : i32
    return %arg0, %c0_i32, %c0_i32_0 : i32, i32, i32
  }
}

module attributes {stable_mosaic.version = 11 : i64} {
  func.func @_dwpw_taps_kernel(%arg0: i32, %arg1: memref<9x128x128xbf16, #tpu.memory_space<vmem>>, %arg2: memref<9x1x128xf32, #tpu.memory_space<vmem>>, %arg3: memref<1x128xf32, #tpu.memory_space<vmem>>, %arg4: memref<128x128xbf16, #tpu.memory_space<vmem>>, %arg5: memref<1x128xf32, #tpu.memory_space<vmem>>, %arg6: memref<128x128xbf16, #tpu.memory_space<vmem>>) attributes {dimension_semantics = [#tpu.dimension_semantics<parallel>], iteration_bounds = array<i64: 1>, scalar_prefetch = 0 : i64, scratch_operands = 0 : i64, tpu.core_type = #tpu.core_type<tc>, window_params = [{transform_indices = @transform_0, window_bounds = array<i64: 9, 128, 128>}, {pipeline_mode = #tpu.pipeline_mode<synchronous>, transform_indices = @transform_1, window_bounds = array<i64: 9, 1, 128>}, {pipeline_mode = #tpu.pipeline_mode<synchronous>, transform_indices = @transform_2, window_bounds = array<i64: 1, 128>}, {pipeline_mode = #tpu.pipeline_mode<synchronous>, transform_indices = @transform_3, window_bounds = array<i64: 128, 128>}, {pipeline_mode = #tpu.pipeline_mode<synchronous>, transform_indices = @transform_4, window_bounds = array<i64: 1, 128>}, {transform_indices = @transform_5, window_bounds = array<i64: 128, 128>}]} {
    %c0 = arith.constant 0 : index
    %c0_0 = arith.constant 0 : index
    %c0_1 = arith.constant 0 : index
    %0 = vector.load %arg1[%c0, %c0_0, %c0_1] : memref<9x128x128xbf16, #tpu.memory_space<vmem>>, vector<1x128x128xbf16>
    %1 = vector.shape_cast %0 : vector<1x128x128xbf16> to vector<128x128xbf16>
    %2 = arith.extf %1 : vector<128x128xbf16> to vector<128x128xf32>
    %c0_2 = arith.constant 0 : index
    %c0_3 = arith.constant 0 : index
    %c0_4 = arith.constant 0 : index
    %3 = vector.load %arg2[%c0_2, %c0_3, %c0_4] : memref<9x1x128xf32, #tpu.memory_space<vmem>>, vector<1x1x128xf32>
    %4 = vector.shape_cast %3 : vector<1x1x128xf32> to vector<1x128xf32>
    %5 = vector.broadcast %4 : vector<1x128xf32> to vector<128x128xf32>
    %6 = arith.mulf %2, %5 : vector<128x128xf32>
    %c1 = arith.constant 1 : index
    %c0_5 = arith.constant 0 : index
    %c0_6 = arith.constant 0 : index
    %7 = vector.load %arg1[%c1, %c0_5, %c0_6] : memref<9x128x128xbf16, #tpu.memory_space<vmem>>, vector<1x128x128xbf16>
    %8 = vector.shape_cast %7 : vector<1x128x128xbf16> to vector<128x128xbf16>
    %9 = arith.extf %8 : vector<128x128xbf16> to vector<128x128xf32>
    %c1_7 = arith.constant 1 : index
    %c0_8 = arith.constant 0 : index
    %c0_9 = arith.constant 0 : index
    %10 = vector.load %arg2[%c1_7, %c0_8, %c0_9] : memref<9x1x128xf32, #tpu.memory_space<vmem>>, vector<1x1x128xf32>
    %11 = vector.shape_cast %10 : vector<1x1x128xf32> to vector<1x128xf32>
    %12 = vector.broadcast %11 : vector<1x128xf32> to vector<128x128xf32>
    %13 = arith.mulf %9, %12 : vector<128x128xf32>
    %14 = arith.addf %6, %13 : vector<128x128xf32>
    %c2 = arith.constant 2 : index
    %c0_10 = arith.constant 0 : index
    %c0_11 = arith.constant 0 : index
    %15 = vector.load %arg1[%c2, %c0_10, %c0_11] : memref<9x128x128xbf16, #tpu.memory_space<vmem>>, vector<1x128x128xbf16>
    %16 = vector.shape_cast %15 : vector<1x128x128xbf16> to vector<128x128xbf16>
    %17 = arith.extf %16 : vector<128x128xbf16> to vector<128x128xf32>
    %c2_12 = arith.constant 2 : index
    %c0_13 = arith.constant 0 : index
    %c0_14 = arith.constant 0 : index
    %18 = vector.load %arg2[%c2_12, %c0_13, %c0_14] : memref<9x1x128xf32, #tpu.memory_space<vmem>>, vector<1x1x128xf32>
    %19 = vector.shape_cast %18 : vector<1x1x128xf32> to vector<1x128xf32>
    %20 = vector.broadcast %19 : vector<1x128xf32> to vector<128x128xf32>
    %21 = arith.mulf %17, %20 : vector<128x128xf32>
    %22 = arith.addf %14, %21 : vector<128x128xf32>
    %c3 = arith.constant 3 : index
    %c0_15 = arith.constant 0 : index
    %c0_16 = arith.constant 0 : index
    %23 = vector.load %arg1[%c3, %c0_15, %c0_16] : memref<9x128x128xbf16, #tpu.memory_space<vmem>>, vector<1x128x128xbf16>
    %24 = vector.shape_cast %23 : vector<1x128x128xbf16> to vector<128x128xbf16>
    %25 = arith.extf %24 : vector<128x128xbf16> to vector<128x128xf32>
    %c3_17 = arith.constant 3 : index
    %c0_18 = arith.constant 0 : index
    %c0_19 = arith.constant 0 : index
    %26 = vector.load %arg2[%c3_17, %c0_18, %c0_19] : memref<9x1x128xf32, #tpu.memory_space<vmem>>, vector<1x1x128xf32>
    %27 = vector.shape_cast %26 : vector<1x1x128xf32> to vector<1x128xf32>
    %28 = vector.broadcast %27 : vector<1x128xf32> to vector<128x128xf32>
    %29 = arith.mulf %25, %28 : vector<128x128xf32>
    %30 = arith.addf %22, %29 : vector<128x128xf32>
    %c4 = arith.constant 4 : index
    %c0_20 = arith.constant 0 : index
    %c0_21 = arith.constant 0 : index
    %31 = vector.load %arg1[%c4, %c0_20, %c0_21] : memref<9x128x128xbf16, #tpu.memory_space<vmem>>, vector<1x128x128xbf16>
    %32 = vector.shape_cast %31 : vector<1x128x128xbf16> to vector<128x128xbf16>
    %33 = arith.extf %32 : vector<128x128xbf16> to vector<128x128xf32>
    %c4_22 = arith.constant 4 : index
    %c0_23 = arith.constant 0 : index
    %c0_24 = arith.constant 0 : index
    %34 = vector.load %arg2[%c4_22, %c0_23, %c0_24] : memref<9x1x128xf32, #tpu.memory_space<vmem>>, vector<1x1x128xf32>
    %35 = vector.shape_cast %34 : vector<1x1x128xf32> to vector<1x128xf32>
    %36 = vector.broadcast %35 : vector<1x128xf32> to vector<128x128xf32>
    %37 = arith.mulf %33, %36 : vector<128x128xf32>
    %38 = arith.addf %30, %37 : vector<128x128xf32>
    %c5 = arith.constant 5 : index
    %c0_25 = arith.constant 0 : index
    %c0_26 = arith.constant 0 : index
    %39 = vector.load %arg1[%c5, %c0_25, %c0_26] : memref<9x128x128xbf16, #tpu.memory_space<vmem>>, vector<1x128x128xbf16>
    %40 = vector.shape_cast %39 : vector<1x128x128xbf16> to vector<128x128xbf16>
    %41 = arith.extf %40 : vector<128x128xbf16> to vector<128x128xf32>
    %c5_27 = arith.constant 5 : index
    %c0_28 = arith.constant 0 : index
    %c0_29 = arith.constant 0 : index
    %42 = vector.load %arg2[%c5_27, %c0_28, %c0_29] : memref<9x1x128xf32, #tpu.memory_space<vmem>>, vector<1x1x128xf32>
    %43 = vector.shape_cast %42 : vector<1x1x128xf32> to vector<1x128xf32>
    %44 = vector.broadcast %43 : vector<1x128xf32> to vector<128x128xf32>
    %45 = arith.mulf %41, %44 : vector<128x128xf32>
    %46 = arith.addf %38, %45 : vector<128x128xf32>
    %c6 = arith.constant 6 : index
    %c0_30 = arith.constant 0 : index
    %c0_31 = arith.constant 0 : index
    %47 = vector.load %arg1[%c6, %c0_30, %c0_31] : memref<9x128x128xbf16, #tpu.memory_space<vmem>>, vector<1x128x128xbf16>
    %48 = vector.shape_cast %47 : vector<1x128x128xbf16> to vector<128x128xbf16>
    %49 = arith.extf %48 : vector<128x128xbf16> to vector<128x128xf32>
    %c6_32 = arith.constant 6 : index
    %c0_33 = arith.constant 0 : index
    %c0_34 = arith.constant 0 : index
    %50 = vector.load %arg2[%c6_32, %c0_33, %c0_34] : memref<9x1x128xf32, #tpu.memory_space<vmem>>, vector<1x1x128xf32>
    %51 = vector.shape_cast %50 : vector<1x1x128xf32> to vector<1x128xf32>
    %52 = vector.broadcast %51 : vector<1x128xf32> to vector<128x128xf32>
    %53 = arith.mulf %49, %52 : vector<128x128xf32>
    %54 = arith.addf %46, %53 : vector<128x128xf32>
    %c7 = arith.constant 7 : index
    %c0_35 = arith.constant 0 : index
    %c0_36 = arith.constant 0 : index
    %55 = vector.load %arg1[%c7, %c0_35, %c0_36] : memref<9x128x128xbf16, #tpu.memory_space<vmem>>, vector<1x128x128xbf16>
    %56 = vector.shape_cast %55 : vector<1x128x128xbf16> to vector<128x128xbf16>
    %57 = arith.extf %56 : vector<128x128xbf16> to vector<128x128xf32>
    %c7_37 = arith.constant 7 : index
    %c0_38 = arith.constant 0 : index
    %c0_39 = arith.constant 0 : index
    %58 = vector.load %arg2[%c7_37, %c0_38, %c0_39] : memref<9x1x128xf32, #tpu.memory_space<vmem>>, vector<1x1x128xf32>
    %59 = vector.shape_cast %58 : vector<1x1x128xf32> to vector<1x128xf32>
    %60 = vector.broadcast %59 : vector<1x128xf32> to vector<128x128xf32>
    %61 = arith.mulf %57, %60 : vector<128x128xf32>
    %62 = arith.addf %54, %61 : vector<128x128xf32>
    %c8 = arith.constant 8 : index
    %c0_40 = arith.constant 0 : index
    %c0_41 = arith.constant 0 : index
    %63 = vector.load %arg1[%c8, %c0_40, %c0_41] : memref<9x128x128xbf16, #tpu.memory_space<vmem>>, vector<1x128x128xbf16>
    %64 = vector.shape_cast %63 : vector<1x128x128xbf16> to vector<128x128xbf16>
    %65 = arith.extf %64 : vector<128x128xbf16> to vector<128x128xf32>
    %c8_42 = arith.constant 8 : index
    %c0_43 = arith.constant 0 : index
    %c0_44 = arith.constant 0 : index
    %66 = vector.load %arg2[%c8_42, %c0_43, %c0_44] : memref<9x1x128xf32, #tpu.memory_space<vmem>>, vector<1x1x128xf32>
    %67 = vector.shape_cast %66 : vector<1x1x128xf32> to vector<1x128xf32>
    %68 = vector.broadcast %67 : vector<1x128xf32> to vector<128x128xf32>
    %69 = arith.mulf %65, %68 : vector<128x128xf32>
    %70 = arith.addf %62, %69 : vector<128x128xf32>
    %c0_45 = arith.constant 0 : index
    %c0_46 = arith.constant 0 : index
    %71 = vector.load %arg3[%c0_45, %c0_46] : memref<1x128xf32, #tpu.memory_space<vmem>>, vector<1x128xf32>
    %72 = vector.broadcast %71 : vector<1x128xf32> to vector<128x128xf32>
    %73 = arith.addf %70, %72 : vector<128x128xf32>
    %cst = arith.constant 0.000000e+00 : f32
    %74 = vector.broadcast %cst : f32 to vector<128x128xf32>
    %75 = arith.maximumf %73, %74 : vector<128x128xf32>
    %cst_47 = arith.constant 6.000000e+00 : f32
    %76 = vector.broadcast %cst_47 : f32 to vector<128x128xf32>
    %77 = arith.minimumf %75, %76 : vector<128x128xf32>
    %78 = arith.truncf %77 : vector<128x128xf32> to vector<128x128xbf16>
    %c0_48 = arith.constant 0 : index
    %c0_49 = arith.constant 0 : index
    %79 = vector.load %arg4[%c0_48, %c0_49] : memref<128x128xbf16, #tpu.memory_space<vmem>>, vector<128x128xbf16>
    %cst_50 = arith.constant dense<0.000000e+00> : vector<128x128xf32>
    %80 = tpu.matmul %78, %79, %cst_50 {dimension_numbers = #tpu.dot_dimension_numbers<[1], [0], [0], [1], [0, 0, 1, 1], [], []>} : vector<128x128xbf16>, vector<128x128xbf16>, vector<128x128xf32> -> vector<128x128xf32>
    %c0_51 = arith.constant 0 : index
    %c0_52 = arith.constant 0 : index
    %81 = vector.load %arg5[%c0_51, %c0_52] : memref<1x128xf32, #tpu.memory_space<vmem>>, vector<1x128xf32>
    %82 = vector.broadcast %81 : vector<1x128xf32> to vector<128x128xf32>
    %83 = arith.addf %80, %82 : vector<128x128xf32>
    %cst_53 = arith.constant 0.000000e+00 : f32
    %84 = vector.broadcast %cst_53 : f32 to vector<128x128xf32>
    %85 = arith.maximumf %83, %84 : vector<128x128xf32>
    %cst_54 = arith.constant 6.000000e+00 : f32
    %86 = vector.broadcast %cst_54 : f32 to vector<128x128xf32>
    %87 = arith.minimumf %85, %86 : vector<128x128xf32>
    %88 = arith.truncf %87 : vector<128x128xf32> to vector<128x128xbf16>
    %c0_55 = arith.constant 0 : index
    %c0_56 = arith.constant 0 : index
    %89 = vector.load %arg6[%c0_55, %c0_56] : memref<128x128xbf16, #tpu.memory_space<vmem>>, vector<128x128xbf16>
    tpu.vector_store %arg6[%c0_55, %c0_56], %88 {strides = array<i32>} : memref<128x128xbf16, #tpu.memory_space<vmem>>, vector<128x128xbf16>,
    return
  }
  func.func @transform_0(%arg0: i32) -> (i32, i32, i32) {
    %c0_i32 = arith.constant 0 : i32
    %c0_i32_0 = arith.constant 0 : i32
    %c0_i32_1 = arith.constant 0 : i32
    return %c0_i32, %arg0, %c0_i32_0 : i32, i32, i32
  }
  func.func @transform_1(%arg0: i32) -> (i32, i32, i32) {
    %c0_i32 = arith.constant 0 : i32
    %c0_i32_0 = arith.constant 0 : i32
    %c0_i32_1 = arith.constant 0 : i32
    %c0_i32_2 = arith.constant 0 : i32
    return %c0_i32, %c0_i32_0, %c0_i32_1 : i32, i32, i32
  }
  func.func @transform_2(%arg0: i32) -> (i32, i32) {
    %c0_i32 = arith.constant 0 : i32
    %c0_i32_0 = arith.constant 0 : i32
    %c0_i32_1 = arith.constant 0 : i32
    return %c0_i32, %c0_i32_0 : i32, i32
  }
  func.func @transform_3(%arg0: i32) -> (i32, i32) {
    %c0_i32 = arith.constant 0 : i32
    %c0_i32_0 = arith.constant 0 : i32
    %c0_i32_1 = arith.constant 0 : i32
    return %c0_i32, %c0_i32_0 : i32, i32
  }
  func.func @transform_4(%arg0: i32) -> (i32, i32) {
    %c0_i32 = arith.constant 0 : i32
    %c0_i32_0 = arith.constant 0 : i32
    %c0_i32_1 = arith.constant 0 : i32
    return %c0_i32, %c0_i32_0 : i32, i32
  }
  func.func @transform_5(%arg0: i32) -> (i32, i32) {
    %c0_i32 = arith.constant 0 : i32
    %c0_i32_0 = arith.constant 0 : i32
    return %arg0, %c0_i32 : i32, i32
  }
}

module attributes {stable_mosaic.version = 11 : i64} {
  func.func @_dwpw_flat_kernel(%arg0: i32, %arg1: memref<1x104x128xbf16, #tpu.memory_space<vmem>>, %arg2: memref<9x1x128xf32, #tpu.memory_space<vmem>>, %arg3: memref<1x128xf32, #tpu.memory_space<vmem>>, %arg4: memref<128x128xbf16, #tpu.memory_space<vmem>>, %arg5: memref<1x128xf32, #tpu.memory_space<vmem>>, %arg6: memref<1x80x128xbf16, #tpu.memory_space<vmem>>) attributes {dimension_semantics = [#tpu.dimension_semantics<parallel>], iteration_bounds = array<i64: 2>, scalar_prefetch = 0 : i64, scratch_operands = 0 : i64, tpu.core_type = #tpu.core_type<tc>, window_params = [{transform_indices = @transform_0, window_bounds = array<i64: 1, 104, 128>}, {pipeline_mode = #tpu.pipeline_mode<synchronous>, transform_indices = @transform_1, window_bounds = array<i64: 9, 1, 128>}, {pipeline_mode = #tpu.pipeline_mode<synchronous>, transform_indices = @transform_2, window_bounds = array<i64: 1, 128>}, {pipeline_mode = #tpu.pipeline_mode<synchronous>, transform_indices = @transform_3, window_bounds = array<i64: 128, 128>}, {pipeline_mode = #tpu.pipeline_mode<synchronous>, transform_indices = @transform_4, window_bounds = array<i64: 1, 128>}, {transform_indices = @transform_5, window_bounds = array<i64: 1, 80, 128>}]} {
    %c0 = arith.constant 0 : index
    %c0_0 = arith.constant 0 : index
    %c0_1 = arith.constant 0 : index
    %0 = vector.load %arg1[%c0, %c0_0, %c0_1] : memref<1x104x128xbf16, #tpu.memory_space<vmem>>, vector<1x104x128xbf16>
    %1 = vector.shape_cast %0 : vector<1x104x128xbf16> to vector<104x128xbf16>
    %2 = vector.extract_strided_slice %1 {offsets = [0, 0], sizes = [80, 128], strides = [1, 1]} : vector<104x128xbf16> to vector<80x128xbf16>
    %3 = arith.extf %2 : vector<80x128xbf16> to vector<80x128xf32>
    %c0_2 = arith.constant 0 : index
    %c0_3 = arith.constant 0 : index
    %c0_4 = arith.constant 0 : index
    %4 = vector.load %arg2[%c0_2, %c0_3, %c0_4] : memref<9x1x128xf32, #tpu.memory_space<vmem>>, vector<1x1x128xf32>
    %5 = vector.shape_cast %4 : vector<1x1x128xf32> to vector<1x128xf32>
    %6 = vector.broadcast %5 : vector<1x128xf32> to vector<80x128xf32>
    %7 = arith.mulf %3, %6 : vector<80x128xf32>
    %8 = vector.extract_strided_slice %1 {offsets = [1, 0], sizes = [80, 128], strides = [1, 1]} : vector<104x128xbf16> to vector<80x128xbf16>
    %9 = arith.extf %8 : vector<80x128xbf16> to vector<80x128xf32>
    %c1 = arith.constant 1 : index
    %c0_5 = arith.constant 0 : index
    %c0_6 = arith.constant 0 : index
    %10 = vector.load %arg2[%c1, %c0_5, %c0_6] : memref<9x1x128xf32, #tpu.memory_space<vmem>>, vector<1x1x128xf32>
    %11 = vector.shape_cast %10 : vector<1x1x128xf32> to vector<1x128xf32>
    %12 = vector.broadcast %11 : vector<1x128xf32> to vector<80x128xf32>
    %13 = arith.mulf %9, %12 : vector<80x128xf32>
    %14 = arith.addf %7, %13 : vector<80x128xf32>
    %15 = vector.extract_strided_slice %1 {offsets = [2, 0], sizes = [80, 128], strides = [1, 1]} : vector<104x128xbf16> to vector<80x128xbf16>
    %16 = arith.extf %15 : vector<80x128xbf16> to vector<80x128xf32>
    %c2 = arith.constant 2 : index
    %c0_7 = arith.constant 0 : index
    %c0_8 = arith.constant 0 : index
    %17 = vector.load %arg2[%c2, %c0_7, %c0_8] : memref<9x1x128xf32, #tpu.memory_space<vmem>>, vector<1x1x128xf32>
    %18 = vector.shape_cast %17 : vector<1x1x128xf32> to vector<1x128xf32>
    %19 = vector.broadcast %18 : vector<1x128xf32> to vector<80x128xf32>
    %20 = arith.mulf %16, %19 : vector<80x128xf32>
    %21 = arith.addf %14, %20 : vector<80x128xf32>
    %22 = vector.extract_strided_slice %1 {offsets = [10, 0], sizes = [80, 128], strides = [1, 1]} : vector<104x128xbf16> to vector<80x128xbf16>
    %23 = arith.extf %22 : vector<80x128xbf16> to vector<80x128xf32>
    %c3 = arith.constant 3 : index
    %c0_9 = arith.constant 0 : index
    %c0_10 = arith.constant 0 : index
    %24 = vector.load %arg2[%c3, %c0_9, %c0_10] : memref<9x1x128xf32, #tpu.memory_space<vmem>>, vector<1x1x128xf32>
    %25 = vector.shape_cast %24 : vector<1x1x128xf32> to vector<1x128xf32>
    %26 = vector.broadcast %25 : vector<1x128xf32> to vector<80x128xf32>
    %27 = arith.mulf %23, %26 : vector<80x128xf32>
    %28 = arith.addf %21, %27 : vector<80x128xf32>
    %29 = vector.extract_strided_slice %1 {offsets = [11, 0], sizes = [80, 128], strides = [1, 1]} : vector<104x128xbf16> to vector<80x128xbf16>
    %30 = arith.extf %29 : vector<80x128xbf16> to vector<80x128xf32>
    %c4 = arith.constant 4 : index
    %c0_11 = arith.constant 0 : index
    %c0_12 = arith.constant 0 : index
    %31 = vector.load %arg2[%c4, %c0_11, %c0_12] : memref<9x1x128xf32, #tpu.memory_space<vmem>>, vector<1x1x128xf32>
    %32 = vector.shape_cast %31 : vector<1x1x128xf32> to vector<1x128xf32>
    %33 = vector.broadcast %32 : vector<1x128xf32> to vector<80x128xf32>
    %34 = arith.mulf %30, %33 : vector<80x128xf32>
    %35 = arith.addf %28, %34 : vector<80x128xf32>
    %36 = vector.extract_strided_slice %1 {offsets = [12, 0], sizes = [80, 128], strides = [1, 1]} : vector<104x128xbf16> to vector<80x128xbf16>
    %37 = arith.extf %36 : vector<80x128xbf16> to vector<80x128xf32>
    %c5 = arith.constant 5 : index
    %c0_13 = arith.constant 0 : index
    %c0_14 = arith.constant 0 : index
    %38 = vector.load %arg2[%c5, %c0_13, %c0_14] : memref<9x1x128xf32, #tpu.memory_space<vmem>>, vector<1x1x128xf32>
    %39 = vector.shape_cast %38 : vector<1x1x128xf32> to vector<1x128xf32>
    %40 = vector.broadcast %39 : vector<1x128xf32> to vector<80x128xf32>
    %41 = arith.mulf %37, %40 : vector<80x128xf32>
    %42 = arith.addf %35, %41 : vector<80x128xf32>
    %43 = vector.extract_strided_slice %1 {offsets = [20, 0], sizes = [80, 128], strides = [1, 1]} : vector<104x128xbf16> to vector<80x128xbf16>
    %44 = arith.extf %43 : vector<80x128xbf16> to vector<80x128xf32>
    %c6 = arith.constant 6 : index
    %c0_15 = arith.constant 0 : index
    %c0_16 = arith.constant 0 : index
    %45 = vector.load %arg2[%c6, %c0_15, %c0_16] : memref<9x1x128xf32, #tpu.memory_space<vmem>>, vector<1x1x128xf32>
    %46 = vector.shape_cast %45 : vector<1x1x128xf32> to vector<1x128xf32>
    %47 = vector.broadcast %46 : vector<1x128xf32> to vector<80x128xf32>
    %48 = arith.mulf %44, %47 : vector<80x128xf32>
    %49 = arith.addf %42, %48 : vector<80x128xf32>
    %50 = vector.extract_strided_slice %1 {offsets = [21, 0], sizes = [80, 128], strides = [1, 1]} : vector<104x128xbf16> to vector<80x128xbf16>
    %51 = arith.extf %50 : vector<80x128xbf16> to vector<80x128xf32>
    %c7 = arith.constant 7 : index
    %c0_17 = arith.constant 0 : index
    %c0_18 = arith.constant 0 : index
    %52 = vector.load %arg2[%c7, %c0_17, %c0_18] : memref<9x1x128xf32, #tpu.memory_space<vmem>>, vector<1x1x128xf32>
    %53 = vector.shape_cast %52 : vector<1x1x128xf32> to vector<1x128xf32>
    %54 = vector.broadcast %53 : vector<1x128xf32> to vector<80x128xf32>
    %55 = arith.mulf %51, %54 : vector<80x128xf32>
    %56 = arith.addf %49, %55 : vector<80x128xf32>
    %57 = vector.extract_strided_slice %1 {offsets = [22, 0], sizes = [80, 128], strides = [1, 1]} : vector<104x128xbf16> to vector<80x128xbf16>
    %58 = arith.extf %57 : vector<80x128xbf16> to vector<80x128xf32>
    %c8 = arith.constant 8 : index
    %c0_19 = arith.constant 0 : index
    %c0_20 = arith.constant 0 : index
    %59 = vector.load %arg2[%c8, %c0_19, %c0_20] : memref<9x1x128xf32, #tpu.memory_space<vmem>>, vector<1x1x128xf32>
    %60 = vector.shape_cast %59 : vector<1x1x128xf32> to vector<1x128xf32>
    %61 = vector.broadcast %60 : vector<1x128xf32> to vector<80x128xf32>
    %62 = arith.mulf %58, %61 : vector<80x128xf32>
    %63 = arith.addf %56, %62 : vector<80x128xf32>
    %c0_21 = arith.constant 0 : index
    %c0_22 = arith.constant 0 : index
    %64 = vector.load %arg3[%c0_21, %c0_22] : memref<1x128xf32, #tpu.memory_space<vmem>>, vector<1x128xf32>
    %65 = vector.broadcast %64 : vector<1x128xf32> to vector<80x128xf32>
    %66 = arith.addf %63, %65 : vector<80x128xf32>
    %cst = arith.constant 0.000000e+00 : f32
    %67 = vector.broadcast %cst : f32 to vector<80x128xf32>
    %68 = arith.maximumf %66, %67 : vector<80x128xf32>
    %cst_23 = arith.constant 6.000000e+00 : f32
    %69 = vector.broadcast %cst_23 : f32 to vector<80x128xf32>
    %70 = arith.minimumf %68, %69 : vector<80x128xf32>
    %71 = arith.truncf %70 : vector<80x128xf32> to vector<80x128xbf16>
    %c0_24 = arith.constant 0 : index
    %c0_25 = arith.constant 0 : index
    %72 = vector.load %arg4[%c0_24, %c0_25] : memref<128x128xbf16, #tpu.memory_space<vmem>>, vector<128x128xbf16>
    %cst_26 = arith.constant dense<0.000000e+00> : vector<80x128xf32>
    %73 = tpu.matmul %71, %72, %cst_26 {dimension_numbers = #tpu.dot_dimension_numbers<[1], [0], [0], [1], [0, 0, 1, 1], [], []>} : vector<80x128xbf16>, vector<128x128xbf16>, vector<80x128xf32> -> vector<80x128xf32>
    %c0_27 = arith.constant 0 : index
    %c0_28 = arith.constant 0 : index
    %74 = vector.load %arg5[%c0_27, %c0_28] : memref<1x128xf32, #tpu.memory_space<vmem>>, vector<1x128xf32>
    %75 = vector.broadcast %74 : vector<1x128xf32> to vector<80x128xf32>
    %76 = arith.addf %73, %75 : vector<80x128xf32>
    %cst_29 = arith.constant 0.000000e+00 : f32
    %77 = vector.broadcast %cst_29 : f32 to vector<80x128xf32>
    %78 = arith.maximumf %76, %77 : vector<80x128xf32>
    %cst_30 = arith.constant 6.000000e+00 : f32
    %79 = vector.broadcast %cst_30 : f32 to vector<80x128xf32>
    %80 = arith.minimumf %78, %79 : vector<80x128xf32>
    %81 = arith.truncf %80 : vector<80x128xf32> to vector<80x128xbf16>
    %c0_31 = arith.constant 0 : index
    %c0_32 = arith.constant 0 : index
    %c0_33 = arith.constant 0 : index
    %82 = vector.load %arg6[%c0_31, %c0_32, %c0_33] : memref<1x80x128xbf16, #tpu.memory_space<vmem>>, vector<1x80x128xbf16>
    %83 = vector.shape_cast %82 : vector<1x80x128xbf16> to vector<80x128xbf16>
    %84 = vector.shape_cast %81 : vector<80x128xbf16> to vector<1x80x128xbf16>
    tpu.vector_store %arg6[%c0_31, %c0_32, %c0_33], %84 {strides = array<i32>} : memref<1x80x128xbf16, #tpu.memory_space<vmem>>, vector<1x80x128xbf16>,
    return
  }
  func.func @transform_0(%arg0: i32) -> (i32, i32, i32) {
    %c0_i32 = arith.constant 0 : i32
    %c0_i32_0 = arith.constant 0 : i32
    %c0_i32_1 = arith.constant 0 : i32
    return %arg0, %c0_i32, %c0_i32_0 : i32, i32, i32
  }
  func.func @transform_1(%arg0: i32) -> (i32, i32, i32) {
    %c0_i32 = arith.constant 0 : i32
    %c0_i32_0 = arith.constant 0 : i32
    %c0_i32_1 = arith.constant 0 : i32
    %c0_i32_2 = arith.constant 0 : i32
    return %c0_i32, %c0_i32_0, %c0_i32_1 : i32, i32, i32
  }
  func.func @transform_2(%arg0: i32) -> (i32, i32) {
    %c0_i32 = arith.constant 0 : i32
    %c0_i32_0 = arith.constant 0 : i32
    %c0_i32_1 = arith.constant 0 : i32
    return %c0_i32, %c0_i32_0 : i32, i32
  }
  func.func @transform_3(%arg0: i32) -> (i32, i32) {
    %c0_i32 = arith.constant 0 : i32
    %c0_i32_0 = arith.constant 0 : i32
    %c0_i32_1 = arith.constant 0 : i32
    return %c0_i32, %c0_i32_0 : i32, i32
  }
  func.func @transform_4(%arg0: i32) -> (i32, i32) {
    %c0_i32 = arith.constant 0 : i32
    %c0_i32_0 = arith.constant 0 : i32
    %c0_i32_1 = arith.constant 0 : i32
    return %c0_i32, %c0_i32_0 : i32, i32
  }
  func.func @transform_5(%arg0: i32) -> (i32, i32, i32) {
    %c0_i32 = arith.constant 0 : i32
    %c0_i32_0 = arith.constant 0 : i32
    %c0_i32_1 = arith.constant 0 : i32
    return %arg0, %c0_i32, %c0_i32_0 : i32, i32, i32
  }
}

module attributes {stable_mosaic.version = 11 : i64} {
  func.func @_dwpw_taps_kernel(%arg0: i32, %arg1: memref<9x32x128xbf16, #tpu.memory_space<vmem>>, %arg2: memref<9x1x128xf32, #tpu.memory_space<vmem>>, %arg3: memref<1x128xf32, #tpu.memory_space<vmem>>, %arg4: memref<128x128xbf16, #tpu.memory_space<vmem>>, %arg5: memref<1x128xf32, #tpu.memory_space<vmem>>, %arg6: memref<32x128xbf16, #tpu.memory_space<vmem>>) attributes {dimension_semantics = [#tpu.dimension_semantics<parallel>], iteration_bounds = array<i64: 1>, scalar_prefetch = 0 : i64, scratch_operands = 0 : i64, tpu.core_type = #tpu.core_type<tc>, window_params = [{transform_indices = @transform_0, window_bounds = array<i64: 9, 32, 128>}, {pipeline_mode = #tpu.pipeline_mode<synchronous>, transform_indices = @transform_1, window_bounds = array<i64: 9, 1, 128>}, {pipeline_mode = #tpu.pipeline_mode<synchronous>, transform_indices = @transform_2, window_bounds = array<i64: 1, 128>}, {pipeline_mode = #tpu.pipeline_mode<synchronous>, transform_indices = @transform_3, window_bounds = array<i64: 128, 128>}, {pipeline_mode = #tpu.pipeline_mode<synchronous>, transform_indices = @transform_4, window_bounds = array<i64: 1, 128>}, {transform_indices = @transform_5, window_bounds = array<i64: 32, 128>}]} {
    %c0 = arith.constant 0 : index
    %c0_0 = arith.constant 0 : index
    %c0_1 = arith.constant 0 : index
    %0 = vector.load %arg1[%c0, %c0_0, %c0_1] : memref<9x32x128xbf16, #tpu.memory_space<vmem>>, vector<1x32x128xbf16>
    %1 = vector.shape_cast %0 : vector<1x32x128xbf16> to vector<32x128xbf16>
    %2 = arith.extf %1 : vector<32x128xbf16> to vector<32x128xf32>
    %c0_2 = arith.constant 0 : index
    %c0_3 = arith.constant 0 : index
    %c0_4 = arith.constant 0 : index
    %3 = vector.load %arg2[%c0_2, %c0_3, %c0_4] : memref<9x1x128xf32, #tpu.memory_space<vmem>>, vector<1x1x128xf32>
    %4 = vector.shape_cast %3 : vector<1x1x128xf32> to vector<1x128xf32>
    %5 = vector.broadcast %4 : vector<1x128xf32> to vector<32x128xf32>
    %6 = arith.mulf %2, %5 : vector<32x128xf32>
    %c1 = arith.constant 1 : index
    %c0_5 = arith.constant 0 : index
    %c0_6 = arith.constant 0 : index
    %7 = vector.load %arg1[%c1, %c0_5, %c0_6] : memref<9x32x128xbf16, #tpu.memory_space<vmem>>, vector<1x32x128xbf16>
    %8 = vector.shape_cast %7 : vector<1x32x128xbf16> to vector<32x128xbf16>
    %9 = arith.extf %8 : vector<32x128xbf16> to vector<32x128xf32>
    %c1_7 = arith.constant 1 : index
    %c0_8 = arith.constant 0 : index
    %c0_9 = arith.constant 0 : index
    %10 = vector.load %arg2[%c1_7, %c0_8, %c0_9] : memref<9x1x128xf32, #tpu.memory_space<vmem>>, vector<1x1x128xf32>
    %11 = vector.shape_cast %10 : vector<1x1x128xf32> to vector<1x128xf32>
    %12 = vector.broadcast %11 : vector<1x128xf32> to vector<32x128xf32>
    %13 = arith.mulf %9, %12 : vector<32x128xf32>
    %14 = arith.addf %6, %13 : vector<32x128xf32>
    %c2 = arith.constant 2 : index
    %c0_10 = arith.constant 0 : index
    %c0_11 = arith.constant 0 : index
    %15 = vector.load %arg1[%c2, %c0_10, %c0_11] : memref<9x32x128xbf16, #tpu.memory_space<vmem>>, vector<1x32x128xbf16>
    %16 = vector.shape_cast %15 : vector<1x32x128xbf16> to vector<32x128xbf16>
    %17 = arith.extf %16 : vector<32x128xbf16> to vector<32x128xf32>
    %c2_12 = arith.constant 2 : index
    %c0_13 = arith.constant 0 : index
    %c0_14 = arith.constant 0 : index
    %18 = vector.load %arg2[%c2_12, %c0_13, %c0_14] : memref<9x1x128xf32, #tpu.memory_space<vmem>>, vector<1x1x128xf32>
    %19 = vector.shape_cast %18 : vector<1x1x128xf32> to vector<1x128xf32>
    %20 = vector.broadcast %19 : vector<1x128xf32> to vector<32x128xf32>
    %21 = arith.mulf %17, %20 : vector<32x128xf32>
    %22 = arith.addf %14, %21 : vector<32x128xf32>
    %c3 = arith.constant 3 : index
    %c0_15 = arith.constant 0 : index
    %c0_16 = arith.constant 0 : index
    %23 = vector.load %arg1[%c3, %c0_15, %c0_16] : memref<9x32x128xbf16, #tpu.memory_space<vmem>>, vector<1x32x128xbf16>
    %24 = vector.shape_cast %23 : vector<1x32x128xbf16> to vector<32x128xbf16>
    %25 = arith.extf %24 : vector<32x128xbf16> to vector<32x128xf32>
    %c3_17 = arith.constant 3 : index
    %c0_18 = arith.constant 0 : index
    %c0_19 = arith.constant 0 : index
    %26 = vector.load %arg2[%c3_17, %c0_18, %c0_19] : memref<9x1x128xf32, #tpu.memory_space<vmem>>, vector<1x1x128xf32>
    %27 = vector.shape_cast %26 : vector<1x1x128xf32> to vector<1x128xf32>
    %28 = vector.broadcast %27 : vector<1x128xf32> to vector<32x128xf32>
    %29 = arith.mulf %25, %28 : vector<32x128xf32>
    %30 = arith.addf %22, %29 : vector<32x128xf32>
    %c4 = arith.constant 4 : index
    %c0_20 = arith.constant 0 : index
    %c0_21 = arith.constant 0 : index
    %31 = vector.load %arg1[%c4, %c0_20, %c0_21] : memref<9x32x128xbf16, #tpu.memory_space<vmem>>, vector<1x32x128xbf16>
    %32 = vector.shape_cast %31 : vector<1x32x128xbf16> to vector<32x128xbf16>
    %33 = arith.extf %32 : vector<32x128xbf16> to vector<32x128xf32>
    %c4_22 = arith.constant 4 : index
    %c0_23 = arith.constant 0 : index
    %c0_24 = arith.constant 0 : index
    %34 = vector.load %arg2[%c4_22, %c0_23, %c0_24] : memref<9x1x128xf32, #tpu.memory_space<vmem>>, vector<1x1x128xf32>
    %35 = vector.shape_cast %34 : vector<1x1x128xf32> to vector<1x128xf32>
    %36 = vector.broadcast %35 : vector<1x128xf32> to vector<32x128xf32>
    %37 = arith.mulf %33, %36 : vector<32x128xf32>
    %38 = arith.addf %30, %37 : vector<32x128xf32>
    %c5 = arith.constant 5 : index
    %c0_25 = arith.constant 0 : index
    %c0_26 = arith.constant 0 : index
    %39 = vector.load %arg1[%c5, %c0_25, %c0_26] : memref<9x32x128xbf16, #tpu.memory_space<vmem>>, vector<1x32x128xbf16>
    %40 = vector.shape_cast %39 : vector<1x32x128xbf16> to vector<32x128xbf16>
    %41 = arith.extf %40 : vector<32x128xbf16> to vector<32x128xf32>
    %c5_27 = arith.constant 5 : index
    %c0_28 = arith.constant 0 : index
    %c0_29 = arith.constant 0 : index
    %42 = vector.load %arg2[%c5_27, %c0_28, %c0_29] : memref<9x1x128xf32, #tpu.memory_space<vmem>>, vector<1x1x128xf32>
    %43 = vector.shape_cast %42 : vector<1x1x128xf32> to vector<1x128xf32>
    %44 = vector.broadcast %43 : vector<1x128xf32> to vector<32x128xf32>
    %45 = arith.mulf %41, %44 : vector<32x128xf32>
    %46 = arith.addf %38, %45 : vector<32x128xf32>
    %c6 = arith.constant 6 : index
    %c0_30 = arith.constant 0 : index
    %c0_31 = arith.constant 0 : index
    %47 = vector.load %arg1[%c6, %c0_30, %c0_31] : memref<9x32x128xbf16, #tpu.memory_space<vmem>>, vector<1x32x128xbf16>
    %48 = vector.shape_cast %47 : vector<1x32x128xbf16> to vector<32x128xbf16>
    %49 = arith.extf %48 : vector<32x128xbf16> to vector<32x128xf32>
    %c6_32 = arith.constant 6 : index
    %c0_33 = arith.constant 0 : index
    %c0_34 = arith.constant 0 : index
    %50 = vector.load %arg2[%c6_32, %c0_33, %c0_34] : memref<9x1x128xf32, #tpu.memory_space<vmem>>, vector<1x1x128xf32>
    %51 = vector.shape_cast %50 : vector<1x1x128xf32> to vector<1x128xf32>
    %52 = vector.broadcast %51 : vector<1x128xf32> to vector<32x128xf32>
    %53 = arith.mulf %49, %52 : vector<32x128xf32>
    %54 = arith.addf %46, %53 : vector<32x128xf32>
    %c7 = arith.constant 7 : index
    %c0_35 = arith.constant 0 : index
    %c0_36 = arith.constant 0 : index
    %55 = vector.load %arg1[%c7, %c0_35, %c0_36] : memref<9x32x128xbf16, #tpu.memory_space<vmem>>, vector<1x32x128xbf16>
    %56 = vector.shape_cast %55 : vector<1x32x128xbf16> to vector<32x128xbf16>
    %57 = arith.extf %56 : vector<32x128xbf16> to vector<32x128xf32>
    %c7_37 = arith.constant 7 : index
    %c0_38 = arith.constant 0 : index
    %c0_39 = arith.constant 0 : index
    %58 = vector.load %arg2[%c7_37, %c0_38, %c0_39] : memref<9x1x128xf32, #tpu.memory_space<vmem>>, vector<1x1x128xf32>
    %59 = vector.shape_cast %58 : vector<1x1x128xf32> to vector<1x128xf32>
    %60 = vector.broadcast %59 : vector<1x128xf32> to vector<32x128xf32>
    %61 = arith.mulf %57, %60 : vector<32x128xf32>
    %62 = arith.addf %54, %61 : vector<32x128xf32>
    %c8 = arith.constant 8 : index
    %c0_40 = arith.constant 0 : index
    %c0_41 = arith.constant 0 : index
    %63 = vector.load %arg1[%c8, %c0_40, %c0_41] : memref<9x32x128xbf16, #tpu.memory_space<vmem>>, vector<1x32x128xbf16>
    %64 = vector.shape_cast %63 : vector<1x32x128xbf16> to vector<32x128xbf16>
    %65 = arith.extf %64 : vector<32x128xbf16> to vector<32x128xf32>
    %c8_42 = arith.constant 8 : index
    %c0_43 = arith.constant 0 : index
    %c0_44 = arith.constant 0 : index
    %66 = vector.load %arg2[%c8_42, %c0_43, %c0_44] : memref<9x1x128xf32, #tpu.memory_space<vmem>>, vector<1x1x128xf32>
    %67 = vector.shape_cast %66 : vector<1x1x128xf32> to vector<1x128xf32>
    %68 = vector.broadcast %67 : vector<1x128xf32> to vector<32x128xf32>
    %69 = arith.mulf %65, %68 : vector<32x128xf32>
    %70 = arith.addf %62, %69 : vector<32x128xf32>
    %c0_45 = arith.constant 0 : index
    %c0_46 = arith.constant 0 : index
    %71 = vector.load %arg3[%c0_45, %c0_46] : memref<1x128xf32, #tpu.memory_space<vmem>>, vector<1x128xf32>
    %72 = vector.broadcast %71 : vector<1x128xf32> to vector<32x128xf32>
    %73 = arith.addf %70, %72 : vector<32x128xf32>
    %cst = arith.constant 0.000000e+00 : f32
    %74 = vector.broadcast %cst : f32 to vector<32x128xf32>
    %75 = arith.maximumf %73, %74 : vector<32x128xf32>
    %cst_47 = arith.constant 6.000000e+00 : f32
    %76 = vector.broadcast %cst_47 : f32 to vector<32x128xf32>
    %77 = arith.minimumf %75, %76 : vector<32x128xf32>
    %78 = arith.truncf %77 : vector<32x128xf32> to vector<32x128xbf16>
    %c0_48 = arith.constant 0 : index
    %c0_49 = arith.constant 0 : index
    %79 = vector.load %arg4[%c0_48, %c0_49] : memref<128x128xbf16, #tpu.memory_space<vmem>>, vector<128x128xbf16>
    %cst_50 = arith.constant dense<0.000000e+00> : vector<32x128xf32>
    %80 = tpu.matmul %78, %79, %cst_50 {dimension_numbers = #tpu.dot_dimension_numbers<[1], [0], [0], [1], [0, 0, 1, 1], [], []>} : vector<32x128xbf16>, vector<128x128xbf16>, vector<32x128xf32> -> vector<32x128xf32>
    %c0_51 = arith.constant 0 : index
    %c0_52 = arith.constant 0 : index
    %81 = vector.load %arg5[%c0_51, %c0_52] : memref<1x128xf32, #tpu.memory_space<vmem>>, vector<1x128xf32>
    %82 = vector.broadcast %81 : vector<1x128xf32> to vector<32x128xf32>
    %83 = arith.addf %80, %82 : vector<32x128xf32>
    %cst_53 = arith.constant 0.000000e+00 : f32
    %84 = vector.broadcast %cst_53 : f32 to vector<32x128xf32>
    %85 = arith.maximumf %83, %84 : vector<32x128xf32>
    %cst_54 = arith.constant 6.000000e+00 : f32
    %86 = vector.broadcast %cst_54 : f32 to vector<32x128xf32>
    %87 = arith.minimumf %85, %86 : vector<32x128xf32>
    %88 = arith.truncf %87 : vector<32x128xf32> to vector<32x128xbf16>
    %c0_55 = arith.constant 0 : index
    %c0_56 = arith.constant 0 : index
    %89 = vector.load %arg6[%c0_55, %c0_56] : memref<32x128xbf16, #tpu.memory_space<vmem>>, vector<32x128xbf16>
    tpu.vector_store %arg6[%c0_55, %c0_56], %88 {strides = array<i32>} : memref<32x128xbf16, #tpu.memory_space<vmem>>, vector<32x128xbf16>,
    return
  }
  func.func @transform_0(%arg0: i32) -> (i32, i32, i32) {
    %c0_i32 = arith.constant 0 : i32
    %c0_i32_0 = arith.constant 0 : i32
    %c0_i32_1 = arith.constant 0 : i32
    return %c0_i32, %arg0, %c0_i32_0 : i32, i32, i32
  }
  func.func @transform_1(%arg0: i32) -> (i32, i32, i32) {
    %c0_i32 = arith.constant 0 : i32
    %c0_i32_0 = arith.constant 0 : i32
    %c0_i32_1 = arith.constant 0 : i32
    %c0_i32_2 = arith.constant 0 : i32
    return %c0_i32, %c0_i32_0, %c0_i32_1 : i32, i32, i32
  }
  func.func @transform_2(%arg0: i32) -> (i32, i32) {
    %c0_i32 = arith.constant 0 : i32
    %c0_i32_0 = arith.constant 0 : i32
    %c0_i32_1 = arith.constant 0 : i32
    return %c0_i32, %c0_i32_0 : i32, i32
  }
  func.func @transform_3(%arg0: i32) -> (i32, i32) {
    %c0_i32 = arith.constant 0 : i32
    %c0_i32_0 = arith.constant 0 : i32
    %c0_i32_1 = arith.constant 0 : i32
    return %c0_i32, %c0_i32_0 : i32, i32
  }
  func.func @transform_4(%arg0: i32) -> (i32, i32) {
    %c0_i32 = arith.constant 0 : i32
    %c0_i32_0 = arith.constant 0 : i32
    %c0_i32_1 = arith.constant 0 : i32
    return %c0_i32, %c0_i32_0 : i32, i32
  }
  func.func @transform_5(%arg0: i32) -> (i32, i32) {
    %c0_i32 = arith.constant 0 : i32
    %c0_i32_0 = arith.constant 0 : i32
    return %arg0, %c0_i32 : i32, i32
  }
}

module attributes {stable_mosaic.version = 11 : i64} {
  func.func @_dwpw_flat_kernel(%arg0: i32, %arg1: memref<1x40x128xbf16, #tpu.memory_space<vmem>>, %arg2: memref<9x1x128xf32, #tpu.memory_space<vmem>>, %arg3: memref<1x128xf32, #tpu.memory_space<vmem>>, %arg4: memref<128x128xbf16, #tpu.memory_space<vmem>>, %arg5: memref<1x128xf32, #tpu.memory_space<vmem>>, %arg6: memref<1x24x128xbf16, #tpu.memory_space<vmem>>) attributes {dimension_semantics = [#tpu.dimension_semantics<parallel>], iteration_bounds = array<i64: 2>, scalar_prefetch = 0 : i64, scratch_operands = 0 : i64, tpu.core_type = #tpu.core_type<tc>, window_params = [{transform_indices = @transform_0, window_bounds = array<i64: 1, 40, 128>}, {pipeline_mode = #tpu.pipeline_mode<synchronous>, transform_indices = @transform_1, window_bounds = array<i64: 9, 1, 128>}, {pipeline_mode = #tpu.pipeline_mode<synchronous>, transform_indices = @transform_2, window_bounds = array<i64: 1, 128>}, {pipeline_mode = #tpu.pipeline_mode<synchronous>, transform_indices = @transform_3, window_bounds = array<i64: 128, 128>}, {pipeline_mode = #tpu.pipeline_mode<synchronous>, transform_indices = @transform_4, window_bounds = array<i64: 1, 128>}, {transform_indices = @transform_5, window_bounds = array<i64: 1, 24, 128>}]} {
    %c0 = arith.constant 0 : index
    %c0_0 = arith.constant 0 : index
    %c0_1 = arith.constant 0 : index
    %0 = vector.load %arg1[%c0, %c0_0, %c0_1] : memref<1x40x128xbf16, #tpu.memory_space<vmem>>, vector<1x40x128xbf16>
    %1 = vector.shape_cast %0 : vector<1x40x128xbf16> to vector<40x128xbf16>
    %2 = vector.extract_strided_slice %1 {offsets = [0, 0], sizes = [24, 128], strides = [1, 1]} : vector<40x128xbf16> to vector<24x128xbf16>
    %3 = arith.extf %2 : vector<24x128xbf16> to vector<24x128xf32>
    %c0_2 = arith.constant 0 : index
    %c0_3 = arith.constant 0 : index
    %c0_4 = arith.constant 0 : index
    %4 = vector.load %arg2[%c0_2, %c0_3, %c0_4] : memref<9x1x128xf32, #tpu.memory_space<vmem>>, vector<1x1x128xf32>
    %5 = vector.shape_cast %4 : vector<1x1x128xf32> to vector<1x128xf32>
    %6 = vector.broadcast %5 : vector<1x128xf32> to vector<24x128xf32>
    %7 = arith.mulf %3, %6 : vector<24x128xf32>
    %8 = vector.extract_strided_slice %1 {offsets = [1, 0], sizes = [24, 128], strides = [1, 1]} : vector<40x128xbf16> to vector<24x128xbf16>
    %9 = arith.extf %8 : vector<24x128xbf16> to vector<24x128xf32>
    %c1 = arith.constant 1 : index
    %c0_5 = arith.constant 0 : index
    %c0_6 = arith.constant 0 : index
    %10 = vector.load %arg2[%c1, %c0_5, %c0_6] : memref<9x1x128xf32, #tpu.memory_space<vmem>>, vector<1x1x128xf32>
    %11 = vector.shape_cast %10 : vector<1x1x128xf32> to vector<1x128xf32>
    %12 = vector.broadcast %11 : vector<1x128xf32> to vector<24x128xf32>
    %13 = arith.mulf %9, %12 : vector<24x128xf32>
    %14 = arith.addf %7, %13 : vector<24x128xf32>
    %15 = vector.extract_strided_slice %1 {offsets = [2, 0], sizes = [24, 128], strides = [1, 1]} : vector<40x128xbf16> to vector<24x128xbf16>
    %16 = arith.extf %15 : vector<24x128xbf16> to vector<24x128xf32>
    %c2 = arith.constant 2 : index
    %c0_7 = arith.constant 0 : index
    %c0_8 = arith.constant 0 : index
    %17 = vector.load %arg2[%c2, %c0_7, %c0_8] : memref<9x1x128xf32, #tpu.memory_space<vmem>>, vector<1x1x128xf32>
    %18 = vector.shape_cast %17 : vector<1x1x128xf32> to vector<1x128xf32>
    %19 = vector.broadcast %18 : vector<1x128xf32> to vector<24x128xf32>
    %20 = arith.mulf %16, %19 : vector<24x128xf32>
    %21 = arith.addf %14, %20 : vector<24x128xf32>
    %22 = vector.extract_strided_slice %1 {offsets = [6, 0], sizes = [24, 128], strides = [1, 1]} : vector<40x128xbf16> to vector<24x128xbf16>
    %23 = arith.extf %22 : vector<24x128xbf16> to vector<24x128xf32>
    %c3 = arith.constant 3 : index
    %c0_9 = arith.constant 0 : index
    %c0_10 = arith.constant 0 : index
    %24 = vector.load %arg2[%c3, %c0_9, %c0_10] : memref<9x1x128xf32, #tpu.memory_space<vmem>>, vector<1x1x128xf32>
    %25 = vector.shape_cast %24 : vector<1x1x128xf32> to vector<1x128xf32>
    %26 = vector.broadcast %25 : vector<1x128xf32> to vector<24x128xf32>
    %27 = arith.mulf %23, %26 : vector<24x128xf32>
    %28 = arith.addf %21, %27 : vector<24x128xf32>
    %29 = vector.extract_strided_slice %1 {offsets = [7, 0], sizes = [24, 128], strides = [1, 1]} : vector<40x128xbf16> to vector<24x128xbf16>
    %30 = arith.extf %29 : vector<24x128xbf16> to vector<24x128xf32>
    %c4 = arith.constant 4 : index
    %c0_11 = arith.constant 0 : index
    %c0_12 = arith.constant 0 : index
    %31 = vector.load %arg2[%c4, %c0_11, %c0_12] : memref<9x1x128xf32, #tpu.memory_space<vmem>>, vector<1x1x128xf32>
    %32 = vector.shape_cast %31 : vector<1x1x128xf32> to vector<1x128xf32>
    %33 = vector.broadcast %32 : vector<1x128xf32> to vector<24x128xf32>
    %34 = arith.mulf %30, %33 : vector<24x128xf32>
    %35 = arith.addf %28, %34 : vector<24x128xf32>
    %36 = vector.extract_strided_slice %1 {offsets = [8, 0], sizes = [24, 128], strides = [1, 1]} : vector<40x128xbf16> to vector<24x128xbf16>
    %37 = arith.extf %36 : vector<24x128xbf16> to vector<24x128xf32>
    %c5 = arith.constant 5 : index
    %c0_13 = arith.constant 0 : index
    %c0_14 = arith.constant 0 : index
    %38 = vector.load %arg2[%c5, %c0_13, %c0_14] : memref<9x1x128xf32, #tpu.memory_space<vmem>>, vector<1x1x128xf32>
    %39 = vector.shape_cast %38 : vector<1x1x128xf32> to vector<1x128xf32>
    %40 = vector.broadcast %39 : vector<1x128xf32> to vector<24x128xf32>
    %41 = arith.mulf %37, %40 : vector<24x128xf32>
    %42 = arith.addf %35, %41 : vector<24x128xf32>
    %43 = vector.extract_strided_slice %1 {offsets = [12, 0], sizes = [24, 128], strides = [1, 1]} : vector<40x128xbf16> to vector<24x128xbf16>
    %44 = arith.extf %43 : vector<24x128xbf16> to vector<24x128xf32>
    %c6 = arith.constant 6 : index
    %c0_15 = arith.constant 0 : index
    %c0_16 = arith.constant 0 : index
    %45 = vector.load %arg2[%c6, %c0_15, %c0_16] : memref<9x1x128xf32, #tpu.memory_space<vmem>>, vector<1x1x128xf32>
    %46 = vector.shape_cast %45 : vector<1x1x128xf32> to vector<1x128xf32>
    %47 = vector.broadcast %46 : vector<1x128xf32> to vector<24x128xf32>
    %48 = arith.mulf %44, %47 : vector<24x128xf32>
    %49 = arith.addf %42, %48 : vector<24x128xf32>
    %50 = vector.extract_strided_slice %1 {offsets = [13, 0], sizes = [24, 128], strides = [1, 1]} : vector<40x128xbf16> to vector<24x128xbf16>
    %51 = arith.extf %50 : vector<24x128xbf16> to vector<24x128xf32>
    %c7 = arith.constant 7 : index
    %c0_17 = arith.constant 0 : index
    %c0_18 = arith.constant 0 : index
    %52 = vector.load %arg2[%c7, %c0_17, %c0_18] : memref<9x1x128xf32, #tpu.memory_space<vmem>>, vector<1x1x128xf32>
    %53 = vector.shape_cast %52 : vector<1x1x128xf32> to vector<1x128xf32>
    %54 = vector.broadcast %53 : vector<1x128xf32> to vector<24x128xf32>
    %55 = arith.mulf %51, %54 : vector<24x128xf32>
    %56 = arith.addf %49, %55 : vector<24x128xf32>
    %57 = vector.extract_strided_slice %1 {offsets = [14, 0], sizes = [24, 128], strides = [1, 1]} : vector<40x128xbf16> to vector<24x128xbf16>
    %58 = arith.extf %57 : vector<24x128xbf16> to vector<24x128xf32>
    %c8 = arith.constant 8 : index
    %c0_19 = arith.constant 0 : index
    %c0_20 = arith.constant 0 : index
    %59 = vector.load %arg2[%c8, %c0_19, %c0_20] : memref<9x1x128xf32, #tpu.memory_space<vmem>>, vector<1x1x128xf32>
    %60 = vector.shape_cast %59 : vector<1x1x128xf32> to vector<1x128xf32>
    %61 = vector.broadcast %60 : vector<1x128xf32> to vector<24x128xf32>
    %62 = arith.mulf %58, %61 : vector<24x128xf32>
    %63 = arith.addf %56, %62 : vector<24x128xf32>
    %c0_21 = arith.constant 0 : index
    %c0_22 = arith.constant 0 : index
    %64 = vector.load %arg3[%c0_21, %c0_22] : memref<1x128xf32, #tpu.memory_space<vmem>>, vector<1x128xf32>
    %65 = vector.broadcast %64 : vector<1x128xf32> to vector<24x128xf32>
    %66 = arith.addf %63, %65 : vector<24x128xf32>
    %cst = arith.constant 0.000000e+00 : f32
    %67 = vector.broadcast %cst : f32 to vector<24x128xf32>
    %68 = arith.maximumf %66, %67 : vector<24x128xf32>
    %cst_23 = arith.constant 6.000000e+00 : f32
    %69 = vector.broadcast %cst_23 : f32 to vector<24x128xf32>
    %70 = arith.minimumf %68, %69 : vector<24x128xf32>
    %71 = arith.truncf %70 : vector<24x128xf32> to vector<24x128xbf16>
    %c0_24 = arith.constant 0 : index
    %c0_25 = arith.constant 0 : index
    %72 = vector.load %arg4[%c0_24, %c0_25] : memref<128x128xbf16, #tpu.memory_space<vmem>>, vector<128x128xbf16>
    %cst_26 = arith.constant dense<0.000000e+00> : vector<24x128xf32>
    %73 = tpu.matmul %71, %72, %cst_26 {dimension_numbers = #tpu.dot_dimension_numbers<[1], [0], [0], [1], [0, 0, 1, 1], [], []>} : vector<24x128xbf16>, vector<128x128xbf16>, vector<24x128xf32> -> vector<24x128xf32>
    %c0_27 = arith.constant 0 : index
    %c0_28 = arith.constant 0 : index
    %74 = vector.load %arg5[%c0_27, %c0_28] : memref<1x128xf32, #tpu.memory_space<vmem>>, vector<1x128xf32>
    %75 = vector.broadcast %74 : vector<1x128xf32> to vector<24x128xf32>
    %76 = arith.addf %73, %75 : vector<24x128xf32>
    %cst_29 = arith.constant 0.000000e+00 : f32
    %77 = vector.broadcast %cst_29 : f32 to vector<24x128xf32>
    %78 = arith.maximumf %76, %77 : vector<24x128xf32>
    %cst_30 = arith.constant 6.000000e+00 : f32
    %79 = vector.broadcast %cst_30 : f32 to vector<24x128xf32>
    %80 = arith.minimumf %78, %79 : vector<24x128xf32>
    %81 = arith.truncf %80 : vector<24x128xf32> to vector<24x128xbf16>
    %c0_31 = arith.constant 0 : index
    %c0_32 = arith.constant 0 : index
    %c0_33 = arith.constant 0 : index
    %82 = vector.load %arg6[%c0_31, %c0_32, %c0_33] : memref<1x24x128xbf16, #tpu.memory_space<vmem>>, vector<1x24x128xbf16>
    %83 = vector.shape_cast %82 : vector<1x24x128xbf16> to vector<24x128xbf16>
    %84 = vector.shape_cast %81 : vector<24x128xbf16> to vector<1x24x128xbf16>
    tpu.vector_store %arg6[%c0_31, %c0_32, %c0_33], %84 {strides = array<i32>} : memref<1x24x128xbf16, #tpu.memory_space<vmem>>, vector<1x24x128xbf16>,
    return
  }
  func.func @transform_0(%arg0: i32) -> (i32, i32, i32) {
    %c0_i32 = arith.constant 0 : i32
    %c0_i32_0 = arith.constant 0 : i32
    %c0_i32_1 = arith.constant 0 : i32
    return %arg0, %c0_i32, %c0_i32_0 : i32, i32, i32
  }
  func.func @transform_1(%arg0: i32) -> (i32, i32, i32) {
    %c0_i32 = arith.constant 0 : i32
    %c0_i32_0 = arith.constant 0 : i32
    %c0_i32_1 = arith.constant 0 : i32
    %c0_i32_2 = arith.constant 0 : i32
    return %c0_i32, %c0_i32_0, %c0_i32_1 : i32, i32, i32
  }
  func.func @transform_2(%arg0: i32) -> (i32, i32) {
    %c0_i32 = arith.constant 0 : i32
    %c0_i32_0 = arith.constant 0 : i32
    %c0_i32_1 = arith.constant 0 : i32
    return %c0_i32, %c0_i32_0 : i32, i32
  }
  func.func @transform_3(%arg0: i32) -> (i32, i32) {
    %c0_i32 = arith.constant 0 : i32
    %c0_i32_0 = arith.constant 0 : i32
    %c0_i32_1 = arith.constant 0 : i32
    return %c0_i32, %c0_i32_0 : i32, i32
  }
  func.func @transform_4(%arg0: i32) -> (i32, i32) {
    %c0_i32 = arith.constant 0 : i32
    %c0_i32_0 = arith.constant 0 : i32
    %c0_i32_1 = arith.constant 0 : i32
    return %c0_i32, %c0_i32_0 : i32, i32
  }
  func.func @transform_5(%arg0: i32) -> (i32, i32, i32) {
    %c0_i32 = arith.constant 0 : i32
    %c0_i32_0 = arith.constant 0 : i32
    %c0_i32_1 = arith.constant 0 : i32
    return %arg0, %c0_i32, %c0_i32_0 : i32, i32, i32
  }
}

module attributes {stable_mosaic.version = 11 : i64} {
  func.func @_dwpw_taps_kernel(%arg0: i32, %arg1: memref<9x8x128xbf16, #tpu.memory_space<vmem>>, %arg2: memref<9x1x128xf32, #tpu.memory_space<vmem>>, %arg3: memref<1x128xf32, #tpu.memory_space<vmem>>, %arg4: memref<128x128xbf16, #tpu.memory_space<vmem>>, %arg5: memref<1x128xf32, #tpu.memory_space<vmem>>, %arg6: memref<8x128xbf16, #tpu.memory_space<vmem>>) attributes {dimension_semantics = [#tpu.dimension_semantics<parallel>], iteration_bounds = array<i64: 1>, scalar_prefetch = 0 : i64, scratch_operands = 0 : i64, tpu.core_type = #tpu.core_type<tc>, window_params = [{transform_indices = @transform_0, window_bounds = array<i64: 9, 8, 128>}, {pipeline_mode = #tpu.pipeline_mode<synchronous>, transform_indices = @transform_1, window_bounds = array<i64: 9, 1, 128>}, {pipeline_mode = #tpu.pipeline_mode<synchronous>, transform_indices = @transform_2, window_bounds = array<i64: 1, 128>}, {pipeline_mode = #tpu.pipeline_mode<synchronous>, transform_indices = @transform_3, window_bounds = array<i64: 128, 128>}, {pipeline_mode = #tpu.pipeline_mode<synchronous>, transform_indices = @transform_4, window_bounds = array<i64: 1, 128>}, {transform_indices = @transform_5, window_bounds = array<i64: 8, 128>}]} {
    %c0 = arith.constant 0 : index
    %c0_0 = arith.constant 0 : index
    %c0_1 = arith.constant 0 : index
    %0 = vector.load %arg1[%c0, %c0_0, %c0_1] : memref<9x8x128xbf16, #tpu.memory_space<vmem>>, vector<1x8x128xbf16>
    %1 = vector.shape_cast %0 : vector<1x8x128xbf16> to vector<8x128xbf16>
    %2 = arith.extf %1 : vector<8x128xbf16> to vector<8x128xf32>
    %c0_2 = arith.constant 0 : index
    %c0_3 = arith.constant 0 : index
    %c0_4 = arith.constant 0 : index
    %3 = vector.load %arg2[%c0_2, %c0_3, %c0_4] : memref<9x1x128xf32, #tpu.memory_space<vmem>>, vector<1x1x128xf32>
    %4 = vector.shape_cast %3 : vector<1x1x128xf32> to vector<1x128xf32>
    %5 = vector.broadcast %4 : vector<1x128xf32> to vector<8x128xf32>
    %6 = arith.mulf %2, %5 : vector<8x128xf32>
    %c1 = arith.constant 1 : index
    %c0_5 = arith.constant 0 : index
    %c0_6 = arith.constant 0 : index
    %7 = vector.load %arg1[%c1, %c0_5, %c0_6] : memref<9x8x128xbf16, #tpu.memory_space<vmem>>, vector<1x8x128xbf16>
    %8 = vector.shape_cast %7 : vector<1x8x128xbf16> to vector<8x128xbf16>
    %9 = arith.extf %8 : vector<8x128xbf16> to vector<8x128xf32>
    %c1_7 = arith.constant 1 : index
    %c0_8 = arith.constant 0 : index
    %c0_9 = arith.constant 0 : index
    %10 = vector.load %arg2[%c1_7, %c0_8, %c0_9] : memref<9x1x128xf32, #tpu.memory_space<vmem>>, vector<1x1x128xf32>
    %11 = vector.shape_cast %10 : vector<1x1x128xf32> to vector<1x128xf32>
    %12 = vector.broadcast %11 : vector<1x128xf32> to vector<8x128xf32>
    %13 = arith.mulf %9, %12 : vector<8x128xf32>
    %14 = arith.addf %6, %13 : vector<8x128xf32>
    %c2 = arith.constant 2 : index
    %c0_10 = arith.constant 0 : index
    %c0_11 = arith.constant 0 : index
    %15 = vector.load %arg1[%c2, %c0_10, %c0_11] : memref<9x8x128xbf16, #tpu.memory_space<vmem>>, vector<1x8x128xbf16>
    %16 = vector.shape_cast %15 : vector<1x8x128xbf16> to vector<8x128xbf16>
    %17 = arith.extf %16 : vector<8x128xbf16> to vector<8x128xf32>
    %c2_12 = arith.constant 2 : index
    %c0_13 = arith.constant 0 : index
    %c0_14 = arith.constant 0 : index
    %18 = vector.load %arg2[%c2_12, %c0_13, %c0_14] : memref<9x1x128xf32, #tpu.memory_space<vmem>>, vector<1x1x128xf32>
    %19 = vector.shape_cast %18 : vector<1x1x128xf32> to vector<1x128xf32>
    %20 = vector.broadcast %19 : vector<1x128xf32> to vector<8x128xf32>
    %21 = arith.mulf %17, %20 : vector<8x128xf32>
    %22 = arith.addf %14, %21 : vector<8x128xf32>
    %c3 = arith.constant 3 : index
    %c0_15 = arith.constant 0 : index
    %c0_16 = arith.constant 0 : index
    %23 = vector.load %arg1[%c3, %c0_15, %c0_16] : memref<9x8x128xbf16, #tpu.memory_space<vmem>>, vector<1x8x128xbf16>
    %24 = vector.shape_cast %23 : vector<1x8x128xbf16> to vector<8x128xbf16>
    %25 = arith.extf %24 : vector<8x128xbf16> to vector<8x128xf32>
    %c3_17 = arith.constant 3 : index
    %c0_18 = arith.constant 0 : index
    %c0_19 = arith.constant 0 : index
    %26 = vector.load %arg2[%c3_17, %c0_18, %c0_19] : memref<9x1x128xf32, #tpu.memory_space<vmem>>, vector<1x1x128xf32>
    %27 = vector.shape_cast %26 : vector<1x1x128xf32> to vector<1x128xf32>
    %28 = vector.broadcast %27 : vector<1x128xf32> to vector<8x128xf32>
    %29 = arith.mulf %25, %28 : vector<8x128xf32>
    %30 = arith.addf %22, %29 : vector<8x128xf32>
    %c4 = arith.constant 4 : index
    %c0_20 = arith.constant 0 : index
    %c0_21 = arith.constant 0 : index
    %31 = vector.load %arg1[%c4, %c0_20, %c0_21] : memref<9x8x128xbf16, #tpu.memory_space<vmem>>, vector<1x8x128xbf16>
    %32 = vector.shape_cast %31 : vector<1x8x128xbf16> to vector<8x128xbf16>
    %33 = arith.extf %32 : vector<8x128xbf16> to vector<8x128xf32>
    %c4_22 = arith.constant 4 : index
    %c0_23 = arith.constant 0 : index
    %c0_24 = arith.constant 0 : index
    %34 = vector.load %arg2[%c4_22, %c0_23, %c0_24] : memref<9x1x128xf32, #tpu.memory_space<vmem>>, vector<1x1x128xf32>
    %35 = vector.shape_cast %34 : vector<1x1x128xf32> to vector<1x128xf32>
    %36 = vector.broadcast %35 : vector<1x128xf32> to vector<8x128xf32>
    %37 = arith.mulf %33, %36 : vector<8x128xf32>
    %38 = arith.addf %30, %37 : vector<8x128xf32>
    %c5 = arith.constant 5 : index
    %c0_25 = arith.constant 0 : index
    %c0_26 = arith.constant 0 : index
    %39 = vector.load %arg1[%c5, %c0_25, %c0_26] : memref<9x8x128xbf16, #tpu.memory_space<vmem>>, vector<1x8x128xbf16>
    %40 = vector.shape_cast %39 : vector<1x8x128xbf16> to vector<8x128xbf16>
    %41 = arith.extf %40 : vector<8x128xbf16> to vector<8x128xf32>
    %c5_27 = arith.constant 5 : index
    %c0_28 = arith.constant 0 : index
    %c0_29 = arith.constant 0 : index
    %42 = vector.load %arg2[%c5_27, %c0_28, %c0_29] : memref<9x1x128xf32, #tpu.memory_space<vmem>>, vector<1x1x128xf32>
    %43 = vector.shape_cast %42 : vector<1x1x128xf32> to vector<1x128xf32>
    %44 = vector.broadcast %43 : vector<1x128xf32> to vector<8x128xf32>
    %45 = arith.mulf %41, %44 : vector<8x128xf32>
    %46 = arith.addf %38, %45 : vector<8x128xf32>
    %c6 = arith.constant 6 : index
    %c0_30 = arith.constant 0 : index
    %c0_31 = arith.constant 0 : index
    %47 = vector.load %arg1[%c6, %c0_30, %c0_31] : memref<9x8x128xbf16, #tpu.memory_space<vmem>>, vector<1x8x128xbf16>
    %48 = vector.shape_cast %47 : vector<1x8x128xbf16> to vector<8x128xbf16>
    %49 = arith.extf %48 : vector<8x128xbf16> to vector<8x128xf32>
    %c6_32 = arith.constant 6 : index
    %c0_33 = arith.constant 0 : index
    %c0_34 = arith.constant 0 : index
    %50 = vector.load %arg2[%c6_32, %c0_33, %c0_34] : memref<9x1x128xf32, #tpu.memory_space<vmem>>, vector<1x1x128xf32>
    %51 = vector.shape_cast %50 : vector<1x1x128xf32> to vector<1x128xf32>
    %52 = vector.broadcast %51 : vector<1x128xf32> to vector<8x128xf32>
    %53 = arith.mulf %49, %52 : vector<8x128xf32>
    %54 = arith.addf %46, %53 : vector<8x128xf32>
    %c7 = arith.constant 7 : index
    %c0_35 = arith.constant 0 : index
    %c0_36 = arith.constant 0 : index
    %55 = vector.load %arg1[%c7, %c0_35, %c0_36] : memref<9x8x128xbf16, #tpu.memory_space<vmem>>, vector<1x8x128xbf16>
    %56 = vector.shape_cast %55 : vector<1x8x128xbf16> to vector<8x128xbf16>
    %57 = arith.extf %56 : vector<8x128xbf16> to vector<8x128xf32>
    %c7_37 = arith.constant 7 : index
    %c0_38 = arith.constant 0 : index
    %c0_39 = arith.constant 0 : index
    %58 = vector.load %arg2[%c7_37, %c0_38, %c0_39] : memref<9x1x128xf32, #tpu.memory_space<vmem>>, vector<1x1x128xf32>
    %59 = vector.shape_cast %58 : vector<1x1x128xf32> to vector<1x128xf32>
    %60 = vector.broadcast %59 : vector<1x128xf32> to vector<8x128xf32>
    %61 = arith.mulf %57, %60 : vector<8x128xf32>
    %62 = arith.addf %54, %61 : vector<8x128xf32>
    %c8 = arith.constant 8 : index
    %c0_40 = arith.constant 0 : index
    %c0_41 = arith.constant 0 : index
    %63 = vector.load %arg1[%c8, %c0_40, %c0_41] : memref<9x8x128xbf16, #tpu.memory_space<vmem>>, vector<1x8x128xbf16>
    %64 = vector.shape_cast %63 : vector<1x8x128xbf16> to vector<8x128xbf16>
    %65 = arith.extf %64 : vector<8x128xbf16> to vector<8x128xf32>
    %c8_42 = arith.constant 8 : index
    %c0_43 = arith.constant 0 : index
    %c0_44 = arith.constant 0 : index
    %66 = vector.load %arg2[%c8_42, %c0_43, %c0_44] : memref<9x1x128xf32, #tpu.memory_space<vmem>>, vector<1x1x128xf32>
    %67 = vector.shape_cast %66 : vector<1x1x128xf32> to vector<1x128xf32>
    %68 = vector.broadcast %67 : vector<1x128xf32> to vector<8x128xf32>
    %69 = arith.mulf %65, %68 : vector<8x128xf32>
    %70 = arith.addf %62, %69 : vector<8x128xf32>
    %c0_45 = arith.constant 0 : index
    %c0_46 = arith.constant 0 : index
    %71 = vector.load %arg3[%c0_45, %c0_46] : memref<1x128xf32, #tpu.memory_space<vmem>>, vector<1x128xf32>
    %72 = vector.broadcast %71 : vector<1x128xf32> to vector<8x128xf32>
    %73 = arith.addf %70, %72 : vector<8x128xf32>
    %cst = arith.constant 0.000000e+00 : f32
    %74 = vector.broadcast %cst : f32 to vector<8x128xf32>
    %75 = arith.maximumf %73, %74 : vector<8x128xf32>
    %cst_47 = arith.constant 6.000000e+00 : f32
    %76 = vector.broadcast %cst_47 : f32 to vector<8x128xf32>
    %77 = arith.minimumf %75, %76 : vector<8x128xf32>
    %78 = arith.truncf %77 : vector<8x128xf32> to vector<8x128xbf16>
    %c0_48 = arith.constant 0 : index
    %c0_49 = arith.constant 0 : index
    %79 = vector.load %arg4[%c0_48, %c0_49] : memref<128x128xbf16, #tpu.memory_space<vmem>>, vector<128x128xbf16>
    %cst_50 = arith.constant dense<0.000000e+00> : vector<8x128xf32>
    %80 = tpu.matmul %78, %79, %cst_50 {dimension_numbers = #tpu.dot_dimension_numbers<[1], [0], [0], [1], [0, 0, 1, 1], [], []>} : vector<8x128xbf16>, vector<128x128xbf16>, vector<8x128xf32> -> vector<8x128xf32>
    %c0_51 = arith.constant 0 : index
    %c0_52 = arith.constant 0 : index
    %81 = vector.load %arg5[%c0_51, %c0_52] : memref<1x128xf32, #tpu.memory_space<vmem>>, vector<1x128xf32>
    %82 = vector.broadcast %81 : vector<1x128xf32> to vector<8x128xf32>
    %83 = arith.addf %80, %82 : vector<8x128xf32>
    %cst_53 = arith.constant 0.000000e+00 : f32
    %84 = vector.broadcast %cst_53 : f32 to vector<8x128xf32>
    %85 = arith.maximumf %83, %84 : vector<8x128xf32>
    %cst_54 = arith.constant 6.000000e+00 : f32
    %86 = vector.broadcast %cst_54 : f32 to vector<8x128xf32>
    %87 = arith.minimumf %85, %86 : vector<8x128xf32>
    %88 = arith.truncf %87 : vector<8x128xf32> to vector<8x128xbf16>
    %c0_55 = arith.constant 0 : index
    %c0_56 = arith.constant 0 : index
    %89 = vector.load %arg6[%c0_55, %c0_56] : memref<8x128xbf16, #tpu.memory_space<vmem>>, vector<8x128xbf16>
    tpu.vector_store %arg6[%c0_55, %c0_56], %88 {strides = array<i32>} : memref<8x128xbf16, #tpu.memory_space<vmem>>, vector<8x128xbf16>,
    return
  }
  func.func @transform_0(%arg0: i32) -> (i32, i32, i32) {
    %c0_i32 = arith.constant 0 : i32
    %c0_i32_0 = arith.constant 0 : i32
    %c0_i32_1 = arith.constant 0 : i32
    return %c0_i32, %arg0, %c0_i32_0 : i32, i32, i32
  }
  func.func @transform_1(%arg0: i32) -> (i32, i32, i32) {
    %c0_i32 = arith.constant 0 : i32
    %c0_i32_0 = arith.constant 0 : i32
    %c0_i32_1 = arith.constant 0 : i32
    %c0_i32_2 = arith.constant 0 : i32
    return %c0_i32, %c0_i32_0, %c0_i32_1 : i32, i32, i32
  }
  func.func @transform_2(%arg0: i32) -> (i32, i32) {
    %c0_i32 = arith.constant 0 : i32
    %c0_i32_0 = arith.constant 0 : i32
    %c0_i32_1 = arith.constant 0 : i32
    return %c0_i32, %c0_i32_0 : i32, i32
  }
  func.func @transform_3(%arg0: i32) -> (i32, i32) {
    %c0_i32 = arith.constant 0 : i32
    %c0_i32_0 = arith.constant 0 : i32
    %c0_i32_1 = arith.constant 0 : i32
    return %c0_i32, %c0_i32_0 : i32, i32
  }
  func.func @transform_4(%arg0: i32) -> (i32, i32) {
    %c0_i32 = arith.constant 0 : i32
    %c0_i32_0 = arith.constant 0 : i32
    %c0_i32_1 = arith.constant 0 : i32
    return %c0_i32, %c0_i32_0 : i32, i32
  }
  func.func @transform_5(%arg0: i32) -> (i32, i32) {
    %c0_i32 = arith.constant 0 : i32
    %c0_i32_0 = arith.constant 0 : i32
    return %arg0, %c0_i32 : i32, i32
  }
}

module attributes {stable_mosaic.version = 11 : i64} {
  func.func @_dwpw_flat_kernel(%arg0: i32, %arg1: memref<1x24x128xbf16, #tpu.memory_space<vmem>>, %arg2: memref<9x1x128xf32, #tpu.memory_space<vmem>>, %arg3: memref<1x128xf32, #tpu.memory_space<vmem>>, %arg4: memref<128x128xbf16, #tpu.memory_space<vmem>>, %arg5: memref<1x128xf32, #tpu.memory_space<vmem>>, %arg6: memref<1x8x128xbf16, #tpu.memory_space<vmem>>) attributes {dimension_semantics = [#tpu.dimension_semantics<parallel>], iteration_bounds = array<i64: 2>, scalar_prefetch = 0 : i64, scratch_operands = 0 : i64, tpu.core_type = #tpu.core_type<tc>, window_params = [{transform_indices = @transform_0, window_bounds = array<i64: 1, 24, 128>}, {pipeline_mode = #tpu.pipeline_mode<synchronous>, transform_indices = @transform_1, window_bounds = array<i64: 9, 1, 128>}, {pipeline_mode = #tpu.pipeline_mode<synchronous>, transform_indices = @transform_2, window_bounds = array<i64: 1, 128>}, {pipeline_mode = #tpu.pipeline_mode<synchronous>, transform_indices = @transform_3, window_bounds = array<i64: 128, 128>}, {pipeline_mode = #tpu.pipeline_mode<synchronous>, transform_indices = @transform_4, window_bounds = array<i64: 1, 128>}, {transform_indices = @transform_5, window_bounds = array<i64: 1, 8, 128>}]} {
    %c0 = arith.constant 0 : index
    %c0_0 = arith.constant 0 : index
    %c0_1 = arith.constant 0 : index
    %0 = vector.load %arg1[%c0, %c0_0, %c0_1] : memref<1x24x128xbf16, #tpu.memory_space<vmem>>, vector<1x24x128xbf16>
    %1 = vector.shape_cast %0 : vector<1x24x128xbf16> to vector<24x128xbf16>
    %2 = vector.extract_strided_slice %1 {offsets = [0, 0], sizes = [8, 128], strides = [1, 1]} : vector<24x128xbf16> to vector<8x128xbf16>
    %3 = arith.extf %2 : vector<8x128xbf16> to vector<8x128xf32>
    %c0_2 = arith.constant 0 : index
    %c0_3 = arith.constant 0 : index
    %c0_4 = arith.constant 0 : index
    %4 = vector.load %arg2[%c0_2, %c0_3, %c0_4] : memref<9x1x128xf32, #tpu.memory_space<vmem>>, vector<1x1x128xf32>
    %5 = vector.shape_cast %4 : vector<1x1x128xf32> to vector<1x128xf32>
    %6 = vector.broadcast %5 : vector<1x128xf32> to vector<8x128xf32>
    %7 = arith.mulf %3, %6 : vector<8x128xf32>
    %8 = vector.extract_strided_slice %1 {offsets = [1, 0], sizes = [8, 128], strides = [1, 1]} : vector<24x128xbf16> to vector<8x128xbf16>
    %9 = arith.extf %8 : vector<8x128xbf16> to vector<8x128xf32>
    %c1 = arith.constant 1 : index
    %c0_5 = arith.constant 0 : index
    %c0_6 = arith.constant 0 : index
    %10 = vector.load %arg2[%c1, %c0_5, %c0_6] : memref<9x1x128xf32, #tpu.memory_space<vmem>>, vector<1x1x128xf32>
    %11 = vector.shape_cast %10 : vector<1x1x128xf32> to vector<1x128xf32>
    %12 = vector.broadcast %11 : vector<1x128xf32> to vector<8x128xf32>
    %13 = arith.mulf %9, %12 : vector<8x128xf32>
    %14 = arith.addf %7, %13 : vector<8x128xf32>
    %15 = vector.extract_strided_slice %1 {offsets = [2, 0], sizes = [8, 128], strides = [1, 1]} : vector<24x128xbf16> to vector<8x128xbf16>
    %16 = arith.extf %15 : vector<8x128xbf16> to vector<8x128xf32>
    %c2 = arith.constant 2 : index
    %c0_7 = arith.constant 0 : index
    %c0_8 = arith.constant 0 : index
    %17 = vector.load %arg2[%c2, %c0_7, %c0_8] : memref<9x1x128xf32, #tpu.memory_space<vmem>>, vector<1x1x128xf32>
    %18 = vector.shape_cast %17 : vector<1x1x128xf32> to vector<1x128xf32>
    %19 = vector.broadcast %18 : vector<1x128xf32> to vector<8x128xf32>
    %20 = arith.mulf %16, %19 : vector<8x128xf32>
    %21 = arith.addf %14, %20 : vector<8x128xf32>
    %22 = vector.extract_strided_slice %1 {offsets = [4, 0], sizes = [8, 128], strides = [1, 1]} : vector<24x128xbf16> to vector<8x128xbf16>
    %23 = arith.extf %22 : vector<8x128xbf16> to vector<8x128xf32>
    %c3 = arith.constant 3 : index
    %c0_9 = arith.constant 0 : index
    %c0_10 = arith.constant 0 : index
    %24 = vector.load %arg2[%c3, %c0_9, %c0_10] : memref<9x1x128xf32, #tpu.memory_space<vmem>>, vector<1x1x128xf32>
    %25 = vector.shape_cast %24 : vector<1x1x128xf32> to vector<1x128xf32>
    %26 = vector.broadcast %25 : vector<1x128xf32> to vector<8x128xf32>
    %27 = arith.mulf %23, %26 : vector<8x128xf32>
    %28 = arith.addf %21, %27 : vector<8x128xf32>
    %29 = vector.extract_strided_slice %1 {offsets = [5, 0], sizes = [8, 128], strides = [1, 1]} : vector<24x128xbf16> to vector<8x128xbf16>
    %30 = arith.extf %29 : vector<8x128xbf16> to vector<8x128xf32>
    %c4 = arith.constant 4 : index
    %c0_11 = arith.constant 0 : index
    %c0_12 = arith.constant 0 : index
    %31 = vector.load %arg2[%c4, %c0_11, %c0_12] : memref<9x1x128xf32, #tpu.memory_space<vmem>>, vector<1x1x128xf32>
    %32 = vector.shape_cast %31 : vector<1x1x128xf32> to vector<1x128xf32>
    %33 = vector.broadcast %32 : vector<1x128xf32> to vector<8x128xf32>
    %34 = arith.mulf %30, %33 : vector<8x128xf32>
    %35 = arith.addf %28, %34 : vector<8x128xf32>
    %36 = vector.extract_strided_slice %1 {offsets = [6, 0], sizes = [8, 128], strides = [1, 1]} : vector<24x128xbf16> to vector<8x128xbf16>
    %37 = arith.extf %36 : vector<8x128xbf16> to vector<8x128xf32>
    %c5 = arith.constant 5 : index
    %c0_13 = arith.constant 0 : index
    %c0_14 = arith.constant 0 : index
    %38 = vector.load %arg2[%c5, %c0_13, %c0_14] : memref<9x1x128xf32, #tpu.memory_space<vmem>>, vector<1x1x128xf32>
    %39 = vector.shape_cast %38 : vector<1x1x128xf32> to vector<1x128xf32>
    %40 = vector.broadcast %39 : vector<1x128xf32> to vector<8x128xf32>
    %41 = arith.mulf %37, %40 : vector<8x128xf32>
    %42 = arith.addf %35, %41 : vector<8x128xf32>
    %43 = vector.extract_strided_slice %1 {offsets = [8, 0], sizes = [8, 128], strides = [1, 1]} : vector<24x128xbf16> to vector<8x128xbf16>
    %44 = arith.extf %43 : vector<8x128xbf16> to vector<8x128xf32>
    %c6 = arith.constant 6 : index
    %c0_15 = arith.constant 0 : index
    %c0_16 = arith.constant 0 : index
    %45 = vector.load %arg2[%c6, %c0_15, %c0_16] : memref<9x1x128xf32, #tpu.memory_space<vmem>>, vector<1x1x128xf32>
    %46 = vector.shape_cast %45 : vector<1x1x128xf32> to vector<1x128xf32>
    %47 = vector.broadcast %46 : vector<1x128xf32> to vector<8x128xf32>
    %48 = arith.mulf %44, %47 : vector<8x128xf32>
    %49 = arith.addf %42, %48 : vector<8x128xf32>
    %50 = vector.extract_strided_slice %1 {offsets = [9, 0], sizes = [8, 128], strides = [1, 1]} : vector<24x128xbf16> to vector<8x128xbf16>
    %51 = arith.extf %50 : vector<8x128xbf16> to vector<8x128xf32>
    %c7 = arith.constant 7 : index
    %c0_17 = arith.constant 0 : index
    %c0_18 = arith.constant 0 : index
    %52 = vector.load %arg2[%c7, %c0_17, %c0_18] : memref<9x1x128xf32, #tpu.memory_space<vmem>>, vector<1x1x128xf32>
    %53 = vector.shape_cast %52 : vector<1x1x128xf32> to vector<1x128xf32>
    %54 = vector.broadcast %53 : vector<1x128xf32> to vector<8x128xf32>
    %55 = arith.mulf %51, %54 : vector<8x128xf32>
    %56 = arith.addf %49, %55 : vector<8x128xf32>
    %57 = vector.extract_strided_slice %1 {offsets = [10, 0], sizes = [8, 128], strides = [1, 1]} : vector<24x128xbf16> to vector<8x128xbf16>
    %58 = arith.extf %57 : vector<8x128xbf16> to vector<8x128xf32>
    %c8 = arith.constant 8 : index
    %c0_19 = arith.constant 0 : index
    %c0_20 = arith.constant 0 : index
    %59 = vector.load %arg2[%c8, %c0_19, %c0_20] : memref<9x1x128xf32, #tpu.memory_space<vmem>>, vector<1x1x128xf32>
    %60 = vector.shape_cast %59 : vector<1x1x128xf32> to vector<1x128xf32>
    %61 = vector.broadcast %60 : vector<1x128xf32> to vector<8x128xf32>
    %62 = arith.mulf %58, %61 : vector<8x128xf32>
    %63 = arith.addf %56, %62 : vector<8x128xf32>
    %c0_21 = arith.constant 0 : index
    %c0_22 = arith.constant 0 : index
    %64 = vector.load %arg3[%c0_21, %c0_22] : memref<1x128xf32, #tpu.memory_space<vmem>>, vector<1x128xf32>
    %65 = vector.broadcast %64 : vector<1x128xf32> to vector<8x128xf32>
    %66 = arith.addf %63, %65 : vector<8x128xf32>
    %cst = arith.constant 0.000000e+00 : f32
    %67 = vector.broadcast %cst : f32 to vector<8x128xf32>
    %68 = arith.maximumf %66, %67 : vector<8x128xf32>
    %cst_23 = arith.constant 6.000000e+00 : f32
    %69 = vector.broadcast %cst_23 : f32 to vector<8x128xf32>
    %70 = arith.minimumf %68, %69 : vector<8x128xf32>
    %71 = arith.truncf %70 : vector<8x128xf32> to vector<8x128xbf16>
    %c0_24 = arith.constant 0 : index
    %c0_25 = arith.constant 0 : index
    %72 = vector.load %arg4[%c0_24, %c0_25] : memref<128x128xbf16, #tpu.memory_space<vmem>>, vector<128x128xbf16>
    %cst_26 = arith.constant dense<0.000000e+00> : vector<8x128xf32>
    %73 = tpu.matmul %71, %72, %cst_26 {dimension_numbers = #tpu.dot_dimension_numbers<[1], [0], [0], [1], [0, 0, 1, 1], [], []>} : vector<8x128xbf16>, vector<128x128xbf16>, vector<8x128xf32> -> vector<8x128xf32>
    %c0_27 = arith.constant 0 : index
    %c0_28 = arith.constant 0 : index
    %74 = vector.load %arg5[%c0_27, %c0_28] : memref<1x128xf32, #tpu.memory_space<vmem>>, vector<1x128xf32>
    %75 = vector.broadcast %74 : vector<1x128xf32> to vector<8x128xf32>
    %76 = arith.addf %73, %75 : vector<8x128xf32>
    %cst_29 = arith.constant 0.000000e+00 : f32
    %77 = vector.broadcast %cst_29 : f32 to vector<8x128xf32>
    %78 = arith.maximumf %76, %77 : vector<8x128xf32>
    %cst_30 = arith.constant 6.000000e+00 : f32
    %79 = vector.broadcast %cst_30 : f32 to vector<8x128xf32>
    %80 = arith.minimumf %78, %79 : vector<8x128xf32>
    %81 = arith.truncf %80 : vector<8x128xf32> to vector<8x128xbf16>
    %c0_31 = arith.constant 0 : index
    %c0_32 = arith.constant 0 : index
    %c0_33 = arith.constant 0 : index
    %82 = vector.load %arg6[%c0_31, %c0_32, %c0_33] : memref<1x8x128xbf16, #tpu.memory_space<vmem>>, vector<1x8x128xbf16>
    %83 = vector.shape_cast %82 : vector<1x8x128xbf16> to vector<8x128xbf16>
    %84 = vector.shape_cast %81 : vector<8x128xbf16> to vector<1x8x128xbf16>
    tpu.vector_store %arg6[%c0_31, %c0_32, %c0_33], %84 {strides = array<i32>} : memref<1x8x128xbf16, #tpu.memory_space<vmem>>, vector<1x8x128xbf16>,
    return
  }
  func.func @transform_0(%arg0: i32) -> (i32, i32, i32) {
    %c0_i32 = arith.constant 0 : i32
    %c0_i32_0 = arith.constant 0 : i32
    %c0_i32_1 = arith.constant 0 : i32
    return %arg0, %c0_i32, %c0_i32_0 : i32, i32, i32
  }
  func.func @transform_1(%arg0: i32) -> (i32, i32, i32) {
    %c0_i32 = arith.constant 0 : i32
    %c0_i32_0 = arith.constant 0 : i32
    %c0_i32_1 = arith.constant 0 : i32
    %c0_i32_2 = arith.constant 0 : i32
    return %c0_i32, %c0_i32_0, %c0_i32_1 : i32, i32, i32
  }
  func.func @transform_2(%arg0: i32) -> (i32, i32) {
    %c0_i32 = arith.constant 0 : i32
    %c0_i32_0 = arith.constant 0 : i32
    %c0_i32_1 = arith.constant 0 : i32
    return %c0_i32, %c0_i32_0 : i32, i32
  }
  func.func @transform_3(%arg0: i32) -> (i32, i32) {
    %c0_i32 = arith.constant 0 : i32
    %c0_i32_0 = arith.constant 0 : i32
    %c0_i32_1 = arith.constant 0 : i32
    return %c0_i32, %c0_i32_0 : i32, i32
  }
  func.func @transform_4(%arg0: i32) -> (i32, i32) {
    %c0_i32 = arith.constant 0 : i32
    %c0_i32_0 = arith.constant 0 : i32
    %c0_i32_1 = arith.constant 0 : i32
    return %c0_i32, %c0_i32_0 : i32, i32
  }
  func.func @transform_5(%arg0: i32) -> (i32, i32, i32) {
    %c0_i32 = arith.constant 0 : i32
    %c0_i32_0 = arith.constant 0 : i32
    %c0_i32_1 = arith.constant 0 : i32
    return %arg0, %c0_i32, %c0_i32_0 : i32, i32, i32
  }
}

module attributes {stable_mosaic.version = 11 : i64} {
  func.func @_pool_fc_kernel(%arg0: i32, %arg1: memref<2x1x128xbf16, #tpu.memory_space<vmem>>, %arg2: memref<128x128xbf16, #tpu.memory_space<vmem>>, %arg3: memref<1x128xf32, #tpu.memory_space<vmem>>, %arg4: memref<2x128xf32, #tpu.memory_space<vmem>>) attributes {dimension_semantics = [#tpu.dimension_semantics<parallel>], iteration_bounds = array<i64: 1>, scalar_prefetch = 0 : i64, scratch_operands = 0 : i64, tpu.core_type = #tpu.core_type<tc>, window_params = [{transform_indices = @transform_0, window_bounds = array<i64: 2, 1, 128>}, {pipeline_mode = #tpu.pipeline_mode<synchronous>, transform_indices = @transform_1, window_bounds = array<i64: 128, 128>}, {pipeline_mode = #tpu.pipeline_mode<synchronous>, transform_indices = @transform_2, window_bounds = array<i64: 1, 128>}, {transform_indices = @transform_3, window_bounds = array<i64: 2, 128>}]} {
    %c0 = arith.constant 0 : index
    %c0_0 = arith.constant 0 : index
    %c0_1 = arith.constant 0 : index
    %0 = vector.load %arg1[%c0, %c0_0, %c0_1] : memref<2x1x128xbf16, #tpu.memory_space<vmem>>, vector<2x1x128xbf16>
    %1 = arith.extf %0 : vector<2x1x128xbf16> to vector<2x1x128xf32>
    %cst = arith.constant dense<0.000000e+00> : vector<2x128xf32>
    %2 = vector.multi_reduction <add>, %1, %cst [1] : vector<2x1x128xf32> to vector<2x128xf32>
    %cst_2 = arith.constant 1.000000e+00 : f32
    %3 = vector.broadcast %cst_2 : f32 to vector<2x128xf32>
    %4 = arith.divf %2, %3 : vector<2x128xf32>
    %5 = arith.truncf %4 : vector<2x128xf32> to vector<2x128xbf16>
    %c0_3 = arith.constant 0 : index
    %c0_4 = arith.constant 0 : index
    %6 = vector.load %arg2[%c0_3, %c0_4] : memref<128x128xbf16, #tpu.memory_space<vmem>>, vector<128x128xbf16>
    %cst_5 = arith.constant dense<0.000000e+00> : vector<2x128xf32>
    %7 = tpu.matmul %5, %6, %cst_5 {dimension_numbers = #tpu.dot_dimension_numbers<[1], [0], [0], [1], [0, 0, 1, 1], [], []>} : vector<2x128xbf16>, vector<128x128xbf16>, vector<2x128xf32> -> vector<2x128xf32>
    %c0_6 = arith.constant 0 : index
    %c0_7 = arith.constant 0 : index
    %8 = vector.load %arg3[%c0_6, %c0_7] : memref<1x128xf32, #tpu.memory_space<vmem>>, vector<1x128xf32>
    %9 = vector.broadcast %8 : vector<1x128xf32> to vector<2x128xf32>
    %10 = arith.addf %7, %9 : vector<2x128xf32>
    %c0_8 = arith.constant 0 : index
    %c0_9 = arith.constant 0 : index
    %11 = vector.load %arg4[%c0_8, %c0_9] : memref<2x128xf32, #tpu.memory_space<vmem>>, vector<2x128xf32>
    tpu.vector_store %arg4[%c0_8, %c0_9], %10 {strides = array<i32>} : memref<2x128xf32, #tpu.memory_space<vmem>>, vector<2x128xf32>,
    return
  }
  func.func @transform_0(%arg0: i32) -> (i32, i32, i32) {
    %c0_i32 = arith.constant 0 : i32
    %c0_i32_0 = arith.constant 0 : i32
    %c0_i32_1 = arith.constant 0 : i32
    return %arg0, %c0_i32, %c0_i32_0 : i32, i32, i32
  }
  func.func @transform_1(%arg0: i32) -> (i32, i32) {
    %c0_i32 = arith.constant 0 : i32
    %c0_i32_0 = arith.constant 0 : i32
    %c0_i32_1 = arith.constant 0 : i32
    return %c0_i32, %c0_i32_0 : i32, i32
  }
  func.func @transform_2(%arg0: i32) -> (i32, i32) {
    %c0_i32 = arith.constant 0 : i32
    %c0_i32_0 = arith.constant 0 : i32
    %c0_i32_1 = arith.constant 0 : i32
    return %c0_i32, %c0_i32_0 : i32, i32
  }
  func.func @transform_3(%arg0: i32) -> (i32, i32) {
    %c0_i32 = arith.constant 0 : i32
    %c0_i32_0 = arith.constant 0 : i32
    return %arg0, %c0_i32 : i32, i32
  }
}

</mosaic_0001>

<llo_original>
// kernel: mobilenet_v1_forward.15
$region0: #{mobilenet_v1_forward.15}
  #allocation0 [shape = 'u32[]', space=smem, size = 0x4, offset = 0x4, fixed_abs, tag = 'smem constant byte address 0x4 - core index']
  #allocation1 [shape = 'u32[144,128]{1,0:T(1,128)}', space=vmem, size = 0x12000, scoped, tag = 'internal scratch']
  %s0 = inlined_call_operand.hbm [shape: bf16[512,27], index: 0, kind: input, shape index: {}]
  %s1 = inlined_call_operand.hbm [shape: bf16[27,128], index: 1, kind: input, shape index: {}]
  %s2 = inlined_call_operand.hbm [shape: f32[1,128], index: 2, kind: input, shape index: {}]
  %s3 = inlined_call_operand.hbm [shape: bf16[512,128], index: 3, kind: output, shape index: {}]
  %s4 = sld [smem:[#allocation0]]
  $region34: #{mobilenet_v1_forward.15} parent=0
    _
  %s6 = ssub.s32 1, %s4
  %s7 = scalar_select 0, %s6, %s4
  $region1: #{mobilenet_v1_forward.15} parent=0
    #allocation2 [shape = 'u8[131072]{0}', space=vmem, size = 0x20000, scoped, tag = 'input window, operand 0, single buffered']
    #allocation3 [shape = 's32[1]{0}', space=sflag, size = 0x4, scoped, tag = 'scoped memory for mobilenet_v1_forward.15']
    #allocation4 [shape = 's32[1]{0}', space=sflag, size = 0x4, scoped, tag = 'scoped memory for mobilenet_v1_forward.15']
    #allocation5 [shape = 'u8[8192]{0}', space=vmem, size = 0x2000, scoped, tag = 'input window, operand 1, single buffered']
    #allocation6 [shape = 's32[1]{0}', space=sflag, size = 0x4, scoped, tag = 'scoped memory for mobilenet_v1_forward.15']
    #allocation7 [shape = 'u8[512]{0}', space=vmem, size = 0x400, scoped, tag = 'input window, operand 2, single buffered']
    #allocation8 [shape = 'u8[131072]{0}', space=vmem, size = 0x20000, scoped, tag = 'output window, operand 0, single buffered']
    %8 = vsyncpa [#allocation3], 0
    %9 = vsyncpa [#allocation6], 0
    %10 = vsyncpa [#allocation4], 0
    // Predicated region
    $region2: #{mobilenet_v1_forward.15} parent=1 // pred_check
      _
    $region3: #{mobilenet_v1_forward.15} parent=1 // pred_check_branch
      %12 = sbr.rel (0) target = $region5
    $region4: #{mobilenet_v1_forward.15} parent=1 // pred_region
      %s14 = ssub.s32 4096, 4096
      %15 = vsyncadd [#allocation3], %s14
      %s16 = sshll.u32 [#allocation2], 4
      %s17 = int_to_ptr.vmem [resolvable:$true] %s16
      %22 = dma.hbm_to_vmem [thread:$0]  %s0, 4096, %s17, [#allocation3], 64, 64, 4
    $region5: #{mobilenet_v1_forward.15} parent=1 // pred_fallthru
      _
    // Predicated region
    $region6: #{mobilenet_v1_forward.15} parent=1 // pred_check
      _
    $region7: #{mobilenet_v1_forward.15} parent=1 // pred_check_branch
      %24 = sbr.rel (0) target = $region9
    $region8: #{mobilenet_v1_forward.15} parent=1 // pred_region
      %s26 = ssub.s32 256, 256
      %27 = vsyncadd [#allocation6], %s26
      %s28 = sshll.u32 [#allocation5], 4
      %s29 = int_to_ptr.vmem [resolvable:$true] %s28
      %34 = dma.hbm_to_vmem [thread:$0]  %s1, 256, %s29, [#allocation6], 64, 64, 4
    $region9: #{mobilenet_v1_forward.15} parent=1 // pred_fallthru
      _
    // Predicated region
    $region10: #{mobilenet_v1_forward.15} parent=1 // pred_check
      _
    $region11: #{mobilenet_v1_forward.15} parent=1 // pred_check_branch
      %36 = sbr.rel (0) target = $region13
    $region12: #{mobilenet_v1_forward.15} parent=1 // pred_region
      %s38 = ssub.s32 16, 16
      %39 = vsyncadd [#allocation6], %s38
      %s41 = sshll.u32 [#allocation7], 4
      %s42 = int_to_ptr.vmem [resolvable:$true] %s41
      %44 = dma.hbm_to_vmem [thread:$0]  %s2, 16, %s42, [#allocation6]
    $region13: #{mobilenet_v1_forward.15} parent=1 // pred_fallthru
      _
    // Predicated region
    $region14: #{mobilenet_v1_forward.15} parent=1 // pred_check
      _
    $region15: #{mobilenet_v1_forward.15} parent=1 // pred_check_branch
      %46 = sbr.rel (0) target = $region17
    $region16: #{mobilenet_v1_forward.15} parent=1 // pred_region
      %47 = dma.done [#allocation3], 4096
    $region17: #{mobilenet_v1_forward.15} parent=1 // pred_fallthru
      _
    // Predicated region
    $region18: #{mobilenet_v1_forward.15} parent=1 // pred_check
      _
    $region19: #{mobilenet_v1_forward.15} parent=1 // pred_check_branch
      %49 = sbr.rel (0) target = $region21
    $region20: #{mobilenet_v1_forward.15} parent=1 // pred_region
      %50 = dma.done [#allocation6], 256
    $region21: #{mobilenet_v1_forward.15} parent=1 // pred_fallthru
      _
    // Predicated region
    $region22: #{mobilenet_v1_forward.15} parent=1 // pred_check
      _
    $region23: #{mobilenet_v1_forward.15} parent=1 // pred_check_branch
      %52 = sbr.rel (0) target = $region25
    $region24: #{mobilenet_v1_forward.15} parent=1 // pred_region
      %53 = dma.done [#allocation6], 16
    $region25: #{mobilenet_v1_forward.15} parent=1 // pred_fallthru
      _
    %v55 = vld [vmem:[#allocation2] sm:$0xf]
    %v56 = vld [vmem:[#allocation2 + $0x4] sm:$0xf]
    %v57 = vld [vmem:[#allocation2 + $0x8] sm:$0xf]
    %v58 = vld [vmem:[#allocation2 + $0xc] sm:$0xf]
    %v59 = vld [vmem:[#allocation2 + $0x10] sm:$0xf]
    %v60 = vld [vmem:[#allocation2 + $0x14] sm:$0xf]
    %v61 = vld [vmem:[#allocation2 + $0x18] sm:$0xf]
    %v62 = vld [vmem:[#allocation2 + $0x1c] sm:$0xf]
    %v63 = vld [vmem:[#allocation2 + $0x20] sm:$0xf]
    %v64 = vld [vmem:[#allocation2 + $0x24] sm:$0xf]
    %v65 = vld [vmem:[#allocation2 + $0x28] sm:$0xf]
    %v66 = vld [vmem:[#allocation2 + $0x2c] sm:$0xf]
    %v67 = vld [vmem:[#allocation2 + $0x30] sm:$0xf]
    %v68 = vld [vmem:[#allocation2 + $0x34] sm:$0xf]
    %v69 = vld [vmem:[#allocation2 + $0x38] sm:$0xf]
    %v70 = vld [vmem:[#allocation2 + $0x3c] sm:$0xf]
    %v71 = vld [vmem:[#allocation2 + $0x40] sm:$0xf]
    %v72 = vld [vmem:[#allocation2 + $0x44] sm:$0xf]
    %v73 = vld [vmem:[#allocation2 + $0x48] sm:$0xf]
    %v74 = vld [vmem:[#allocation2 + $0x4c] sm:$0xf]
    %v75 = vld [vmem:[#allocation2 + $0x50] sm:$0xf]
    %v76 = vld [vmem:[#allocation2 + $0x54] sm:$0xf]
    %v77 = vld [vmem:[#allocation2 + $0x58] sm:$0xf]
    %v78 = vld [vmem:[#allocation2 + $0x5c] sm:$0xf]
    %v79 = vld [vmem:[#allocation2 + $0x60] sm:$0xf]
    %v80 = vld [vmem:[#allocation2 + $0x64] sm:$0xf]
    %v81 = vld [vmem:[#allocation2 + $0x68] sm:$0xf]
    %v82 = vld [vmem:[#allocation2 + $0x6c] sm:$0xf]
    %v83 = vld [vmem:[#allocation2 + $0x70] sm:$0xf]
    %v84 = vld [vmem:[#allocation2 + $0x74] sm:$0xf]
    %v85 = vld [vmem:[#allocation2 + $0x78] sm:$0xf]
    %v86 = vld [vmem:[#allocation2 + $0x7c] sm:$0xf]
    %v87 = vld [vmem:[#allocation2 + $0x80] sm:$0xf]
    %v88 = vld [vmem:[#allocation2 + $0x84] sm:$0xf]
    %v89 = vld [vmem:[#allocation2 + $0x88] sm:$0xf]
    %v90 = vld [vmem:[#allocation2 + $0x8c] sm:$0xf]
    %v91 = vld [vmem:[#allocation2 + $0x90] sm:$0xf]
    %v92 = vld [vmem:[#allocation2 + $0x94] sm:$0xf]
    %v93 = vld [vmem:[#allocation2 + $0x98] sm:$0xf]
    %v94 = vld [vmem:[#allocation2 + $0x9c] sm:$0xf]
    %v95 = vld [vmem:[#allocation2 + $0xa0] sm:$0xf]
    %v96 = vld [vmem:[#allocation2 + $0xa4] sm:$0xf]
    %v97 = vld [vmem:[#allocation2 + $0xa8] sm:$0xf]
    %v98 = vld [vmem:[#allocation2 + $0xac] sm:$0xf]
    %v99 = vld [vmem:[#allocation2 + $0xb0] sm:$0xf]
    %v100 = vld [vmem:[#allocation2 + $0xb4] sm:$0xf]
    %v101 = vld [vmem:[#allocation2 + $0xb8] sm:$0xf]
    %v102 = vld [vmem:[#allocation2 + $0xbc] sm:$0xf]
    %v103 = vld [vmem:[#allocation2 + $0xc0] sm:$0xf]
    %v104 = vld [vmem:[#allocation2 + $0xc4] sm:$0xf]
    %v105 = vld [vmem:[#allocation2 + $0xc8] sm:$0xf]
    %v106 = vld [vmem:[#allocation2 + $0xcc] sm:$0xf]
    %v107 = vld [vmem:[#allocation2 + $0xd0] sm:$0xf]
    %v108 = vld [vmem:[#allocation2 + $0xd4] sm:$0xf]
    %v109 = vld [vmem:[#allocation2 + $0xd8] sm:$0xf]
    %v110 = vld [vmem:[#allocation2 + $0xdc] sm:$0xf]
    %v111 = vld [vmem:[#allocation2 + $0xe0] sm:$0xf]
    %v112 = vld [vmem:[#allocation2 + $0xe4] sm:$0xf]
    %v113 = vld [vmem:[#allocation2 + $0xe8] sm:$0xf]
    %v114 = vld [vmem:[#allocation2 + $0xec] sm:$0xf]
    %v115 = vld [vmem:[#allocation2 + $0xf0] sm:$0xf]
    %v116 = vld [vmem:[#allocation2 + $0xf4] sm:$0xf]
    %v117 = vld [vmem:[#allocation2 + $0xf8] sm:$0xf]
    %v118 = vld [vmem:[#allocation2 + $0xfc] sm:$0xf]
    %v119 = vld [vmem:[#allocation5] sm:$0xf]
    %v120 = vld [vmem:[#allocation5 + $0x4] sm:$0xf]
    %v121 = vld [vmem:[#allocation5 + $0x8] sm:$0xf]
    %v122 = vld [vmem:[#allocation5 + $0xc] sm:$0x3]
    %v123 = vld [vmem:[#allocation7] sm:$0x1]
    %v125 = vlaneseq
    %v126 = vshrl.u32 %v125, 7
    %v127 = vsub.s32 0, %v126
    %v128 = vrot.slane %v123, %v127
    %v194 = vunpack.c.l.b16 %v55
    %v195 = vunpack.c.l.b16 %v56
    %v196 = vunpack.c.l.b16 %v57
    %v197 = vunpack.c.l.b16 %v58
    %v198 = vunpack.c.l.b16 %v59
    %v199 = vunpack.c.l.b16 %v60
    %v200 = vunpack.c.l.b16 %v61
    %v201 = vunpack.c.l.b16 %v62
    %v202 = vunpack.c.l.b16 %v63
    %v203 = vunpack.c.l.b16 %v64
    %v204 = vunpack.c.l.b16 %v65
    %v205 = vunpack.c.l.b16 %v66
    %v206 = vunpack.c.l.b16 %v67
    %v207 = vunpack.c.l.b16 %v68
    %v208 = vunpack.c.l.b16 %v69
    %v209 = vunpack.c.l.b16 %v70
    %v210 = vunpack.c.l.b16 %v71
    %v211 = vunpack.c.l.b16 %v72
    %v212 = vunpack.c.l.b16 %v73
    %v213 = vunpack.c.l.b16 %v74
    %v214 = vunpack.c.l.b16 %v75
    %v215 = vunpack.c.l.b16 %v76
    %v216 = vunpack.c.l.b16 %v77
    %v217 = vunpack.c.l.b16 %v78
    %v218 = vunpack.c.l.b16 %v79
    %v219 = vunpack.c.l.b16 %v80
    %v220 = vunpack.c.l.b16 %v81
    %v221 = vunpack.c.l.b16 %v82
    %v222 = vunpack.c.l.b16 %v83
    %v223 = vunpack.c.l.b16 %v84
    %v224 = vunpack.c.l.b16 %v85
    %v225 = vunpack.c.l.b16 %v86
    %v226 = vunpack.c.l.b16 %v87
    %v227 = vunpack.c.l.b16 %v88
    %v228 = vunpack.c.l.b16 %v89
    %v229 = vunpack.c.l.b16 %v90
    %v230 = vunpack.c.l.b16 %v91
    %v231 = vunpack.c.l.b16 %v92
    %v232 = vunpack.c.l.b16 %v93
    %v233 = vunpack.c.l.b16 %v94
    %v234 = vunpack.c.l.b16 %v95
    %v235 = vunpack.c.l.b16 %v96
    %v236 = vunpack.c.l.b16 %v97
    %v237 = vunpack.c.l.b16 %v98
    %v238 = vunpack.c.l.b16 %v99
    %v239 = vunpack.c.l.b16 %v100
    %v240 = vunpack.c.l.b16 %v101
    %v241 = vunpack.c.l.b16 %v102
    %v242 = vunpack.c.l.b16 %v103
    %v243 = vunpack.c.l.b16 %v104
    %v244 = vunpack.c.l.b16 %v105
    %v245 = vunpack.c.l.b16 %v106
    %v246 = vunpack.c.l.b16 %v107
    %v247 = vunpack.c.l.b16 %v108
    %v248 = vunpack.c.l.b16 %v109
    %v249 = vunpack.c.l.b16 %v110
    %v250 = vunpack.c.l.b16 %v111
    %v251 = vunpack.c.l.b16 %v112
    %v252 = vunpack.c.l.b16 %v113
    %v253 = vunpack.c.l.b16 %v114
    %v254 = vunpack.c.l.b16 %v115
    %v255 = vunpack.c.l.b16 %v116
    %v256 = vunpack.c.l.b16 %v117
    %v257 = vunpack.c.l.b16 %v118
    %v258 = vpack.c.b16 %v195, %v194
    %v259 = vpack.c.b16 %v197, %v196
    %v260 = vpack.c.b16 %v199, %v198
    %v261 = vpack.c.b16 %v201, %v200
    %v262 = vpack.c.b16 %v203, %v202
    %v263 = vpack.c.b16 %v205, %v204
    %v264 = vpack.c.b16 %v207, %v206
    %v265 = vpack.c.b16 %v209, %v208
    %v266 = vpack.c.b16 %v211, %v210
    %v267 = vpack.c.b16 %v213, %v212
    %v268 = vpack.c.b16 %v215, %v214
    %v269 = vpack.c.b16 %v217, %v216
    %v270 = vpack.c.b16 %v219, %v218
    %v271 = vpack.c.b16 %v221, %v220
    %v272 = vpack.c.b16 %v223, %v222
    %v273 = vpack.c.b16 %v225, %v224
    %v274 = vpack.c.b16 %v227, %v226
    %v275 = vpack.c.b16 %v229, %v228
    %v276 = vpack.c.b16 %v231, %v230
    %v277 = vpack.c.b16 %v233, %v232
    %v278 = vpack.c.b16 %v235, %v234
    %v279 = vpack.c.b16 %v237, %v236
    %v280 = vpack.c.b16 %v239, %v238
    %v281 = vpack.c.b16 %v241, %v240
    %v282 = vpack.c.b16 %v243, %v242
    %v283 = vpack.c.b16 %v245, %v244
    %v284 = vpack.c.b16 %v247, %v246
    %v285 = vpack.c.b16 %v249, %v248
    %v286 = vpack.c.b16 %v251, %v250
    %v287 = vpack.c.b16 %v253, %v252
    %v288 = vpack.c.b16 %v255, %v254
    %v289 = vpack.c.b16 %v257, %v256
    %v294 = vunpack.c.l.b16 %v119
    %v295 = vunpack.c.l.b16 %v120
    %v296 = vunpack.c.l.b16 %v121
    %v297 = vunpack.c.l.b16 %v122
    %v298 = vpack.c.b16 %v295, %v294
    %v299 = vpack.c.b16 %v297, %v296
    %vm301 = vcmask 220160
    %v303 = vsel %vm301, %v258, 0
    %v306 = vsel %vm301, %v259, 0
    %v309 = vsel %vm301, %v260, 0
    %v312 = vsel %vm301, %v261, 0
    %v315 = vsel %vm301, %v262, 0
    %v318 = vsel %vm301, %v263, 0
    %v321 = vsel %vm301, %v264, 0
    %v324 = vsel %vm301, %v265, 0
    %v327 = vsel %vm301, %v266, 0
    %v330 = vsel %vm301, %v267, 0
    %v333 = vsel %vm301, %v268, 0
    %v336 = vsel %vm301, %v269, 0
    %v339 = vsel %vm301, %v270, 0
    %v342 = vsel %vm301, %v271, 0
    %v345 = vsel %vm301, %v272, 0
    %v348 = vsel %vm301, %v273, 0
    %v351 = vsel %vm301, %v274, 0
    %v354 = vsel %vm301, %v275, 0
    %v357 = vsel %vm301, %v276, 0
    %v360 = vsel %vm301, %v277, 0
    %v363 = vsel %vm301, %v278, 0
    %v366 = vsel %vm301, %v279, 0
    %v369 = vsel %vm301, %v280, 0
    %v372 = vsel %vm301, %v281, 0
    %v375 = vsel %vm301, %v282, 0
    %v378 = vsel %vm301, %v283, 0
    %v381 = vsel %vm301, %v284, 0
    %v384 = vsel %vm301, %v285, 0
    %v387 = vsel %vm301, %v286, 0
    %v390 = vsel %vm301, %v287, 0
    %v393 = vsel %vm301, %v288, 0
    %v396 = vsel %vm301, %v289, 0
    %vm398 = vcmask 1044480
    %vm399 = vcmask 1045504
    %v400 = vsel %vm398, 4294967295, 65535
    %v401 = vsel %vm399, %v400, 0
    %v403 = vand.u32 %v299, %v401
    %405 = vmatprep.subr.bf16.mxu0 0
    %406 = vmatpush1.bf16.msra.mxu0 %v298
    %407 = vmatprep.subr.bf16.mxu0 0
    %408 = vmatpush1.bf16.msra.mxu0 %v403
    %409 = vmatprep.subr.bf16.mxu0 0
    %410 = vmatpush1.bf16.msra.mxu0 0
    %411 = vmatprep.subr.bf16.mxu0 0
    %412 = vmatpush1.bf16.msra.mxu0 0
    %413 = vmatprep.subr.bf16.mxu0 0
    %414 = vmatpush1.bf16.msra.mxu0 0
    %415 = vmatprep.subr.bf16.mxu0 0
    %416 = vmatpush1.bf16.msra.mxu0 0
    %417 = vmatprep.subr.bf16.mxu0 0
    %418 = vmatpush1.bf16.msra.mxu0 0
    %419 = vmatprep.subr.bf16.mxu0 0
    %420 = vmatpush1.bf16.msra.mxu0 0
    %421 = vmatprep.subr.bf16.mxu0 0
    %422 = vmatpush1.bf16.msra.mxu0 0
    %423 = vmatprep.subr.bf16.mxu0 0
    %424 = vmatpush1.bf16.msra.mxu0 0
    %425 = vmatprep.subr.bf16.mxu0 0
    %426 = vmatpush1.bf16.msra.mxu0 0
    %427 = vmatprep.subr.bf16.mxu0 0
    %428 = vmatpush1.bf16.msra.mxu0 0
    %429 = vmatprep.subr.bf16.mxu0 0
    %430 = vmatpush1.bf16.msra.mxu0 0
    %431 = vmatprep.subr.bf16.mxu0 0
    %432 = vmatpush1.bf16.msra.mxu0 0
    %433 = vmatprep.subr.bf16.mxu0 0
    %434 = vmatpush1.bf16.msra.mxu0 0
    %435 = vmatprep.subr.bf16.mxu0 0
    %436 = vmatpush1.bf16.msra.mxu0 0
    %437 = vmatprep.mubr.bf16.mxu0 0
    %438 = vmatmul.mubr.bf16.gmra.mrb[0].mxu0 %v303
    %v439 = vpop.f32.mrb[0].mxu0
    %v440 = vadd.f32 %v128, %v439
    %v441 = vpop.f32.mrb[0].mxu0
    %v442 = vpop.f32.mrb[0].mxu0
    %v443 = vadd.f32 %v128, %v442
    %v444 = vpop.f32.mrb[0].mxu0
    %445 = vmatprep.mubr.bf16.mxu0 0
    %446 = vmatmul.mubr.bf16.gmra.mrb[0].mxu0 %v306
    %v447 = vpop.f32.mrb[0].mxu0
    %v448 = vadd.f32 %v128, %v447
    %v449 = vpop.f32.mrb[0].mxu0
    %v450 = vpop.f32.mrb[0].mxu0
    %v451 = vadd.f32 %v128, %v450
    %v452 = vpop.f32.mrb[0].mxu0
    %453 = vmatprep.mubr.bf16.mxu0 0
    %454 = vmatmul.mubr.bf16.gmra.mrb[0].mxu0 %v309
    %v455 = vpop.f32.mrb[0].mxu0
    %v456 = vadd.f32 %v128, %v455
    %v457 = vpop.f32.mrb[0].mxu0
    %v458 = vpop.f32.mrb[0].mxu0
    %v459 = vadd.f32 %v128, %v458
    %v460 = vpop.f32.mrb[0].mxu0
    %461 = vmatprep.mubr.bf16.mxu0 0
    %462 = vmatmul.mubr.bf16.gmra.mrb[0].mxu0 %v312
    %v463 = vpop.f32.mrb[0].mxu0
    %v464 = vadd.f32 %v128, %v463
    %v465 = vpop.f32.mrb[0].mxu0
    %v466 = vpop.f32.mrb[0].mxu0
    %v467 = vadd.f32 %v128, %v466
    %v468 = vpop.f32.mrb[0].mxu0
    %469 = vmatprep.mubr.bf16.mxu0 0
    %470 = vmatmul.mubr.bf16.gmra.mrb[0].mxu0 %v315
    %v471 = vpop.f32.mrb[0].mxu0
    %v472 = vadd.f32 %v128, %v471
    %v473 = vpop.f32.mrb[0].mxu0
    %v474 = vpop.f32.mrb[0].mxu0
    %v475 = vadd.f32 %v128, %v474
    %v476 = vpop.f32.mrb[0].mxu0
    %477 = vmatprep.mubr.bf16.mxu0 0
    %478 = vmatmul.mubr.bf16.gmra.mrb[0].mxu0 %v318
    %v479 = vpop.f32.mrb[0].mxu0
    %v480 = vadd.f32 %v128, %v479
    %v481 = vpop.f32.mrb[0].mxu0
    %v482 = vpop.f32.mrb[0].mxu0
    %v483 = vadd.f32 %v128, %v482
    %v484 = vpop.f32.mrb[0].mxu0
    %485 = vmatprep.mubr.bf16.mxu0 0
    %486 = vmatmul.mubr.bf16.gmra.mrb[0].mxu0 %v321
    %v487 = vpop.f32.mrb[0].mxu0
    %v488 = vadd.f32 %v128, %v487
    %v489 = vpop.f32.mrb[0].mxu0
    %v490 = vpop.f32.mrb[0].mxu0
    %v491 = vadd.f32 %v128, %v490
    %v492 = vpop.f32.mrb[0].mxu0
    %493 = vmatprep.mubr.bf16.mxu0 0
    %494 = vmatmul.mubr.bf16.gmra.mrb[0].mxu0 %v324
    %v495 = vpop.f32.mrb[0].mxu0
    %v496 = vadd.f32 %v128, %v495
    %v497 = vpop.f32.mrb[0].mxu0
    %v498 = vpop.f32.mrb[0].mxu0
    %v499 = vadd.f32 %v128, %v498
    %v500 = vpop.f32.mrb[0].mxu0
    %501 = vmatprep.mubr.bf16.mxu0 0
    %502 = vmatmul.mubr.bf16.gmra.mrb[0].mxu0 %v327
    %v503 = vpop.f32.mrb[0].mxu0
    %v504 = vadd.f32 %v128, %v503
    %v505 = vpop.f32.mrb[0].mxu0
    %v506 = vpop.f32.mrb[0].mxu0
    %v507 = vadd.f32 %v128, %v506
    %v508 = vpop.f32.mrb[0].mxu0
    %509 = vmatprep.mubr.bf16.mxu0 0
    %510 = vmatmul.mubr.bf16.gmra.mrb[0].mxu0 %v330
    %v511 = vpop.f32.mrb[0].mxu0
    %v512 = vadd.f32 %v128, %v511
    %v513 = vpop.f32.mrb[0].mxu0
    %v514 = vpop.f32.mrb[0].mxu0
    %v515 = vadd.f32 %v128, %v514
    %v516 = vpop.f32.mrb[0].mxu0
    %517 = vmatprep.mubr.bf16.mxu0 0
    %518 = vmatmul.mubr.bf16.gmra.mrb[0].mxu0 %v333
    %v519 = vpop.f32.mrb[0].mxu0
    %v520 = vadd.f32 %v128, %v519
    %v521 = vpop.f32.mrb[0].mxu0
    %v522 = vpop.f32.mrb[0].mxu0
    %v523 = vadd.f32 %v128, %v522
    %v524 = vpop.f32.mrb[0].mxu0
    %525 = vmatprep.mubr.bf16.mxu0 0
    %526 = vmatmul.mubr.bf16.gmra.mrb[0].mxu0 %v336
    %v527 = vpop.f32.mrb[0].mxu0
    %v528 = vadd.f32 %v128, %v527
    %v529 = vpop.f32.mrb[0].mxu0
    %v530 = vpop.f32.mrb[0].mxu0
    %v531 = vadd.f32 %v128, %v530
    %v532 = vpop.f32.mrb[0].mxu0
    %533 = vmatprep.mubr.bf16.mxu0 0
    %534 = vmatmul.mubr.bf16.gmra.mrb[0].mxu0 %v339
    %v535 = vpop.f32.mrb[0].mxu0
    %v536 = vadd.f32 %v128, %v535
    %v537 = vpop.f32.mrb[0].mxu0
    %v538 = vpop.f32.mrb[0].mxu0
    %v539 = vadd.f32 %v128, %v538
    %v540 = vpop.f32.mrb[0].mxu0
    %541 = vmatprep.mubr.bf16.mxu0 0
    %542 = vmatmul.mubr.bf16.gmra.mrb[0].mxu0 %v342
    %v543 = vpop.f32.mrb[0].mxu0
    %v544 = vadd.f32 %v128, %v543
    %v545 = vpop.f32.mrb[0].mxu0
    %v546 = vpop.f32.mrb[0].mxu0
    %v547 = vadd.f32 %v128, %v546
    %v548 = vpop.f32.mrb[0].mxu0
    %549 = vmatprep.mubr.bf16.mxu0 0
    %550 = vmatmul.mubr.bf16.gmra.mrb[0].mxu0 %v345
    %v551 = vpop.f32.mrb[0].mxu0
    %v552 = vadd.f32 %v128, %v551
    %v553 = vpop.f32.mrb[0].mxu0
    %v554 = vpop.f32.mrb[0].mxu0
    %v555 = vadd.f32 %v128, %v554
    %v556 = vpop.f32.mrb[0].mxu0
    %557 = vmatprep.mubr.bf16.mxu0 0
    %558 = vmatmul.mubr.bf16.gmra.mrb[0].mxu0 %v348
    %v559 = vpop.f32.mrb[0].mxu0
    %v560 = vadd.f32 %v128, %v559
    %v561 = vpop.f32.mrb[0].mxu0
    %v562 = vpop.f32.mrb[0].mxu0
    %v563 = vadd.f32 %v128, %v562
    %v564 = vpop.f32.mrb[0].mxu0
    %565 = vmatprep.mubr.bf16.mxu0 0
    %566 = vmatmul.mubr.bf16.gmra.mrb[0].mxu0 %v351
    %v567 = vpop.f32.mrb[0].mxu0
    %v568 = vadd.f32 %v128, %v567
    %v569 = vpop.f32.mrb[0].mxu0
    %v570 = vpop.f32.mrb[0].mxu0
    %v571 = vadd.f32 %v128, %v570
    %v572 = vpop.f32.mrb[0].mxu0
    %573 = vmatprep.mubr.bf16.mxu0 0
    %574 = vmatmul.mubr.bf16.gmra.mrb[0].mxu0 %v354
    %v575 = vpop.f32.mrb[0].mxu0
    %v576 = vadd.f32 %v128, %v575
    %v577 = vpop.f32.mrb[0].mxu0
    %v578 = vpop.f32.mrb[0].mxu0
    %v579 = vadd.f32 %v128, %v578
    %v580 = vpop.f32.mrb[0].mxu0
    %581 = vmatprep.mubr.bf16.mxu0 0
    %582 = vmatmul.mubr.bf16.gmra.mrb[0].mxu0 %v357
    %v583 = vpop.f32.mrb[0].mxu0
    %v584 = vadd.f32 %v128, %v583
    %v585 = vpop.f32.mrb[0].mxu0
    %v586 = vpop.f32.mrb[0].mxu0
    %v587 = vadd.f32 %v128, %v586
    %v588 = vpop.f32.mrb[0].mxu0
    %589 = vmatprep.mubr.bf16.mxu0 0
    %590 = vmatmul.mubr.bf16.gmra.mrb[0].mxu0 %v360
    %v591 = vpop.f32.mrb[0].mxu0
    %v592 = vadd.f32 %v128, %v591
    %v593 = vpop.f32.mrb[0].mxu0
    %v594 = vpop.f32.mrb[0].mxu0
    %v595 = vadd.f32 %v128, %v594
    %v596 = vpop.f32.mrb[0].mxu0
    %597 = vmatprep.mubr.bf16.mxu0 0
    %598 = vmatmul.mubr.bf16.gmra.mrb[0].mxu0 %v363
    %v599 = vpop.f32.mrb[0].mxu0
    %v600 = vadd.f32 %v128, %v599
    %v601 = vpop.f32.mrb[0].mxu0
    %v602 = vpop.f32.mrb[0].mxu0
    %v603 = vadd.f32 %v128, %v602
    %v604 = vpop.f32.mrb[0].mxu0
    %605 = vmatprep.mubr.bf16.mxu0 0
    %606 = vmatmul.mubr.bf16.gmra.mrb[0].mxu0 %v366
    %v607 = vpop.f32.mrb[0].mxu0
    %v608 = vadd.f32 %v128, %v607
    %v609 = vpop.f32.mrb[0].mxu0
    %v610 = vpop.f32.mrb[0].mxu0
    %v611 = vadd.f32 %v128, %v610
    %v612 = vpop.f32.mrb[0].mxu0
    %613 = vmatprep.mubr.bf16.mxu0 0
    %614 = vmatmul.mubr.bf16.gmra.mrb[0].mxu0 %v369
    %v615 = vpop.f32.mrb[0].mxu0
    %v616 = vadd.f32 %v128, %v615
    %v617 = vpop.f32.mrb[0].mxu0
    %v618 = vpop.f32.mrb[0].mxu0
    %v619 = vadd.f32 %v128, %v618
    %v620 = vpop.f32.mrb[0].mxu0
    %621 = vmatprep.mubr.bf16.mxu0 0
    %622 = vmatmul.mubr.bf16.gmra.mrb[0].mxu0 %v372
    %v623 = vpop.f32.mrb[0].mxu0
    %v624 = vadd.f32 %v128, %v623
    %v625 = vpop.f32.mrb[0].mxu0
    %v626 = vpop.f32.mrb[0].mxu0
    %v627 = vadd.f32 %v128, %v626
    %v628 = vpop.f32.mrb[0].mxu0
    %629 = vmatprep.mubr.bf16.mxu0 0
    %630 = vmatmul.mubr.bf16.gmra.mrb[0].mxu0 %v375
    %v631 = vpop.f32.mrb[0].mxu0
    %v632 = vadd.f32 %v128, %v631
    %v633 = vpop.f32.mrb[0].mxu0
    %v634 = vpop.f32.mrb[0].mxu0
    %v635 = vadd.f32 %v128, %v634
    %v636 = vpop.f32.mrb[0].mxu0
    %637 = vmatprep.mubr.bf16.mxu0 0
    %638 = vmatmul.mubr.bf16.gmra.mrb[0].mxu0 %v378
    %v639 = vpop.f32.mrb[0].mxu0
    %v640 = vadd.f32 %v128, %v639
    %v641 = vpop.f32.mrb[0].mxu0
    %v642 = vpop.f32.mrb[0].mxu0
    %v643 = vadd.f32 %v128, %v642
    %v644 = vpop.f32.mrb[0].mxu0
    %645 = vmatprep.mubr.bf16.mxu0 0
    %646 = vmatmul.mubr.bf16.gmra.mrb[0].mxu0 %v381
    %v647 = vpop.f32.mrb[0].mxu0
    %v648 = vadd.f32 %v128, %v647
    %v649 = vpop.f32.mrb[0].mxu0
    %v650 = vpop.f32.mrb[0].mxu0
    %v651 = vadd.f32 %v128, %v650
    %v652 = vpop.f32.mrb[0].mxu0
    %653 = vmatprep.mubr.bf16.mxu0 0
    %654 = vmatmul.mubr.bf16.gmra.mrb[0].mxu0 %v384
    %v655 = vpop.f32.mrb[0].mxu0
    %v656 = vadd.f32 %v128, %v655
    %v657 = vpop.f32.mrb[0].mxu0
    %v658 = vpop.f32.mrb[0].mxu0
    %v659 = vadd.f32 %v128, %v658
    %v660 = vpop.f32.mrb[0].mxu0
    %661 = vmatprep.mubr.bf16.mxu0 0
    %662 = vmatmul.mubr.bf16.gmra.mrb[0].mxu0 %v387
    %v663 = vpop.f32.mrb[0].mxu0
    %v664 = vadd.f32 %v128, %v663
    %v665 = vpop.f32.mrb[0].mxu0
    %v666 = vpop.f32.mrb[0].mxu0
    %v667 = vadd.f32 %v128, %v666
    %v668 = vpop.f32.mrb[0].mxu0
    %669 = vmatprep.mubr.bf16.mxu0 0
    %670 = vmatmul.mubr.bf16.gmra.mrb[0].mxu0 %v390
    %v671 = vpop.f32.mrb[0].mxu0
    %v672 = vadd.f32 %v128, %v671
    %v673 = vpop.f32.mrb[0].mxu0
    %v674 = vpop.f32.mrb[0].mxu0
    %v675 = vadd.f32 %v128, %v674
    %v676 = vpop.f32.mrb[0].mxu0
    %677 = vmatprep.mubr.bf16.mxu0 0
    %678 = vmatmul.mubr.bf16.gmra.mrb[0].mxu0 %v393
    %v679 = vpop.f32.mrb[0].mxu0
    %v680 = vadd.f32 %v128, %v679
    %v681 = vpop.f32.mrb[0].mxu0
    %v682 = vpop.f32.mrb[0].mxu0
    %v683 = vadd.f32 %v128, %v682
    %v684 = vpop.f32.mrb[0].mxu0
    %685 = vmatprep.mubr.bf16.mxu0 0
    %686 = vmatmul.mubr.bf16.gmra.mrb[0].mxu0 %v396
    %v687 = vpop.f32.mrb[0].mxu0
    %v688 = vadd.f32 %v128, %v687
    %v689 = vpop.f32.mrb[0].mxu0
    %v690 = vpop.f32.mrb[0].mxu0
    %v691 = vadd.f32 %v128, %v690
    %v692 = vpop.f32.mrb[0].mxu0
    %693 = vdwg.mxu0
    %v694 = vmax.f32 %v440, 0.0
    %v695 = vmax.f32 %v443, 0.0
    %v696 = vmax.f32 %v448, 0.0
    %v697 = vmax.f32 %v451, 0.0
    %v698 = vmax.f32 %v456, 0.0
    %v699 = vmax.f32 %v459, 0.0
    %v700 = vmax.f32 %v464, 0.0
    %v701 = vmax.f32 %v467, 0.0
    %v702 = vmax.f32 %v472, 0.0
    %v703 = vmax.f32 %v475, 0.0
    %v704 = vmax.f32 %v480, 0.0
    %v705 = vmax.f32 %v483, 0.0
    %v706 = vmax.f32 %v488, 0.0
    %v707 = vmax.f32 %v491, 0.0
    %v708 = vmax.f32 %v496, 0.0
    %v709 = vmax.f32 %v499, 0.0
    %v710 = vmax.f32 %v504, 0.0
    %v711 = vmax.f32 %v507, 0.0
    %v712 = vmax.f32 %v512, 0.0
    %v713 = vmax.f32 %v515, 0.0
    %v714 = vmax.f32 %v520, 0.0
    %v715 = vmax.f32 %v523, 0.0
    %v716 = vmax.f32 %v528, 0.0
    %v717 = vmax.f32 %v531, 0.0
    %v718 = vmax.f32 %v536, 0.0
    %v719 = vmax.f32 %v539, 0.0
    %v720 = vmax.f32 %v544, 0.0
    %v721 = vmax.f32 %v547, 0.0
    %v722 = vmax.f32 %v552, 0.0
    %v723 = vmax.f32 %v555, 0.0
    %v724 = vmax.f32 %v560, 0.0
    %v725 = vmax.f32 %v563, 0.0
    %v726 = vmax.f32 %v568, 0.0
    %v727 = vmax.f32 %v571, 0.0
    %v728 = vmax.f32 %v576, 0.0
    %v729 = vmax.f32 %v579, 0.0
    %v730 = vmax.f32 %v584, 0.0
    %v731 = vmax.f32 %v587, 0.0
    %v732 = vmax.f32 %v592, 0.0
    %v733 = vmax.f32 %v595, 0.0
    %v734 = vmax.f32 %v600, 0.0
    %v735 = vmax.f32 %v603, 0.0
    %v736 = vmax.f32 %v608, 0.0
    %v737 = vmax.f32 %v611, 0.0
    %v738 = vmax.f32 %v616, 0.0
    %v739 = vmax.f32 %v619, 0.0
    %v740 = vmax.f32 %v624, 0.0
    %v741 = vmax.f32 %v627, 0.0
    %v742 = vmax.f32 %v632, 0.0
    %v743 = vmax.f32 %v635, 0.0
    %v744 = vmax.f32 %v640, 0.0
    %v745 = vmax.f32 %v643, 0.0
    %v746 = vmax.f32 %v648, 0.0
    %v747 = vmax.f32 %v651, 0.0
    %v748 = vmax.f32 %v656, 0.0
    %v749 = vmax.f32 %v659, 0.0
    %v750 = vmax.f32 %v664, 0.0
    %v751 = vmax.f32 %v667, 0.0
    %v752 = vmax.f32 %v672, 0.0
    %v753 = vmax.f32 %v675, 0.0
    %v754 = vmax.f32 %v680, 0.0
    %v755 = vmax.f32 %v683, 0.0
    %v756 = vmax.f32 %v688, 0.0
    %v757 = vmax.f32 %v691, 0.0
    %v758 = vmin.f32 %v694, 6.0
    %v759 = vmin.f32 %v695, 6.0
    %v760 = vmin.f32 %v696, 6.0
    %v761 = vmin.f32 %v697, 6.0
    %v762 = vmin.f32 %v698, 6.0
    %v763 = vmin.f32 %v699, 6.0
    %v764 = vmin.f32 %v700, 6.0
    %v765 = vmin.f32 %v701, 6.0
    %v766 = vmin.f32 %v702, 6.0
    %v767 = vmin.f32 %v703, 6.0
    %v768 = vmin.f32 %v704, 6.0
    %v769 = vmin.f32 %v705, 6.0
    %v770 = vmin.f32 %v706, 6.0
    %v771 = vmin.f32 %v707, 6.0
    %v772 = vmin.f32 %v708, 6.0
    %v773 = vmin.f32 %v709, 6.0
    %v774 = vmin.f32 %v710, 6.0
    %v775 = vmin.f32 %v711, 6.0
    %v776 = vmin.f32 %v712, 6.0
    %v777 = vmin.f32 %v713, 6.0
    %v778 = vmin.f32 %v714, 6.0
    %v779 = vmin.f32 %v715, 6.0
    %v780 = vmin.f32 %v716, 6.0
    %v781 = vmin.f32 %v717, 6.0
    %v782 = vmin.f32 %v718, 6.0
    %v783 = vmin.f32 %v719, 6.0
    %v784 = vmin.f32 %v720, 6.0
    %v785 = vmin.f32 %v721, 6.0
    %v786 = vmin.f32 %v722, 6.0
    %v787 = vmin.f32 %v723, 6.0
    %v788 = vmin.f32 %v724, 6.0
    %v789 = vmin.f32 %v725, 6.0
    %v790 = vmin.f32 %v726, 6.0
    %v791 = vmin.f32 %v727, 6.0
    %v792 = vmin.f32 %v728, 6.0
    %v793 = vmin.f32 %v729, 6.0
    %v794 = vmin.f32 %v730, 6.0
    %v795 = vmin.f32 %v731, 6.0
    %v796 = vmin.f32 %v732, 6.0
    %v797 = vmin.f32 %v733, 6.0
    %v798 = vmin.f32 %v734, 6.0
    %v799 = vmin.f32 %v735, 6.0
    %v800 = vmin.f32 %v736, 6.0
    %v801 = vmin.f32 %v737, 6.0
    %v802 = vmin.f32 %v738, 6.0
    %v803 = vmin.f32 %v739, 6.0
    %v804 = vmin.f32 %v740, 6.0
    %v805 = vmin.f32 %v741, 6.0
    %v806 = vmin.f32 %v742, 6.0
    %v807 = vmin.f32 %v743, 6.0
    %v808 = vmin.f32 %v744, 6.0
    %v809 = vmin.f32 %v745, 6.0
    %v810 = vmin.f32 %v746, 6.0
    %v811 = vmin.f32 %v747, 6.0
    %v812 = vmin.f32 %v748, 6.0
    %v813 = vmin.f32 %v749, 6.0
    %v814 = vmin.f32 %v750, 6.0
    %v815 = vmin.f32 %v751, 6.0
    %v816 = vmin.f32 %v752, 6.0
    %v817 = vmin.f32 %v753, 6.0
    %v818 = vmin.f32 %v754, 6.0
    %v819 = vmin.f32 %v755, 6.0
    %v820 = vmin.f32 %v756, 6.0
    %v821 = vmin.f32 %v757, 6.0
    %v822 = vpack.c.bf16 %v759, %v758
    %v823 = vpack.c.bf16 %v761, %v760
    %v824 = vpack.c.bf16 %v763, %v762
    %v825 = vpack.c.bf16 %v765, %v764
    %v826 = vpack.c.bf16 %v767, %v766
    %v827 = vpack.c.bf16 %v769, %v768
    %v828 = vpack.c.bf16 %v771, %v770
    %v829 = vpack.c.bf16 %v773, %v772
    %v830 = vpack.c.bf16 %v775, %v774
    %v831 = vpack.c.bf16 %v777, %v776
    %v832 = vpack.c.bf16 %v779, %v778
    %v833 = vpack.c.bf16 %v781, %v780
    %v834 = vpack.c.bf16 %v783, %v782
    %v835 = vpack.c.bf16 %v785, %v784
    %v836 = vpack.c.bf16 %v787, %v786
    %v837 = vpack.c.bf16 %v789, %v788
    %v838 = vpack.c.bf16 %v791, %v790
    %v839 = vpack.c.bf16 %v793, %v792
    %v840 = vpack.c.bf16 %v795, %v794
    %v841 = vpack.c.bf16 %v797, %v796
    %v842 = vpack.c.bf16 %v799, %v798
    %v843 = vpack.c.bf16 %v801, %v800
    %v844 = vpack.c.bf16 %v803, %v802
    %v845 = vpack.c.bf16 %v805, %v804
    %v846 = vpack.c.bf16 %v807, %v806
    %v847 = vpack.c.bf16 %v809, %v808
    %v848 = vpack.c.bf16 %v811, %v810
    %v849 = vpack.c.bf16 %v813, %v812
    %v850 = vpack.c.bf16 %v815, %v814
    %v851 = vpack.c.bf16 %v817, %v816
    %v852 = vpack.c.bf16 %v819, %v818
    %v853 = vpack.c.bf16 %v821, %v820
    %v886 = vunpack.c.l.b16 %v822
    %v887 = vunpack.c.h.b16 %v822
    %v888 = vunpack.c.l.b16 %v823
    %v889 = vunpack.c.h.b16 %v823
    %v890 = vunpack.c.l.b16 %v824
    %v891 = vunpack.c.h.b16 %v824
    %v892 = vunpack.c.l.b16 %v825
    %v893 = vunpack.c.h.b16 %v825
    %v894 = vunpack.c.l.b16 %v826
    %v895 = vunpack.c.h.b16 %v826
    %v896 = vunpack.c.l.b16 %v827
    %v897 = vunpack.c.h.b16 %v827
    %v898 = vunpack.c.l.b16 %v828
    %v899 = vunpack.c.h.b16 %v828
    %v900 = vunpack.c.l.b16 %v829
    %v901 = vunpack.c.h.b16 %v829
    %v902 = vunpack.c.l.b16 %v830
    %v903 = vunpack.c.h.b16 %v830
    %v904 = vunpack.c.l.b16 %v831
    %v905 = vunpack.c.h.b16 %v831
    %v906 = vunpack.c.l.b16 %v832
    %v907 = vunpack.c.h.b16 %v832
    %v908 = vunpack.c.l.b16 %v833
    %v909 = vunpack.c.h.b16 %v833
    %v910 = vunpack.c.l.b16 %v834
    %v911 = vunpack.c.h.b16 %v834
    %v912 = vunpack.c.l.b16 %v835
    %v913 = vunpack.c.h.b16 %v835
    %v914 = vunpack.c.l.b16 %v836
    %v915 = vunpack.c.h.b16 %v836
    %v916 = vunpack.c.l.b16 %v837
    %v917 = vunpack.c.h.b16 %v837
    %v918 = vunpack.c.l.b16 %v838
    %v919 = vunpack.c.h.b16 %v838
    %v920 = vunpack.c.l.b16 %v839
    %v921 = vunpack.c.h.b16 %v839
    %v922 = vunpack.c.l.b16 %v840
    %v923 = vunpack.c.h.b16 %v840
    %v924 = vunpack.c.l.b16 %v841
    %v925 = vunpack.c.h.b16 %v841
    %v926 = vunpack.c.l.b16 %v842
    %v927 = vunpack.c.h.b16 %v842
    %v928 = vunpack.c.l.b16 %v843
    %v929 = vunpack.c.h.b16 %v843
    %v930 = vunpack.c.l.b16 %v844
    %v931 = vunpack.c.h.b16 %v844
    %v932 = vunpack.c.l.b16 %v845
    %v933 = vunpack.c.h.b16 %v845
    %v934 = vunpack.c.l.b16 %v846
    %v935 = vunpack.c.h.b16 %v846
    %v936 = vunpack.c.l.b16 %v847
    %v937 = vunpack.c.h.b16 %v847
    %v938 = vunpack.c.l.b16 %v848
    %v939 = vunpack.c.h.b16 %v848
    %v940 = vunpack.c.l.b16 %v849
    %v941 = vunpack.c.h.b16 %v849
    %v942 = vunpack.c.l.b16 %v850
    %v943 = vunpack.c.h.b16 %v850
    %v944 = vunpack.c.l.b16 %v851
    %v945 = vunpack.c.h.b16 %v851
    %v946 = vunpack.c.l.b16 %v852
    %v947 = vunpack.c.h.b16 %v852
    %v948 = vunpack.c.l.b16 %v853
    %v949 = vunpack.c.h.b16 %v853
    %v950 = vpack.c.b16 %v886, %v886
    %v951 = vpack.c.b16 %v887, %v887
    %v952 = vpack.c.b16 %v888, %v888
    %v953 = vpack.c.b16 %v889, %v889
    %v954 = vpack.c.b16 %v890, %v890
    %v955 = vpack.c.b16 %v891, %v891
    %v956 = vpack.c.b16 %v892, %v892
    %v957 = vpack.c.b16 %v893, %v893
    %v958 = vpack.c.b16 %v894, %v894
    %v959 = vpack.c.b16 %v895, %v895
    %v960 = vpack.c.b16 %v896, %v896
    %v961 = vpack.c.b16 %v897, %v897
    %v962 = vpack.c.b16 %v898, %v898
    %v963 = vpack.c.b16 %v899, %v899
    %v964 = vpack.c.b16 %v900, %v900
    %v965 = vpack.c.b16 %v901, %v901
    %v966 = vpack.c.b16 %v902, %v902
    %v967 = vpack.c.b16 %v903, %v903
    %v968 = vpack.c.b16 %v904, %v904
    %v969 = vpack.c.b16 %v905, %v905
    %v970 = vpack.c.b16 %v906, %v906
    %v971 = vpack.c.b16 %v907, %v907
    %v972 = vpack.c.b16 %v908, %v908
    %v973 = vpack.c.b16 %v909, %v909
    %v974 = vpack.c.b16 %v910, %v910
    %v975 = vpack.c.b16 %v911, %v911
    %v976 = vpack.c.b16 %v912, %v912
    %v977 = vpack.c.b16 %v913, %v913
    %v978 = vpack.c.b16 %v914, %v914
    %v979 = vpack.c.b16 %v915, %v915
    %v980 = vpack.c.b16 %v916, %v916
    %v981 = vpack.c.b16 %v917, %v917
    %v982 = vpack.c.b16 %v918, %v918
    %v983 = vpack.c.b16 %v919, %v919
    %v984 = vpack.c.b16 %v920, %v920
    %v985 = vpack.c.b16 %v921, %v921
    %v986 = vpack.c.b16 %v922, %v922
    %v987 = vpack.c.b16 %v923, %v923
    %v988 = vpack.c.b16 %v924, %v924
    %v989 = vpack.c.b16 %v925, %v925
    %v990 = vpack.c.b16 %v926, %v926
    %v991 = vpack.c.b16 %v927, %v927
    %v992 = vpack.c.b16 %v928, %v928
    %v993 = vpack.c.b16 %v929, %v929
    %v994 = vpack.c.b16 %v930, %v930
    %v995 = vpack.c.b16 %v931, %v931
    %v996 = vpack.c.b16 %v932, %v932
    %v997 = vpack.c.b16 %v933, %v933
    %v998 = vpack.c.b16 %v934, %v934
    %v999 = vpack.c.b16 %v935, %v935
    %v1000 = vpack.c.b16 %v936, %v936
    %v1001 = vpack.c.b16 %v937, %v937
    %v1002 = vpack.c.b16 %v938, %v938
    %v1003 = vpack.c.b16 %v939, %v939
    %v1004 = vpack.c.b16 %v940, %v940
    %v1005 = vpack.c.b16 %v941, %v941
    %v1006 = vpack.c.b16 %v942, %v942
    %v1007 = vpack.c.b16 %v943, %v943
    %v1008 = vpack.c.b16 %v944, %v944
    %v1009 = vpack.c.b16 %v945, %v945
    %v1010 = vpack.c.b16 %v946, %v946
    %v1011 = vpack.c.b16 %v947, %v947
    %v1012 = vpack.c.b16 %v948, %v948
    %v1013 = vpack.c.b16 %v949, %v949
    %1078 = vst [vmem:[#allocation8] sm:$0xf] %v950
    %1079 = vst [vmem:[#allocation8 + $0x4] sm:$0xf] %v951
    %1080 = vst [vmem:[#allocation8 + $0x8] sm:$0xf] %v952
    %1081 = vst [vmem:[#allocation8 + $0xc] sm:$0xf] %v953
    %1082 = vst [vmem:[#allocation8 + $0x10] sm:$0xf] %v954
    %1083 = vst [vmem:[#allocation8 + $0x14] sm:$0xf] %v955
    %1084 = vst [vmem:[#allocation8 + $0x18] sm:$0xf] %v956
    %1085 = vst [vmem:[#allocation8 + $0x1c] sm:$0xf] %v957
    %1086 = vst [vmem:[#allocation8 + $0x20] sm:$0xf] %v958
    %1087 = vst [vmem:[#allocation8 + $0x24] sm:$0xf] %v959
    %1088 = vst [vmem:[#allocation8 + $0x28] sm:$0xf] %v960
    %1089 = vst [vmem:[#allocation8 + $0x2c] sm:$0xf] %v961
    %1090 = vst [vmem:[#allocation8 + $0x30] sm:$0xf] %v962
    %1091 = vst [vmem:[#allocation8 + $0x34] sm:$0xf] %v963
    %1092 = vst [vmem:[#allocation8 + $0x38] sm:$0xf] %v964
    %1093 = vst [vmem:[#allocation8 + $0x3c] sm:$0xf] %v965
    %1094 = vst [vmem:[#allocation8 + $0x40] sm:$0xf] %v966
    %1095 = vst [vmem:[#allocation8 + $0x44] sm:$0xf] %v967
    %1096 = vst [vmem:[#allocation8 + $0x48] sm:$0xf] %v968
    %1097 = vst [vmem:[#allocation8 + $0x4c] sm:$0xf] %v969
    %1098 = vst [vmem:[#allocation8 + $0x50] sm:$0xf] %v970
    %1099 = vst [vmem:[#allocation8 + $0x54] sm:$0xf] %v971
    %1100 = vst [vmem:[#allocation8 + $0x58] sm:$0xf] %v972
    %1101 = vst [vmem:[#allocation8 + $0x5c] sm:$0xf] %v973
    %1102 = vst [vmem:[#allocation8 + $0x60] sm:$0xf] %v974
    %1103 = vst [vmem:[#allocation8 + $0x64] sm:$0xf] %v975
    %1104 = vst [vmem:[#allocation8 + $0x68] sm:$0xf] %v976
    %1105 = vst [vmem:[#allocation8 + $0x6c] sm:$0xf] %v977
    %1106 = vst [vmem:[#allocation8 + $0x70] sm:$0xf] %v978
    %1107 = vst [vmem:[#allocation8 + $0x74] sm:$0xf] %v979
    %1108 = vst [vmem:[#allocation8 + $0x78] sm:$0xf] %v980
    %1109 = vst [vmem:[#allocation8 + $0x7c] sm:$0xf] %v981
    %1110 = vst [vmem:[#allocation8 + $0x80] sm:$0xf] %v982
    %1111 = vst [vmem:[#allocation8 + $0x84] sm:$0xf] %v983
    %1112 = vst [vmem:[#allocation8 + $0x88] sm:$0xf] %v984
    %1113 = vst [vmem:[#allocation8 + $0x8c] sm:$0xf] %v985
    %1114 = vst [vmem:[#allocation8 + $0x90] sm:$0xf] %v986
    %1115 = vst [vmem:[#allocation8 + $0x94] sm:$0xf] %v987
    %1116 = vst [vmem:[#allocation8 + $0x98] sm:$0xf] %v988
    %1117 = vst [vmem:[#allocation8 + $0x9c] sm:$0xf] %v989
    %1118 = vst [vmem:[#allocation8 + $0xa0] sm:$0xf] %v990
    %1119 = vst [vmem:[#allocation8 + $0xa4] sm:$0xf] %v991
    %1120 = vst [vmem:[#allocation8 + $0xa8] sm:$0xf] %v992
    %1121 = vst [vmem:[#allocation8 + $0xac] sm:$0xf] %v993
    %1122 = vst [vmem:[#allocation8 + $0xb0] sm:$0xf] %v994
    %1123 = vst [vmem:[#allocation8 + $0xb4] sm:$0xf] %v995
    %1124 = vst [vmem:[#allocation8 + $0xb8] sm:$0xf] %v996
    %1125 = vst [vmem:[#allocation8 + $0xbc] sm:$0xf] %v997
    %1126 = vst [vmem:[#allocation8 + $0xc0] sm:$0xf] %v998
    %1127 = vst [vmem:[#allocation8 + $0xc4] sm:$0xf] %v999
    %1128 = vst [vmem:[#allocation8 + $0xc8] sm:$0xf] %v1000
    %1129 = vst [vmem:[#allocation8 + $0xcc] sm:$0xf] %v1001
    %1130 = vst [vmem:[#allocation8 + $0xd0] sm:$0xf] %v1002
    %1131 = vst [vmem:[#allocation8 + $0xd4] sm:$0xf] %v1003
    %1132 = vst [vmem:[#allocation8 + $0xd8] sm:$0xf] %v1004
    %1133 = vst [vmem:[#allocation8 + $0xdc] sm:$0xf] %v1005
    %1134 = vst [vmem:[#allocation8 + $0xe0] sm:$0xf] %v1006
    %1135 = vst [vmem:[#allocation8 + $0xe4] sm:$0xf] %v1007
    %1136 = vst [vmem:[#allocation8 + $0xe8] sm:$0xf] %v1008
    %1137 = vst [vmem:[#allocation8 + $0xec] sm:$0xf] %v1009
    %1138 = vst [vmem:[#allocation8 + $0xf0] sm:$0xf] %v1010
    %1139 = vst [vmem:[#allocation8 + $0xf4] sm:$0xf] %v1011
    %1140 = vst [vmem:[#allocation8 + $0xf8] sm:$0xf] %v1012
    %1141 = vst [vmem:[#allocation8 + $0xfc] sm:$0xf] %v1013
    // Predicated region
    $region26: #{mobilenet_v1_forward.15} parent=1 // pred_check
      _
    $region27: #{mobilenet_v1_forward.15} parent=1 // pred_check_branch
      %1143 = sbr.rel (0) target = $region29
    $region28: #{mobilenet_v1_forward.15} parent=1 // pred_region
      %s1145 = ssub.s32 4096, 4096
      %1146 = vsyncadd [#allocation4], %s1145
      %s1147 = sshll.u32 [#allocation8], 4
      %s1148 = int_to_ptr.vmem [resolvable:$true] %s1147
      %1153 = dma.vmem_to_hbm [thread:$0]  %s1148, 4096, %s3, [#allocation4], 64, 64, 4
    $region29: #{mobilenet_v1_forward.15} parent=1 // pred_fallthru
      _
    // Predicated region
    $region30: #{mobilenet_v1_forward.15} parent=1 // pred_check
      _
    $region31: #{mobilenet_v1_forward.15} parent=1 // pred_check_branch
      %1155 = sbr.rel (0) target = $region33
    $region32: #{mobilenet_v1_forward.15} parent=1 // pred_region
      %1156 = dma.done [#allocation4], 4096
    $region33: #{mobilenet_v1_forward.15} parent=1 // pred_fallthru
      _
    %1157 = vsyncpa [#allocation3], 1
    %1158 = vsyncpa [#allocation6], 1
    %1159 = vsyncpa [#allocation4], 1

// kernel: mobilenet_v1_forward.16
$region0: #{mobilenet_v1_forward.16}
  #allocation0 [shape = 'u32[]', space=smem, size = 0x4, offset = 0x4, fixed_abs, tag = 'smem constant byte address 0x4 - core index']
  #allocation1 [shape = 'u32[144,128]{1,0:T(1,128)}', space=vmem, size = 0x12000, scoped, tag = 'internal scratch']
  %s0 = inlined_call_operand.hbm [shape: bf16[2,328,128], index: 0, kind: input, shape index: {}]
  %s1 = inlined_call_operand.hbm [shape: f32[9,1,128], index: 1, kind: input, shape index: {}]
  %s2 = inlined_call_operand.hbm [shape: f32[1,128], index: 2, kind: input, shape index: {}]
  %s3 = inlined_call_operand.hbm [shape: bf16[128,128], index: 3, kind: input, shape index: {}]
  %s4 = inlined_call_operand.hbm [shape: f32[1,128], index: 4, kind: input, shape index: {}]
  %s5 = inlined_call_operand.hbm [shape: bf16[2,288,128], index: 5, kind: output, shape index: {}]
  %s6 = sld [smem:[#allocation0]]
  $region73: #{mobilenet_v1_forward.16} parent=0
    _
  %s8 = ssub.s32 1, %s6
  %s9 = scalar_select 0, %s8, %s6
  $region1: #{mobilenet_v1_forward.16} parent=0
    #allocation2 [shape = 'u8[167936]{0}', space=vmem, size = 0x29000, scoped, tag = 'input window, operand 0']
    #allocation3 [shape = 's32[2]{0}', space=sflag, size = 0x8, scoped, tag = 'scoped memory for mobilenet_v1_forward.16']
    #allocation4 [shape = 's32[2]{0}', space=sflag, size = 0x8, scoped, tag = 'scoped memory for mobilenet_v1_forward.16']
    #allocation5 [shape = 'u8[4608]{0}', space=vmem, size = 0x1400, scoped, tag = 'input window, operand 1, single buffered']
    #allocation6 [shape = 's32[1]{0}', space=sflag, size = 0x4, scoped, tag = 'scoped memory for mobilenet_v1_forward.16']
    #allocation7 [shape = 'u8[512]{0}', space=vmem, size = 0x400, scoped, tag = 'input window, operand 2, single buffered']
    #allocation8 [shape = 'u8[32768]{0}', space=vmem, size = 0x8000, scoped, tag = 'input window, operand 3, single buffered']
    #allocation9 [shape = 's32[1]{0}', space=sflag, size = 0x4, scoped, tag = 'scoped memory for mobilenet_v1_forward.16']
    #allocation10 [shape = 'u8[512]{0}', space=vmem, size = 0x400, scoped, tag = 'input window, operand 4, single buffered']
    #allocation11 [shape = 'u8[147456]{0}', space=vmem, size = 0x24000, scoped, tag = 'output window, operand 0']
    %10 = vsyncpa [#allocation3], 0
    %s11 = scalar_lea.sflag [#allocation3], 1
    %12 = vsyncpa %s11, 0
    %13 = vsyncpa [#allocation6], 0
    %14 = vsyncpa [#allocation9], 0
    %15 = vsyncpa [#allocation4], 0
    %s16 = scalar_lea.sflag [#allocation4], 1
    %17 = vsyncpa %s16, 0
    loop: start=0, step=1, limit=4
    $region2: #{mobilenet_v1_forward.16} parent=1 // loop_pre_header
      _
    $region3: #{mobilenet_v1_forward.16} parent=1 // loop_header
      %s19 = sphi 0, %s23
      %p20 = scmp.ge.s32.totalorder %s19, 4
      %s29 = sphi 0, %s31
      %s32 = sphi 0, %s29
      %s33 = sphi 0, %s32
      %s49 = sphi 0, %s33
      %s53 = sphi 0, %s53
      %s55 = sphi 0, %s53
      %s56 = sphi 0, %s55
      %s70 = sphi 0, %s56
      %s74 = sphi 0, %s74
      %s76 = sphi 0, %s74
      %s77 = sphi 0, %s76
      %s91 = sphi 0, %s77
      %s95 = sphi 0, %s95
      %s97 = sphi 0, %s95
      %s98 = sphi 0, %s97
      %s112 = sphi 0, %s98
      %s116 = sphi 0, %s116
      %s118 = sphi 0, %s116
      %s119 = sphi 0, %s118
      %s133 = sphi 0, %s119
      %s139 = sphi 0, %s141
      %s142 = sphi 0, %s139
      %s143 = sphi 0, %s142
      %s159 = sphi 0, %s143
    $region4: #{mobilenet_v1_forward.16} parent=1 // loop_header_branch
      %22 = sbr.rel (%p20) target = $region8
    $region5: #{mobilenet_v1_forward.16} parent=1 // loop_body
      %s24 = ssub.s32 %s19, 1
      %s25 = ssub.s32 %s19, 2
      %s26 = sadd.s32 %s19, 1
      %s27 = ssub.s32 %s19, %s26
      %p28 = scmp.eq.s32.totalorder %s27, 0
      %s30 = sadd.s32 %s29, 1
      %s31 = scalar_select %p28, %s29, %s30
      %p34 = pneg %p28
      %p35 = scmp.eq.s32.totalorder %s19, 1
      %p36 = por %p34, %p35
      %p37 = scmp.ne.s32.totalorder %s29, %s32
      %p38 = scmp.eq.s32.totalorder %s19, 0
      %p39 = por %p37, %p38
      %p40 = scmp.ne.s32.totalorder %s29, %s32
      %p41 = scmp.eq.s32.totalorder %s24, 1
      %p42 = por %p40, %p41
      %p43 = scmp.ne.s32.totalorder %s32, %s33
      %p44 = scmp.eq.s32.totalorder %s24, 0
      %p45 = por %p43, %p44
      %p46 = scmp.ne.s32.totalorder %s32, %s33
      %p47 = scmp.eq.s32.totalorder %s25, 1
      %p48 = por %p46, %p47
      %p50 = scmp.ne.s32.totalorder %s33, %s49
      %p51 = scmp.eq.s32.totalorder %s25, 0
      %p52 = por %p50, %p51
      %s54 = sadd.s32 %s53, 1
      %p57 = scmp.eq.s32.totalorder %s19, 1
      %p58 = scmp.ne.s32.totalorder %s53, %s55
      %p59 = scmp.eq.s32.totalorder %s19, 0
      %p60 = por %p58, %p59
      %p61 = scmp.ne.s32.totalorder %s53, %s55
      %p62 = scmp.eq.s32.totalorder %s24, 1
      %p63 = por %p61, %p62
      %p64 = scmp.ne.s32.totalorder %s55, %s56
      %p65 = scmp.eq.s32.totalorder %s24, 0
      %p66 = por %p64, %p65
      %p67 = scmp.ne.s32.totalorder %s55, %s56
      %p68 = scmp.eq.s32.totalorder %s25, 1
      %p69 = por %p67, %p68
      %p71 = scmp.ne.s32.totalorder %s56, %s70
      %p72 = scmp.eq.s32.totalorder %s25, 0
      %p73 = por %p71, %p72
      %s75 = sadd.s32 %s74, 1
      %p78 = scmp.eq.s32.totalorder %s19, 1
      %p79 = scmp.ne.s32.totalorder %s74, %s76
      %p80 = scmp.eq.s32.totalorder %s19, 0
      %p81 = por %p79, %p80
      %p82 = scmp.ne.s32.totalorder %s74, %s76
      %p83 = scmp.eq.s32.totalorder %s24, 1
      %p84 = por %p82, %p83
      %p85 = scmp.ne.s32.totalorder %s76, %s77
      %p86 = scmp.eq.s32.totalorder %s24, 0
      %p87 = por %p85, %p86
      %p88 = scmp.ne.s32.totalorder %s76, %s77
      %p89 = scmp.eq.s32.totalorder %s25, 1
      %p90 = por %p88, %p89
      %p92 = scmp.ne.s32.totalorder %s77, %s91
      %p93 = scmp.eq.s32.totalorder %s25, 0
      %p94 = por %p92, %p93
      %s96 = sadd.s32 %s95, 1
      %p99 = scmp.eq.s32.totalorder %s19, 1
      %p100 = scmp.ne.s32.totalorder %s95, %s97
      %p101 = scmp.eq.s32.totalorder %s19, 0
      %p102 = por %p100, %p101
      %p103 = scmp.ne.s32.totalorder %s95, %s97
      %p104 = scmp.eq.s32.totalorder %s24, 1
      %p105 = por %p103, %p104
      %p106 = scmp.ne.s32.totalorder %s97, %s98
      %p107 = scmp.eq.s32.totalorder %s24, 0
      %p108 = por %p106, %p107
      %p109 = scmp.ne.s32.totalorder %s97, %s98
      %p110 = scmp.eq.s32.totalorder %s25, 1
      %p111 = por %p109, %p110
      %p113 = scmp.ne.s32.totalorder %s98, %s112
      %p114 = scmp.eq.s32.totalorder %s25, 0
      %p115 = por %p113, %p114
      %s117 = sadd.s32 %s116, 1
      %p120 = scmp.eq.s32.totalorder %s19, 1
      %p121 = scmp.ne.s32.totalorder %s116, %s118
      %p122 = scmp.eq.s32.totalorder %s19, 0
      %p123 = por %p121, %p122
      %p124 = scmp.ne.s32.totalorder %s116, %s118
      %p125 = scmp.eq.s32.totalorder %s24, 1
      %p126 = por %p124, %p125
      %p127 = scmp.ne.s32.totalorder %s118, %s119
      %p128 = scmp.eq.s32.totalorder %s24, 0
      %p129 = por %p127, %p128
      %p130 = scmp.ne.s32.totalorder %s118, %s119
      %p131 = scmp.eq.s32.totalorder %s25, 1
      %p132 = por %p130, %p131
      %p134 = scmp.ne.s32.totalorder %s119, %s133
      %p135 = scmp.eq.s32.totalorder %s25, 0
      %p136 = por %p134, %p135
      %s137 = ssub.s32 %s19, %s26
      %p138 = scmp.eq.s32.totalorder %s137, 0
      %s140 = sadd.s32 %s139, 1
      %s141 = scalar_select %p138, %s139, %s140
      %p144 = pneg %p138
      %p145 = scmp.eq.s32.totalorder %s19, 1
      %p146 = por %p144, %p145
      %p147 = scmp.ne.s32.totalorder %s139, %s142
      %p148 = scmp.eq.s32.totalorder %s19, 0
      %p149 = por %p147, %p148
      %p150 = scmp.ne.s32.totalorder %s139, %s142
      %p151 = scmp.eq.s32.totalorder %s24, 1
      %p152 = por %p150, %p151
      %p153 = scmp.ne.s32.totalorder %s142, %s143
      %p154 = scmp.eq.s32.totalorder %s24, 0
      %p155 = por %p153, %p154
      %p156 = scmp.ne.s32.totalorder %s142, %s143
      %p157 = scmp.eq.s32.totalorder %s25, 1
      %p158 = por %p156, %p157
      %p160 = scmp.ne.s32.totalorder %s143, %s159
      %p161 = scmp.eq.s32.totalorder %s25, 0
      %p162 = por %p160, %p161
      %p163 = scmp.le.s32.totalorder 1, %s19
      %p164 = scmp.lt.s32.totalorder %s19, 3
      %p165 = pnand %p163, %p164
      %p166 = pneg %p165
      // Predicated region
      $region9: #{mobilenet_v1_forward.16} parent=5 // pred_check
        _
      $region10: #{mobilenet_v1_forward.16} parent=5 // pred_check_branch
        %168 = sbr.rel (%p165) target = $region12
      $region11: #{mobilenet_v1_forward.16} parent=5 // pred_region
        %s169 = ssub.s32 %s19, 1
        // Predicated region
        $region13: #{mobilenet_v1_forward.16} parent=11 // pred_check
          %p170 = pneg %p66
        $region14: #{mobilenet_v1_forward.16} parent=11 // pred_check_branch
          %172 = sbr.rel (%p170) target = $region16
        $region15: #{mobilenet_v1_forward.16} parent=11 // pred_region
          %s174 = ssub.s32 144, 144
          %175 = vsyncadd [#allocation6], %s174
          %s176 = sshll.u32 [#allocation5], 4
          %s177 = int_to_ptr.vmem [resolvable:$true] %s176
          %182 = dma.hbm_to_vmem [thread:$0]  %s1, 144, %s177, [#allocation6], 16, 16, 1
        $region16: #{mobilenet_v1_forward.16} parent=11 // pred_fallthru
          _
        // Predicated region
        $region17: #{mobilenet_v1_forward.16} parent=11 // pred_check
          %p183 = pneg %p87
        $region18: #{mobilenet_v1_forward.16} parent=11 // pred_check_branch
          %185 = sbr.rel (%p183) target = $region20
        $region19: #{mobilenet_v1_forward.16} parent=11 // pred_region
          %s187 = ssub.s32 16, 16
          %188 = vsyncadd [#allocation6], %s187
          %s190 = sshll.u32 [#allocation7], 4
          %s191 = int_to_ptr.vmem [resolvable:$true] %s190
          %193 = dma.hbm_to_vmem [thread:$0]  %s2, 16, %s191, [#allocation6]
        $region20: #{mobilenet_v1_forward.16} parent=11 // pred_fallthru
          _
        // Predicated region
        $region21: #{mobilenet_v1_forward.16} parent=11 // pred_check
          %p194 = pneg %p108
        $region22: #{mobilenet_v1_forward.16} parent=11 // pred_check_branch
          %196 = sbr.rel (%p194) target = $region24
        $region23: #{mobilenet_v1_forward.16} parent=11 // pred_region
          %s198 = ssub.s32 1024, 1024
          %199 = vsyncadd [#allocation9], %s198
          %s200 = sshll.u32 [#allocation8], 4
          %s201 = int_to_ptr.vmem [resolvable:$true] %s200
          %206 = dma.hbm_to_vmem [thread:$0]  %s3, 1024, %s201, [#allocation9], 64, 64, 4
        $region24: #{mobilenet_v1_forward.16} parent=11 // pred_fallthru
          _
        // Predicated region
        $region25: #{mobilenet_v1_forward.16} parent=11 // pred_check
          %p207 = pneg %p129
        $region26: #{mobilenet_v1_forward.16} parent=11 // pred_check_branch
          %209 = sbr.rel (%p207) target = $region28
        $region27: #{mobilenet_v1_forward.16} parent=11 // pred_region
          %s211 = ssub.s32 16, 16
          %212 = vsyncadd [#allocation9], %s211
          %s214 = sshll.u32 [#allocation10], 4
          %s215 = int_to_ptr.vmem [resolvable:$true] %s214
          %217 = dma.hbm_to_vmem [thread:$0]  %s4, 16, %s215, [#allocation9]
        $region28: #{mobilenet_v1_forward.16} parent=11 // pred_fallthru
          _
      $region12: #{mobilenet_v1_forward.16} parent=5 // pred_fallthru
        _
      %p218 = scmp.lt.s32.totalorder %s19, 2
      // Predicated region
      $region29: #{mobilenet_v1_forward.16} parent=5 // pred_check
        %p219 = pneg %p218
      $region30: #{mobilenet_v1_forward.16} parent=5 // pred_check_branch
        %221 = sbr.rel (%p219) target = $region32
      $region31: #{mobilenet_v1_forward.16} parent=5 // pred_region
        // Predicated region
        $region33: #{mobilenet_v1_forward.16} parent=31 // pred_check
          %p222 = pneg %p39
        $region34: #{mobilenet_v1_forward.16} parent=31 // pred_check_branch
          %224 = sbr.rel (%p222) target = $region36
        $region35: #{mobilenet_v1_forward.16} parent=31 // pred_region
          %s225 = sand.u32 %s29, 1
          %s226 = scalar_lea.sflag [#allocation3], %s225
          %s227 = sand.u32 %s29, 1
          %s228 = smul.addr %s227, 164
          %s229 = scalar_lea.vmem [#allocation2], %s228
          %s231 = ssub.s32 2624, 2624
          %232 = vsyncadd %s226, %s231
          %s233 = smul.addr %s19, 41
          %s234 = smul.addr %s233, 64
          %s235 = scalar_lea.hbm %s0, %s234
          %s236 = sshll.u32 %s229, 4
          %s237 = int_to_ptr.vmem [resolvable:$true] %s236
          %242 = dma.hbm_to_vmem [thread:$0]  %s235, 2624, %s237, %s226, 64, 64, 4
        $region36: #{mobilenet_v1_forward.16} parent=31 // pred_fallthru
          _
      $region32: #{mobilenet_v1_forward.16} parent=5 // pred_fallthru
        _
      %p243 = scmp.le.s32.totalorder 1, %s19
      %p244 = scmp.lt.s32.totalorder %s19, 3
      %p245 = pnand %p243, %p244
      %p246 = pneg %p245
      // Predicated region
      $region37: #{mobilenet_v1_forward.16} parent=5 // pred_check
        _
      $region38: #{mobilenet_v1_forward.16} parent=5 // pred_check_branch
        %248 = sbr.rel (%p245) target = $region40
      $region39: #{mobilenet_v1_forward.16} parent=5 // pred_region
        %s249 = ssub.s32 %s19, 1
        %s250 = sand.u32 %s32, 1
        %s251 = scalar_lea.sflag [#allocation3], %s250
        %s252 = sand.u32 %s32, 1
        %s253 = smul.addr %s252, 164
        %s254 = scalar_lea.vmem [#allocation2], %s253
        // Predicated region
        $region41: #{mobilenet_v1_forward.16} parent=39 // pred_check
          %p255 = pneg %p45
        $region42: #{mobilenet_v1_forward.16} parent=39 // pred_check_branch
          %257 = sbr.rel (%p255) target = $region44
        $region43: #{mobilenet_v1_forward.16} parent=39 // pred_region
          %258 = dma.done %s251, 2624
        $region44: #{mobilenet_v1_forward.16} parent=39 // pred_fallthru
          _
        // Predicated region
        $region45: #{mobilenet_v1_forward.16} parent=39 // pred_check
          %p259 = pneg %p66
        $region46: #{mobilenet_v1_forward.16} parent=39 // pred_check_branch
          %261 = sbr.rel (%p259) target = $region48
        $region47: #{mobilenet_v1_forward.16} parent=39 // pred_region
          %262 = dma.done [#allocation6], 144
        $region48: #{mobilenet_v1_forward.16} parent=39 // pred_fallthru
          _
        // Predicated region
        $region49: #{mobilenet_v1_forward.16} parent=39 // pred_check
          %p263 = pneg %p87
        $region50: #{mobilenet_v1_forward.16} parent=39 // pred_check_branch
          %265 = sbr.rel (%p263) target = $region52
        $region51: #{mobilenet_v1_forward.16} parent=39 // pred_region
          %266 = dma.done [#allocation6], 16
        $region52: #{mobilenet_v1_forward.16} parent=39 // pred_fallthru
          _
        // Predicated region
        $region53: #{mobilenet_v1_forward.16} parent=39 // pred_check
          %p267 = pneg %p108
        $region54: #{mobilenet_v1_forward.16} parent=39 // pred_check_branch
          %269 = sbr.rel (%p267) target = $region56
        $region55: #{mobilenet_v1_forward.16} parent=39 // pred_region
          %270 = dma.done [#allocation9], 1024
        $region56: #{mobilenet_v1_forward.16} parent=39 // pred_fallthru
          _
        // Predicated region
        $region57: #{mobilenet_v1_forward.16} parent=39 // pred_check
          %p271 = pneg %p129
        $region58: #{mobilenet_v1_forward.16} parent=39 // pred_check_branch
          %273 = sbr.rel (%p271) target = $region60
        $region59: #{mobilenet_v1_forward.16} parent=39 // pred_region
          %274 = dma.done [#allocation9], 16
        $region60: #{mobilenet_v1_forward.16} parent=39 // pred_fallthru
          _
        %s275 = sand.u32 %s32, 1
        %s276 = scalar_lea.sflag [#allocation3], %s275
        %s277 = sand.u32 %s32, 1
        %s278 = smul.addr %s277, 164
        %s279 = scalar_lea.vmem [#allocation2], %s278
        %p280 = pneg %p45
        %p281 = pneg %p42
        %p282 = pneg %p66
        %p283 = pneg %p63
        %p284 = pneg %p87
        %p285 = pneg %p84
        %p286 = pneg %p108
        %p287 = pneg %p105
        %p288 = pneg %p129
        %p289 = pneg %p126
        %p290 = pneg %p155
        %p291 = pneg %p152
        %s292 = sand.u32 %s142, 1
        %s293 = scalar_lea.sflag [#allocation4], %s292
        %s294 = sand.u32 %s142, 1
        %s295 = smul.addr %s294, 144
        %s296 = scalar_lea.vmem [#allocation11], %s295
        %v298 = vld [vmem:[%s254] sm:$0xf]
        %v299 = vld [vmem:[%s254 + $0x4] sm:$0xf]
        %v300 = vld [vmem:[%s254 + $0x8] sm:$0xf]
        %v301 = vld [vmem:[%s254 + $0xc] sm:$0xf]
        %v302 = vld [vmem:[%s254 + $0x10] sm:$0xf]
        %v303 = vld [vmem:[%s254 + $0x14] sm:$0xf]
        %v304 = vld [vmem:[%s254 + $0x18] sm:$0xf]
        %v305 = vld [vmem:[%s254 + $0x1c] sm:$0xf]
        %v306 = vld [vmem:[%s254 + $0x20] sm:$0xf]
        %v307 = vld [vmem:[%s254 + $0x24] sm:$0xf]
        %v308 = vld [vmem:[%s254 + $0x28] sm:$0xf]
        %v309 = vld [vmem:[%s254 + $0x2c] sm:$0xf]
        %v310 = vld [vmem:[%s254 + $0x30] sm:$0xf]
        %v311 = vld [vmem:[%s254 + $0x34] sm:$0xf]
        %v312 = vld [vmem:[%s254 + $0x38] sm:$0xf]
        %v313 = vld [vmem:[%s254 + $0x3c] sm:$0xf]
        %v314 = vld [vmem:[%s254 + $0x40] sm:$0xf]
        %v315 = vld [vmem:[%s254 + $0x44] sm:$0xf]
        %v316 = vld [vmem:[%s254 + $0x48] sm:$0xf]
        %v317 = vld [vmem:[%s254 + $0x4c] sm:$0xf]
        %v318 = vld [vmem:[%s254 + $0x50] sm:$0xf]
        %v319 = vld [vmem:[%s254 + $0x54] sm:$0xf]
        %v320 = vld [vmem:[%s254 + $0x58] sm:$0xf]
        %v321 = vld [vmem:[%s254 + $0x5c] sm:$0xf]
        %v322 = vld [vmem:[%s254 + $0x60] sm:$0xf]
        %v323 = vld [vmem:[%s254 + $0x64] sm:$0xf]
        %v324 = vld [vmem:[%s254 + $0x68] sm:$0xf]
        %v325 = vld [vmem:[%s254 + $0x6c] sm:$0xf]
        %v326 = vld [vmem:[%s254 + $0x70] sm:$0xf]
        %v327 = vld [vmem:[%s254 + $0x74] sm:$0xf]
        %v328 = vld [vmem:[%s254 + $0x78] sm:$0xf]
        %v329 = vld [vmem:[%s254 + $0x7c] sm:$0xf]
        %v330 = vld [vmem:[%s254 + $0x80] sm:$0xf]
        %v331 = vld [vmem:[%s254 + $0x84] sm:$0xf]
        %v332 = vld [vmem:[%s254 + $0x88] sm:$0xf]
        %v333 = vld [vmem:[%s254 + $0x8c] sm:$0xf]
        %v334 = vld [vmem:[%s254 + $0x90] sm:$0xf]
        %v335 = vld [vmem:[%s254 + $0x94] sm:$0xf]
        %v336 = vld [vmem:[%s254 + $0x98] sm:$0xf]
        %v337 = vld [vmem:[%s254 + $0x9c] sm:$0xf]
        %v338 = vld [vmem:[%s254 + $0xa0] sm:$0xf]
        %v339 = vunpack.c.l.bf16 %v298
        %v340 = vunpack.c.l.bf16 %v299
        %v341 = vunpack.c.l.bf16 %v300
        %v342 = vunpack.c.l.bf16 %v301
        %v343 = vunpack.c.l.bf16 %v302
        %v344 = vunpack.c.l.bf16 %v303
        %v345 = vunpack.c.l.bf16 %v304
        %v346 = vunpack.c.l.bf16 %v305
        %v347 = vunpack.c.l.bf16 %v306
        %v348 = vunpack.c.l.bf16 %v307
        %v349 = vunpack.c.l.bf16 %v308
        %v350 = vunpack.c.l.bf16 %v309
        %v351 = vunpack.c.l.bf16 %v310
        %v352 = vunpack.c.l.bf16 %v311
        %v353 = vunpack.c.l.bf16 %v312
        %v354 = vunpack.c.l.bf16 %v313
        %v355 = vunpack.c.l.bf16 %v314
        %v356 = vunpack.c.l.bf16 %v315
        %v357 = vunpack.c.l.bf16 %v316
        %v358 = vunpack.c.l.bf16 %v317
        %v359 = vunpack.c.l.bf16 %v318
        %v360 = vunpack.c.l.bf16 %v319
        %v361 = vunpack.c.l.bf16 %v320
        %v362 = vunpack.c.l.bf16 %v321
        %v363 = vunpack.c.l.bf16 %v322
        %v364 = vunpack.c.l.bf16 %v323
        %v365 = vunpack.c.l.bf16 %v324
        %v366 = vunpack.c.l.bf16 %v325
        %v367 = vunpack.c.l.bf16 %v326
        %v368 = vunpack.c.l.bf16 %v327
        %v369 = vunpack.c.l.bf16 %v328
        %v370 = vunpack.c.l.bf16 %v329
        %v371 = vunpack.c.l.bf16 %v330
        %v372 = vunpack.c.l.bf16 %v331
        %v373 = vunpack.c.l.bf16 %v332
        %v374 = vunpack.c.l.bf16 %v333
        %v375 = vld [vmem:[#allocation5] sm:$0x1]
        %v377 = vlaneseq
        %v378 = vshrl.u32 %v377, 7
        %v379 = vsub.s32 0, %v378
        %v380 = vrot.slane %v375, %v379
        %v382 = vmul.f32 %v339, %v380
        %v383 = vmul.f32 %v340, %v380
        %v384 = vmul.f32 %v341, %v380
        %v385 = vmul.f32 %v342, %v380
        %v386 = vmul.f32 %v343, %v380
        %v387 = vmul.f32 %v344, %v380
        %v388 = vmul.f32 %v345, %v380
        %v389 = vmul.f32 %v346, %v380
        %v390 = vmul.f32 %v347, %v380
        %v391 = vmul.f32 %v348, %v380
        %v392 = vmul.f32 %v349, %v380
        %v393 = vmul.f32 %v350, %v380
        %v394 = vmul.f32 %v351, %v380
        %v395 = vmul.f32 %v352, %v380
        %v396 = vmul.f32 %v353, %v380
        %v397 = vmul.f32 %v354, %v380
        %v398 = vmul.f32 %v355, %v380
        %v399 = vmul.f32 %v356, %v380
        %v400 = vmul.f32 %v357, %v380
        %v401 = vmul.f32 %v358, %v380
        %v402 = vmul.f32 %v359, %v380
        %v403 = vmul.f32 %v360, %v380
        %v404 = vmul.f32 %v361, %v380
        %v405 = vmul.f32 %v362, %v380
        %v406 = vmul.f32 %v363, %v380
        %v407 = vmul.f32 %v364, %v380
        %v408 = vmul.f32 %v365, %v380
        %v409 = vmul.f32 %v366, %v380
        %v410 = vmul.f32 %v367, %v380
        %v411 = vmul.f32 %v368, %v380
        %v412 = vmul.f32 %v369, %v380
        %v413 = vmul.f32 %v370, %v380
        %v414 = vmul.f32 %v371, %v380
        %v415 = vmul.f32 %v372, %v380
        %v416 = vmul.f32 %v373, %v380
        %v417 = vmul.f32 %v374, %v380
        %v418 = vunpack.c.l.bf16 %v334
        %s419 = scalar_lea.vmem [#allocation5], 1
        %v420 = vld [vmem:[%s419] sm:$0x1]
        %v422 = vlaneseq
        %v423 = vshrl.u32 %v422, 7
        %v424 = vsub.s32 0, %v423
        %v425 = vrot.slane %v420, %v424
        %v427 = vmul.f32 %v339, %v425
        %v428 = vmul.f32 %v340, %v425
        %v429 = vmul.f32 %v341, %v425
        %v430 = vmul.f32 %v342, %v425
        %v431 = vmul.f32 %v343, %v425
        %v432 = vmul.f32 %v344, %v425
        %v433 = vmul.f32 %v345, %v425
        %v434 = vmul.f32 %v346, %v425
        %v435 = vmul.f32 %v347, %v425
        %v436 = vmul.f32 %v348, %v425
        %v437 = vmul.f32 %v349, %v425
        %v438 = vmul.f32 %v350, %v425
        %v439 = vmul.f32 %v351, %v425
        %v440 = vmul.f32 %v352, %v425
        %v441 = vmul.f32 %v353, %v425
        %v442 = vmul.f32 %v354, %v425
        %v443 = vmul.f32 %v355, %v425
        %v444 = vmul.f32 %v356, %v425
        %v445 = vmul.f32 %v357, %v425
        %v446 = vmul.f32 %v358, %v425
        %v447 = vmul.f32 %v359, %v425
        %v448 = vmul.f32 %v360, %v425
        %v449 = vmul.f32 %v361, %v425
        %v450 = vmul.f32 %v362, %v425
        %v451 = vmul.f32 %v363, %v425
        %v452 = vmul.f32 %v364, %v425
        %v453 = vmul.f32 %v365, %v425
        %v454 = vmul.f32 %v366, %v425
        %v455 = vmul.f32 %v367, %v425
        %v456 = vmul.f32 %v368, %v425
        %v457 = vmul.f32 %v369, %v425
        %v458 = vmul.f32 %v370, %v425
        %v459 = vmul.f32 %v371, %v425
        %v460 = vmul.f32 %v372, %v425
        %v461 = vmul.f32 %v373, %v425
        %v462 = vmul.f32 %v374, %v425
        %v463 = vmul.f32 %v418, %v425
        %vm501 = vcmask 1046528
        %v502 = vrot.slane %v427, 1
        %v503 = vrot.slane %v428, 1
        %v504 = vsel %vm501, %v502, %v503
        %v505 = vrot.slane %v429, 1
        %v506 = vsel %vm501, %v503, %v505
        %v507 = vrot.slane %v430, 1
        %v508 = vsel %vm501, %v505, %v507
        %v509 = vrot.slane %v431, 1
        %v510 = vsel %vm501, %v507, %v509
        %v511 = vrot.slane %v432, 1
        %v512 = vsel %vm501, %v509, %v511
        %v513 = vrot.slane %v433, 1
        %v514 = vsel %vm501, %v511, %v513
        %v515 = vrot.slane %v434, 1
        %v516 = vsel %vm501, %v513, %v515
        %v517 = vrot.slane %v435, 1
        %v518 = vsel %vm501, %v515, %v517
        %v519 = vrot.slane %v436, 1
        %v520 = vsel %vm501, %v517, %v519
        %v521 = vrot.slane %v437, 1
        %v522 = vsel %vm501, %v519, %v521
        %v523 = vrot.slane %v438, 1
        %v524 = vsel %vm501, %v521, %v523
        %v525 = vrot.slane %v439, 1
        %v526 = vsel %vm501, %v523, %v525
        %v527 = vrot.slane %v440, 1
        %v528 = vsel %vm501, %v525, %v527
        %v529 = vrot.slane %v441, 1
        %v530 = vsel %vm501, %v527, %v529
        %v531 = vrot.slane %v442, 1
        %v532 = vsel %vm501, %v529, %v531
        %v533 = vrot.slane %v443, 1
        %v534 = vsel %vm501, %v531, %v533
        %v535 = vrot.slane %v444, 1
        %v536 = vsel %vm501, %v533, %v535
        %v537 = vrot.slane %v445, 1
        %v538 = vsel %vm501, %v535, %v537
        %v539 = vrot.slane %v446, 1
        %v540 = vsel %vm501, %v537, %v539
        %v541 = vrot.slane %v447, 1
        %v542 = vsel %vm501, %v539, %v541
        %v543 = vrot.slane %v448, 1
        %v544 = vsel %vm501, %v541, %v543
        %v545 = vrot.slane %v449, 1
        %v546 = vsel %vm501, %v543, %v545
        %v547 = vrot.slane %v450, 1
        %v548 = vsel %vm501, %v545, %v547
        %v549 = vrot.slane %v451, 1
        %v550 = vsel %vm501, %v547, %v549
        %v551 = vrot.slane %v452, 1
        %v552 = vsel %vm501, %v549, %v551
        %v553 = vrot.slane %v453, 1
        %v554 = vsel %vm501, %v551, %v553
        %v555 = vrot.slane %v454, 1
        %v556 = vsel %vm501, %v553, %v555
        %v557 = vrot.slane %v455, 1
        %v558 = vsel %vm501, %v555, %v557
        %v559 = vrot.slane %v456, 1
        %v560 = vsel %vm501, %v557, %v559
        %v561 = vrot.slane %v457, 1
        %v562 = vsel %vm501, %v559, %v561
        %v563 = vrot.slane %v458, 1
        %v564 = vsel %vm501, %v561, %v563
        %v565 = vrot.slane %v459, 1
        %v566 = vsel %vm501, %v563, %v565
        %v567 = vrot.slane %v460, 1
        %v568 = vsel %vm501, %v565, %v567
        %v569 = vrot.slane %v461, 1
        %v570 = vsel %vm501, %v567, %v569
        %v571 = vrot.slane %v462, 1
        %v572 = vsel %vm501, %v569, %v571
        %v573 = vrot.slane %v463, 1
        %v574 = vsel %vm501, %v571, %v573
        %v611 = vadd.f32 %v382, %v504
        %v612 = vadd.f32 %v383, %v506
        %v613 = vadd.f32 %v384, %v508
        %v614 = vadd.f32 %v385, %v510
        %v615 = vadd.f32 %v386, %v512
        %v616 = vadd.f32 %v387, %v514
        %v617 = vadd.f32 %v388, %v516
        %v618 = vadd.f32 %v389, %v518
        %v619 = vadd.f32 %v390, %v520
        %v620 = vadd.f32 %v391, %v522
        %v621 = vadd.f32 %v392, %v524
        %v622 = vadd.f32 %v393, %v526
        %v623 = vadd.f32 %v394, %v528
        %v624 = vadd.f32 %v395, %v530
        %v625 = vadd.f32 %v396, %v532
        %v626 = vadd.f32 %v397, %v534
        %v627 = vadd.f32 %v398, %v536
        %v628 = vadd.f32 %v399, %v538
        %v629 = vadd.f32 %v400, %v540
        %v630 = vadd.f32 %v401, %v542
        %v631 = vadd.f32 %v402, %v544
        %v632 = vadd.f32 %v403, %v546
        %v633 = vadd.f32 %v404, %v548
        %v634 = vadd.f32 %v405, %v550
        %v635 = vadd.f32 %v406, %v552
        %v636 = vadd.f32 %v407, %v554
        %v637 = vadd.f32 %v408, %v556
        %v638 = vadd.f32 %v409, %v558
        %v639 = vadd.f32 %v410, %v560
        %v640 = vadd.f32 %v411, %v562
        %v641 = vadd.f32 %v412, %v564
        %v642 = vadd.f32 %v413, %v566
        %v643 = vadd.f32 %v414, %v568
        %v644 = vadd.f32 %v415, %v570
        %v645 = vadd.f32 %v416, %v572
        %v646 = vadd.f32 %v417, %v574
        %s647 = scalar_lea.vmem [#allocation5], 2
        %v648 = vld [vmem:[%s647] sm:$0x1]
        %v650 = vlaneseq
        %v651 = vshrl.u32 %v650, 7
        %v652 = vsub.s32 0, %v651
        %v653 = vrot.slane %v648, %v652
        %v655 = vmul.f32 %v339, %v653
        %v656 = vmul.f32 %v340, %v653
        %v657 = vmul.f32 %v341, %v653
        %v658 = vmul.f32 %v342, %v653
        %v659 = vmul.f32 %v343, %v653
        %v660 = vmul.f32 %v344, %v653
        %v661 = vmul.f32 %v345, %v653
        %v662 = vmul.f32 %v346, %v653
        %v663 = vmul.f32 %v347, %v653
        %v664 = vmul.f32 %v348, %v653
        %v665 = vmul.f32 %v349, %v653
        %v666 = vmul.f32 %v350, %v653
        %v667 = vmul.f32 %v351, %v653
        %v668 = vmul.f32 %v352, %v653
        %v669 = vmul.f32 %v353, %v653
        %v670 = vmul.f32 %v354, %v653
        %v671 = vmul.f32 %v355, %v653
        %v672 = vmul.f32 %v356, %v653
        %v673 = vmul.f32 %v357, %v653
        %v674 = vmul.f32 %v358, %v653
        %v675 = vmul.f32 %v359, %v653
        %v676 = vmul.f32 %v360, %v653
        %v677 = vmul.f32 %v361, %v653
        %v678 = vmul.f32 %v362, %v653
        %v679 = vmul.f32 %v363, %v653
        %v680 = vmul.f32 %v364, %v653
        %v681 = vmul.f32 %v365, %v653
        %v682 = vmul.f32 %v366, %v653
        %v683 = vmul.f32 %v367, %v653
        %v684 = vmul.f32 %v368, %v653
        %v685 = vmul.f32 %v369, %v653
        %v686 = vmul.f32 %v370, %v653
        %v687 = vmul.f32 %v371, %v653
        %v688 = vmul.f32 %v372, %v653
        %v689 = vmul.f32 %v373, %v653
        %v690 = vmul.f32 %v374, %v653
        %v691 = vmul.f32 %v418, %v653
        %vm729 = vcmask 1045504
        %v730 = vrot.slane %v655, 2
        %v731 = vrot.slane %v656, 2
        %v732 = vsel %vm729, %v730, %v731
        %v733 = vrot.slane %v657, 2
        %v734 = vsel %vm729, %v731, %v733
        %v735 = vrot.slane %v658, 2
        %v736 = vsel %vm729, %v733, %v735
        %v737 = vrot.slane %v659, 2
        %v738 = vsel %vm729, %v735, %v737
        %v739 = vrot.slane %v660, 2
        %v740 = vsel %vm729, %v737, %v739
        %v741 = vrot.slane %v661, 2
        %v742 = vsel %vm729, %v739, %v741
        %v743 = vrot.slane %v662, 2
        %v744 = vsel %vm729, %v741, %v743
        %v745 = vrot.slane %v663, 2
        %v746 = vsel %vm729, %v743, %v745
        %v747 = vrot.slane %v664, 2
        %v748 = vsel %vm729, %v745, %v747
        %v749 = vrot.slane %v665, 2
        %v750 = vsel %vm729, %v747, %v749
        %v751 = vrot.slane %v666, 2
        %v752 = vsel %vm729, %v749, %v751
        %v753 = vrot.slane %v667, 2
        %v754 = vsel %vm729, %v751, %v753
        %v755 = vrot.slane %v668, 2
        %v756 = vsel %vm729, %v753, %v755
        %v757 = vrot.slane %v669, 2
        %v758 = vsel %vm729, %v755, %v757
        %v759 = vrot.slane %v670, 2
        %v760 = vsel %vm729, %v757, %v759
        %v761 = vrot.slane %v671, 2
        %v762 = vsel %vm729, %v759, %v761
        %v763 = vrot.slane %v672, 2
        %v764 = vsel %vm729, %v761, %v763
        %v765 = vrot.slane %v673, 2
        %v766 = vsel %vm729, %v763, %v765
        %v767 = vrot.slane %v674, 2
        %v768 = vsel %vm729, %v765, %v767
        %v769 = vrot.slane %v675, 2
        %v770 = vsel %vm729, %v767, %v769
        %v771 = vrot.slane %v676, 2
        %v772 = vsel %vm729, %v769, %v771
        %v773 = vrot.slane %v677, 2
        %v774 = vsel %vm729, %v771, %v773
        %v775 = vrot.slane %v678, 2
        %v776 = vsel %vm729, %v773, %v775
        %v777 = vrot.slane %v679, 2
        %v778 = vsel %vm729, %v775, %v777
        %v779 = vrot.slane %v680, 2
        %v780 = vsel %vm729, %v777, %v779
        %v781 = vrot.slane %v681, 2
        %v782 = vsel %vm729, %v779, %v781
        %v783 = vrot.slane %v682, 2
        %v784 = vsel %vm729, %v781, %v783
        %v785 = vrot.slane %v683, 2
        %v786 = vsel %vm729, %v783, %v785
        %v787 = vrot.slane %v684, 2
        %v788 = vsel %vm729, %v785, %v787
        %v789 = vrot.slane %v685, 2
        %v790 = vsel %vm729, %v787, %v789
        %v791 = vrot.slane %v686, 2
        %v792 = vsel %vm729, %v789, %v791
        %v793 = vrot.slane %v687, 2
        %v794 = vsel %vm729, %v791, %v793
        %v795 = vrot.slane %v688, 2
        %v796 = vsel %vm729, %v793, %v795
        %v797 = vrot.slane %v689, 2
        %v798 = vsel %vm729, %v795, %v797
        %v799 = vrot.slane %v690, 2
        %v800 = vsel %vm729, %v797, %v799
        %v801 = vrot.slane %v691, 2
        %v802 = vsel %vm729, %v799, %v801
        %v839 = vadd.f32 %v611, %v732
        %v840 = vadd.f32 %v612, %v734
        %v841 = vadd.f32 %v613, %v736
        %v842 = vadd.f32 %v614, %v738
        %v843 = vadd.f32 %v615, %v740
        %v844 = vadd.f32 %v616, %v742
        %v845 = vadd.f32 %v617, %v744
        %v846 = vadd.f32 %v618, %v746
        %v847 = vadd.f32 %v619, %v748
        %v848 = vadd.f32 %v620, %v750
        %v849 = vadd.f32 %v621, %v752
        %v850 = vadd.f32 %v622, %v754
        %v851 = vadd.f32 %v623, %v756
        %v852 = vadd.f32 %v624, %v758
        %v853 = vadd.f32 %v625, %v760
        %v854 = vadd.f32 %v626, %v762
        %v855 = vadd.f32 %v627, %v764
        %v856 = vadd.f32 %v628, %v766
        %v857 = vadd.f32 %v629, %v768
        %v858 = vadd.f32 %v630, %v770
        %v859 = vadd.f32 %v631, %v772
        %v860 = vadd.f32 %v632, %v774
        %v861 = vadd.f32 %v633, %v776
        %v862 = vadd.f32 %v634, %v778
        %v863 = vadd.f32 %v635, %v780
        %v864 = vadd.f32 %v636, %v782
        %v865 = vadd.f32 %v637, %v784
        %v866 = vadd.f32 %v638, %v786
        %v867 = vadd.f32 %v639, %v788
        %v868 = vadd.f32 %v640, %v790
        %v869 = vadd.f32 %v641, %v792
        %v870 = vadd.f32 %v642, %v794
        %v871 = vadd.f32 %v643, %v796
        %v872 = vadd.f32 %v644, %v798
        %v873 = vadd.f32 %v645, %v800
        %v874 = vadd.f32 %v646, %v802
        %v875 = vunpack.c.l.bf16 %v335
        %v876 = vunpack.c.l.bf16 %v336
        %s877 = scalar_lea.vmem [#allocation5], 3
        %v878 = vld [vmem:[%s877] sm:$0x1]
        %v880 = vlaneseq
        %v881 = vshrl.u32 %v880, 7
        %v882 = vsub.s32 0, %v881
        %v883 = vrot.slane %v878, %v882
        %v885 = vmul.f32 %v341, %v883
        %v886 = vmul.f32 %v342, %v883
        %v887 = vmul.f32 %v343, %v883
        %v888 = vmul.f32 %v344, %v883
        %v889 = vmul.f32 %v345, %v883
        %v890 = vmul.f32 %v346, %v883
        %v891 = vmul.f32 %v347, %v883
        %v892 = vmul.f32 %v348, %v883
        %v893 = vmul.f32 %v349, %v883
        %v894 = vmul.f32 %v350, %v883
        %v895 = vmul.f32 %v351, %v883
        %v896 = vmul.f32 %v352, %v883
        %v897 = vmul.f32 %v353, %v883
        %v898 = vmul.f32 %v354, %v883
        %v899 = vmul.f32 %v355, %v883
        %v900 = vmul.f32 %v356, %v883
        %v901 = vmul.f32 %v357, %v883
        %v902 = vmul.f32 %v358, %v883
        %v903 = vmul.f32 %v359, %v883
        %v904 = vmul.f32 %v360, %v883
        %v905 = vmul.f32 %v361, %v883
        %v906 = vmul.f32 %v362, %v883
        %v907 = vmul.f32 %v363, %v883
        %v908 = vmul.f32 %v364, %v883
        %v909 = vmul.f32 %v365, %v883
        %v910 = vmul.f32 %v366, %v883
        %v911 = vmul.f32 %v367, %v883
        %v912 = vmul.f32 %v368, %v883
        %v913 = vmul.f32 %v369, %v883
        %v914 = vmul.f32 %v370, %v883
        %v915 = vmul.f32 %v371, %v883
        %v916 = vmul.f32 %v372, %v883
        %v917 = vmul.f32 %v373, %v883
        %v918 = vmul.f32 %v374, %v883
        %v919 = vmul.f32 %v418, %v883
        %v920 = vmul.f32 %v875, %v883
        %v921 = vmul.f32 %v876, %v883
        %v959 = vrot.slane %v885, 2
        %v960 = vrot.slane %v886, 2
        %v961 = vsel %vm729, %v959, %v960
        %v962 = vrot.slane %v887, 2
        %v963 = vsel %vm729, %v960, %v962
        %v964 = vrot.slane %v888, 2
        %v965 = vsel %vm729, %v962, %v964
        %v966 = vrot.slane %v889, 2
        %v967 = vsel %vm729, %v964, %v966
        %v968 = vrot.slane %v890, 2
        %v969 = vsel %vm729, %v966, %v968
        %v970 = vrot.slane %v891, 2
        %v971 = vsel %vm729, %v968, %v970
        %v972 = vrot.slane %v892, 2
        %v973 = vsel %vm729, %v970, %v972
        %v974 = vrot.slane %v893, 2
        %v975 = vsel %vm729, %v972, %v974
        %v976 = vrot.slane %v894, 2
        %v977 = vsel %vm729, %v974, %v976
        %v978 = vrot.slane %v895, 2
        %v979 = vsel %vm729, %v976, %v978
        %v980 = vrot.slane %v896, 2
        %v981 = vsel %vm729, %v978, %v980
        %v982 = vrot.slane %v897, 2
        %v983 = vsel %vm729, %v980, %v982
        %v984 = vrot.slane %v898, 2
        %v985 = vsel %vm729, %v982, %v984
        %v986 = vrot.slane %v899, 2
        %v987 = vsel %vm729, %v984, %v986
        %v988 = vrot.slane %v900, 2
        %v989 = vsel %vm729, %v986, %v988
        %v990 = vrot.slane %v901, 2
        %v991 = vsel %vm729, %v988, %v990
        %v992 = vrot.slane %v902, 2
        %v993 = vsel %vm729, %v990, %v992
        %v994 = vrot.slane %v903, 2
        %v995 = vsel %vm729, %v992, %v994
        %v996 = vrot.slane %v904, 2
        %v997 = vsel %vm729, %v994, %v996
        %v998 = vrot.slane %v905, 2
        %v999 = vsel %vm729, %v996, %v998
        %v1000 = vrot.slane %v906, 2
        %v1001 = vsel %vm729, %v998, %v1000
        %v1002 = vrot.slane %v907, 2
        %v1003 = vsel %vm729, %v1000, %v1002
        %v1004 = vrot.slane %v908, 2
        %v1005 = vsel %vm729, %v1002, %v1004
        %v1006 = vrot.slane %v909, 2
        %v1007 = vsel %vm729, %v1004, %v1006
        %v1008 = vrot.slane %v910, 2
        %v1009 = vsel %vm729, %v1006, %v1008
        %v1010 = vrot.slane %v911, 2
        %v1011 = vsel %vm729, %v1008, %v1010
        %v1012 = vrot.slane %v912, 2
        %v1013 = vsel %vm729, %v1010, %v1012
        %v1014 = vrot.slane %v913, 2
        %v1015 = vsel %vm729, %v1012, %v1014
        %v1016 = vrot.slane %v914, 2
        %v1017 = vsel %vm729, %v1014, %v1016
        %v1018 = vrot.slane %v915, 2
        %v1019 = vsel %vm729, %v1016, %v1018
        %v1020 = vrot.slane %v916, 2
        %v1021 = vsel %vm729, %v1018, %v1020
        %v1022 = vrot.slane %v917, 2
        %v1023 = vsel %vm729, %v1020, %v1022
        %v1024 = vrot.slane %v918, 2
        %v1025 = vsel %vm729, %v1022, %v1024
        %v1026 = vrot.slane %v919, 2
        %v1027 = vsel %vm729, %v1024, %v1026
        %v1028 = vrot.slane %v920, 2
        %v1029 = vsel %vm729, %v1026, %v1028
        %v1030 = vrot.slane %v921, 2
        %v1031 = vsel %vm729, %v1028, %v1030
        %v1068 = vadd.f32 %v839, %v961
        %v1069 = vadd.f32 %v840, %v963
        %v1070 = vadd.f32 %v841, %v965
        %v1071 = vadd.f32 %v842, %v967
        %v1072 = vadd.f32 %v843, %v969
        %v1073 = vadd.f32 %v844, %v971
        %v1074 = vadd.f32 %v845, %v973
        %v1075 = vadd.f32 %v846, %v975
        %v1076 = vadd.f32 %v847, %v977
        %v1077 = vadd.f32 %v848, %v979
        %v1078 = vadd.f32 %v849, %v981
        %v1079 = vadd.f32 %v850, %v983
        %v1080 = vadd.f32 %v851, %v985
        %v1081 = vadd.f32 %v852, %v987
        %v1082 = vadd.f32 %v853, %v989
        %v1083 = vadd.f32 %v854, %v991
        %v1084 = vadd.f32 %v855, %v993
        %v1085 = vadd.f32 %v856, %v995
        %v1086 = vadd.f32 %v857, %v997
        %v1087 = vadd.f32 %v858, %v999
        %v1088 = vadd.f32 %v859, %v1001
        %v1089 = vadd.f32 %v860, %v1003
        %v1090 = vadd.f32 %v861, %v1005
        %v1091 = vadd.f32 %v862, %v1007
        %v1092 = vadd.f32 %v863, %v1009
        %v1093 = vadd.f32 %v864, %v1011
        %v1094 = vadd.f32 %v865, %v1013
        %v1095 = vadd.f32 %v866, %v1015
        %v1096 = vadd.f32 %v867, %v1017
        %v1097 = vadd.f32 %v868, %v1019
        %v1098 = vadd.f32 %v869, %v1021
        %v1099 = vadd.f32 %v870, %v1023
        %v1100 = vadd.f32 %v871, %v1025
        %v1101 = vadd.f32 %v872, %v1027
        %v1102 = vadd.f32 %v873, %v1029
        %v1103 = vadd.f32 %v874, %v1031
        %s1104 = scalar_lea.vmem [#allocation5], 4
        %v1105 = vld [vmem:[%s1104] sm:$0x1]
        %v1107 = vlaneseq
        %v1108 = vshrl.u32 %v1107, 7
        %v1109 = vsub.s32 0, %v1108
        %v1110 = vrot.slane %v1105, %v1109
        %v1112 = vmul.f32 %v341, %v1110
        %v1113 = vmul.f32 %v342, %v1110
        %v1114 = vmul.f32 %v343, %v1110
        %v1115 = vmul.f32 %v344, %v1110
        %v1116 = vmul.f32 %v345, %v1110
        %v1117 = vmul.f32 %v346, %v1110
        %v1118 = vmul.f32 %v347, %v1110
        %v1119 = vmul.f32 %v348, %v1110
        %v1120 = vmul.f32 %v349, %v1110
        %v1121 = vmul.f32 %v350, %v1110
        %v1122 = vmul.f32 %v351, %v1110
        %v1123 = vmul.f32 %v352, %v1110
        %v1124 = vmul.f32 %v353, %v1110
        %v1125 = vmul.f32 %v354, %v1110
        %v1126 = vmul.f32 %v355, %v1110
        %v1127 = vmul.f32 %v356, %v1110
        %v1128 = vmul.f32 %v357, %v1110
        %v1129 = vmul.f32 %v358, %v1110
        %v1130 = vmul.f32 %v359, %v1110
        %v1131 = vmul.f32 %v360, %v1110
        %v1132 = vmul.f32 %v361, %v1110
        %v1133 = vmul.f32 %v362, %v1110
        %v1134 = vmul.f32 %v363, %v1110
        %v1135 = vmul.f32 %v364, %v1110
        %v1136 = vmul.f32 %v365, %v1110
        %v1137 = vmul.f32 %v366, %v1110
        %v1138 = vmul.f32 %v367, %v1110
        %v1139 = vmul.f32 %v368, %v1110
        %v1140 = vmul.f32 %v369, %v1110
        %v1141 = vmul.f32 %v370, %v1110
        %v1142 = vmul.f32 %v371, %v1110
        %v1143 = vmul.f32 %v372, %v1110
        %v1144 = vmul.f32 %v373, %v1110
        %v1145 = vmul.f32 %v374, %v1110
        %v1146 = vmul.f32 %v418, %v1110
        %v1147 = vmul.f32 %v875, %v1110
        %v1148 = vmul.f32 %v876, %v1110
        %vm1186 = vcmask 1044480
        %v1187 = vrot.slane %v1112, 3
        %v1188 = vrot.slane %v1113, 3
        %v1189 = vsel %vm1186, %v1187, %v1188
        %v1190 = vrot.slane %v1114, 3
        %v1191 = vsel %vm1186, %v1188, %v1190
        %v1192 = vrot.slane %v1115, 3
        %v1193 = vsel %vm1186, %v1190, %v1192
        %v1194 = vrot.slane %v1116, 3
        %v1195 = vsel %vm1186, %v1192, %v1194
        %v1196 = vrot.slane %v1117, 3
        %v1197 = vsel %vm1186, %v1194, %v1196
        %v1198 = vrot.slane %v1118, 3
        %v1199 = vsel %vm1186, %v1196, %v1198
        %v1200 = vrot.slane %v1119, 3
        %v1201 = vsel %vm1186, %v1198, %v1200
        %v1202 = vrot.slane %v1120, 3
        %v1203 = vsel %vm1186, %v1200, %v1202
        %v1204 = vrot.slane %v1121, 3
        %v1205 = vsel %vm1186, %v1202, %v1204
        %v1206 = vrot.slane %v1122, 3
        %v1207 = vsel %vm1186, %v1204, %v1206
        %v1208 = vrot.slane %v1123, 3
        %v1209 = vsel %vm1186, %v1206, %v1208
        %v1210 = vrot.slane %v1124, 3
        %v1211 = vsel %vm1186, %v1208, %v1210
        %v1212 = vrot.slane %v1125, 3
        %v1213 = vsel %vm1186, %v1210, %v1212
        %v1214 = vrot.slane %v1126, 3
        %v1215 = vsel %vm1186, %v1212, %v1214
        %v1216 = vrot.slane %v1127, 3
        %v1217 = vsel %vm1186, %v1214, %v1216
        %v1218 = vrot.slane %v1128, 3
        %v1219 = vsel %vm1186, %v1216, %v1218
        %v1220 = vrot.slane %v1129, 3
        %v1221 = vsel %vm1186, %v1218, %v1220
        %v1222 = vrot.slane %v1130, 3
        %v1223 = vsel %vm1186, %v1220, %v1222
        %v1224 = vrot.slane %v1131, 3
        %v1225 = vsel %vm1186, %v1222, %v1224
        %v1226 = vrot.slane %v1132, 3
        %v1227 = vsel %vm1186, %v1224, %v1226
        %v1228 = vrot.slane %v1133, 3
        %v1229 = vsel %vm1186, %v1226, %v1228
        %v1230 = vrot.slane %v1134, 3
        %v1231 = vsel %vm1186, %v1228, %v1230
        %v1232 = vrot.slane %v1135, 3
        %v1233 = vsel %vm1186, %v1230, %v1232
        %v1234 = vrot.slane %v1136, 3
        %v1235 = vsel %vm1186, %v1232, %v1234
        %v1236 = vrot.slane %v1137, 3
        %v1237 = vsel %vm1186, %v1234, %v1236
        %v1238 = vrot.slane %v1138, 3
        %v1239 = vsel %vm1186, %v1236, %v1238
        %v1240 = vrot.slane %v1139, 3
        %v1241 = vsel %vm1186, %v1238, %v1240
        %v1242 = vrot.slane %v1140, 3
        %v1243 = vsel %vm1186, %v1240, %v1242
        %v1244 = vrot.slane %v1141, 3
        %v1245 = vsel %vm1186, %v1242, %v1244
        %v1246 = vrot.slane %v1142, 3
        %v1247 = vsel %vm1186, %v1244, %v1246
        %v1248 = vrot.slane %v1143, 3
        %v1249 = vsel %vm1186, %v1246, %v1248
        %v1250 = vrot.slane %v1144, 3
        %v1251 = vsel %vm1186, %v1248, %v1250
        %v1252 = vrot.slane %v1145, 3
        %v1253 = vsel %vm1186, %v1250, %v1252
        %v1254 = vrot.slane %v1146, 3
        %v1255 = vsel %vm1186, %v1252, %v1254
        %v1256 = vrot.slane %v1147, 3
        %v1257 = vsel %vm1186, %v1254, %v1256
        %v1258 = vrot.slane %v1148, 3
        %v1259 = vsel %vm1186, %v1256, %v1258
        %v1296 = vadd.f32 %v1068, %v1189
        %v1297 = vadd.f32 %v1069, %v1191
        %v1298 = vadd.f32 %v1070, %v1193
        %v1299 = vadd.f32 %v1071, %v1195
        %v1300 = vadd.f32 %v1072, %v1197
        %v1301 = vadd.f32 %v1073, %v1199
        %v1302 = vadd.f32 %v1074, %v1201
        %v1303 = vadd.f32 %v1075, %v1203
        %v1304 = vadd.f32 %v1076, %v1205
        %v1305 = vadd.f32 %v1077, %v1207
        %v1306 = vadd.f32 %v1078, %v1209
        %v1307 = vadd.f32 %v1079, %v1211
        %v1308 = vadd.f32 %v1080, %v1213
        %v1309 = vadd.f32 %v1081, %v1215
        %v1310 = vadd.f32 %v1082, %v1217
        %v1311 = vadd.f32 %v1083, %v1219
        %v1312 = vadd.f32 %v1084, %v1221
        %v1313 = vadd.f32 %v1085, %v1223
        %v1314 = vadd.f32 %v1086, %v1225
        %v1315 = vadd.f32 %v1087, %v1227
        %v1316 = vadd.f32 %v1088, %v1229
        %v1317 = vadd.f32 %v1089, %v1231
        %v1318 = vadd.f32 %v1090, %v1233
        %v1319 = vadd.f32 %v1091, %v1235
        %v1320 = vadd.f32 %v1092, %v1237
        %v1321 = vadd.f32 %v1093, %v1239
        %v1322 = vadd.f32 %v1094, %v1241
        %v1323 = vadd.f32 %v1095, %v1243
        %v1324 = vadd.f32 %v1096, %v1245
        %v1325 = vadd.f32 %v1097, %v1247
        %v1326 = vadd.f32 %v1098, %v1249
        %v1327 = vadd.f32 %v1099, %v1251
        %v1328 = vadd.f32 %v1100, %v1253
        %v1329 = vadd.f32 %v1101, %v1255
        %v1330 = vadd.f32 %v1102, %v1257
        %v1331 = vadd.f32 %v1103, %v1259
        %s1332 = scalar_lea.vmem [#allocation5], 5
        %v1333 = vld [vmem:[%s1332] sm:$0x1]
        %v1335 = vlaneseq
        %v1336 = vshrl.u32 %v1335, 7
        %v1337 = vsub.s32 0, %v1336
        %v1338 = vrot.slane %v1333, %v1337
        %v1340 = vmul.f32 %v341, %v1338
        %v1341 = vmul.f32 %v342, %v1338
        %v1342 = vmul.f32 %v343, %v1338
        %v1343 = vmul.f32 %v344, %v1338
        %v1344 = vmul.f32 %v345, %v1338
        %v1345 = vmul.f32 %v346, %v1338
        %v1346 = vmul.f32 %v347, %v1338
        %v1347 = vmul.f32 %v348, %v1338
        %v1348 = vmul.f32 %v349, %v1338
        %v1349 = vmul.f32 %v350, %v1338
        %v1350 = vmul.f32 %v351, %v1338
        %v1351 = vmul.f32 %v352, %v1338
        %v1352 = vmul.f32 %v353, %v1338
        %v1353 = vmul.f32 %v354, %v1338
        %v1354 = vmul.f32 %v355, %v1338
        %v1355 = vmul.f32 %v356, %v1338
        %v1356 = vmul.f32 %v357, %v1338
        %v1357 = vmul.f32 %v358, %v1338
        %v1358 = vmul.f32 %v359, %v1338
        %v1359 = vmul.f32 %v360, %v1338
        %v1360 = vmul.f32 %v361, %v1338
        %v1361 = vmul.f32 %v362, %v1338
        %v1362 = vmul.f32 %v363, %v1338
        %v1363 = vmul.f32 %v364, %v1338
        %v1364 = vmul.f32 %v365, %v1338
        %v1365 = vmul.f32 %v366, %v1338
        %v1366 = vmul.f32 %v367, %v1338
        %v1367 = vmul.f32 %v368, %v1338
        %v1368 = vmul.f32 %v369, %v1338
        %v1369 = vmul.f32 %v370, %v1338
        %v1370 = vmul.f32 %v371, %v1338
        %v1371 = vmul.f32 %v372, %v1338
        %v1372 = vmul.f32 %v373, %v1338
        %v1373 = vmul.f32 %v374, %v1338
        %v1374 = vmul.f32 %v418, %v1338
        %v1375 = vmul.f32 %v875, %v1338
        %v1376 = vmul.f32 %v876, %v1338
        %vm1414 = vcmask 1043456
        %v1415 = vrot.slane %v1340, 4
        %v1416 = vrot.slane %v1341, 4
        %v1417 = vsel %vm1414, %v1415, %v1416
        %v1418 = vrot.slane %v1342, 4
        %v1419 = vsel %vm1414, %v1416, %v1418
        %v1420 = vrot.slane %v1343, 4
        %v1421 = vsel %vm1414, %v1418, %v1420
        %v1422 = vrot.slane %v1344, 4
        %v1423 = vsel %vm1414, %v1420, %v1422
        %v1424 = vrot.slane %v1345, 4
        %v1425 = vsel %vm1414, %v1422, %v1424
        %v1426 = vrot.slane %v1346, 4
        %v1427 = vsel %vm1414, %v1424, %v1426
        %v1428 = vrot.slane %v1347, 4
        %v1429 = vsel %vm1414, %v1426, %v1428
        %v1430 = vrot.slane %v1348, 4
        %v1431 = vsel %vm1414, %v1428, %v1430
        %v1432 = vrot.slane %v1349, 4
        %v1433 = vsel %vm1414, %v1430, %v1432
        %v1434 = vrot.slane %v1350, 4
        %v1435 = vsel %vm1414, %v1432, %v1434
        %v1436 = vrot.slane %v1351, 4
        %v1437 = vsel %vm1414, %v1434, %v1436
        %v1438 = vrot.slane %v1352, 4
        %v1439 = vsel %vm1414, %v1436, %v1438
        %v1440 = vrot.slane %v1353, 4
        %v1441 = vsel %vm1414, %v1438, %v1440
        %v1442 = vrot.slane %v1354, 4
        %v1443 = vsel %vm1414, %v1440, %v1442
        %v1444 = vrot.slane %v1355, 4
        %v1445 = vsel %vm1414, %v1442, %v1444
        %v1446 = vrot.slane %v1356, 4
        %v1447 = vsel %vm1414, %v1444, %v1446
        %v1448 = vrot.slane %v1357, 4
        %v1449 = vsel %vm1414, %v1446, %v1448
        %v1450 = vrot.slane %v1358, 4
        %v1451 = vsel %vm1414, %v1448, %v1450
        %v1452 = vrot.slane %v1359, 4
        %v1453 = vsel %vm1414, %v1450, %v1452
        %v1454 = vrot.slane %v1360, 4
        %v1455 = vsel %vm1414, %v1452, %v1454
        %v1456 = vrot.slane %v1361, 4
        %v1457 = vsel %vm1414, %v1454, %v1456
        %v1458 = vrot.slane %v1362, 4
        %v1459 = vsel %vm1414, %v1456, %v1458
        %v1460 = vrot.slane %v1363, 4
        %v1461 = vsel %vm1414, %v1458, %v1460
        %v1462 = vrot.slane %v1364, 4
        %v1463 = vsel %vm1414, %v1460, %v1462
        %v1464 = vrot.slane %v1365, 4
        %v1465 = vsel %vm1414, %v1462, %v1464
        %v1466 = vrot.slane %v1366, 4
        %v1467 = vsel %vm1414, %v1464, %v1466
        %v1468 = vrot.slane %v1367, 4
        %v1469 = vsel %vm1414, %v1466, %v1468
        %v1470 = vrot.slane %v1368, 4
        %v1471 = vsel %vm1414, %v1468, %v1470
        %v1472 = vrot.slane %v1369, 4
        %v1473 = vsel %vm1414, %v1470, %v1472
        %v1474 = vrot.slane %v1370, 4
        %v1475 = vsel %vm1414, %v1472, %v1474
        %v1476 = vrot.slane %v1371, 4
        %v1477 = vsel %vm1414, %v1474, %v1476
        %v1478 = vrot.slane %v1372, 4
        %v1479 = vsel %vm1414, %v1476, %v1478
        %v1480 = vrot.slane %v1373, 4
        %v1481 = vsel %vm1414, %v1478, %v1480
        %v1482 = vrot.slane %v1374, 4
        %v1483 = vsel %vm1414, %v1480, %v1482
        %v1484 = vrot.slane %v1375, 4
        %v1485 = vsel %vm1414, %v1482, %v1484
        %v1486 = vrot.slane %v1376, 4
        %v1487 = vsel %vm1414, %v1484, %v1486
        %v1524 = vadd.f32 %v1296, %v1417
        %v1525 = vadd.f32 %v1297, %v1419
        %v1526 = vadd.f32 %v1298, %v1421
        %v1527 = vadd.f32 %v1299, %v1423
        %v1528 = vadd.f32 %v1300, %v1425
        %v1529 = vadd.f32 %v1301, %v1427
        %v1530 = vadd.f32 %v1302, %v1429
        %v1531 = vadd.f32 %v1303, %v1431
        %v1532 = vadd.f32 %v1304, %v1433
        %v1533 = vadd.f32 %v1305, %v1435
        %v1534 = vadd.f32 %v1306, %v1437
        %v1535 = vadd.f32 %v1307, %v1439
        %v1536 = vadd.f32 %v1308, %v1441
        %v1537 = vadd.f32 %v1309, %v1443
        %v1538 = vadd.f32 %v1310, %v1445
        %v1539 = vadd.f32 %v1311, %v1447
        %v1540 = vadd.f32 %v1312, %v1449
        %v1541 = vadd.f32 %v1313, %v1451
        %v1542 = vadd.f32 %v1314, %v1453
        %v1543 = vadd.f32 %v1315, %v1455
        %v1544 = vadd.f32 %v1316, %v1457
        %v1545 = vadd.f32 %v1317, %v1459
        %v1546 = vadd.f32 %v1318, %v1461
        %v1547 = vadd.f32 %v1319, %v1463
        %v1548 = vadd.f32 %v1320, %v1465
        %v1549 = vadd.f32 %v1321, %v1467
        %v1550 = vadd.f32 %v1322, %v1469
        %v1551 = vadd.f32 %v1323, %v1471
        %v1552 = vadd.f32 %v1324, %v1473
        %v1553 = vadd.f32 %v1325, %v1475
        %v1554 = vadd.f32 %v1326, %v1477
        %v1555 = vadd.f32 %v1327, %v1479
        %v1556 = vadd.f32 %v1328, %v1481
        %v1557 = vadd.f32 %v1329, %v1483
        %v1558 = vadd.f32 %v1330, %v1485
        %v1559 = vadd.f32 %v1331, %v1487
        %v1560 = vunpack.c.l.bf16 %v337
        %v1561 = vunpack.c.l.bf16 %v338
        %s1562 = scalar_lea.vmem [#allocation5], 6
        %v1563 = vld [vmem:[%s1562] sm:$0x1]
        %v1565 = vlaneseq
        %v1566 = vshrl.u32 %v1565, 7
        %v1567 = vsub.s32 0, %v1566
        %v1568 = vrot.slane %v1563, %v1567
        %v1570 = vmul.f32 %v343, %v1568
        %v1571 = vmul.f32 %v344, %v1568
        %v1572 = vmul.f32 %v345, %v1568
        %v1573 = vmul.f32 %v346, %v1568
        %v1574 = vmul.f32 %v347, %v1568
        %v1575 = vmul.f32 %v348, %v1568
        %v1576 = vmul.f32 %v349, %v1568
        %v1577 = vmul.f32 %v350, %v1568
        %v1578 = vmul.f32 %v351, %v1568
        %v1579 = vmul.f32 %v352, %v1568
        %v1580 = vmul.f32 %v353, %v1568
        %v1581 = vmul.f32 %v354, %v1568
        %v1582 = vmul.f32 %v355, %v1568
        %v1583 = vmul.f32 %v356, %v1568
        %v1584 = vmul.f32 %v357, %v1568
        %v1585 = vmul.f32 %v358, %v1568
        %v1586 = vmul.f32 %v359, %v1568
        %v1587 = vmul.f32 %v360, %v1568
        %v1588 = vmul.f32 %v361, %v1568
        %v1589 = vmul.f32 %v362, %v1568
        %v1590 = vmul.f32 %v363, %v1568
        %v1591 = vmul.f32 %v364, %v1568
        %v1592 = vmul.f32 %v365, %v1568
        %v1593 = vmul.f32 %v366, %v1568
        %v1594 = vmul.f32 %v367, %v1568
        %v1595 = vmul.f32 %v368, %v1568
        %v1596 = vmul.f32 %v369, %v1568
        %v1597 = vmul.f32 %v370, %v1568
        %v1598 = vmul.f32 %v371, %v1568
        %v1599 = vmul.f32 %v372, %v1568
        %v1600 = vmul.f32 %v373, %v1568
        %v1601 = vmul.f32 %v374, %v1568
        %v1602 = vmul.f32 %v418, %v1568
        %v1603 = vmul.f32 %v875, %v1568
        %v1604 = vmul.f32 %v876, %v1568
        %v1605 = vmul.f32 %v1560, %v1568
        %v1606 = vmul.f32 %v1561, %v1568
        %v1644 = vrot.slane %v1570, 4
        %v1645 = vrot.slane %v1571, 4
        %v1646 = vsel %vm1414, %v1644, %v1645
        %v1647 = vrot.slane %v1572, 4
        %v1648 = vsel %vm1414, %v1645, %v1647
        %v1649 = vrot.slane %v1573, 4
        %v1650 = vsel %vm1414, %v1647, %v1649
        %v1651 = vrot.slane %v1574, 4
        %v1652 = vsel %vm1414, %v1649, %v1651
        %v1653 = vrot.slane %v1575, 4
        %v1654 = vsel %vm1414, %v1651, %v1653
        %v1655 = vrot.slane %v1576, 4
        %v1656 = vsel %vm1414, %v1653, %v1655
        %v1657 = vrot.slane %v1577, 4
        %v1658 = vsel %vm1414, %v1655, %v1657
        %v1659 = vrot.slane %v1578, 4
        %v1660 = vsel %vm1414, %v1657, %v1659
        %v1661 = vrot.slane %v1579, 4
        %v1662 = vsel %vm1414, %v1659, %v1661
        %v1663 = vrot.slane %v1580, 4
        %v1664 = vsel %vm1414, %v1661, %v1663
        %v1665 = vrot.slane %v1581, 4
        %v1666 = vsel %vm1414, %v1663, %v1665
        %v1667 = vrot.slane %v1582, 4
        %v1668 = vsel %vm1414, %v1665, %v1667
        %v1669 = vrot.slane %v1583, 4
        %v1670 = vsel %vm1414, %v1667, %v1669
        %v1671 = vrot.slane %v1584, 4
        %v1672 = vsel %vm1414, %v1669, %v1671
        %v1673 = vrot.slane %v1585, 4
        %v1674 = vsel %vm1414, %v1671, %v1673
        %v1675 = vrot.slane %v1586, 4
        %v1676 = vsel %vm1414, %v1673, %v1675
        %v1677 = vrot.slane %v1587, 4
        %v1678 = vsel %vm1414, %v1675, %v1677
        %v1679 = vrot.slane %v1588, 4
        %v1680 = vsel %vm1414, %v1677, %v1679
        %v1681 = vrot.slane %v1589, 4
        %v1682 = vsel %vm1414, %v1679, %v1681
        %v1683 = vrot.slane %v1590, 4
        %v1684 = vsel %vm1414, %v1681, %v1683
        %v1685 = vrot.slane %v1591, 4
        %v1686 = vsel %vm1414, %v1683, %v1685
        %v1687 = vrot.slane %v1592, 4
        %v1688 = vsel %vm1414, %v1685, %v1687
        %v1689 = vrot.slane %v1593, 4
        %v1690 = vsel %vm1414, %v1687, %v1689
        %v1691 = vrot.slane %v1594, 4
        %v1692 = vsel %vm1414, %v1689, %v1691
        %v1693 = vrot.slane %v1595, 4
        %v1694 = vsel %vm1414, %v1691, %v1693
        %v1695 = vrot.slane %v1596, 4
        %v1696 = vsel %vm1414, %v1693, %v1695
        %v1697 = vrot.slane %v1597, 4
        %v1698 = vsel %vm1414, %v1695, %v1697
        %v1699 = vrot.slane %v1598, 4
        %v1700 = vsel %vm1414, %v1697, %v1699
        %v1701 = vrot.slane %v1599, 4
        %v1702 = vsel %vm1414, %v1699, %v1701
        %v1703 = vrot.slane %v1600, 4
        %v1704 = vsel %vm1414, %v1701, %v1703
        %v1705 = vrot.slane %v1601, 4
        %v1706 = vsel %vm1414, %v1703, %v1705
        %v1707 = vrot.slane %v1602, 4
        %v1708 = vsel %vm1414, %v1705, %v1707
        %v1709 = vrot.slane %v1603, 4
        %v1710 = vsel %vm1414, %v1707, %v1709
        %v1711 = vrot.slane %v1604, 4
        %v1712 = vsel %vm1414, %v1709, %v1711
        %v1713 = vrot.slane %v1605, 4
        %v1714 = vsel %vm1414, %v1711, %v1713
        %v1715 = vrot.slane %v1606, 4
        %v1716 = vsel %vm1414, %v1713, %v1715
        %v1753 = vadd.f32 %v1524, %v1646
        %v1754 = vadd.f32 %v1525, %v1648
        %v1755 = vadd.f32 %v1526, %v1650
        %v1756 = vadd.f32 %v1527, %v1652
        %v1757 = vadd.f32 %v1528, %v1654
        %v1758 = vadd.f32 %v1529, %v1656
        %v1759 = vadd.f32 %v1530, %v1658
        %v1760 = vadd.f32 %v1531, %v1660
        %v1761 = vadd.f32 %v1532, %v1662
        %v1762 = vadd.f32 %v1533, %v1664
        %v1763 = vadd.f32 %v1534, %v1666
        %v1764 = vadd.f32 %v1535, %v1668
        %v1765 = vadd.f32 %v1536, %v1670
        %v1766 = vadd.f32 %v1537, %v1672
        %v1767 = vadd.f32 %v1538, %v1674
        %v1768 = vadd.f32 %v1539, %v1676
        %v1769 = vadd.f32 %v1540, %v1678
        %v1770 = vadd.f32 %v1541, %v1680
        %v1771 = vadd.f32 %v1542, %v1682
        %v1772 = vadd.f32 %v1543, %v1684
        %v1773 = vadd.f32 %v1544, %v1686
        %v1774 = vadd.f32 %v1545, %v1688
        %v1775 = vadd.f32 %v1546, %v1690
        %v1776 = vadd.f32 %v1547, %v1692
        %v1777 = vadd.f32 %v1548, %v1694
        %v1778 = vadd.f32 %v1549, %v1696
        %v1779 = vadd.f32 %v1550, %v1698
        %v1780 = vadd.f32 %v1551, %v1700
        %v1781 = vadd.f32 %v1552, %v1702
        %v1782 = vadd.f32 %v1553, %v1704
        %v1783 = vadd.f32 %v1554, %v1706
        %v1784 = vadd.f32 %v1555, %v1708
        %v1785 = vadd.f32 %v1556, %v1710
        %v1786 = vadd.f32 %v1557, %v1712
        %v1787 = vadd.f32 %v1558, %v1714
        %v1788 = vadd.f32 %v1559, %v1716
        %s1789 = scalar_lea.vmem [#allocation5], 7
        %v1790 = vld [vmem:[%s1789] sm:$0x1]
        %v1792 = vlaneseq
        %v1793 = vshrl.u32 %v1792, 7
        %v1794 = vsub.s32 0, %v1793
        %v1795 = vrot.slane %v1790, %v1794
        %v1797 = vmul.f32 %v343, %v1795
        %v1798 = vmul.f32 %v344, %v1795
        %v1799 = vmul.f32 %v345, %v1795
        %v1800 = vmul.f32 %v346, %v1795
        %v1801 = vmul.f32 %v347, %v1795
        %v1802 = vmul.f32 %v348, %v1795
        %v1803 = vmul.f32 %v349, %v1795
        %v1804 = vmul.f32 %v350, %v1795
        %v1805 = vmul.f32 %v351, %v1795
        %v1806 = vmul.f32 %v352, %v1795
        %v1807 = vmul.f32 %v353, %v1795
        %v1808 = vmul.f32 %v354, %v1795
        %v1809 = vmul.f32 %v355, %v1795
        %v1810 = vmul.f32 %v356, %v1795
        %v1811 = vmul.f32 %v357, %v1795
        %v1812 = vmul.f32 %v358, %v1795
        %v1813 = vmul.f32 %v359, %v1795
        %v1814 = vmul.f32 %v360, %v1795
        %v1815 = vmul.f32 %v361, %v1795
        %v1816 = vmul.f32 %v362, %v1795
        %v1817 = vmul.f32 %v363, %v1795
        %v1818 = vmul.f32 %v364, %v1795
        %v1819 = vmul.f32 %v365, %v1795
        %v1820 = vmul.f32 %v366, %v1795
        %v1821 = vmul.f32 %v367, %v1795
        %v1822 = vmul.f32 %v368, %v1795
        %v1823 = vmul.f32 %v369, %v1795
        %v1824 = vmul.f32 %v370, %v1795
        %v1825 = vmul.f32 %v371, %v1795
        %v1826 = vmul.f32 %v372, %v1795
        %v1827 = vmul.f32 %v373, %v1795
        %v1828 = vmul.f32 %v374, %v1795
        %v1829 = vmul.f32 %v418, %v1795
        %v1830 = vmul.f32 %v875, %v1795
        %v1831 = vmul.f32 %v876, %v1795
        %v1832 = vmul.f32 %v1560, %v1795
        %v1833 = vmul.f32 %v1561, %v1795
        %vm1871 = vcmask 1042432
        %v1872 = vrot.slane %v1797, 5
        %v1873 = vrot.slane %v1798, 5
        %v1874 = vsel %vm1871, %v1872, %v1873
        %v1875 = vrot.slane %v1799, 5
        %v1876 = vsel %vm1871, %v1873, %v1875
        %v1877 = vrot.slane %v1800, 5
        %v1878 = vsel %vm1871, %v1875, %v1877
        %v1879 = vrot.slane %v1801, 5
        %v1880 = vsel %vm1871, %v1877, %v1879
        %v1881 = vrot.slane %v1802, 5
        %v1882 = vsel %vm1871, %v1879, %v1881
        %v1883 = vrot.slane %v1803, 5
        %v1884 = vsel %vm1871, %v1881, %v1883
        %v1885 = vrot.slane %v1804, 5
        %v1886 = vsel %vm1871, %v1883, %v1885
        %v1887 = vrot.slane %v1805, 5
        %v1888 = vsel %vm1871, %v1885, %v1887
        %v1889 = vrot.slane %v1806, 5
        %v1890 = vsel %vm1871, %v1887, %v1889
        %v1891 = vrot.slane %v1807, 5
        %v1892 = vsel %vm1871, %v1889, %v1891
        %v1893 = vrot.slane %v1808, 5
        %v1894 = vsel %vm1871, %v1891, %v1893
        %v1895 = vrot.slane %v1809, 5
        %v1896 = vsel %vm1871, %v1893, %v1895
        %v1897 = vrot.slane %v1810, 5
        %v1898 = vsel %vm1871, %v1895, %v1897
        %v1899 = vrot.slane %v1811, 5
        %v1900 = vsel %vm1871, %v1897, %v1899
        %v1901 = vrot.slane %v1812, 5
        %v1902 = vsel %vm1871, %v1899, %v1901
        %v1903 = vrot.slane %v1813, 5
        %v1904 = vsel %vm1871, %v1901, %v1903
        %v1905 = vrot.slane %v1814, 5
        %v1906 = vsel %vm1871, %v1903, %v1905
        %v1907 = vrot.slane %v1815, 5
        %v1908 = vsel %vm1871, %v1905, %v1907
        %v1909 = vrot.slane %v1816, 5
        %v1910 = vsel %vm1871, %v1907, %v1909
        %v1911 = vrot.slane %v1817, 5
        %v1912 = vsel %vm1871, %v1909, %v1911
        %v1913 = vrot.slane %v1818, 5
        %v1914 = vsel %vm1871, %v1911, %v1913
        %v1915 = vrot.slane %v1819, 5
        %v1916 = vsel %vm1871, %v1913, %v1915
        %v1917 = vrot.slane %v1820, 5
        %v1918 = vsel %vm1871, %v1915, %v1917
        %v1919 = vrot.slane %v1821, 5
        %v1920 = vsel %vm1871, %v1917, %v1919
        %v1921 = vrot.slane %v1822, 5
        %v1922 = vsel %vm1871, %v1919, %v1921
        %v1923 = vrot.slane %v1823, 5
        %v1924 = vsel %vm1871, %v1921, %v1923
        %v1925 = vrot.slane %v1824, 5
        %v1926 = vsel %vm1871, %v1923, %v1925
        %v1927 = vrot.slane %v1825, 5
        %v1928 = vsel %vm1871, %v1925, %v1927
        %v1929 = vrot.slane %v1826, 5
        %v1930 = vsel %vm1871, %v1927, %v1929
        %v1931 = vrot.slane %v1827, 5
        %v1932 = vsel %vm1871, %v1929, %v1931
        %v1933 = vrot.slane %v1828, 5
        %v1934 = vsel %vm1871, %v1931, %v1933
        %v1935 = vrot.slane %v1829, 5
        %v1936 = vsel %vm1871, %v1933, %v1935
        %v1937 = vrot.slane %v1830, 5
        %v1938 = vsel %vm1871, %v1935, %v1937
        %v1939 = vrot.slane %v1831, 5
        %v1940 = vsel %vm1871, %v1937, %v1939
        %v1941 = vrot.slane %v1832, 5
        %v1942 = vsel %vm1871, %v1939, %v1941
        %v1943 = vrot.slane %v1833, 5
        %v1944 = vsel %vm1871, %v1941, %v1943
        %v1981 = vadd.f32 %v1753, %v1874
        %v1982 = vadd.f32 %v1754, %v1876
        %v1983 = vadd.f32 %v1755, %v1878
        %v1984 = vadd.f32 %v1756, %v1880
        %v1985 = vadd.f32 %v1757, %v1882
        %v1986 = vadd.f32 %v1758, %v1884
        %v1987 = vadd.f32 %v1759, %v1886
        %v1988 = vadd.f32 %v1760, %v1888
        %v1989 = vadd.f32 %v1761, %v1890
        %v1990 = vadd.f32 %v1762, %v1892
        %v1991 = vadd.f32 %v1763, %v1894
        %v1992 = vadd.f32 %v1764, %v1896
        %v1993 = vadd.f32 %v1765, %v1898
        %v1994 = vadd.f32 %v1766, %v1900
        %v1995 = vadd.f32 %v1767, %v1902
        %v1996 = vadd.f32 %v1768, %v1904
        %v1997 = vadd.f32 %v1769, %v1906
        %v1998 = vadd.f32 %v1770, %v1908
        %v1999 = vadd.f32 %v1771, %v1910
        %v2000 = vadd.f32 %v1772, %v1912
        %v2001 = vadd.f32 %v1773, %v1914
        %v2002 = vadd.f32 %v1774, %v1916
        %v2003 = vadd.f32 %v1775, %v1918
        %v2004 = vadd.f32 %v1776, %v1920
        %v2005 = vadd.f32 %v1777, %v1922
        %v2006 = vadd.f32 %v1778, %v1924
        %v2007 = vadd.f32 %v1779, %v1926
        %v2008 = vadd.f32 %v1780, %v1928
        %v2009 = vadd.f32 %v1781, %v1930
        %v2010 = vadd.f32 %v1782, %v1932
        %v2011 = vadd.f32 %v1783, %v1934
        %v2012 = vadd.f32 %v1784, %v1936
        %v2013 = vadd.f32 %v1785, %v1938
        %v2014 = vadd.f32 %v1786, %v1940
        %v2015 = vadd.f32 %v1787, %v1942
        %v2016 = vadd.f32 %v1788, %v1944
        %s2017 = scalar_lea.vmem [#allocation5], 8
        %v2018 = vld [vmem:[%s2017] sm:$0x1]
        %v2020 = vlaneseq
        %v2021 = vshrl.u32 %v2020, 7
        %v2022 = vsub.s32 0, %v2021
        %v2023 = vrot.slane %v2018, %v2022
        %v2025 = vmul.f32 %v343, %v2023
        %v2026 = vmul.f32 %v344, %v2023
        %v2027 = vmul.f32 %v345, %v2023
        %v2028 = vmul.f32 %v346, %v2023
        %v2029 = vmul.f32 %v347, %v2023
        %v2030 = vmul.f32 %v348, %v2023
        %v2031 = vmul.f32 %v349, %v2023
        %v2032 = vmul.f32 %v350, %v2023
        %v2033 = vmul.f32 %v351, %v2023
        %v2034 = vmul.f32 %v352, %v2023
        %v2035 = vmul.f32 %v353, %v2023
        %v2036 = vmul.f32 %v354, %v2023
        %v2037 = vmul.f32 %v355, %v2023
        %v2038 = vmul.f32 %v356, %v2023
        %v2039 = vmul.f32 %v357, %v2023
        %v2040 = vmul.f32 %v358, %v2023
        %v2041 = vmul.f32 %v359, %v2023
        %v2042 = vmul.f32 %v360, %v2023
        %v2043 = vmul.f32 %v361, %v2023
        %v2044 = vmul.f32 %v362, %v2023
        %v2045 = vmul.f32 %v363, %v2023
        %v2046 = vmul.f32 %v364, %v2023
        %v2047 = vmul.f32 %v365, %v2023
        %v2048 = vmul.f32 %v366, %v2023
        %v2049 = vmul.f32 %v367, %v2023
        %v2050 = vmul.f32 %v368, %v2023
        %v2051 = vmul.f32 %v369, %v2023
        %v2052 = vmul.f32 %v370, %v2023
        %v2053 = vmul.f32 %v371, %v2023
        %v2054 = vmul.f32 %v372, %v2023
        %v2055 = vmul.f32 %v373, %v2023
        %v2056 = vmul.f32 %v374, %v2023
        %v2057 = vmul.f32 %v418, %v2023
        %v2058 = vmul.f32 %v875, %v2023
        %v2059 = vmul.f32 %v876, %v2023
        %v2060 = vmul.f32 %v1560, %v2023
        %v2061 = vmul.f32 %v1561, %v2023
        %vm2099 = vcmask 1041408
        %v2100 = vrot.slane %v2025, 6
        %v2101 = vrot.slane %v2026, 6
        %v2102 = vsel %vm2099, %v2100, %v2101
        %v2103 = vrot.slane %v2027, 6
        %v2104 = vsel %vm2099, %v2101, %v2103
        %v2105 = vrot.slane %v2028, 6
        %v2106 = vsel %vm2099, %v2103, %v2105
        %v2107 = vrot.slane %v2029, 6
        %v2108 = vsel %vm2099, %v2105, %v2107
        %v2109 = vrot.slane %v2030, 6
        %v2110 = vsel %vm2099, %v2107, %v2109
        %v2111 = vrot.slane %v2031, 6
        %v2112 = vsel %vm2099, %v2109, %v2111
        %v2113 = vrot.slane %v2032, 6
        %v2114 = vsel %vm2099, %v2111, %v2113
        %v2115 = vrot.slane %v2033, 6
        %v2116 = vsel %vm2099, %v2113, %v2115
        %v2117 = vrot.slane %v2034, 6
        %v2118 = vsel %vm2099, %v2115, %v2117
        %v2119 = vrot.slane %v2035, 6
        %v2120 = vsel %vm2099, %v2117, %v2119
        %v2121 = vrot.slane %v2036, 6
        %v2122 = vsel %vm2099, %v2119, %v2121
        %v2123 = vrot.slane %v2037, 6
        %v2124 = vsel %vm2099, %v2121, %v2123
        %v2125 = vrot.slane %v2038, 6
        %v2126 = vsel %vm2099, %v2123, %v2125
        %v2127 = vrot.slane %v2039, 6
        %v2128 = vsel %vm2099, %v2125, %v2127
        %v2129 = vrot.slane %v2040, 6
        %v2130 = vsel %vm2099, %v2127, %v2129
        %v2131 = vrot.slane %v2041, 6
        %v2132 = vsel %vm2099, %v2129, %v2131
        %v2133 = vrot.slane %v2042, 6
        %v2134 = vsel %vm2099, %v2131, %v2133
        %v2135 = vrot.slane %v2043, 6
        %v2136 = vsel %vm2099, %v2133, %v2135
        %v2137 = vrot.slane %v2044, 6
        %v2138 = vsel %vm2099, %v2135, %v2137
        %v2139 = vrot.slane %v2045, 6
        %v2140 = vsel %vm2099, %v2137, %v2139
        %v2141 = vrot.slane %v2046, 6
        %v2142 = vsel %vm2099, %v2139, %v2141
        %v2143 = vrot.slane %v2047, 6
        %v2144 = vsel %vm2099, %v2141, %v2143
        %v2145 = vrot.slane %v2048, 6
        %v2146 = vsel %vm2099, %v2143, %v2145
        %v2147 = vrot.slane %v2049, 6
        %v2148 = vsel %vm2099, %v2145, %v2147
        %v2149 = vrot.slane %v2050, 6
        %v2150 = vsel %vm2099, %v2147, %v2149
        %v2151 = vrot.slane %v2051, 6
        %v2152 = vsel %vm2099, %v2149, %v2151
        %v2153 = vrot.slane %v2052, 6
        %v2154 = vsel %vm2099, %v2151, %v2153
        %v2155 = vrot.slane %v2053, 6
        %v2156 = vsel %vm2099, %v2153, %v2155
        %v2157 = vrot.slane %v2054, 6
        %v2158 = vsel %vm2099, %v2155, %v2157
        %v2159 = vrot.slane %v2055, 6
        %v2160 = vsel %vm2099, %v2157, %v2159
        %v2161 = vrot.slane %v2056, 6
        %v2162 = vsel %vm2099, %v2159, %v2161
        %v2163 = vrot.slane %v2057, 6
        %v2164 = vsel %vm2099, %v2161, %v2163
        %v2165 = vrot.slane %v2058, 6
        %v2166 = vsel %vm2099, %v2163, %v2165
        %v2167 = vrot.slane %v2059, 6
        %v2168 = vsel %vm2099, %v2165, %v2167
        %v2169 = vrot.slane %v2060, 6
        %v2170 = vsel %vm2099, %v2167, %v2169
        %v2171 = vrot.slane %v2061, 6
        %v2172 = vsel %vm2099, %v2169, %v2171
        %v2209 = vadd.f32 %v1981, %v2102
        %v2210 = vadd.f32 %v1982, %v2104
        %v2211 = vadd.f32 %v1983, %v2106
        %v2212 = vadd.f32 %v1984, %v2108
        %v2213 = vadd.f32 %v1985, %v2110
        %v2214 = vadd.f32 %v1986, %v2112
        %v2215 = vadd.f32 %v1987, %v2114
        %v2216 = vadd.f32 %v1988, %v2116
        %v2217 = vadd.f32 %v1989, %v2118
        %v2218 = vadd.f32 %v1990, %v2120
        %v2219 = vadd.f32 %v1991, %v2122
        %v2220 = vadd.f32 %v1992, %v2124
        %v2221 = vadd.f32 %v1993, %v2126
        %v2222 = vadd.f32 %v1994, %v2128
        %v2223 = vadd.f32 %v1995, %v2130
        %v2224 = vadd.f32 %v1996, %v2132
        %v2225 = vadd.f32 %v1997, %v2134
        %v2226 = vadd.f32 %v1998, %v2136
        %v2227 = vadd.f32 %v1999, %v2138
        %v2228 = vadd.f32 %v2000, %v2140
        %v2229 = vadd.f32 %v2001, %v2142
        %v2230 = vadd.f32 %v2002, %v2144
        %v2231 = vadd.f32 %v2003, %v2146
        %v2232 = vadd.f32 %v2004, %v2148
        %v2233 = vadd.f32 %v2005, %v2150
        %v2234 = vadd.f32 %v2006, %v2152
        %v2235 = vadd.f32 %v2007, %v2154
        %v2236 = vadd.f32 %v2008, %v2156
        %v2237 = vadd.f32 %v2009, %v2158
        %v2238 = vadd.f32 %v2010, %v2160
        %v2239 = vadd.f32 %v2011, %v2162
        %v2240 = vadd.f32 %v2012, %v2164
        %v2241 = vadd.f32 %v2013, %v2166
        %v2242 = vadd.f32 %v2014, %v2168
        %v2243 = vadd.f32 %v2015, %v2170
        %v2244 = vadd.f32 %v2016, %v2172
        %v2245 = vld [vmem:[#allocation7] sm:$0x1]
        %v2247 = vlaneseq
        %v2248 = vshrl.u32 %v2247, 7
        %v2249 = vsub.s32 0, %v2248
        %v2250 = vrot.slane %v2245, %v2249
        %v2252 = vadd.f32 %v2209, %v2250
        %v2253 = vadd.f32 %v2210, %v2250
        %v2254 = vadd.f32 %v2211, %v2250
        %v2255 = vadd.f32 %v2212, %v2250
        %v2256 = vadd.f32 %v2213, %v2250
        %v2257 = vadd.f32 %v2214, %v2250
        %v2258 = vadd.f32 %v2215, %v2250
        %v2259 = vadd.f32 %v2216, %v2250
        %v2260 = vadd.f32 %v2217, %v2250
        %v2261 = vadd.f32 %v2218, %v2250
        %v2262 = vadd.f32 %v2219, %v2250
        %v2263 = vadd.f32 %v2220, %v2250
        %v2264 = vadd.f32 %v2221, %v2250
        %v2265 = vadd.f32 %v2222, %v2250
        %v2266 = vadd.f32 %v2223, %v2250
        %v2267 = vadd.f32 %v2224, %v2250
        %v2268 = vadd.f32 %v2225, %v2250
        %v2269 = vadd.f32 %v2226, %v2250
        %v2270 = vadd.f32 %v2227, %v2250
        %v2271 = vadd.f32 %v2228, %v2250
        %v2272 = vadd.f32 %v2229, %v2250
        %v2273 = vadd.f32 %v2230, %v2250
        %v2274 = vadd.f32 %v2231, %v2250
        %v2275 = vadd.f32 %v2232, %v2250
        %v2276 = vadd.f32 %v2233, %v2250
        %v2277 = vadd.f32 %v2234, %v2250
        %v2278 = vadd.f32 %v2235, %v2250
        %v2279 = vadd.f32 %v2236, %v2250
        %v2280 = vadd.f32 %v2237, %v2250
        %v2281 = vadd.f32 %v2238, %v2250
        %v2282 = vadd.f32 %v2239, %v2250
        %v2283 = vadd.f32 %v2240, %v2250
        %v2284 = vadd.f32 %v2241, %v2250
        %v2285 = vadd.f32 %v2242, %v2250
        %v2286 = vadd.f32 %v2243, %v2250
        %v2287 = vadd.f32 %v2244, %v2250
        %v2288 = vmax.f32 %v2252, 0.0
        %v2289 = vmax.f32 %v2253, 0.0
        %v2290 = vmax.f32 %v2254, 0.0
        %v2291 = vmax.f32 %v2255, 0.0
        %v2292 = vmax.f32 %v2256, 0.0
        %v2293 = vmax.f32 %v2257, 0.0
        %v2294 = vmax.f32 %v2258, 0.0
        %v2295 = vmax.f32 %v2259, 0.0
        %v2296 = vmax.f32 %v2260, 0.0
        %v2297 = vmax.f32 %v2261, 0.0
        %v2298 = vmax.f32 %v2262, 0.0
        %v2299 = vmax.f32 %v2263, 0.0
        %v2300 = vmax.f32 %v2264, 0.0
        %v2301 = vmax.f32 %v2265, 0.0
        %v2302 = vmax.f32 %v2266, 0.0
        %v2303 = vmax.f32 %v2267, 0.0
        %v2304 = vmax.f32 %v2268, 0.0
        %v2305 = vmax.f32 %v2269, 0.0
        %v2306 = vmax.f32 %v2270, 0.0
        %v2307 = vmax.f32 %v2271, 0.0
        %v2308 = vmax.f32 %v2272, 0.0
        %v2309 = vmax.f32 %v2273, 0.0
        %v2310 = vmax.f32 %v2274, 0.0
        %v2311 = vmax.f32 %v2275, 0.0
        %v2312 = vmax.f32 %v2276, 0.0
        %v2313 = vmax.f32 %v2277, 0.0
        %v2314 = vmax.f32 %v2278, 0.0
        %v2315 = vmax.f32 %v2279, 0.0
        %v2316 = vmax.f32 %v2280, 0.0
        %v2317 = vmax.f32 %v2281, 0.0
        %v2318 = vmax.f32 %v2282, 0.0
        %v2319 = vmax.f32 %v2283, 0.0
        %v2320 = vmax.f32 %v2284, 0.0
        %v2321 = vmax.f32 %v2285, 0.0
        %v2322 = vmax.f32 %v2286, 0.0
        %v2323 = vmax.f32 %v2287, 0.0
        %v2324 = vmin.f32 %v2288, 6.0
        %v2325 = vmin.f32 %v2289, 6.0
        %v2326 = vmin.f32 %v2290, 6.0
        %v2327 = vmin.f32 %v2291, 6.0
        %v2328 = vmin.f32 %v2292, 6.0
        %v2329 = vmin.f32 %v2293, 6.0
        %v2330 = vmin.f32 %v2294, 6.0
        %v2331 = vmin.f32 %v2295, 6.0
        %v2332 = vmin.f32 %v2296, 6.0
        %v2333 = vmin.f32 %v2297, 6.0
        %v2334 = vmin.f32 %v2298, 6.0
        %v2335 = vmin.f32 %v2299, 6.0
        %v2336 = vmin.f32 %v2300, 6.0
        %v2337 = vmin.f32 %v2301, 6.0
        %v2338 = vmin.f32 %v2302, 6.0
        %v2339 = vmin.f32 %v2303, 6.0
        %v2340 = vmin.f32 %v2304, 6.0
        %v2341 = vmin.f32 %v2305, 6.0
        %v2342 = vmin.f32 %v2306, 6.0
        %v2343 = vmin.f32 %v2307, 6.0
        %v2344 = vmin.f32 %v2308, 6.0
        %v2345 = vmin.f32 %v2309, 6.0
        %v2346 = vmin.f32 %v2310, 6.0
        %v2347 = vmin.f32 %v2311, 6.0
        %v2348 = vmin.f32 %v2312, 6.0
        %v2349 = vmin.f32 %v2313, 6.0
        %v2350 = vmin.f32 %v2314, 6.0
        %v2351 = vmin.f32 %v2315, 6.0
        %v2352 = vmin.f32 %v2316, 6.0
        %v2353 = vmin.f32 %v2317, 6.0
        %v2354 = vmin.f32 %v2318, 6.0
        %v2355 = vmin.f32 %v2319, 6.0
        %v2356 = vmin.f32 %v2320, 6.0
        %v2357 = vmin.f32 %v2321, 6.0
        %v2358 = vmin.f32 %v2322, 6.0
        %v2359 = vmin.f32 %v2323, 6.0
        %v2360 = vpack.c.bf16 %v2325, %v2324
        %v2361 = vpack.c.bf16 %v2327, %v2326
        %v2362 = vpack.c.bf16 %v2329, %v2328
        %v2363 = vpack.c.bf16 %v2331, %v2330
        %v2364 = vpack.c.bf16 %v2333, %v2332
        %v2365 = vpack.c.bf16 %v2335, %v2334
        %v2366 = vpack.c.bf16 %v2337, %v2336
        %v2367 = vpack.c.bf16 %v2339, %v2338
        %v2368 = vpack.c.bf16 %v2341, %v2340
        %v2369 = vpack.c.bf16 %v2343, %v2342
        %v2370 = vpack.c.bf16 %v2345, %v2344
        %v2371 = vpack.c.bf16 %v2347, %v2346
        %v2372 = vpack.c.bf16 %v2349, %v2348
        %v2373 = vpack.c.bf16 %v2351, %v2350
        %v2374 = vpack.c.bf16 %v2353, %v2352
        %v2375 = vpack.c.bf16 %v2355, %v2354
        %v2376 = vpack.c.bf16 %v2357, %v2356
        %v2377 = vpack.c.bf16 %v2359, %v2358
        %v2378 = vld [vmem:[#allocation8] sm:$0xf]
        %v2379 = vld [vmem:[#allocation8 + $0x4] sm:$0xf]
        %v2380 = vld [vmem:[#allocation8 + $0x8] sm:$0xf]
        %v2381 = vld [vmem:[#allocation8 + $0xc] sm:$0xf]
        %v2382 = vld [vmem:[#allocation8 + $0x10] sm:$0xf]
        %v2383 = vld [vmem:[#allocation8 + $0x14] sm:$0xf]
        %v2384 = vld [vmem:[#allocation8 + $0x18] sm:$0xf]
        %v2385 = vld [vmem:[#allocation8 + $0x1c] sm:$0xf]
        %v2386 = vld [vmem:[#allocation8 + $0x20] sm:$0xf]
        %v2387 = vld [vmem:[#allocation8 + $0x24] sm:$0xf]
        %v2388 = vld [vmem:[#allocation8 + $0x28] sm:$0xf]
        %v2389 = vld [vmem:[#allocation8 + $0x2c] sm:$0xf]
        %v2390 = vld [vmem:[#allocation8 + $0x30] sm:$0xf]
        %v2391 = vld [vmem:[#allocation8 + $0x34] sm:$0xf]
        %v2392 = vld [vmem:[#allocation8 + $0x38] sm:$0xf]
        %v2393 = vld [vmem:[#allocation8 + $0x3c] sm:$0xf]
        %v2394 = vld [vmem:[#allocation10] sm:$0x1]
        %v2396 = vlaneseq
        %v2397 = vshrl.u32 %v2396, 7
        %v2398 = vsub.s32 0, %v2397
        %v2399 = vrot.slane %v2394, %v2398
        %v2417 = vunpack.c.l.b16 %v2378
        %v2418 = vunpack.c.l.b16 %v2379
        %v2419 = vunpack.c.l.b16 %v2380
        %v2420 = vunpack.c.l.b16 %v2381
        %v2421 = vunpack.c.l.b16 %v2382
        %v2422 = vunpack.c.l.b16 %v2383
        %v2423 = vunpack.c.l.b16 %v2384
        %v2424 = vunpack.c.l.b16 %v2385
        %v2425 = vunpack.c.l.b16 %v2386
        %v2426 = vunpack.c.l.b16 %v2387
        %v2427 = vunpack.c.l.b16 %v2388
        %v2428 = vunpack.c.l.b16 %v2389
        %v2429 = vunpack.c.l.b16 %v2390
        %v2430 = vunpack.c.l.b16 %v2391
        %v2431 = vunpack.c.l.b16 %v2392
        %v2432 = vunpack.c.l.b16 %v2393
        %v2433 = vpack.c.b16 %v2418, %v2417
        %v2434 = vpack.c.b16 %v2420, %v2419
        %v2435 = vpack.c.b16 %v2422, %v2421
        %v2436 = vpack.c.b16 %v2424, %v2423
        %v2437 = vpack.c.b16 %v2426, %v2425
        %v2438 = vpack.c.b16 %v2428, %v2427
        %v2439 = vpack.c.b16 %v2430, %v2429
        %v2440 = vpack.c.b16 %v2432, %v2431
        %2449 = vmatprep.subr.bf16.mxu0 0
        %2450 = vmatpush1.bf16.msra.mxu0 %v2433
        %2451 = vmatprep.subr.bf16.mxu0 0
        %2452 = vmatpush1.bf16.msra.mxu0 %v2434
        %2453 = vmatprep.subr.bf16.mxu0 0
        %2454 = vmatpush1.bf16.msra.mxu0 %v2435
        %2455 = vmatprep.subr.bf16.mxu0 0
        %2456 = vmatpush1.bf16.msra.mxu0 %v2436
        %2457 = vmatprep.subr.bf16.mxu0 0
        %2458 = vmatpush1.bf16.msra.mxu0 %v2437
        %2459 = vmatprep.subr.bf16.mxu0 0
        %2460 = vmatpush1.bf16.msra.mxu0 %v2438
        %2461 = vmatprep.subr.bf16.mxu0 0
        %2462 = vmatpush1.bf16.msra.mxu0 %v2439
        %2463 = vmatprep.subr.bf16.mxu0 0
        %2464 = vmatpush1.bf16.msra.mxu0 %v2440
        %2465 = vmatprep.subr.bf16.mxu0 0
        %2466 = vmatpush1.bf16.msra.mxu0 0
        %2467 = vmatprep.subr.bf16.mxu0 0
        %2468 = vmatpush1.bf16.msra.mxu0 0
        %2469 = vmatprep.subr.bf16.mxu0 0
        %2470 = vmatpush1.bf16.msra.mxu0 0
        %2471 = vmatprep.subr.bf16.mxu0 0
        %2472 = vmatpush1.bf16.msra.mxu0 0
        %2473 = vmatprep.subr.bf16.mxu0 0
        %2474 = vmatpush1.bf16.msra.mxu0 0
        %2475 = vmatprep.subr.bf16.mxu0 0
        %2476 = vmatpush1.bf16.msra.mxu0 0
        %2477 = vmatprep.subr.bf16.mxu0 0
        %2478 = vmatpush1.bf16.msra.mxu0 0
        %2479 = vmatprep.subr.bf16.mxu0 0
        %2480 = vmatpush1.bf16.msra.mxu0 0
        %2481 = vmatprep.mubr.bf16.mxu0 0
        %2482 = vmatmul.mubr.bf16.gmra.mrb[0].mxu0 %v2360
        %v2483 = vpop.f32.mrb[0].mxu0
        %v2484 = vadd.f32 %v2399, %v2483
        %v2485 = vpop.f32.mrb[0].mxu0
        %v2486 = vpop.f32.mrb[0].mxu0
        %v2487 = vadd.f32 %v2399, %v2486
        %v2488 = vpop.f32.mrb[0].mxu0
        %2489 = vmatprep.mubr.bf16.mxu0 0
        %2490 = vmatmul.mubr.bf16.gmra.mrb[0].mxu0 %v2361
        %v2491 = vpop.f32.mrb[0].mxu0
        %v2492 = vadd.f32 %v2399, %v2491
        %v2493 = vpop.f32.mrb[0].mxu0
        %v2494 = vpop.f32.mrb[0].mxu0
        %v2495 = vadd.f32 %v2399, %v2494
        %v2496 = vpop.f32.mrb[0].mxu0
        %2497 = vmatprep.mubr.bf16.mxu0 0
        %2498 = vmatmul.mubr.bf16.gmra.mrb[0].mxu0 %v2362
        %v2499 = vpop.f32.mrb[0].mxu0
        %v2500 = vadd.f32 %v2399, %v2499
        %v2501 = vpop.f32.mrb[0].mxu0
        %v2502 = vpop.f32.mrb[0].mxu0
        %v2503 = vadd.f32 %v2399, %v2502
        %v2504 = vpop.f32.mrb[0].mxu0
        %2505 = vmatprep.mubr.bf16.mxu0 0
        %2506 = vmatmul.mubr.bf16.gmra.mrb[0].mxu0 %v2363
        %v2507 = vpop.f32.mrb[0].mxu0
        %v2508 = vadd.f32 %v2399, %v2507
        %v2509 = vpop.f32.mrb[0].mxu0
        %v2510 = vpop.f32.mrb[0].mxu0
        %v2511 = vadd.f32 %v2399, %v2510
        %v2512 = vpop.f32.mrb[0].mxu0
        %2513 = vmatprep.mubr.bf16.mxu0 0
        %2514 = vmatmul.mubr.bf16.gmra.mrb[0].mxu0 %v2364
        %v2515 = vpop.f32.mrb[0].mxu0
        %v2516 = vadd.f32 %v2399, %v2515
        %v2517 = vpop.f32.mrb[0].mxu0
        %v2518 = vpop.f32.mrb[0].mxu0
        %v2519 = vadd.f32 %v2399, %v2518
        %v2520 = vpop.f32.mrb[0].mxu0
        %2521 = vmatprep.mubr.bf16.mxu0 0
        %2522 = vmatmul.mubr.bf16.gmra.mrb[0].mxu0 %v2365
        %v2523 = vpop.f32.mrb[0].mxu0
        %v2524 = vadd.f32 %v2399, %v2523
        %v2525 = vpop.f32.mrb[0].mxu0
        %v2526 = vpop.f32.mrb[0].mxu0
        %v2527 = vadd.f32 %v2399, %v2526
        %v2528 = vpop.f32.mrb[0].mxu0
        %2529 = vmatprep.mubr.bf16.mxu0 0
        %2530 = vmatmul.mubr.bf16.gmra.mrb[0].mxu0 %v2366
        %v2531 = vpop.f32.mrb[0].mxu0
        %v2532 = vadd.f32 %v2399, %v2531
        %v2533 = vpop.f32.mrb[0].mxu0
        %v2534 = vpop.f32.mrb[0].mxu0
        %v2535 = vadd.f32 %v2399, %v2534
        %v2536 = vpop.f32.mrb[0].mxu0
        %2537 = vmatprep.mubr.bf16.mxu0 0
        %2538 = vmatmul.mubr.bf16.gmra.mrb[0].mxu0 %v2367
        %v2539 = vpop.f32.mrb[0].mxu0
        %v2540 = vadd.f32 %v2399, %v2539
        %v2541 = vpop.f32.mrb[0].mxu0
        %v2542 = vpop.f32.mrb[0].mxu0
        %v2543 = vadd.f32 %v2399, %v2542
        %v2544 = vpop.f32.mrb[0].mxu0
        %2545 = vmatprep.mubr.bf16.mxu0 0
        %2546 = vmatmul.mubr.bf16.gmra.mrb[0].mxu0 %v2368
        %v2547 = vpop.f32.mrb[0].mxu0
        %v2548 = vadd.f32 %v2399, %v2547
        %v2549 = vpop.f32.mrb[0].mxu0
        %v2550 = vpop.f32.mrb[0].mxu0
        %v2551 = vadd.f32 %v2399, %v2550
        %v2552 = vpop.f32.mrb[0].mxu0
        %2553 = vmatprep.mubr.bf16.mxu0 0
        %2554 = vmatmul.mubr.bf16.gmra.mrb[0].mxu0 %v2369
        %v2555 = vpop.f32.mrb[0].mxu0
        %v2556 = vadd.f32 %v2399, %v2555
        %v2557 = vpop.f32.mrb[0].mxu0
        %v2558 = vpop.f32.mrb[0].mxu0
        %v2559 = vadd.f32 %v2399, %v2558
        %v2560 = vpop.f32.mrb[0].mxu0
        %2561 = vmatprep.mubr.bf16.mxu0 0
        %2562 = vmatmul.mubr.bf16.gmra.mrb[0].mxu0 %v2370
        %v2563 = vpop.f32.mrb[0].mxu0
        %v2564 = vadd.f32 %v2399, %v2563
        %v2565 = vpop.f32.mrb[0].mxu0
        %v2566 = vpop.f32.mrb[0].mxu0
        %v2567 = vadd.f32 %v2399, %v2566
        %v2568 = vpop.f32.mrb[0].mxu0
        %2569 = vmatprep.mubr.bf16.mxu0 0
        %2570 = vmatmul.mubr.bf16.gmra.mrb[0].mxu0 %v2371
        %v2571 = vpop.f32.mrb[0].mxu0
        %v2572 = vadd.f32 %v2399, %v2571
        %v2573 = vpop.f32.mrb[0].mxu0
        %v2574 = vpop.f32.mrb[0].mxu0
        %v2575 = vadd.f32 %v2399, %v2574
        %v2576 = vpop.f32.mrb[0].mxu0
        %2577 = vmatprep.mubr.bf16.mxu0 0
        %2578 = vmatmul.mubr.bf16.gmra.mrb[0].mxu0 %v2372
        %v2579 = vpop.f32.mrb[0].mxu0
        %v2580 = vadd.f32 %v2399, %v2579
        %v2581 = vpop.f32.mrb[0].mxu0
        %v2582 = vpop.f32.mrb[0].mxu0
        %v2583 = vadd.f32 %v2399, %v2582
        %v2584 = vpop.f32.mrb[0].mxu0
        %2585 = vmatprep.mubr.bf16.mxu0 0
        %2586 = vmatmul.mubr.bf16.gmra.mrb[0].mxu0 %v2373
        %v2587 = vpop.f32.mrb[0].mxu0
        %v2588 = vadd.f32 %v2399, %v2587
        %v2589 = vpop.f32.mrb[0].mxu0
        %v2590 = vpop.f32.mrb[0].mxu0
        %v2591 = vadd.f32 %v2399, %v2590
        %v2592 = vpop.f32.mrb[0].mxu0
        %2593 = vmatprep.mubr.bf16.mxu0 0
        %2594 = vmatmul.mubr.bf16.gmra.mrb[0].mxu0 %v2374
        %v2595 = vpop.f32.mrb[0].mxu0
        %v2596 = vadd.f32 %v2399, %v2595
        %v2597 = vpop.f32.mrb[0].mxu0
        %v2598 = vpop.f32.mrb[0].mxu0
        %v2599 = vadd.f32 %v2399, %v2598
        %v2600 = vpop.f32.mrb[0].mxu0
        %2601 = vmatprep.mubr.bf16.mxu0 0
        %2602 = vmatmul.mubr.bf16.gmra.mrb[0].mxu0 %v2375
        %v2603 = vpop.f32.mrb[0].mxu0
        %v2604 = vadd.f32 %v2399, %v2603
        %v2605 = vpop.f32.mrb[0].mxu0
        %v2606 = vpop.f32.mrb[0].mxu0
        %v2607 = vadd.f32 %v2399, %v2606
        %v2608 = vpop.f32.mrb[0].mxu0
        %2609 = vmatprep.mubr.bf16.mxu0 0
        %2610 = vmatmul.mubr.bf16.gmra.mrb[0].mxu0 %v2376
        %v2611 = vpop.f32.mrb[0].mxu0
        %v2612 = vadd.f32 %v2399, %v2611
        %v2613 = vpop.f32.mrb[0].mxu0
        %v2614 = vpop.f32.mrb[0].mxu0
        %v2615 = vadd.f32 %v2399, %v2614
        %v2616 = vpop.f32.mrb[0].mxu0
        %2617 = vmatprep.mubr.bf16.mxu0 0
        %2618 = vmatmul.mubr.bf16.gmra.mrb[0].mxu0 %v2377
        %v2619 = vpop.f32.mrb[0].mxu0
        %v2620 = vadd.f32 %v2399, %v2619
        %v2621 = vpop.f32.mrb[0].mxu0
        %v2622 = vpop.f32.mrb[0].mxu0
        %v2623 = vadd.f32 %v2399, %v2622
        %v2624 = vpop.f32.mrb[0].mxu0
        %2625 = vdwg.mxu0
        %v2626 = vmax.f32 %v2484, 0.0
        %v2627 = vmax.f32 %v2487, 0.0
        %v2628 = vmax.f32 %v2492, 0.0
        %v2629 = vmax.f32 %v2495, 0.0
        %v2630 = vmax.f32 %v2500, 0.0
        %v2631 = vmax.f32 %v2503, 0.0
        %v2632 = vmax.f32 %v2508, 0.0
        %v2633 = vmax.f32 %v2511, 0.0
        %v2634 = vmax.f32 %v2516, 0.0
        %v2635 = vmax.f32 %v2519, 0.0
        %v2636 = vmax.f32 %v2524, 0.0
        %v2637 = vmax.f32 %v2527, 0.0
        %v2638 = vmax.f32 %v2532, 0.0
        %v2639 = vmax.f32 %v2535, 0.0
        %v2640 = vmax.f32 %v2540, 0.0
        %v2641 = vmax.f32 %v2543, 0.0
        %v2642 = vmax.f32 %v2548, 0.0
        %v2643 = vmax.f32 %v2551, 0.0
        %v2644 = vmax.f32 %v2556, 0.0
        %v2645 = vmax.f32 %v2559, 0.0
        %v2646 = vmax.f32 %v2564, 0.0
        %v2647 = vmax.f32 %v2567, 0.0
        %v2648 = vmax.f32 %v2572, 0.0
        %v2649 = vmax.f32 %v2575, 0.0
        %v2650 = vmax.f32 %v2580, 0.0
        %v2651 = vmax.f32 %v2583, 0.0
        %v2652 = vmax.f32 %v2588, 0.0
        %v2653 = vmax.f32 %v2591, 0.0
        %v2654 = vmax.f32 %v2596, 0.0
        %v2655 = vmax.f32 %v2599, 0.0
        %v2656 = vmax.f32 %v2604, 0.0
        %v2657 = vmax.f32 %v2607, 0.0
        %v2658 = vmax.f32 %v2612, 0.0
        %v2659 = vmax.f32 %v2615, 0.0
        %v2660 = vmax.f32 %v2620, 0.0
        %v2661 = vmax.f32 %v2623, 0.0
        %v2662 = vmin.f32 %v2626, 6.0
        %v2663 = vmin.f32 %v2627, 6.0
        %v2664 = vmin.f32 %v2628, 6.0
        %v2665 = vmin.f32 %v2629, 6.0
        %v2666 = vmin.f32 %v2630, 6.0
        %v2667 = vmin.f32 %v2631, 6.0
        %v2668 = vmin.f32 %v2632, 6.0
        %v2669 = vmin.f32 %v2633, 6.0
        %v2670 = vmin.f32 %v2634, 6.0
        %v2671 = vmin.f32 %v2635, 6.0
        %v2672 = vmin.f32 %v2636, 6.0
        %v2673 = vmin.f32 %v2637, 6.0
        %v2674 = vmin.f32 %v2638, 6.0
        %v2675 = vmin.f32 %v2639, 6.0
        %v2676 = vmin.f32 %v2640, 6.0
        %v2677 = vmin.f32 %v2641, 6.0
        %v2678 = vmin.f32 %v2642, 6.0
        %v2679 = vmin.f32 %v2643, 6.0
        %v2680 = vmin.f32 %v2644, 6.0
        %v2681 = vmin.f32 %v2645, 6.0
        %v2682 = vmin.f32 %v2646, 6.0
        %v2683 = vmin.f32 %v2647, 6.0
        %v2684 = vmin.f32 %v2648, 6.0
        %v2685 = vmin.f32 %v2649, 6.0
        %v2686 = vmin.f32 %v2650, 6.0
        %v2687 = vmin.f32 %v2651, 6.0
        %v2688 = vmin.f32 %v2652, 6.0
        %v2689 = vmin.f32 %v2653, 6.0
        %v2690 = vmin.f32 %v2654, 6.0
        %v2691 = vmin.f32 %v2655, 6.0
        %v2692 = vmin.f32 %v2656, 6.0
        %v2693 = vmin.f32 %v2657, 6.0
        %v2694 = vmin.f32 %v2658, 6.0
        %v2695 = vmin.f32 %v2659, 6.0
        %v2696 = vmin.f32 %v2660, 6.0
        %v2697 = vmin.f32 %v2661, 6.0
        %v2698 = vpack.c.bf16 %v2663, %v2662
        %v2699 = vpack.c.bf16 %v2665, %v2664
        %v2700 = vpack.c.bf16 %v2667, %v2666
        %v2701 = vpack.c.bf16 %v2669, %v2668
        %v2702 = vpack.c.bf16 %v2671, %v2670
        %v2703 = vpack.c.bf16 %v2673, %v2672
        %v2704 = vpack.c.bf16 %v2675, %v2674
        %v2705 = vpack.c.bf16 %v2677, %v2676
        %v2706 = vpack.c.bf16 %v2679, %v2678
        %v2707 = vpack.c.bf16 %v2681, %v2680
        %v2708 = vpack.c.bf16 %v2683, %v2682
        %v2709 = vpack.c.bf16 %v2685, %v2684
        %v2710 = vpack.c.bf16 %v2687, %v2686
        %v2711 = vpack.c.bf16 %v2689, %v2688
        %v2712 = vpack.c.bf16 %v2691, %v2690
        %v2713 = vpack.c.bf16 %v2693, %v2692
        %v2714 = vpack.c.bf16 %v2695, %v2694
        %v2715 = vpack.c.bf16 %v2697, %v2696
        %v2734 = vunpack.c.l.b16 %v2698
        %v2735 = vunpack.c.h.b16 %v2698
        %v2736 = vunpack.c.l.b16 %v2699
        %v2737 = vunpack.c.h.b16 %v2699
        %v2738 = vunpack.c.l.b16 %v2700
        %v2739 = vunpack.c.h.b16 %v2700
        %v2740 = vunpack.c.l.b16 %v2701
        %v2741 = vunpack.c.h.b16 %v2701
        %v2742 = vunpack.c.l.b16 %v2702
        %v2743 = vunpack.c.h.b16 %v2702
        %v2744 = vunpack.c.l.b16 %v2703
        %v2745 = vunpack.c.h.b16 %v2703
        %v2746 = vunpack.c.l.b16 %v2704
        %v2747 = vunpack.c.h.b16 %v2704
        %v2748 = vunpack.c.l.b16 %v2705
        %v2749 = vunpack.c.h.b16 %v2705
        %v2750 = vunpack.c.l.b16 %v2706
        %v2751 = vunpack.c.h.b16 %v2706
        %v2752 = vunpack.c.l.b16 %v2707
        %v2753 = vunpack.c.h.b16 %v2707
        %v2754 = vunpack.c.l.b16 %v2708
        %v2755 = vunpack.c.h.b16 %v2708
        %v2756 = vunpack.c.l.b16 %v2709
        %v2757 = vunpack.c.h.b16 %v2709
        %v2758 = vunpack.c.l.b16 %v2710
        %v2759 = vunpack.c.h.b16 %v2710
        %v2760 = vunpack.c.l.b16 %v2711
        %v2761 = vunpack.c.h.b16 %v2711
        %v2762 = vunpack.c.l.b16 %v2712
        %v2763 = vunpack.c.h.b16 %v2712
        %v2764 = vunpack.c.l.b16 %v2713
        %v2765 = vunpack.c.h.b16 %v2713
        %v2766 = vunpack.c.l.b16 %v2714
        %v2767 = vunpack.c.h.b16 %v2714
        %v2768 = vunpack.c.l.b16 %v2715
        %v2769 = vunpack.c.h.b16 %v2715
        %v2770 = vpack.c.b16 %v2734, %v2734
        %v2771 = vpack.c.b16 %v2735, %v2735
        %v2772 = vpack.c.b16 %v2736, %v2736
        %v2773 = vpack.c.b16 %v2737, %v2737
        %v2774 = vpack.c.b16 %v2738, %v2738
        %v2775 = vpack.c.b16 %v2739, %v2739
        %v2776 = vpack.c.b16 %v2740, %v2740
        %v2777 = vpack.c.b16 %v2741, %v2741
        %v2778 = vpack.c.b16 %v2742, %v2742
        %v2779 = vpack.c.b16 %v2743, %v2743
        %v2780 = vpack.c.b16 %v2744, %v2744
        %v2781 = vpack.c.b16 %v2745, %v2745
        %v2782 = vpack.c.b16 %v2746, %v2746
        %v2783 = vpack.c.b16 %v2747, %v2747
        %v2784 = vpack.c.b16 %v2748, %v2748
        %v2785 = vpack.c.b16 %v2749, %v2749
        %v2786 = vpack.c.b16 %v2750, %v2750
        %v2787 = vpack.c.b16 %v2751, %v2751
        %v2788 = vpack.c.b16 %v2752, %v2752
        %v2789 = vpack.c.b16 %v2753, %v2753
        %v2790 = vpack.c.b16 %v2754, %v2754
        %v2791 = vpack.c.b16 %v2755, %v2755
        %v2792 = vpack.c.b16 %v2756, %v2756
        %v2793 = vpack.c.b16 %v2757, %v2757
        %v2794 = vpack.c.b16 %v2758, %v2758
        %v2795 = vpack.c.b16 %v2759, %v2759
        %v2796 = vpack.c.b16 %v2760, %v2760
        %v2797 = vpack.c.b16 %v2761, %v2761
        %v2798 = vpack.c.b16 %v2762, %v2762
        %v2799 = vpack.c.b16 %v2763, %v2763
        %v2800 = vpack.c.b16 %v2764, %v2764
        %v2801 = vpack.c.b16 %v2765, %v2765
        %v2802 = vpack.c.b16 %v2766, %v2766
        %v2803 = vpack.c.b16 %v2767, %v2767
        %v2804 = vpack.c.b16 %v2768, %v2768
        %v2805 = vpack.c.b16 %v2769, %v2769
        %2842 = vst [vmem:[%s296] sm:$0xf] %v2770
        %2843 = vst [vmem:[%s296 + $0x4] sm:$0xf] %v2771
        %2844 = vst [vmem:[%s296 + $0x8] sm:$0xf] %v2772
        %2845 = vst [vmem:[%s296 + $0xc] sm:$0xf] %v2773
        %2846 = vst [vmem:[%s296 + $0x10] sm:$0xf] %v2774
        %2847 = vst [vmem:[%s296 + $0x14] sm:$0xf] %v2775
        %2848 = vst [vmem:[%s296 + $0x18] sm:$0xf] %v2776
        %2849 = vst [vmem:[%s296 + $0x1c] sm:$0xf] %v2777
        %2850 = vst [vmem:[%s296 + $0x20] sm:$0xf] %v2778
        %2851 = vst [vmem:[%s296 + $0x24] sm:$0xf] %v2779
        %2852 = vst [vmem:[%s296 + $0x28] sm:$0xf] %v2780
        %2853 = vst [vmem:[%s296 + $0x2c] sm:$0xf] %v2781
        %2854 = vst [vmem:[%s296 + $0x30] sm:$0xf] %v2782
        %2855 = vst [vmem:[%s296 + $0x34] sm:$0xf] %v2783
        %2856 = vst [vmem:[%s296 + $0x38] sm:$0xf] %v2784
        %2857 = vst [vmem:[%s296 + $0x3c] sm:$0xf] %v2785
        %2858 = vst [vmem:[%s296 + $0x40] sm:$0xf] %v2786
        %2859 = vst [vmem:[%s296 + $0x44] sm:$0xf] %v2787
        %2860 = vst [vmem:[%s296 + $0x48] sm:$0xf] %v2788
        %2861 = vst [vmem:[%s296 + $0x4c] sm:$0xf] %v2789
        %2862 = vst [vmem:[%s296 + $0x50] sm:$0xf] %v2790
        %2863 = vst [vmem:[%s296 + $0x54] sm:$0xf] %v2791
        %2864 = vst [vmem:[%s296 + $0x58] sm:$0xf] %v2792
        %2865 = vst [vmem:[%s296 + $0x5c] sm:$0xf] %v2793
        %2866 = vst [vmem:[%s296 + $0x60] sm:$0xf] %v2794
        %2867 = vst [vmem:[%s296 + $0x64] sm:$0xf] %v2795
        %2868 = vst [vmem:[%s296 + $0x68] sm:$0xf] %v2796
        %2869 = vst [vmem:[%s296 + $0x6c] sm:$0xf] %v2797
        %2870 = vst [vmem:[%s296 + $0x70] sm:$0xf] %v2798
        %2871 = vst [vmem:[%s296 + $0x74] sm:$0xf] %v2799
        %2872 = vst [vmem:[%s296 + $0x78] sm:$0xf] %v2800
        %2873 = vst [vmem:[%s296 + $0x7c] sm:$0xf] %v2801
        %2874 = vst [vmem:[%s296 + $0x80] sm:$0xf] %v2802
        %2875 = vst [vmem:[%s296 + $0x84] sm:$0xf] %v2803
        %2876 = vst [vmem:[%s296 + $0x88] sm:$0xf] %v2804
        %2877 = vst [vmem:[%s296 + $0x8c] sm:$0xf] %v2805
        %s2878 = sand.u32 %s142, 1
        %s2879 = scalar_lea.sflag [#allocation4], %s2878
        %s2880 = sand.u32 %s142, 1
        %s2881 = smul.addr %s2880, 144
        %s2882 = scalar_lea.vmem [#allocation11], %s2881
        // Predicated region
        $region61: #{mobilenet_v1_forward.16} parent=39 // pred_check
          %p2883 = pneg %p152
        $region62: #{mobilenet_v1_forward.16} parent=39 // pred_check_branch
          %2885 = sbr.rel (%p2883) target = $region64
        $region63: #{mobilenet_v1_forward.16} parent=39 // pred_region
          %s2887 = ssub.s32 2304, 2304
          %2888 = vsyncadd %s2879, %s2887
          %s2889 = smul.addr %s24, 36
          %s2890 = smul.addr %s2889, 64
          %s2891 = scalar_lea.hbm %s5, %s2890
          %s2892 = sshll.u32 %s2882, 4
          %s2893 = int_to_ptr.vmem [resolvable:$true] %s2892
          %2898 = dma.vmem_to_hbm [thread:$0]  %s2893, 2304, %s2891, %s2879, 64, 64, 4
        $region64: #{mobilenet_v1_forward.16} parent=39 // pred_fallthru
          _
      $region40: #{mobilenet_v1_forward.16} parent=5 // pred_fallthru
        _
      %p2899 = scmp.le.s32.totalorder 2, %s19
      // Predicated region
      $region65: #{mobilenet_v1_forward.16} parent=5 // pred_check
        %p2900 = pneg %p2899
      $region66: #{mobilenet_v1_forward.16} parent=5 // pred_check_branch
        %2902 = sbr.rel (%p2900) target = $region68
      $region67: #{mobilenet_v1_forward.16} parent=5 // pred_region
        %s2903 = ssub.s32 %s19, 2
        // Predicated region
        $region69: #{mobilenet_v1_forward.16} parent=67 // pred_check
          %p2904 = pneg %p158
        $region70: #{mobilenet_v1_forward.16} parent=67 // pred_check_branch
          %2906 = sbr.rel (%p2904) target = $region72
        $region71: #{mobilenet_v1_forward.16} parent=67 // pred_region
          %s2907 = sand.u32 %s143, 1
          %s2908 = scalar_lea.sflag [#allocation4], %s2907
          %s2909 = sand.u32 %s143, 1
          %s2910 = smul.addr %s2909, 144
          %s2911 = scalar_lea.vmem [#allocation11], %s2910
          %2912 = dma.done %s2908, 2304
        $region72: #{mobilenet_v1_forward.16} parent=67 // pred_fallthru
          _
      $region68: #{mobilenet_v1_forward.16} parent=5 // pred_fallthru
        _
    $region6: #{mobilenet_v1_forward.16} parent=1 // loop_footer
      %s23 = sadd.s32 1, %s19
    $region7: #{mobilenet_v1_forward.16} parent=1 // loop_footer_branch
      %18 = sbr.rel target = $region3
    $region8: #{mobilenet_v1_forward.16} parent=1 // loop_exit
      _
    %2913 = vsyncpa [#allocation3], 1
    %s2914 = scalar_lea.sflag [#allocation3], 1
    %2915 = vsyncpa %s2914, 1
    %2916 = vsyncpa [#allocation6], 1
    %2917 = vsyncpa [#allocation9], 1
    %2918 = vsyncpa [#allocation4], 1
    %s2919 = scalar_lea.sflag [#allocation4], 1
    %2920 = vsyncpa %s2919, 1

// kernel: mobilenet_v1_forward.17
$region0: #{mobilenet_v1_forward.17}
  #allocation0 [shape = 'u32[]', space=smem, size = 0x4, offset = 0x4, fixed_abs, tag = 'smem constant byte address 0x4 - core index']
  #allocation1 [shape = 'u32[144,128]{1,0:T(1,128)}', space=vmem, size = 0x12000, scoped, tag = 'internal scratch']
  %s0 = inlined_call_operand.hbm [shape: bf16[9,128,128], index: 0, kind: input, shape index: {}]
  %s1 = inlined_call_operand.hbm [shape: f32[9,1,128], index: 1, kind: input, shape index: {}]
  %s2 = inlined_call_operand.hbm [shape: f32[1,128], index: 2, kind: input, shape index: {}]
  %s3 = inlined_call_operand.hbm [shape: bf16[128,128], index: 3, kind: input, shape index: {}]
  %s4 = inlined_call_operand.hbm [shape: f32[1,128], index: 4, kind: input, shape index: {}]
  %s5 = inlined_call_operand.hbm [shape: bf16[128,128], index: 5, kind: output, shape index: {}]
  %s6 = sld [smem:[#allocation0]]
  $region50: #{mobilenet_v1_forward.17} parent=0
    _
  %s8 = ssub.s32 1, %s6
  %s9 = scalar_select 0, %s8, %s6
  $region1: #{mobilenet_v1_forward.17} parent=0
    #allocation2 [shape = 'u8[294912]{0}', space=vmem, size = 0x48000, scoped, tag = 'input window, operand 0, single buffered']
    #allocation3 [shape = 's32[1]{0}', space=sflag, size = 0x4, scoped, tag = 'scoped memory for mobilenet_v1_forward.17']
    #allocation4 [shape = 's32[1]{0}', space=sflag, size = 0x4, scoped, tag = 'scoped memory for mobilenet_v1_forward.17']
    #allocation5 [shape = 'u8[4608]{0}', space=vmem, size = 0x1400, scoped, tag = 'input window, operand 1, single buffered']
    #allocation6 [shape = 's32[1]{0}', space=sflag, size = 0x4, scoped, tag = 'scoped memory for mobilenet_v1_forward.17']
    #allocation7 [shape = 'u8[512]{0}', space=vmem, size = 0x400, scoped, tag = 'input window, operand 2, single buffered']
    #allocation8 [shape = 'u8[32768]{0}', space=vmem, size = 0x8000, scoped, tag = 'input window, operand 3, single buffered']
    #allocation9 [shape = 's32[1]{0}', space=sflag, size = 0x4, scoped, tag = 'scoped memory for mobilenet_v1_forward.17']
    #allocation10 [shape = 'u8[512]{0}', space=vmem, size = 0x400, scoped, tag = 'input window, operand 4, single buffered']
    #allocation11 [shape = 'u8[32768]{0}', space=vmem, size = 0x8000, scoped, tag = 'output window, operand 0, single buffered']
    %10 = vsyncpa [#allocation3], 0
    %11 = vsyncpa [#allocation6], 0
    %12 = vsyncpa [#allocation9], 0
    %13 = vsyncpa [#allocation4], 0
    // Predicated region
    $region2: #{mobilenet_v1_forward.17} parent=1 // pred_check
      _
    $region3: #{mobilenet_v1_forward.17} parent=1 // pred_check_branch
      %15 = sbr.rel (0) target = $region5
    $region4: #{mobilenet_v1_forward.17} parent=1 // pred_region
      %s17 = ssub.s32 9216, 9216
      %18 = vsyncadd [#allocation3], %s17
      %s19 = sshll.u32 [#allocation2], 4
      %s20 = int_to_ptr.vmem [resolvable:$true] %s19
      %25 = dma.hbm_to_vmem [thread:$0]  %s0, 9216, %s20, [#allocation3], 64, 64, 4
    $region5: #{mobilenet_v1_forward.17} parent=1 // pred_fallthru
      _
    // Predicated region
    $region6: #{mobilenet_v1_forward.17} parent=1 // pred_check
      _
    $region7: #{mobilenet_v1_forward.17} parent=1 // pred_check_branch
      %27 = sbr.rel (0) target = $region9
    $region8: #{mobilenet_v1_forward.17} parent=1 // pred_region
      %s29 = ssub.s32 144, 144
      %30 = vsyncadd [#allocation6], %s29
      %s31 = sshll.u32 [#allocation5], 4
      %s32 = int_to_ptr.vmem [resolvable:$true] %s31
      %37 = dma.hbm_to_vmem [thread:$0]  %s1, 144, %s32, [#allocation6], 16, 16, 1
    $region9: #{mobilenet_v1_forward.17} parent=1 // pred_fallthru
      _
    // Predicated region
    $region10: #{mobilenet_v1_forward.17} parent=1 // pred_check
      _
    $region11: #{mobilenet_v1_forward.17} parent=1 // pred_check_branch
      %39 = sbr.rel (0) target = $region13
    $region12: #{mobilenet_v1_forward.17} parent=1 // pred_region
      %s41 = ssub.s32 16, 16
      %42 = vsyncadd [#allocation6], %s41
      %s44 = sshll.u32 [#allocation7], 4
      %s45 = int_to_ptr.vmem [resolvable:$true] %s44
      %47 = dma.hbm_to_vmem [thread:$0]  %s2, 16, %s45, [#allocation6]
    $region13: #{mobilenet_v1_forward.17} parent=1 // pred_fallthru
      _
    // Predicated region
    $region14: #{mobilenet_v1_forward.17} parent=1 // pred_check
      _
    $region15: #{mobilenet_v1_forward.17} parent=1 // pred_check_branch
      %49 = sbr.rel (0) target = $region17
    $region16: #{mobilenet_v1_forward.17} parent=1 // pred_region
      %s51 = ssub.s32 1024, 1024
      %52 = vsyncadd [#allocation9], %s51
      %s53 = sshll.u32 [#allocation8], 4
      %s54 = int_to_ptr.vmem [resolvable:$true] %s53
      %59 = dma.hbm_to_vmem [thread:$0]  %s3, 1024, %s54, [#allocation9], 64, 64, 4
    $region17: #{mobilenet_v1_forward.17} parent=1 // pred_fallthru
      _
    // Predicated region
    $region18: #{mobilenet_v1_forward.17} parent=1 // pred_check
      _
    $region19: #{mobilenet_v1_forward.17} parent=1 // pred_check_branch
      %61 = sbr.rel (0) target = $region21
    $region20: #{mobilenet_v1_forward.17} parent=1 // pred_region
      %s63 = ssub.s32 16, 16
      %64 = vsyncadd [#allocation9], %s63
      %s66 = sshll.u32 [#allocation10], 4
      %s67 = int_to_ptr.vmem [resolvable:$true] %s66
      %69 = dma.hbm_to_vmem [thread:$0]  %s4, 16, %s67, [#allocation9]
    $region21: #{mobilenet_v1_forward.17} parent=1 // pred_fallthru
      _
    // Predicated region
    $region22: #{mobilenet_v1_forward.17} parent=1 // pred_check
      _
    $region23: #{mobilenet_v1_forward.17} parent=1 // pred_check_branch
      %71 = sbr.rel (0) target = $region25
    $region24: #{mobilenet_v1_forward.17} parent=1 // pred_region
      %72 = dma.done [#allocation3], 9216
    $region25: #{mobilenet_v1_forward.17} parent=1 // pred_fallthru
      _
    // Predicated region
    $region26: #{mobilenet_v1_forward.17} parent=1 // pred_check
      _
    $region27: #{mobilenet_v1_forward.17} parent=1 // pred_check_branch
      %74 = sbr.rel (0) target = $region29
    $region28: #{mobilenet_v1_forward.17} parent=1 // pred_region
      %75 = dma.done [#allocation6], 144
    $region29: #{mobilenet_v1_forward.17} parent=1 // pred_fallthru
      _
    // Predicated region
    $region30: #{mobilenet_v1_forward.17} parent=1 // pred_check
      _
    $region31: #{mobilenet_v1_forward.17} parent=1 // pred_check_branch
      %77 = sbr.rel (0) target = $region33
    $region32: #{mobilenet_v1_forward.17} parent=1 // pred_region
      %78 = dma.done [#allocation6], 16
    $region33: #{mobilenet_v1_forward.17} parent=1 // pred_fallthru
      _
    // Predicated region
    $region34: #{mobilenet_v1_forward.17} parent=1 // pred_check
      _
    $region35: #{mobilenet_v1_forward.17} parent=1 // pred_check_branch
      %80 = sbr.rel (0) target = $region37
    $region36: #{mobilenet_v1_forward.17} parent=1 // pred_region
      %81 = dma.done [#allocation9], 1024
    $region37: #{mobilenet_v1_forward.17} parent=1 // pred_fallthru
      _
    // Predicated region
    $region38: #{mobilenet_v1_forward.17} parent=1 // pred_check
      _
    $region39: #{mobilenet_v1_forward.17} parent=1 // pred_check_branch
      %83 = sbr.rel (0) target = $region41
    $region40: #{mobilenet_v1_forward.17} parent=1 // pred_region
      %84 = dma.done [#allocation9], 16
    $region41: #{mobilenet_v1_forward.17} parent=1 // pred_fallthru
      _
    %v86 = vld [vmem:[#allocation2] sm:$0xf]
    %v87 = vld [vmem:[#allocation2 + $0x4] sm:$0xf]
    %v88 = vld [vmem:[#allocation2 + $0x8] sm:$0xf]
    %v89 = vld [vmem:[#allocation2 + $0xc] sm:$0xf]
    %v90 = vld [vmem:[#allocation2 + $0x10] sm:$0xf]
    %v91 = vld [vmem:[#allocation2 + $0x14] sm:$0xf]
    %v92 = vld [vmem:[#allocation2 + $0x18] sm:$0xf]
    %v93 = vld [vmem:[#allocation2 + $0x1c] sm:$0xf]
    %v94 = vld [vmem:[#allocation2 + $0x20] sm:$0xf]
    %v95 = vld [vmem:[#allocation2 + $0x24] sm:$0xf]
    %v96 = vld [vmem:[#allocation2 + $0x28] sm:$0xf]
    %v97 = vld [vmem:[#allocation2 + $0x2c] sm:$0xf]
    %v98 = vld [vmem:[#allocation2 + $0x30] sm:$0xf]
    %v99 = vld [vmem:[#allocation2 + $0x34] sm:$0xf]
    %v100 = vld [vmem:[#allocation2 + $0x38] sm:$0xf]
    %v101 = vld [vmem:[#allocation2 + $0x3c] sm:$0xf]
    %v102 = vunpack.c.l.bf16 %v86
    %v103 = vunpack.c.l.bf16 %v87
    %v104 = vunpack.c.l.bf16 %v88
    %v105 = vunpack.c.l.bf16 %v89
    %v106 = vunpack.c.l.bf16 %v90
    %v107 = vunpack.c.l.bf16 %v91
    %v108 = vunpack.c.l.bf16 %v92
    %v109 = vunpack.c.l.bf16 %v93
    %v110 = vunpack.c.l.bf16 %v94
    %v111 = vunpack.c.l.bf16 %v95
    %v112 = vunpack.c.l.bf16 %v96
    %v113 = vunpack.c.l.bf16 %v97
    %v114 = vunpack.c.l.bf16 %v98
    %v115 = vunpack.c.l.bf16 %v99
    %v116 = vunpack.c.l.bf16 %v100
    %v117 = vunpack.c.l.bf16 %v101
    %v118 = vld [vmem:[#allocation5] sm:$0x1]
    %v120 = vlaneseq
    %v121 = vshrl.u32 %v120, 7
    %v122 = vsub.s32 0, %v121
    %v123 = vrot.slane %v118, %v122
    %v125 = vmul.f32 %v102, %v123
    %v126 = vmul.f32 %v103, %v123
    %v127 = vmul.f32 %v104, %v123
    %v128 = vmul.f32 %v105, %v123
    %v129 = vmul.f32 %v106, %v123
    %v130 = vmul.f32 %v107, %v123
    %v131 = vmul.f32 %v108, %v123
    %v132 = vmul.f32 %v109, %v123
    %v133 = vmul.f32 %v110, %v123
    %v134 = vmul.f32 %v111, %v123
    %v135 = vmul.f32 %v112, %v123
    %v136 = vmul.f32 %v113, %v123
    %v137 = vmul.f32 %v114, %v123
    %v138 = vmul.f32 %v115, %v123
    %v139 = vmul.f32 %v116, %v123
    %v140 = vmul.f32 %v117, %v123
    %s141 = scalar_lea.vmem [#allocation2], 64
    %v142 = vld [vmem:[%s141] sm:$0xf]
    %v143 = vld [vmem:[%s141 + $0x4] sm:$0xf]
    %v144 = vld [vmem:[%s141 + $0x8] sm:$0xf]
    %v145 = vld [vmem:[%s141 + $0xc] sm:$0xf]
    %v146 = vld [vmem:[%s141 + $0x10] sm:$0xf]
    %v147 = vld [vmem:[%s141 + $0x14] sm:$0xf]
    %v148 = vld [vmem:[%s141 + $0x18] sm:$0xf]
    %v149 = vld [vmem:[%s141 + $0x1c] sm:$0xf]
    %v150 = vld [vmem:[%s141 + $0x20] sm:$0xf]
    %v151 = vld [vmem:[%s141 + $0x24] sm:$0xf]
    %v152 = vld [vmem:[%s141 + $0x28] sm:$0xf]
    %v153 = vld [vmem:[%s141 + $0x2c] sm:$0xf]
    %v154 = vld [vmem:[%s141 + $0x30] sm:$0xf]
    %v155 = vld [vmem:[%s141 + $0x34] sm:$0xf]
    %v156 = vld [vmem:[%s141 + $0x38] sm:$0xf]
    %v157 = vld [vmem:[%s141 + $0x3c] sm:$0xf]
    %v158 = vunpack.c.l.bf16 %v142
    %v159 = vunpack.c.l.bf16 %v143
    %v160 = vunpack.c.l.bf16 %v144
    %v161 = vunpack.c.l.bf16 %v145
    %v162 = vunpack.c.l.bf16 %v146
    %v163 = vunpack.c.l.bf16 %v147
    %v164 = vunpack.c.l.bf16 %v148
    %v165 = vunpack.c.l.bf16 %v149
    %v166 = vunpack.c.l.bf16 %v150
    %v167 = vunpack.c.l.bf16 %v151
    %v168 = vunpack.c.l.bf16 %v152
    %v169 = vunpack.c.l.bf16 %v153
    %v170 = vunpack.c.l.bf16 %v154
    %v171 = vunpack.c.l.bf16 %v155
    %v172 = vunpack.c.l.bf16 %v156
    %v173 = vunpack.c.l.bf16 %v157
    %s174 = scalar_lea.vmem [#allocation5], 1
    %v175 = vld [vmem:[%s174] sm:$0x1]
    %v177 = vlaneseq
    %v178 = vshrl.u32 %v177, 7
    %v179 = vsub.s32 0, %v178
    %v180 = vrot.slane %v175, %v179
    %v182 = vmul.f32 %v158, %v180
    %v183 = vmul.f32 %v159, %v180
    %v184 = vmul.f32 %v160, %v180
    %v185 = vmul.f32 %v161, %v180
    %v186 = vmul.f32 %v162, %v180
    %v187 = vmul.f32 %v163, %v180
    %v188 = vmul.f32 %v164, %v180
    %v189 = vmul.f32 %v165, %v180
    %v190 = vmul.f32 %v166, %v180
    %v191 = vmul.f32 %v167, %v180
    %v192 = vmul.f32 %v168, %v180
    %v193 = vmul.f32 %v169, %v180
    %v194 = vmul.f32 %v170, %v180
    %v195 = vmul.f32 %v171, %v180
    %v196 = vmul.f32 %v172, %v180
    %v197 = vmul.f32 %v173, %v180
    %v198 = vadd.f32 %v125, %v182
    %v199 = vadd.f32 %v126, %v183
    %v200 = vadd.f32 %v127, %v184
    %v201 = vadd.f32 %v128, %v185
    %v202 = vadd.f32 %v129, %v186
    %v203 = vadd.f32 %v130, %v187
    %v204 = vadd.f32 %v131, %v188
    %v205 = vadd.f32 %v132, %v189
    %v206 = vadd.f32 %v133, %v190
    %v207 = vadd.f32 %v134, %v191
    %v208 = vadd.f32 %v135, %v192
    %v209 = vadd.f32 %v136, %v193
    %v210 = vadd.f32 %v137, %v194
    %v211 = vadd.f32 %v138, %v195
    %v212 = vadd.f32 %v139, %v196
    %v213 = vadd.f32 %v140, %v197
    %s214 = scalar_lea.vmem [#allocation2], 128
    %v215 = vld [vmem:[%s214] sm:$0xf]
    %v216 = vld [vmem:[%s214 + $0x4] sm:$0xf]
    %v217 = vld [vmem:[%s214 + $0x8] sm:$0xf]
    %v218 = vld [vmem:[%s214 + $0xc] sm:$0xf]
    %v219 = vld [vmem:[%s214 + $0x10] sm:$0xf]
    %v220 = vld [vmem:[%s214 + $0x14] sm:$0xf]
    %v221 = vld [vmem:[%s214 + $0x18] sm:$0xf]
    %v222 = vld [vmem:[%s214 + $0x1c] sm:$0xf]
    %v223 = vld [vmem:[%s214 + $0x20] sm:$0xf]
    %v224 = vld [vmem:[%s214 + $0x24] sm:$0xf]
    %v225 = vld [vmem:[%s214 + $0x28] sm:$0xf]
    %v226 = vld [vmem:[%s214 + $0x2c] sm:$0xf]
    %v227 = vld [vmem:[%s214 + $0x30] sm:$0xf]
    %v228 = vld [vmem:[%s214 + $0x34] sm:$0xf]
    %v229 = vld [vmem:[%s214 + $0x38] sm:$0xf]
    %v230 = vld [vmem:[%s214 + $0x3c] sm:$0xf]
    %v231 = vunpack.c.l.bf16 %v215
    %v232 = vunpack.c.l.bf16 %v216
    %v233 = vunpack.c.l.bf16 %v217
    %v234 = vunpack.c.l.bf16 %v218
    %v235 = vunpack.c.l.bf16 %v219
    %v236 = vunpack.c.l.bf16 %v220
    %v237 = vunpack.c.l.bf16 %v221
    %v238 = vunpack.c.l.bf16 %v222
    %v239 = vunpack.c.l.bf16 %v223
    %v240 = vunpack.c.l.bf16 %v224
    %v241 = vunpack.c.l.bf16 %v225
    %v242 = vunpack.c.l.bf16 %v226
    %v243 = vunpack.c.l.bf16 %v227
    %v244 = vunpack.c.l.bf16 %v228
    %v245 = vunpack.c.l.bf16 %v229
    %v246 = vunpack.c.l.bf16 %v230
    %s247 = scalar_lea.vmem [#allocation5], 2
    %v248 = vld [vmem:[%s247] sm:$0x1]
    %v250 = vlaneseq
    %v251 = vshrl.u32 %v250, 7
    %v252 = vsub.s32 0, %v251
    %v253 = vrot.slane %v248, %v252
    %v255 = vmul.f32 %v231, %v253
    %v256 = vmul.f32 %v232, %v253
    %v257 = vmul.f32 %v233, %v253
    %v258 = vmul.f32 %v234, %v253
    %v259 = vmul.f32 %v235, %v253
    %v260 = vmul.f32 %v236, %v253
    %v261 = vmul.f32 %v237, %v253
    %v262 = vmul.f32 %v238, %v253
    %v263 = vmul.f32 %v239, %v253
    %v264 = vmul.f32 %v240, %v253
    %v265 = vmul.f32 %v241, %v253
    %v266 = vmul.f32 %v242, %v253
    %v267 = vmul.f32 %v243, %v253
    %v268 = vmul.f32 %v244, %v253
    %v269 = vmul.f32 %v245, %v253
    %v270 = vmul.f32 %v246, %v253
    %v271 = vadd.f32 %v198, %v255
    %v272 = vadd.f32 %v199, %v256
    %v273 = vadd.f32 %v200, %v257
    %v274 = vadd.f32 %v201, %v258
    %v275 = vadd.f32 %v202, %v259
    %v276 = vadd.f32 %v203, %v260
    %v277 = vadd.f32 %v204, %v261
    %v278 = vadd.f32 %v205, %v262
    %v279 = vadd.f32 %v206, %v263
    %v280 = vadd.f32 %v207, %v264
    %v281 = vadd.f32 %v208, %v265
    %v282 = vadd.f32 %v209, %v266
    %v283 = vadd.f32 %v210, %v267
    %v284 = vadd.f32 %v211, %v268
    %v285 = vadd.f32 %v212, %v269
    %v286 = vadd.f32 %v213, %v270
    %s287 = scalar_lea.vmem [#allocation2], 192
    %v288 = vld [vmem:[%s287] sm:$0xf]
    %v289 = vld [vmem:[%s287 + $0x4] sm:$0xf]
    %v290 = vld [vmem:[%s287 + $0x8] sm:$0xf]
    %v291 = vld [vmem:[%s287 + $0xc] sm:$0xf]
    %v292 = vld [vmem:[%s287 + $0x10] sm:$0xf]
    %v293 = vld [vmem:[%s287 + $0x14] sm:$0xf]
    %v294 = vld [vmem:[%s287 + $0x18] sm:$0xf]
    %v295 = vld [vmem:[%s287 + $0x1c] sm:$0xf]
    %v296 = vld [vmem:[%s287 + $0x20] sm:$0xf]
    %v297 = vld [vmem:[%s287 + $0x24] sm:$0xf]
    %v298 = vld [vmem:[%s287 + $0x28] sm:$0xf]
    %v299 = vld [vmem:[%s287 + $0x2c] sm:$0xf]
    %v300 = vld [vmem:[%s287 + $0x30] sm:$0xf]
    %v301 = vld [vmem:[%s287 + $0x34] sm:$0xf]
    %v302 = vld [vmem:[%s287 + $0x38] sm:$0xf]
    %v303 = vld [vmem:[%s287 + $0x3c] sm:$0xf]
    %v304 = vunpack.c.l.bf16 %v288
    %v305 = vunpack.c.l.bf16 %v289
    %v306 = vunpack.c.l.bf16 %v290
    %v307 = vunpack.c.l.bf16 %v291
    %v308 = vunpack.c.l.bf16 %v292
    %v309 = vunpack.c.l.bf16 %v293
    %v310 = vunpack.c.l.bf16 %v294
    %v311 = vunpack.c.l.bf16 %v295
    %v312 = vunpack.c.l.bf16 %v296
    %v313 = vunpack.c.l.bf16 %v297
    %v314 = vunpack.c.l.bf16 %v298
    %v315 = vunpack.c.l.bf16 %v299
    %v316 = vunpack.c.l.bf16 %v300
    %v317 = vunpack.c.l.bf16 %v301
    %v318 = vunpack.c.l.bf16 %v302
    %v319 = vunpack.c.l.bf16 %v303
    %s320 = scalar_lea.vmem [#allocation5], 3
    %v321 = vld [vmem:[%s320] sm:$0x1]
    %v323 = vlaneseq
    %v324 = vshrl.u32 %v323, 7
    %v325 = vsub.s32 0, %v324
    %v326 = vrot.slane %v321, %v325
    %v328 = vmul.f32 %v304, %v326
    %v329 = vmul.f32 %v305, %v326
    %v330 = vmul.f32 %v306, %v326
    %v331 = vmul.f32 %v307, %v326
    %v332 = vmul.f32 %v308, %v326
    %v333 = vmul.f32 %v309, %v326
    %v334 = vmul.f32 %v310, %v326
    %v335 = vmul.f32 %v311, %v326
    %v336 = vmul.f32 %v312, %v326
    %v337 = vmul.f32 %v313, %v326
    %v338 = vmul.f32 %v314, %v326
    %v339 = vmul.f32 %v315, %v326
    %v340 = vmul.f32 %v316, %v326
    %v341 = vmul.f32 %v317, %v326
    %v342 = vmul.f32 %v318, %v326
    %v343 = vmul.f32 %v319, %v326
    %v344 = vadd.f32 %v271, %v328
    %v345 = vadd.f32 %v272, %v329
    %v346 = vadd.f32 %v273, %v330
    %v347 = vadd.f32 %v274, %v331
    %v348 = vadd.f32 %v275, %v332
    %v349 = vadd.f32 %v276, %v333
    %v350 = vadd.f32 %v277, %v334
    %v351 = vadd.f32 %v278, %v335
    %v352 = vadd.f32 %v279, %v336
    %v353 = vadd.f32 %v280, %v337
    %v354 = vadd.f32 %v281, %v338
    %v355 = vadd.f32 %v282, %v339
    %v356 = vadd.f32 %v283, %v340
    %v357 = vadd.f32 %v284, %v341
    %v358 = vadd.f32 %v285, %v342
    %v359 = vadd.f32 %v286, %v343
    %s360 = scalar_lea.vmem [#allocation2], 256
    %v361 = vld [vmem:[%s360] sm:$0xf]
    %v362 = vld [vmem:[%s360 + $0x4] sm:$0xf]
    %v363 = vld [vmem:[%s360 + $0x8] sm:$0xf]
    %v364 = vld [vmem:[%s360 + $0xc] sm:$0xf]
    %v365 = vld [vmem:[%s360 + $0x10] sm:$0xf]
    %v366 = vld [vmem:[%s360 + $0x14] sm:$0xf]
    %v367 = vld [vmem:[%s360 + $0x18] sm:$0xf]
    %v368 = vld [vmem:[%s360 + $0x1c] sm:$0xf]
    %v369 = vld [vmem:[%s360 + $0x20] sm:$0xf]
    %v370 = vld [vmem:[%s360 + $0x24] sm:$0xf]
    %v371 = vld [vmem:[%s360 + $0x28] sm:$0xf]
    %v372 = vld [vmem:[%s360 + $0x2c] sm:$0xf]
    %v373 = vld [vmem:[%s360 + $0x30] sm:$0xf]
    %v374 = vld [vmem:[%s360 + $0x34] sm:$0xf]
    %v375 = vld [vmem:[%s360 + $0x38] sm:$0xf]
    %v376 = vld [vmem:[%s360 + $0x3c] sm:$0xf]
    %v377 = vunpack.c.l.bf16 %v361
    %v378 = vunpack.c.l.bf16 %v362
    %v379 = vunpack.c.l.bf16 %v363
    %v380 = vunpack.c.l.bf16 %v364
    %v381 = vunpack.c.l.bf16 %v365
    %v382 = vunpack.c.l.bf16 %v366
    %v383 = vunpack.c.l.bf16 %v367
    %v384 = vunpack.c.l.bf16 %v368
    %v385 = vunpack.c.l.bf16 %v369
    %v386 = vunpack.c.l.bf16 %v370
    %v387 = vunpack.c.l.bf16 %v371
    %v388 = vunpack.c.l.bf16 %v372
    %v389 = vunpack.c.l.bf16 %v373
    %v390 = vunpack.c.l.bf16 %v374
    %v391 = vunpack.c.l.bf16 %v375
    %v392 = vunpack.c.l.bf16 %v376
    %s393 = scalar_lea.vmem [#allocation5], 4
    %v394 = vld [vmem:[%s393] sm:$0x1]
    %v396 = vlaneseq
    %v397 = vshrl.u32 %v396, 7
    %v398 = vsub.s32 0, %v397
    %v399 = vrot.slane %v394, %v398
    %v401 = vmul.f32 %v377, %v399
    %v402 = vmul.f32 %v378, %v399
    %v403 = vmul.f32 %v379, %v399
    %v404 = vmul.f32 %v380, %v399
    %v405 = vmul.f32 %v381, %v399
    %v406 = vmul.f32 %v382, %v399
    %v407 = vmul.f32 %v383, %v399
    %v408 = vmul.f32 %v384, %v399
    %v409 = vmul.f32 %v385, %v399
    %v410 = vmul.f32 %v386, %v399
    %v411 = vmul.f32 %v387, %v399
    %v412 = vmul.f32 %v388, %v399
    %v413 = vmul.f32 %v389, %v399
    %v414 = vmul.f32 %v390, %v399
    %v415 = vmul.f32 %v391, %v399
    %v416 = vmul.f32 %v392, %v399
    %v417 = vadd.f32 %v344, %v401
    %v418 = vadd.f32 %v345, %v402
    %v419 = vadd.f32 %v346, %v403
    %v420 = vadd.f32 %v347, %v404
    %v421 = vadd.f32 %v348, %v405
    %v422 = vadd.f32 %v349, %v406
    %v423 = vadd.f32 %v350, %v407
    %v424 = vadd.f32 %v351, %v408
    %v425 = vadd.f32 %v352, %v409
    %v426 = vadd.f32 %v353, %v410
    %v427 = vadd.f32 %v354, %v411
    %v428 = vadd.f32 %v355, %v412
    %v429 = vadd.f32 %v356, %v413
    %v430 = vadd.f32 %v357, %v414
    %v431 = vadd.f32 %v358, %v415
    %v432 = vadd.f32 %v359, %v416
    %s433 = scalar_lea.vmem [#allocation2], 320
    %v434 = vld [vmem:[%s433] sm:$0xf]
    %v435 = vld [vmem:[%s433 + $0x4] sm:$0xf]
    %v436 = vld [vmem:[%s433 + $0x8] sm:$0xf]
    %v437 = vld [vmem:[%s433 + $0xc] sm:$0xf]
    %v438 = vld [vmem:[%s433 + $0x10] sm:$0xf]
    %v439 = vld [vmem:[%s433 + $0x14] sm:$0xf]
    %v440 = vld [vmem:[%s433 + $0x18] sm:$0xf]
    %v441 = vld [vmem:[%s433 + $0x1c] sm:$0xf]
    %v442 = vld [vmem:[%s433 + $0x20] sm:$0xf]
    %v443 = vld [vmem:[%s433 + $0x24] sm:$0xf]
    %v444 = vld [vmem:[%s433 + $0x28] sm:$0xf]
    %v445 = vld [vmem:[%s433 + $0x2c] sm:$0xf]
    %v446 = vld [vmem:[%s433 + $0x30] sm:$0xf]
    %v447 = vld [vmem:[%s433 + $0x34] sm:$0xf]
    %v448 = vld [vmem:[%s433 + $0x38] sm:$0xf]
    %v449 = vld [vmem:[%s433 + $0x3c] sm:$0xf]
    %v450 = vunpack.c.l.bf16 %v434
    %v451 = vunpack.c.l.bf16 %v435
    %v452 = vunpack.c.l.bf16 %v436
    %v453 = vunpack.c.l.bf16 %v437
    %v454 = vunpack.c.l.bf16 %v438
    %v455 = vunpack.c.l.bf16 %v439
    %v456 = vunpack.c.l.bf16 %v440
    %v457 = vunpack.c.l.bf16 %v441
    %v458 = vunpack.c.l.bf16 %v442
    %v459 = vunpack.c.l.bf16 %v443
    %v460 = vunpack.c.l.bf16 %v444
    %v461 = vunpack.c.l.bf16 %v445
    %v462 = vunpack.c.l.bf16 %v446
    %v463 = vunpack.c.l.bf16 %v447
    %v464 = vunpack.c.l.bf16 %v448
    %v465 = vunpack.c.l.bf16 %v449
    %s466 = scalar_lea.vmem [#allocation5], 5
    %v467 = vld [vmem:[%s466] sm:$0x1]
    %v469 = vlaneseq
    %v470 = vshrl.u32 %v469, 7
    %v471 = vsub.s32 0, %v470
    %v472 = vrot.slane %v467, %v471
    %v474 = vmul.f32 %v450, %v472
    %v475 = vmul.f32 %v451, %v472
    %v476 = vmul.f32 %v452, %v472
    %v477 = vmul.f32 %v453, %v472
    %v478 = vmul.f32 %v454, %v472
    %v479 = vmul.f32 %v455, %v472
    %v480 = vmul.f32 %v456, %v472
    %v481 = vmul.f32 %v457, %v472
    %v482 = vmul.f32 %v458, %v472
    %v483 = vmul.f32 %v459, %v472
    %v484 = vmul.f32 %v460, %v472
    %v485 = vmul.f32 %v461, %v472
    %v486 = vmul.f32 %v462, %v472
    %v487 = vmul.f32 %v463, %v472
    %v488 = vmul.f32 %v464, %v472
    %v489 = vmul.f32 %v465, %v472
    %v490 = vadd.f32 %v417, %v474
    %v491 = vadd.f32 %v418, %v475
    %v492 = vadd.f32 %v419, %v476
    %v493 = vadd.f32 %v420, %v477
    %v494 = vadd.f32 %v421, %v478
    %v495 = vadd.f32 %v422, %v479
    %v496 = vadd.f32 %v423, %v480
    %v497 = vadd.f32 %v424, %v481
    %v498 = vadd.f32 %v425, %v482
    %v499 = vadd.f32 %v426, %v483
    %v500 = vadd.f32 %v427, %v484
    %v501 = vadd.f32 %v428, %v485
    %v502 = vadd.f32 %v429, %v486
    %v503 = vadd.f32 %v430, %v487
    %v504 = vadd.f32 %v431, %v488
    %v505 = vadd.f32 %v432, %v489
    %s506 = scalar_lea.vmem [#allocation2], 384
    %v507 = vld [vmem:[%s506] sm:$0xf]
    %v508 = vld [vmem:[%s506 + $0x4] sm:$0xf]
    %v509 = vld [vmem:[%s506 + $0x8] sm:$0xf]
    %v510 = vld [vmem:[%s506 + $0xc] sm:$0xf]
    %v511 = vld [vmem:[%s506 + $0x10] sm:$0xf]
    %v512 = vld [vmem:[%s506 + $0x14] sm:$0xf]
    %v513 = vld [vmem:[%s506 + $0x18] sm:$0xf]
    %v514 = vld [vmem:[%s506 + $0x1c] sm:$0xf]
    %v515 = vld [vmem:[%s506 + $0x20] sm:$0xf]
    %v516 = vld [vmem:[%s506 + $0x24] sm:$0xf]
    %v517 = vld [vmem:[%s506 + $0x28] sm:$0xf]
    %v518 = vld [vmem:[%s506 + $0x2c] sm:$0xf]
    %v519 = vld [vmem:[%s506 + $0x30] sm:$0xf]
    %v520 = vld [vmem:[%s506 + $0x34] sm:$0xf]
    %v521 = vld [vmem:[%s506 + $0x38] sm:$0xf]
    %v522 = vld [vmem:[%s506 + $0x3c] sm:$0xf]
    %v523 = vunpack.c.l.bf16 %v507
    %v524 = vunpack.c.l.bf16 %v508
    %v525 = vunpack.c.l.bf16 %v509
    %v526 = vunpack.c.l.bf16 %v510
    %v527 = vunpack.c.l.bf16 %v511
    %v528 = vunpack.c.l.bf16 %v512
    %v529 = vunpack.c.l.bf16 %v513
    %v530 = vunpack.c.l.bf16 %v514
    %v531 = vunpack.c.l.bf16 %v515
    %v532 = vunpack.c.l.bf16 %v516
    %v533 = vunpack.c.l.bf16 %v517
    %v534 = vunpack.c.l.bf16 %v518
    %v535 = vunpack.c.l.bf16 %v519
    %v536 = vunpack.c.l.bf16 %v520
    %v537 = vunpack.c.l.bf16 %v521
    %v538 = vunpack.c.l.bf16 %v522
    %s539 = scalar_lea.vmem [#allocation5], 6
    %v540 = vld [vmem:[%s539] sm:$0x1]
    %v542 = vlaneseq
    %v543 = vshrl.u32 %v542, 7
    %v544 = vsub.s32 0, %v543
    %v545 = vrot.slane %v540, %v544
    %v547 = vmul.f32 %v523, %v545
    %v548 = vmul.f32 %v524, %v545
    %v549 = vmul.f32 %v525, %v545
    %v550 = vmul.f32 %v526, %v545
    %v551 = vmul.f32 %v527, %v545
    %v552 = vmul.f32 %v528, %v545
    %v553 = vmul.f32 %v529, %v545
    %v554 = vmul.f32 %v530, %v545
    %v555 = vmul.f32 %v531, %v545
    %v556 = vmul.f32 %v532, %v545
    %v557 = vmul.f32 %v533, %v545
    %v558 = vmul.f32 %v534, %v545
    %v559 = vmul.f32 %v535, %v545
    %v560 = vmul.f32 %v536, %v545
    %v561 = vmul.f32 %v537, %v545
    %v562 = vmul.f32 %v538, %v545
    %v563 = vadd.f32 %v490, %v547
    %v564 = vadd.f32 %v491, %v548
    %v565 = vadd.f32 %v492, %v549
    %v566 = vadd.f32 %v493, %v550
    %v567 = vadd.f32 %v494, %v551
    %v568 = vadd.f32 %v495, %v552
    %v569 = vadd.f32 %v496, %v553
    %v570 = vadd.f32 %v497, %v554
    %v571 = vadd.f32 %v498, %v555
    %v572 = vadd.f32 %v499, %v556
    %v573 = vadd.f32 %v500, %v557
    %v574 = vadd.f32 %v501, %v558
    %v575 = vadd.f32 %v502, %v559
    %v576 = vadd.f32 %v503, %v560
    %v577 = vadd.f32 %v504, %v561
    %v578 = vadd.f32 %v505, %v562
    %s579 = scalar_lea.vmem [#allocation2], 448
    %v580 = vld [vmem:[%s579] sm:$0xf]
    %v581 = vld [vmem:[%s579 + $0x4] sm:$0xf]
    %v582 = vld [vmem:[%s579 + $0x8] sm:$0xf]
    %v583 = vld [vmem:[%s579 + $0xc] sm:$0xf]
    %v584 = vld [vmem:[%s579 + $0x10] sm:$0xf]
    %v585 = vld [vmem:[%s579 + $0x14] sm:$0xf]
    %v586 = vld [vmem:[%s579 + $0x18] sm:$0xf]
    %v587 = vld [vmem:[%s579 + $0x1c] sm:$0xf]
    %v588 = vld [vmem:[%s579 + $0x20] sm:$0xf]
    %v589 = vld [vmem:[%s579 + $0x24] sm:$0xf]
    %v590 = vld [vmem:[%s579 + $0x28] sm:$0xf]
    %v591 = vld [vmem:[%s579 + $0x2c] sm:$0xf]
    %v592 = vld [vmem:[%s579 + $0x30] sm:$0xf]
    %v593 = vld [vmem:[%s579 + $0x34] sm:$0xf]
    %v594 = vld [vmem:[%s579 + $0x38] sm:$0xf]
    %v595 = vld [vmem:[%s579 + $0x3c] sm:$0xf]
    %v596 = vunpack.c.l.bf16 %v580
    %v597 = vunpack.c.l.bf16 %v581
    %v598 = vunpack.c.l.bf16 %v582
    %v599 = vunpack.c.l.bf16 %v583
    %v600 = vunpack.c.l.bf16 %v584
    %v601 = vunpack.c.l.bf16 %v585
    %v602 = vunpack.c.l.bf16 %v586
    %v603 = vunpack.c.l.bf16 %v587
    %v604 = vunpack.c.l.bf16 %v588
    %v605 = vunpack.c.l.bf16 %v589
    %v606 = vunpack.c.l.bf16 %v590
    %v607 = vunpack.c.l.bf16 %v591
    %v608 = vunpack.c.l.bf16 %v592
    %v609 = vunpack.c.l.bf16 %v593
    %v610 = vunpack.c.l.bf16 %v594
    %v611 = vunpack.c.l.bf16 %v595
    %s612 = scalar_lea.vmem [#allocation5], 7
    %v613 = vld [vmem:[%s612] sm:$0x1]
    %v615 = vlaneseq
    %v616 = vshrl.u32 %v615, 7
    %v617 = vsub.s32 0, %v616
    %v618 = vrot.slane %v613, %v617
    %v620 = vmul.f32 %v596, %v618
    %v621 = vmul.f32 %v597, %v618
    %v622 = vmul.f32 %v598, %v618
    %v623 = vmul.f32 %v599, %v618
    %v624 = vmul.f32 %v600, %v618
    %v625 = vmul.f32 %v601, %v618
    %v626 = vmul.f32 %v602, %v618
    %v627 = vmul.f32 %v603, %v618
    %v628 = vmul.f32 %v604, %v618
    %v629 = vmul.f32 %v605, %v618
    %v630 = vmul.f32 %v606, %v618
    %v631 = vmul.f32 %v607, %v618
    %v632 = vmul.f32 %v608, %v618
    %v633 = vmul.f32 %v609, %v618
    %v634 = vmul.f32 %v610, %v618
    %v635 = vmul.f32 %v611, %v618
    %v636 = vadd.f32 %v563, %v620
    %v637 = vadd.f32 %v564, %v621
    %v638 = vadd.f32 %v565, %v622
    %v639 = vadd.f32 %v566, %v623
    %v640 = vadd.f32 %v567, %v624
    %v641 = vadd.f32 %v568, %v625
    %v642 = vadd.f32 %v569, %v626
    %v643 = vadd.f32 %v570, %v627
    %v644 = vadd.f32 %v571, %v628
    %v645 = vadd.f32 %v572, %v629
    %v646 = vadd.f32 %v573, %v630
    %v647 = vadd.f32 %v574, %v631
    %v648 = vadd.f32 %v575, %v632
    %v649 = vadd.f32 %v576, %v633
    %v650 = vadd.f32 %v577, %v634
    %v651 = vadd.f32 %v578, %v635
    %s652 = scalar_lea.vmem [#allocation2], 512
    %v653 = vld [vmem:[%s652] sm:$0xf]
    %v654 = vld [vmem:[%s652 + $0x4] sm:$0xf]
    %v655 = vld [vmem:[%s652 + $0x8] sm:$0xf]
    %v656 = vld [vmem:[%s652 + $0xc] sm:$0xf]
    %v657 = vld [vmem:[%s652 + $0x10] sm:$0xf]
    %v658 = vld [vmem:[%s652 + $0x14] sm:$0xf]
    %v659 = vld [vmem:[%s652 + $0x18] sm:$0xf]
    %v660 = vld [vmem:[%s652 + $0x1c] sm:$0xf]
    %v661 = vld [vmem:[%s652 + $0x20] sm:$0xf]
    %v662 = vld [vmem:[%s652 + $0x24] sm:$0xf]
    %v663 = vld [vmem:[%s652 + $0x28] sm:$0xf]
    %v664 = vld [vmem:[%s652 + $0x2c] sm:$0xf]
    %v665 = vld [vmem:[%s652 + $0x30] sm:$0xf]
    %v666 = vld [vmem:[%s652 + $0x34] sm:$0xf]
    %v667 = vld [vmem:[%s652 + $0x38] sm:$0xf]
    %v668 = vld [vmem:[%s652 + $0x3c] sm:$0xf]
    %v669 = vunpack.c.l.bf16 %v653
    %v670 = vunpack.c.l.bf16 %v654
    %v671 = vunpack.c.l.bf16 %v655
    %v672 = vunpack.c.l.bf16 %v656
    %v673 = vunpack.c.l.bf16 %v657
    %v674 = vunpack.c.l.bf16 %v658
    %v675 = vunpack.c.l.bf16 %v659
    %v676 = vunpack.c.l.bf16 %v660
    %v677 = vunpack.c.l.bf16 %v661
    %v678 = vunpack.c.l.bf16 %v662
    %v679 = vunpack.c.l.bf16 %v663
    %v680 = vunpack.c.l.bf16 %v664
    %v681 = vunpack.c.l.bf16 %v665
    %v682 = vunpack.c.l.bf16 %v666
    %v683 = vunpack.c.l.bf16 %v667
    %v684 = vunpack.c.l.bf16 %v668
    %s685 = scalar_lea.vmem [#allocation5], 8
    %v686 = vld [vmem:[%s685] sm:$0x1]
    %v688 = vlaneseq
    %v689 = vshrl.u32 %v688, 7
    %v690 = vsub.s32 0, %v689
    %v691 = vrot.slane %v686, %v690
    %v693 = vmul.f32 %v669, %v691
    %v694 = vmul.f32 %v670, %v691
    %v695 = vmul.f32 %v671, %v691
    %v696 = vmul.f32 %v672, %v691
    %v697 = vmul.f32 %v673, %v691
    %v698 = vmul.f32 %v674, %v691
    %v699 = vmul.f32 %v675, %v691
    %v700 = vmul.f32 %v676, %v691
    %v701 = vmul.f32 %v677, %v691
    %v702 = vmul.f32 %v678, %v691
    %v703 = vmul.f32 %v679, %v691
    %v704 = vmul.f32 %v680, %v691
    %v705 = vmul.f32 %v681, %v691
    %v706 = vmul.f32 %v682, %v691
    %v707 = vmul.f32 %v683, %v691
    %v708 = vmul.f32 %v684, %v691
    %v709 = vadd.f32 %v636, %v693
    %v710 = vadd.f32 %v637, %v694
    %v711 = vadd.f32 %v638, %v695
    %v712 = vadd.f32 %v639, %v696
    %v713 = vadd.f32 %v640, %v697
    %v714 = vadd.f32 %v641, %v698
    %v715 = vadd.f32 %v642, %v699
    %v716 = vadd.f32 %v643, %v700
    %v717 = vadd.f32 %v644, %v701
    %v718 = vadd.f32 %v645, %v702
    %v719 = vadd.f32 %v646, %v703
    %v720 = vadd.f32 %v647, %v704
    %v721 = vadd.f32 %v648, %v705
    %v722 = vadd.f32 %v649, %v706
    %v723 = vadd.f32 %v650, %v707
    %v724 = vadd.f32 %v651, %v708
    %v725 = vld [vmem:[#allocation7] sm:$0x1]
    %v727 = vlaneseq
    %v728 = vshrl.u32 %v727, 7
    %v729 = vsub.s32 0, %v728
    %v730 = vrot.slane %v725, %v729
    %v732 = vadd.f32 %v709, %v730
    %v733 = vadd.f32 %v710, %v730
    %v734 = vadd.f32 %v711, %v730
    %v735 = vadd.f32 %v712, %v730
    %v736 = vadd.f32 %v713, %v730
    %v737 = vadd.f32 %v714, %v730
    %v738 = vadd.f32 %v715, %v730
    %v739 = vadd.f32 %v716, %v730
    %v740 = vadd.f32 %v717, %v730
    %v741 = vadd.f32 %v718, %v730
    %v742 = vadd.f32 %v719, %v730
    %v743 = vadd.f32 %v720, %v730
    %v744 = vadd.f32 %v721, %v730
    %v745 = vadd.f32 %v722, %v730
    %v746 = vadd.f32 %v723, %v730
    %v747 = vadd.f32 %v724, %v730
    %v748 = vmax.f32 %v732, 0.0
    %v749 = vmax.f32 %v733, 0.0
    %v750 = vmax.f32 %v734, 0.0
    %v751 = vmax.f32 %v735, 0.0
    %v752 = vmax.f32 %v736, 0.0
    %v753 = vmax.f32 %v737, 0.0
    %v754 = vmax.f32 %v738, 0.0
    %v755 = vmax.f32 %v739, 0.0
    %v756 = vmax.f32 %v740, 0.0
    %v757 = vmax.f32 %v741, 0.0
    %v758 = vmax.f32 %v742, 0.0
    %v759 = vmax.f32 %v743, 0.0
    %v760 = vmax.f32 %v744, 0.0
    %v761 = vmax.f32 %v745, 0.0
    %v762 = vmax.f32 %v746, 0.0
    %v763 = vmax.f32 %v747, 0.0
    %v764 = vmin.f32 %v748, 6.0
    %v765 = vmin.f32 %v749, 6.0
    %v766 = vmin.f32 %v750, 6.0
    %v767 = vmin.f32 %v751, 6.0
    %v768 = vmin.f32 %v752, 6.0
    %v769 = vmin.f32 %v753, 6.0
    %v770 = vmin.f32 %v754, 6.0
    %v771 = vmin.f32 %v755, 6.0
    %v772 = vmin.f32 %v756, 6.0
    %v773 = vmin.f32 %v757, 6.0
    %v774 = vmin.f32 %v758, 6.0
    %v775 = vmin.f32 %v759, 6.0
    %v776 = vmin.f32 %v760, 6.0
    %v777 = vmin.f32 %v761, 6.0
    %v778 = vmin.f32 %v762, 6.0
    %v779 = vmin.f32 %v763, 6.0
    %v780 = vpack.c.bf16 %v765, %v764
    %v781 = vpack.c.bf16 %v767, %v766
    %v782 = vpack.c.bf16 %v769, %v768
    %v783 = vpack.c.bf16 %v771, %v770
    %v784 = vpack.c.bf16 %v773, %v772
    %v785 = vpack.c.bf16 %v775, %v774
    %v786 = vpack.c.bf16 %v777, %v776
    %v787 = vpack.c.bf16 %v779, %v778
    %v788 = vld [vmem:[#allocation8] sm:$0xf]
    %v789 = vld [vmem:[#allocation8 + $0x4] sm:$0xf]
    %v790 = vld [vmem:[#allocation8 + $0x8] sm:$0xf]
    %v791 = vld [vmem:[#allocation8 + $0xc] sm:$0xf]
    %v792 = vld [vmem:[#allocation8 + $0x10] sm:$0xf]
    %v793 = vld [vmem:[#allocation8 + $0x14] sm:$0xf]
    %v794 = vld [vmem:[#allocation8 + $0x18] sm:$0xf]
    %v795 = vld [vmem:[#allocation8 + $0x1c] sm:$0xf]
    %v796 = vld [vmem:[#allocation8 + $0x20] sm:$0xf]
    %v797 = vld [vmem:[#allocation8 + $0x24] sm:$0xf]
    %v798 = vld [vmem:[#allocation8 + $0x28] sm:$0xf]
    %v799 = vld [vmem:[#allocation8 + $0x2c] sm:$0xf]
    %v800 = vld [vmem:[#allocation8 + $0x30] sm:$0xf]
    %v801 = vld [vmem:[#allocation8 + $0x34] sm:$0xf]
    %v802 = vld [vmem:[#allocation8 + $0x38] sm:$0xf]
    %v803 = vld [vmem:[#allocation8 + $0x3c] sm:$0xf]
    %v804 = vld [vmem:[#allocation10] sm:$0x1]
    %v806 = vlaneseq
    %v807 = vshrl.u32 %v806, 7
    %v808 = vsub.s32 0, %v807
    %v809 = vrot.slane %v804, %v808
    %v827 = vunpack.c.l.b16 %v788
    %v828 = vunpack.c.l.b16 %v789
    %v829 = vunpack.c.l.b16 %v790
    %v830 = vunpack.c.l.b16 %v791
    %v831 = vunpack.c.l.b16 %v792
    %v832 = vunpack.c.l.b16 %v793
    %v833 = vunpack.c.l.b16 %v794
    %v834 = vunpack.c.l.b16 %v795
    %v835 = vunpack.c.l.b16 %v796
    %v836 = vunpack.c.l.b16 %v797
    %v837 = vunpack.c.l.b16 %v798
    %v838 = vunpack.c.l.b16 %v799
    %v839 = vunpack.c.l.b16 %v800
    %v840 = vunpack.c.l.b16 %v801
    %v841 = vunpack.c.l.b16 %v802
    %v842 = vunpack.c.l.b16 %v803
    %v843 = vpack.c.b16 %v828, %v827
    %v844 = vpack.c.b16 %v830, %v829
    %v845 = vpack.c.b16 %v832, %v831
    %v846 = vpack.c.b16 %v834, %v833
    %v847 = vpack.c.b16 %v836, %v835
    %v848 = vpack.c.b16 %v838, %v837
    %v849 = vpack.c.b16 %v840, %v839
    %v850 = vpack.c.b16 %v842, %v841
    %859 = vmatprep.subr.bf16.mxu0 0
    %860 = vmatpush1.bf16.msra.mxu0 %v843
    %861 = vmatprep.subr.bf16.mxu0 0
    %862 = vmatpush1.bf16.msra.mxu0 %v844
    %863 = vmatprep.subr.bf16.mxu0 0
    %864 = vmatpush1.bf16.msra.mxu0 %v845
    %865 = vmatprep.subr.bf16.mxu0 0
    %866 = vmatpush1.bf16.msra.mxu0 %v846
    %867 = vmatprep.subr.bf16.mxu0 0
    %868 = vmatpush1.bf16.msra.mxu0 %v847
    %869 = vmatprep.subr.bf16.mxu0 0
    %870 = vmatpush1.bf16.msra.mxu0 %v848
    %871 = vmatprep.subr.bf16.mxu0 0
    %872 = vmatpush1.bf16.msra.mxu0 %v849
    %873 = vmatprep.subr.bf16.mxu0 0
    %874 = vmatpush1.bf16.msra.mxu0 %v850
    %875 = vmatprep.subr.bf16.mxu0 0
    %876 = vmatpush1.bf16.msra.mxu0 0
    %877 = vmatprep.subr.bf16.mxu0 0
    %878 = vmatpush1.bf16.msra.mxu0 0
    %879 = vmatprep.subr.bf16.mxu0 0
    %880 = vmatpush1.bf16.msra.mxu0 0
    %881 = vmatprep.subr.bf16.mxu0 0
    %882 = vmatpush1.bf16.msra.mxu0 0
    %883 = vmatprep.subr.bf16.mxu0 0
    %884 = vmatpush1.bf16.msra.mxu0 0
    %885 = vmatprep.subr.bf16.mxu0 0
    %886 = vmatpush1.bf16.msra.mxu0 0
    %887 = vmatprep.subr.bf16.mxu0 0
    %888 = vmatpush1.bf16.msra.mxu0 0
    %889 = vmatprep.subr.bf16.mxu0 0
    %890 = vmatpush1.bf16.msra.mxu0 0
    %891 = vmatprep.mubr.bf16.mxu0 0
    %892 = vmatmul.mubr.bf16.gmra.mrb[0].mxu0 %v780
    %v893 = vpop.f32.mrb[0].mxu0
    %v894 = vadd.f32 %v809, %v893
    %v895 = vpop.f32.mrb[0].mxu0
    %v896 = vpop.f32.mrb[0].mxu0
    %v897 = vadd.f32 %v809, %v896
    %v898 = vpop.f32.mrb[0].mxu0
    %899 = vmatprep.mubr.bf16.mxu0 0
    %900 = vmatmul.mubr.bf16.gmra.mrb[0].mxu0 %v781
    %v901 = vpop.f32.mrb[0].mxu0
    %v902 = vadd.f32 %v809, %v901
    %v903 = vpop.f32.mrb[0].mxu0
    %v904 = vpop.f32.mrb[0].mxu0
    %v905 = vadd.f32 %v809, %v904
    %v906 = vpop.f32.mrb[0].mxu0
    %907 = vmatprep.mubr.bf16.mxu0 0
    %908 = vmatmul.mubr.bf16.gmra.mrb[0].mxu0 %v782
    %v909 = vpop.f32.mrb[0].mxu0
    %v910 = vadd.f32 %v809, %v909
    %v911 = vpop.f32.mrb[0].mxu0
    %v912 = vpop.f32.mrb[0].mxu0
    %v913 = vadd.f32 %v809, %v912
    %v914 = vpop.f32.mrb[0].mxu0
    %915 = vmatprep.mubr.bf16.mxu0 0
    %916 = vmatmul.mubr.bf16.gmra.mrb[0].mxu0 %v783
    %v917 = vpop.f32.mrb[0].mxu0
    %v918 = vadd.f32 %v809, %v917
    %v919 = vpop.f32.mrb[0].mxu0
    %v920 = vpop.f32.mrb[0].mxu0
    %v921 = vadd.f32 %v809, %v920
    %v922 = vpop.f32.mrb[0].mxu0
    %923 = vmatprep.mubr.bf16.mxu0 0
    %924 = vmatmul.mubr.bf16.gmra.mrb[0].mxu0 %v784
    %v925 = vpop.f32.mrb[0].mxu0
    %v926 = vadd.f32 %v809, %v925
    %v927 = vpop.f32.mrb[0].mxu0
    %v928 = vpop.f32.mrb[0].mxu0
    %v929 = vadd.f32 %v809, %v928
    %v930 = vpop.f32.mrb[0].mxu0
    %931 = vmatprep.mubr.bf16.mxu0 0
    %932 = vmatmul.mubr.bf16.gmra.mrb[0].mxu0 %v785
    %v933 = vpop.f32.mrb[0].mxu0
    %v934 = vadd.f32 %v809, %v933
    %v935 = vpop.f32.mrb[0].mxu0
    %v936 = vpop.f32.mrb[0].mxu0
    %v937 = vadd.f32 %v809, %v936
    %v938 = vpop.f32.mrb[0].mxu0
    %939 = vmatprep.mubr.bf16.mxu0 0
    %940 = vmatmul.mubr.bf16.gmra.mrb[0].mxu0 %v786
    %v941 = vpop.f32.mrb[0].mxu0
    %v942 = vadd.f32 %v809, %v941
    %v943 = vpop.f32.mrb[0].mxu0
    %v944 = vpop.f32.mrb[0].mxu0
    %v945 = vadd.f32 %v809, %v944
    %v946 = vpop.f32.mrb[0].mxu0
    %947 = vmatprep.mubr.bf16.mxu0 0
    %948 = vmatmul.mubr.bf16.gmra.mrb[0].mxu0 %v787
    %v949 = vpop.f32.mrb[0].mxu0
    %v950 = vadd.f32 %v809, %v949
    %v951 = vpop.f32.mrb[0].mxu0
    %v952 = vpop.f32.mrb[0].mxu0
    %v953 = vadd.f32 %v809, %v952
    %v954 = vpop.f32.mrb[0].mxu0
    %955 = vdwg.mxu0
    %v956 = vmax.f32 %v894, 0.0
    %v957 = vmax.f32 %v897, 0.0
    %v958 = vmax.f32 %v902, 0.0
    %v959 = vmax.f32 %v905, 0.0
    %v960 = vmax.f32 %v910, 0.0
    %v961 = vmax.f32 %v913, 0.0
    %v962 = vmax.f32 %v918, 0.0
    %v963 = vmax.f32 %v921, 0.0
    %v964 = vmax.f32 %v926, 0.0
    %v965 = vmax.f32 %v929, 0.0
    %v966 = vmax.f32 %v934, 0.0
    %v967 = vmax.f32 %v937, 0.0
    %v968 = vmax.f32 %v942, 0.0
    %v969 = vmax.f32 %v945, 0.0
    %v970 = vmax.f32 %v950, 0.0
    %v971 = vmax.f32 %v953, 0.0
    %v972 = vmin.f32 %v956, 6.0
    %v973 = vmin.f32 %v957, 6.0
    %v974 = vmin.f32 %v958, 6.0
    %v975 = vmin.f32 %v959, 6.0
    %v976 = vmin.f32 %v960, 6.0
    %v977 = vmin.f32 %v961, 6.0
    %v978 = vmin.f32 %v962, 6.0
    %v979 = vmin.f32 %v963, 6.0
    %v980 = vmin.f32 %v964, 6.0
    %v981 = vmin.f32 %v965, 6.0
    %v982 = vmin.f32 %v966, 6.0
    %v983 = vmin.f32 %v967, 6.0
    %v984 = vmin.f32 %v968, 6.0
    %v985 = vmin.f32 %v969, 6.0
    %v986 = vmin.f32 %v970, 6.0
    %v987 = vmin.f32 %v971, 6.0
    %v988 = vpack.c.bf16 %v973, %v972
    %v989 = vpack.c.bf16 %v975, %v974
    %v990 = vpack.c.bf16 %v977, %v976
    %v991 = vpack.c.bf16 %v979, %v978
    %v992 = vpack.c.bf16 %v981, %v980
    %v993 = vpack.c.bf16 %v983, %v982
    %v994 = vpack.c.bf16 %v985, %v984
    %v995 = vpack.c.bf16 %v987, %v986
    %v1004 = vunpack.c.l.b16 %v988
    %v1005 = vunpack.c.h.b16 %v988
    %v1006 = vunpack.c.l.b16 %v989
    %v1007 = vunpack.c.h.b16 %v989
    %v1008 = vunpack.c.l.b16 %v990
    %v1009 = vunpack.c.h.b16 %v990
    %v1010 = vunpack.c.l.b16 %v991
    %v1011 = vunpack.c.h.b16 %v991
    %v1012 = vunpack.c.l.b16 %v992
    %v1013 = vunpack.c.h.b16 %v992
    %v1014 = vunpack.c.l.b16 %v993
    %v1015 = vunpack.c.h.b16 %v993
    %v1016 = vunpack.c.l.b16 %v994
    %v1017 = vunpack.c.h.b16 %v994
    %v1018 = vunpack.c.l.b16 %v995
    %v1019 = vunpack.c.h.b16 %v995
    %v1020 = vpack.c.b16 %v1004, %v1004
    %v1021 = vpack.c.b16 %v1005, %v1005
    %v1022 = vpack.c.b16 %v1006, %v1006
    %v1023 = vpack.c.b16 %v1007, %v1007
    %v1024 = vpack.c.b16 %v1008, %v1008
    %v1025 = vpack.c.b16 %v1009, %v1009
    %v1026 = vpack.c.b16 %v1010, %v1010
    %v1027 = vpack.c.b16 %v1011, %v1011
    %v1028 = vpack.c.b16 %v1012, %v1012
    %v1029 = vpack.c.b16 %v1013, %v1013
    %v1030 = vpack.c.b16 %v1014, %v1014
    %v1031 = vpack.c.b16 %v1015, %v1015
    %v1032 = vpack.c.b16 %v1016, %v1016
    %v1033 = vpack.c.b16 %v1017, %v1017
    %v1034 = vpack.c.b16 %v1018, %v1018
    %v1035 = vpack.c.b16 %v1019, %v1019
    %1052 = vst [vmem:[#allocation11] sm:$0xf] %v1020
    %1053 = vst [vmem:[#allocation11 + $0x4] sm:$0xf] %v1021
    %1054 = vst [vmem:[#allocation11 + $0x8] sm:$0xf] %v1022
    %1055 = vst [vmem:[#allocation11 + $0xc] sm:$0xf] %v1023
    %1056 = vst [vmem:[#allocation11 + $0x10] sm:$0xf] %v1024
    %1057 = vst [vmem:[#allocation11 + $0x14] sm:$0xf] %v1025
    %1058 = vst [vmem:[#allocation11 + $0x18] sm:$0xf] %v1026
    %1059 = vst [vmem:[#allocation11 + $0x1c] sm:$0xf] %v1027
    %1060 = vst [vmem:[#allocation11 + $0x20] sm:$0xf] %v1028
    %1061 = vst [vmem:[#allocation11 + $0x24] sm:$0xf] %v1029
    %1062 = vst [vmem:[#allocation11 + $0x28] sm:$0xf] %v1030
    %1063 = vst [vmem:[#allocation11 + $0x2c] sm:$0xf] %v1031
    %1064 = vst [vmem:[#allocation11 + $0x30] sm:$0xf] %v1032
    %1065 = vst [vmem:[#allocation11 + $0x34] sm:$0xf] %v1033
    %1066 = vst [vmem:[#allocation11 + $0x38] sm:$0xf] %v1034
    %1067 = vst [vmem:[#allocation11 + $0x3c] sm:$0xf] %v1035
    // Predicated region
    $region42: #{mobilenet_v1_forward.17} parent=1 // pred_check
      _
    $region43: #{mobilenet_v1_forward.17} parent=1 // pred_check_branch
      %1069 = sbr.rel (0) target = $region45
    $region44: #{mobilenet_v1_forward.17} parent=1 // pred_region
      %s1071 = ssub.s32 1024, 1024
      %1072 = vsyncadd [#allocation4], %s1071
      %s1073 = sshll.u32 [#allocation11], 4
      %s1074 = int_to_ptr.vmem [resolvable:$true] %s1073
      %1079 = dma.vmem_to_hbm [thread:$0]  %s1074, 1024, %s5, [#allocation4], 64, 64, 4
    $region45: #{mobilenet_v1_forward.17} parent=1 // pred_fallthru
      _
    // Predicated region
    $region46: #{mobilenet_v1_forward.17} parent=1 // pred_check
      _
    $region47: #{mobilenet_v1_forward.17} parent=1 // pred_check_branch
      %1081 = sbr.rel (0) target = $region49
    $region48: #{mobilenet_v1_forward.17} parent=1 // pred_region
      %1082 = dma.done [#allocation4], 1024
    $region49: #{mobilenet_v1_forward.17} parent=1 // pred_fallthru
      _
    %1083 = vsyncpa [#allocation3], 1
    %1084 = vsyncpa [#allocation6], 1
    %1085 = vsyncpa [#allocation9], 1
    %1086 = vsyncpa [#allocation4], 1

// kernel: mobilenet_v1_forward.18
$region0: #{mobilenet_v1_forward.18}
  #allocation0 [shape = 'u32[]', space=smem, size = 0x4, offset = 0x4, fixed_abs, tag = 'smem constant byte address 0x4 - core index']
  #allocation1 [shape = 'u32[144,128]{1,0:T(1,128)}', space=vmem, size = 0x12000, scoped, tag = 'internal scratch']
  %s0 = inlined_call_operand.hbm [shape: bf16[2,104,128], index: 0, kind: input, shape index: {}]
  %s1 = inlined_call_operand.hbm [shape: f32[9,1,128], index: 1, kind: input, shape index: {}]
  %s2 = inlined_call_operand.hbm [shape: f32[1,128], index: 2, kind: input, shape index: {}]
  %s3 = inlined_call_operand.hbm [shape: bf16[128,128], index: 3, kind: input, shape index: {}]
  %s4 = inlined_call_operand.hbm [shape: f32[1,128], index: 4, kind: input, shape index: {}]
  %s5 = inlined_call_operand.hbm [shape: bf16[2,80,128], index: 5, kind: output, shape index: {}]
  %s6 = sld [smem:[#allocation0]]
  $region73: #{mobilenet_v1_forward.18} parent=0
    _
  %s8 = ssub.s32 1, %s6
  %s9 = scalar_select 0, %s8, %s6
  $region1: #{mobilenet_v1_forward.18} parent=0
    #allocation2 [shape = 'u8[53248]{0}', space=vmem, size = 0xd000, scoped, tag = 'input window, operand 0']
    #allocation3 [shape = 's32[2]{0}', space=sflag, size = 0x8, scoped, tag = 'scoped memory for mobilenet_v1_forward.18']
    #allocation4 [shape = 's32[2]{0}', space=sflag, size = 0x8, scoped, tag = 'scoped memory for mobilenet_v1_forward.18']
    #allocation5 [shape = 'u8[4608]{0}', space=vmem, size = 0x1400, scoped, tag = 'input window, operand 1, single buffered']
    #allocation6 [shape = 's32[1]{0}', space=sflag, size = 0x4, scoped, tag = 'scoped memory for mobilenet_v1_forward.18']
    #allocation7 [shape = 'u8[512]{0}', space=vmem, size = 0x400, scoped, tag = 'input window, operand 2, single buffered']
    #allocation8 [shape = 'u8[32768]{0}', space=vmem, size = 0x8000, scoped, tag = 'input window, operand 3, single buffered']
    #allocation9 [shape = 's32[1]{0}', space=sflag, size = 0x4, scoped, tag = 'scoped memory for mobilenet_v1_forward.18']
    #allocation10 [shape = 'u8[512]{0}', space=vmem, size = 0x400, scoped, tag = 'input window, operand 4, single buffered']
    #allocation11 [shape = 'u8[40960]{0}', space=vmem, size = 0xa000, scoped, tag = 'output window, operand 0']
    %10 = vsyncpa [#allocation3], 0
    %s11 = scalar_lea.sflag [#allocation3], 1
    %12 = vsyncpa %s11, 0
    %13 = vsyncpa [#allocation6], 0
    %14 = vsyncpa [#allocation9], 0
    %15 = vsyncpa [#allocation4], 0
    %s16 = scalar_lea.sflag [#allocation4], 1
    %17 = vsyncpa %s16, 0
    loop: start=0, step=1, limit=4
    $region2: #{mobilenet_v1_forward.18} parent=1 // loop_pre_header
      _
    $region3: #{mobilenet_v1_forward.18} parent=1 // loop_header
      %s19 = sphi 0, %s23
      %p20 = scmp.ge.s32.totalorder %s19, 4
      %s29 = sphi 0, %s31
      %s32 = sphi 0, %s29
      %s33 = sphi 0, %s32
      %s49 = sphi 0, %s33
      %s53 = sphi 0, %s53
      %s55 = sphi 0, %s53
      %s56 = sphi 0, %s55
      %s70 = sphi 0, %s56
      %s74 = sphi 0, %s74
      %s76 = sphi 0, %s74
      %s77 = sphi 0, %s76
      %s91 = sphi 0, %s77
      %s95 = sphi 0, %s95
      %s97 = sphi 0, %s95
      %s98 = sphi 0, %s97
      %s112 = sphi 0, %s98
      %s116 = sphi 0, %s116
      %s118 = sphi 0, %s116
      %s119 = sphi 0, %s118
      %s133 = sphi 0, %s119
      %s139 = sphi 0, %s141
      %s142 = sphi 0, %s139
      %s143 = sphi 0, %s142
      %s159 = sphi 0, %s143
    $region4: #{mobilenet_v1_forward.18} parent=1 // loop_header_branch
      %22 = sbr.rel (%p20) target = $region8
    $region5: #{mobilenet_v1_forward.18} parent=1 // loop_body
      %s24 = ssub.s32 %s19, 1
      %s25 = ssub.s32 %s19, 2
      %s26 = sadd.s32 %s19, 1
      %s27 = ssub.s32 %s19, %s26
      %p28 = scmp.eq.s32.totalorder %s27, 0
      %s30 = sadd.s32 %s29, 1
      %s31 = scalar_select %p28, %s29, %s30
      %p34 = pneg %p28
      %p35 = scmp.eq.s32.totalorder %s19, 1
      %p36 = por %p34, %p35
      %p37 = scmp.ne.s32.totalorder %s29, %s32
      %p38 = scmp.eq.s32.totalorder %s19, 0
      %p39 = por %p37, %p38
      %p40 = scmp.ne.s32.totalorder %s29, %s32
      %p41 = scmp.eq.s32.totalorder %s24, 1
      %p42 = por %p40, %p41
      %p43 = scmp.ne.s32.totalorder %s32, %s33
      %p44 = scmp.eq.s32.totalorder %s24, 0
      %p45 = por %p43, %p44
      %p46 = scmp.ne.s32.totalorder %s32, %s33
      %p47 = scmp.eq.s32.totalorder %s25, 1
      %p48 = por %p46, %p47
      %p50 = scmp.ne.s32.totalorder %s33, %s49
      %p51 = scmp.eq.s32.totalorder %s25, 0
      %p52 = por %p50, %p51
      %s54 = sadd.s32 %s53, 1
      %p57 = scmp.eq.s32.totalorder %s19, 1
      %p58 = scmp.ne.s32.totalorder %s53, %s55
      %p59 = scmp.eq.s32.totalorder %s19, 0
      %p60 = por %p58, %p59
      %p61 = scmp.ne.s32.totalorder %s53, %s55
      %p62 = scmp.eq.s32.totalorder %s24, 1
      %p63 = por %p61, %p62
      %p64 = scmp.ne.s32.totalorder %s55, %s56
      %p65 = scmp.eq.s32.totalorder %s24, 0
      %p66 = por %p64, %p65
      %p67 = scmp.ne.s32.totalorder %s55, %s56
      %p68 = scmp.eq.s32.totalorder %s25, 1
      %p69 = por %p67, %p68
      %p71 = scmp.ne.s32.totalorder %s56, %s70
      %p72 = scmp.eq.s32.totalorder %s25, 0
      %p73 = por %p71, %p72
      %s75 = sadd.s32 %s74, 1
      %p78 = scmp.eq.s32.totalorder %s19, 1
      %p79 = scmp.ne.s32.totalorder %s74, %s76
      %p80 = scmp.eq.s32.totalorder %s19, 0
      %p81 = por %p79, %p80
      %p82 = scmp.ne.s32.totalorder %s74, %s76
      %p83 = scmp.eq.s32.totalorder %s24, 1
      %p84 = por %p82, %p83
      %p85 = scmp.ne.s32.totalorder %s76, %s77
      %p86 = scmp.eq.s32.totalorder %s24, 0
      %p87 = por %p85, %p86
      %p88 = scmp.ne.s32.totalorder %s76, %s77
      %p89 = scmp.eq.s32.totalorder %s25, 1
      %p90 = por %p88, %p89
      %p92 = scmp.ne.s32.totalorder %s77, %s91
      %p93 = scmp.eq.s32.totalorder %s25, 0
      %p94 = por %p92, %p93
      %s96 = sadd.s32 %s95, 1
      %p99 = scmp.eq.s32.totalorder %s19, 1
      %p100 = scmp.ne.s32.totalorder %s95, %s97
      %p101 = scmp.eq.s32.totalorder %s19, 0
      %p102 = por %p100, %p101
      %p103 = scmp.ne.s32.totalorder %s95, %s97
      %p104 = scmp.eq.s32.totalorder %s24, 1
      %p105 = por %p103, %p104
      %p106 = scmp.ne.s32.totalorder %s97, %s98
      %p107 = scmp.eq.s32.totalorder %s24, 0
      %p108 = por %p106, %p107
      %p109 = scmp.ne.s32.totalorder %s97, %s98
      %p110 = scmp.eq.s32.totalorder %s25, 1
      %p111 = por %p109, %p110
      %p113 = scmp.ne.s32.totalorder %s98, %s112
      %p114 = scmp.eq.s32.totalorder %s25, 0
      %p115 = por %p113, %p114
      %s117 = sadd.s32 %s116, 1
      %p120 = scmp.eq.s32.totalorder %s19, 1
      %p121 = scmp.ne.s32.totalorder %s116, %s118
      %p122 = scmp.eq.s32.totalorder %s19, 0
      %p123 = por %p121, %p122
      %p124 = scmp.ne.s32.totalorder %s116, %s118
      %p125 = scmp.eq.s32.totalorder %s24, 1
      %p126 = por %p124, %p125
      %p127 = scmp.ne.s32.totalorder %s118, %s119
      %p128 = scmp.eq.s32.totalorder %s24, 0
      %p129 = por %p127, %p128
      %p130 = scmp.ne.s32.totalorder %s118, %s119
      %p131 = scmp.eq.s32.totalorder %s25, 1
      %p132 = por %p130, %p131
      %p134 = scmp.ne.s32.totalorder %s119, %s133
      %p135 = scmp.eq.s32.totalorder %s25, 0
      %p136 = por %p134, %p135
      %s137 = ssub.s32 %s19, %s26
      %p138 = scmp.eq.s32.totalorder %s137, 0
      %s140 = sadd.s32 %s139, 1
      %s141 = scalar_select %p138, %s139, %s140
      %p144 = pneg %p138
      %p145 = scmp.eq.s32.totalorder %s19, 1
      %p146 = por %p144, %p145
      %p147 = scmp.ne.s32.totalorder %s139, %s142
      %p148 = scmp.eq.s32.totalorder %s19, 0
      %p149 = por %p147, %p148
      %p150 = scmp.ne.s32.totalorder %s139, %s142
      %p151 = scmp.eq.s32.totalorder %s24, 1
      %p152 = por %p150, %p151
      %p153 = scmp.ne.s32.totalorder %s142, %s143
      %p154 = scmp.eq.s32.totalorder %s24, 0
      %p155 = por %p153, %p154
      %p156 = scmp.ne.s32.totalorder %s142, %s143
      %p157 = scmp.eq.s32.totalorder %s25, 1
      %p158 = por %p156, %p157
      %p160 = scmp.ne.s32.totalorder %s143, %s159
      %p161 = scmp.eq.s32.totalorder %s25, 0
      %p162 = por %p160, %p161
      %p163 = scmp.le.s32.totalorder 1, %s19
      %p164 = scmp.lt.s32.totalorder %s19, 3
      %p165 = pnand %p163, %p164
      %p166 = pneg %p165
      // Predicated region
      $region9: #{mobilenet_v1_forward.18} parent=5 // pred_check
        _
      $region10: #{mobilenet_v1_forward.18} parent=5 // pred_check_branch
        %168 = sbr.rel (%p165) target = $region12
      $region11: #{mobilenet_v1_forward.18} parent=5 // pred_region
        %s169 = ssub.s32 %s19, 1
        // Predicated region
        $region13: #{mobilenet_v1_forward.18} parent=11 // pred_check
          %p170 = pneg %p66
        $region14: #{mobilenet_v1_forward.18} parent=11 // pred_check_branch
          %172 = sbr.rel (%p170) target = $region16
        $region15: #{mobilenet_v1_forward.18} parent=11 // pred_region
          %s174 = ssub.s32 144, 144
          %175 = vsyncadd [#allocation6], %s174
          %s176 = sshll.u32 [#allocation5], 4
          %s177 = int_to_ptr.vmem [resolvable:$true] %s176
          %182 = dma.hbm_to_vmem [thread:$0]  %s1, 144, %s177, [#allocation6], 16, 16, 1
        $region16: #{mobilenet_v1_forward.18} parent=11 // pred_fallthru
          _
        // Predicated region
        $region17: #{mobilenet_v1_forward.18} parent=11 // pred_check
          %p183 = pneg %p87
        $region18: #{mobilenet_v1_forward.18} parent=11 // pred_check_branch
          %185 = sbr.rel (%p183) target = $region20
        $region19: #{mobilenet_v1_forward.18} parent=11 // pred_region
          %s187 = ssub.s32 16, 16
          %188 = vsyncadd [#allocation6], %s187
          %s190 = sshll.u32 [#allocation7], 4
          %s191 = int_to_ptr.vmem [resolvable:$true] %s190
          %193 = dma.hbm_to_vmem [thread:$0]  %s2, 16, %s191, [#allocation6]
        $region20: #{mobilenet_v1_forward.18} parent=11 // pred_fallthru
          _
        // Predicated region
        $region21: #{mobilenet_v1_forward.18} parent=11 // pred_check
          %p194 = pneg %p108
        $region22: #{mobilenet_v1_forward.18} parent=11 // pred_check_branch
          %196 = sbr.rel (%p194) target = $region24
        $region23: #{mobilenet_v1_forward.18} parent=11 // pred_region
          %s198 = ssub.s32 1024, 1024
          %199 = vsyncadd [#allocation9], %s198
          %s200 = sshll.u32 [#allocation8], 4
          %s201 = int_to_ptr.vmem [resolvable:$true] %s200
          %206 = dma.hbm_to_vmem [thread:$0]  %s3, 1024, %s201, [#allocation9], 64, 64, 4
        $region24: #{mobilenet_v1_forward.18} parent=11 // pred_fallthru
          _
        // Predicated region
        $region25: #{mobilenet_v1_forward.18} parent=11 // pred_check
          %p207 = pneg %p129
        $region26: #{mobilenet_v1_forward.18} parent=11 // pred_check_branch
          %209 = sbr.rel (%p207) target = $region28
        $region27: #{mobilenet_v1_forward.18} parent=11 // pred_region
          %s211 = ssub.s32 16, 16
          %212 = vsyncadd [#allocation9], %s211
          %s214 = sshll.u32 [#allocation10], 4
          %s215 = int_to_ptr.vmem [resolvable:$true] %s214
          %217 = dma.hbm_to_vmem [thread:$0]  %s4, 16, %s215, [#allocation9]
        $region28: #{mobilenet_v1_forward.18} parent=11 // pred_fallthru
          _
      $region12: #{mobilenet_v1_forward.18} parent=5 // pred_fallthru
        _
      %p218 = scmp.lt.s32.totalorder %s19, 2
      // Predicated region
      $region29: #{mobilenet_v1_forward.18} parent=5 // pred_check
        %p219 = pneg %p218
      $region30: #{mobilenet_v1_forward.18} parent=5 // pred_check_branch
        %221 = sbr.rel (%p219) target = $region32
      $region31: #{mobilenet_v1_forward.18} parent=5 // pred_region
        // Predicated region
        $region33: #{mobilenet_v1_forward.18} parent=31 // pred_check
          %p222 = pneg %p39
        $region34: #{mobilenet_v1_forward.18} parent=31 // pred_check_branch
          %224 = sbr.rel (%p222) target = $region36
        $region35: #{mobilenet_v1_forward.18} parent=31 // pred_region
          %s225 = sand.u32 %s29, 1
          %s226 = scalar_lea.sflag [#allocation3], %s225
          %s227 = sand.u32 %s29, 1
          %s228 = smul.addr %s227, 52
          %s229 = scalar_lea.vmem [#allocation2], %s228
          %s231 = ssub.s32 832, 832
          %232 = vsyncadd %s226, %s231
          %s233 = smul.addr %s19, 13
          %s234 = smul.addr %s233, 64
          %s235 = scalar_lea.hbm %s0, %s234
          %s236 = sshll.u32 %s229, 4
          %s237 = int_to_ptr.vmem [resolvable:$true] %s236
          %242 = dma.hbm_to_vmem [thread:$0]  %s235, 832, %s237, %s226, 64, 64, 4
        $region36: #{mobilenet_v1_forward.18} parent=31 // pred_fallthru
          _
      $region32: #{mobilenet_v1_forward.18} parent=5 // pred_fallthru
        _
      %p243 = scmp.le.s32.totalorder 1, %s19
      %p244 = scmp.lt.s32.totalorder %s19, 3
      %p245 = pnand %p243, %p244
      %p246 = pneg %p245
      // Predicated region
      $region37: #{mobilenet_v1_forward.18} parent=5 // pred_check
        _
      $region38: #{mobilenet_v1_forward.18} parent=5 // pred_check_branch
        %248 = sbr.rel (%p245) target = $region40
      $region39: #{mobilenet_v1_forward.18} parent=5 // pred_region
        %s249 = ssub.s32 %s19, 1
        %s250 = sand.u32 %s32, 1
        %s251 = scalar_lea.sflag [#allocation3], %s250
        %s252 = sand.u32 %s32, 1
        %s253 = smul.addr %s252, 52
        %s254 = scalar_lea.vmem [#allocation2], %s253
        // Predicated region
        $region41: #{mobilenet_v1_forward.18} parent=39 // pred_check
          %p255 = pneg %p45
        $region42: #{mobilenet_v1_forward.18} parent=39 // pred_check_branch
          %257 = sbr.rel (%p255) target = $region44
        $region43: #{mobilenet_v1_forward.18} parent=39 // pred_region
          %258 = dma.done %s251, 832
        $region44: #{mobilenet_v1_forward.18} parent=39 // pred_fallthru
          _
        // Predicated region
        $region45: #{mobilenet_v1_forward.18} parent=39 // pred_check
          %p259 = pneg %p66
        $region46: #{mobilenet_v1_forward.18} parent=39 // pred_check_branch
          %261 = sbr.rel (%p259) target = $region48
        $region47: #{mobilenet_v1_forward.18} parent=39 // pred_region
          %262 = dma.done [#allocation6], 144
        $region48: #{mobilenet_v1_forward.18} parent=39 // pred_fallthru
          _
        // Predicated region
        $region49: #{mobilenet_v1_forward.18} parent=39 // pred_check
          %p263 = pneg %p87
        $region50: #{mobilenet_v1_forward.18} parent=39 // pred_check_branch
          %265 = sbr.rel (%p263) target = $region52
        $region51: #{mobilenet_v1_forward.18} parent=39 // pred_region
          %266 = dma.done [#allocation6], 16
        $region52: #{mobilenet_v1_forward.18} parent=39 // pred_fallthru
          _
        // Predicated region
        $region53: #{mobilenet_v1_forward.18} parent=39 // pred_check
          %p267 = pneg %p108
        $region54: #{mobilenet_v1_forward.18} parent=39 // pred_check_branch
          %269 = sbr.rel (%p267) target = $region56
        $region55: #{mobilenet_v1_forward.18} parent=39 // pred_region
          %270 = dma.done [#allocation9], 1024
        $region56: #{mobilenet_v1_forward.18} parent=39 // pred_fallthru
          _
        // Predicated region
        $region57: #{mobilenet_v1_forward.18} parent=39 // pred_check
          %p271 = pneg %p129
        $region58: #{mobilenet_v1_forward.18} parent=39 // pred_check_branch
          %273 = sbr.rel (%p271) target = $region60
        $region59: #{mobilenet_v1_forward.18} parent=39 // pred_region
          %274 = dma.done [#allocation9], 16
        $region60: #{mobilenet_v1_forward.18} parent=39 // pred_fallthru
          _
        %s275 = sand.u32 %s32, 1
        %s276 = scalar_lea.sflag [#allocation3], %s275
        %s277 = sand.u32 %s32, 1
        %s278 = smul.addr %s277, 52
        %s279 = scalar_lea.vmem [#allocation2], %s278
        %p280 = pneg %p45
        %p281 = pneg %p42
        %p282 = pneg %p66
        %p283 = pneg %p63
        %p284 = pneg %p87
        %p285 = pneg %p84
        %p286 = pneg %p108
        %p287 = pneg %p105
        %p288 = pneg %p129
        %p289 = pneg %p126
        %p290 = pneg %p155
        %p291 = pneg %p152
        %s292 = sand.u32 %s142, 1
        %s293 = scalar_lea.sflag [#allocation4], %s292
        %s294 = sand.u32 %s142, 1
        %s295 = smul.addr %s294, 40
        %s296 = scalar_lea.vmem [#allocation11], %s295
        %v298 = vld [vmem:[%s254] sm:$0xf]
        %v299 = vld [vmem:[%s254 + $0x4] sm:$0xf]
        %v300 = vld [vmem:[%s254 + $0x8] sm:$0xf]
        %v301 = vld [vmem:[%s254 + $0xc] sm:$0xf]
        %v302 = vld [vmem:[%s254 + $0x10] sm:$0xf]
        %v303 = vld [vmem:[%s254 + $0x14] sm:$0xf]
        %v304 = vld [vmem:[%s254 + $0x18] sm:$0xf]
        %v305 = vld [vmem:[%s254 + $0x1c] sm:$0xf]
        %v306 = vld [vmem:[%s254 + $0x20] sm:$0xf]
        %v307 = vld [vmem:[%s254 + $0x24] sm:$0xf]
        %v308 = vld [vmem:[%s254 + $0x28] sm:$0xf]
        %v309 = vld [vmem:[%s254 + $0x2c] sm:$0xf]
        %v310 = vld [vmem:[%s254 + $0x30] sm:$0xf]
        %v311 = vunpack.c.l.bf16 %v298
        %v312 = vunpack.c.l.bf16 %v299
        %v313 = vunpack.c.l.bf16 %v300
        %v314 = vunpack.c.l.bf16 %v301
        %v315 = vunpack.c.l.bf16 %v302
        %v316 = vunpack.c.l.bf16 %v303
        %v317 = vunpack.c.l.bf16 %v304
        %v318 = vunpack.c.l.bf16 %v305
        %v319 = vunpack.c.l.bf16 %v306
        %v320 = vunpack.c.l.bf16 %v307
        %v321 = vld [vmem:[#allocation5] sm:$0x1]
        %v323 = vlaneseq
        %v324 = vshrl.u32 %v323, 7
        %v325 = vsub.s32 0, %v324
        %v326 = vrot.slane %v321, %v325
        %v328 = vmul.f32 %v311, %v326
        %v329 = vmul.f32 %v312, %v326
        %v330 = vmul.f32 %v313, %v326
        %v331 = vmul.f32 %v314, %v326
        %v332 = vmul.f32 %v315, %v326
        %v333 = vmul.f32 %v316, %v326
        %v334 = vmul.f32 %v317, %v326
        %v335 = vmul.f32 %v318, %v326
        %v336 = vmul.f32 %v319, %v326
        %v337 = vmul.f32 %v320, %v326
        %v338 = vunpack.c.l.bf16 %v308
        %s339 = scalar_lea.vmem [#allocation5], 1
        %v340 = vld [vmem:[%s339] sm:$0x1]
        %v342 = vlaneseq
        %v343 = vshrl.u32 %v342, 7
        %v344 = vsub.s32 0, %v343
        %v345 = vrot.slane %v340, %v344
        %v347 = vmul.f32 %v311, %v345
        %v348 = vmul.f32 %v312, %v345
        %v349 = vmul.f32 %v313, %v345
        %v350 = vmul.f32 %v314, %v345
        %v351 = vmul.f32 %v315, %v345
        %v352 = vmul.f32 %v316, %v345
        %v353 = vmul.f32 %v317, %v345
        %v354 = vmul.f32 %v318, %v345
        %v355 = vmul.f32 %v319, %v345
        %v356 = vmul.f32 %v320, %v345
        %v357 = vmul.f32 %v338, %v345
        %vm369 = vcmask 1046528
        %v370 = vrot.slane %v347, 1
        %v371 = vrot.slane %v348, 1
        %v372 = vsel %vm369, %v370, %v371
        %v373 = vrot.slane %v349, 1
        %v374 = vsel %vm369, %v371, %v373
        %v375 = vrot.slane %v350, 1
        %v376 = vsel %vm369, %v373, %v375
        %v377 = vrot.slane %v351, 1
        %v378 = vsel %vm369, %v375, %v377
        %v379 = vrot.slane %v352, 1
        %v380 = vsel %vm369, %v377, %v379
        %v381 = vrot.slane %v353, 1
        %v382 = vsel %vm369, %v379, %v381
        %v383 = vrot.slane %v354, 1
        %v384 = vsel %vm369, %v381, %v383
        %v385 = vrot.slane %v355, 1
        %v386 = vsel %vm369, %v383, %v385
        %v387 = vrot.slane %v356, 1
        %v388 = vsel %vm369, %v385, %v387
        %v389 = vrot.slane %v357, 1
        %v390 = vsel %vm369, %v387, %v389
        %v401 = vadd.f32 %v328, %v372
        %v402 = vadd.f32 %v329, %v374
        %v403 = vadd.f32 %v330, %v376
        %v404 = vadd.f32 %v331, %v378
        %v405 = vadd.f32 %v332, %v380
        %v406 = vadd.f32 %v333, %v382
        %v407 = vadd.f32 %v334, %v384
        %v408 = vadd.f32 %v335, %v386
        %v409 = vadd.f32 %v336, %v388
        %v410 = vadd.f32 %v337, %v390
        %s411 = scalar_lea.vmem [#allocation5], 2
        %v412 = vld [vmem:[%s411] sm:$0x1]
        %v414 = vlaneseq
        %v415 = vshrl.u32 %v414, 7
        %v416 = vsub.s32 0, %v415
        %v417 = vrot.slane %v412, %v416
        %v419 = vmul.f32 %v311, %v417
        %v420 = vmul.f32 %v312, %v417
        %v421 = vmul.f32 %v313, %v417
        %v422 = vmul.f32 %v314, %v417
        %v423 = vmul.f32 %v315, %v417
        %v424 = vmul.f32 %v316, %v417
        %v425 = vmul.f32 %v317, %v417
        %v426 = vmul.f32 %v318, %v417
        %v427 = vmul.f32 %v319, %v417
        %v428 = vmul.f32 %v320, %v417
        %v429 = vmul.f32 %v338, %v417
        %vm441 = vcmask 1045504
        %v442 = vrot.slane %v419, 2
        %v443 = vrot.slane %v420, 2
        %v444 = vsel %vm441, %v442, %v443
        %v445 = vrot.slane %v421, 2
        %v446 = vsel %vm441, %v443, %v445
        %v447 = vrot.slane %v422, 2
        %v448 = vsel %vm441, %v445, %v447
        %v449 = vrot.slane %v423, 2
        %v450 = vsel %vm441, %v447, %v449
        %v451 = vrot.slane %v424, 2
        %v452 = vsel %vm441, %v449, %v451
        %v453 = vrot.slane %v425, 2
        %v454 = vsel %vm441, %v451, %v453
        %v455 = vrot.slane %v426, 2
        %v456 = vsel %vm441, %v453, %v455
        %v457 = vrot.slane %v427, 2
        %v458 = vsel %vm441, %v455, %v457
        %v459 = vrot.slane %v428, 2
        %v460 = vsel %vm441, %v457, %v459
        %v461 = vrot.slane %v429, 2
        %v462 = vsel %vm441, %v459, %v461
        %v473 = vadd.f32 %v401, %v444
        %v474 = vadd.f32 %v402, %v446
        %v475 = vadd.f32 %v403, %v448
        %v476 = vadd.f32 %v404, %v450
        %v477 = vadd.f32 %v405, %v452
        %v478 = vadd.f32 %v406, %v454
        %v479 = vadd.f32 %v407, %v456
        %v480 = vadd.f32 %v408, %v458
        %v481 = vadd.f32 %v409, %v460
        %v482 = vadd.f32 %v410, %v462
        %v483 = vunpack.c.l.bf16 %v309
        %s484 = scalar_lea.vmem [#allocation5], 3
        %v485 = vld [vmem:[%s484] sm:$0x1]
        %v487 = vlaneseq
        %v488 = vshrl.u32 %v487, 7
        %v489 = vsub.s32 0, %v488
        %v490 = vrot.slane %v485, %v489
        %v492 = vmul.f32 %v312, %v490
        %v493 = vmul.f32 %v313, %v490
        %v494 = vmul.f32 %v314, %v490
        %v495 = vmul.f32 %v315, %v490
        %v496 = vmul.f32 %v316, %v490
        %v497 = vmul.f32 %v317, %v490
        %v498 = vmul.f32 %v318, %v490
        %v499 = vmul.f32 %v319, %v490
        %v500 = vmul.f32 %v320, %v490
        %v501 = vmul.f32 %v338, %v490
        %v502 = vmul.f32 %v483, %v490
        %v514 = vrot.slane %v492, 2
        %v515 = vrot.slane %v493, 2
        %v516 = vsel %vm441, %v514, %v515
        %v517 = vrot.slane %v494, 2
        %v518 = vsel %vm441, %v515, %v517
        %v519 = vrot.slane %v495, 2
        %v520 = vsel %vm441, %v517, %v519
        %v521 = vrot.slane %v496, 2
        %v522 = vsel %vm441, %v519, %v521
        %v523 = vrot.slane %v497, 2
        %v524 = vsel %vm441, %v521, %v523
        %v525 = vrot.slane %v498, 2
        %v526 = vsel %vm441, %v523, %v525
        %v527 = vrot.slane %v499, 2
        %v528 = vsel %vm441, %v525, %v527
        %v529 = vrot.slane %v500, 2
        %v530 = vsel %vm441, %v527, %v529
        %v531 = vrot.slane %v501, 2
        %v532 = vsel %vm441, %v529, %v531
        %v533 = vrot.slane %v502, 2
        %v534 = vsel %vm441, %v531, %v533
        %v545 = vadd.f32 %v473, %v516
        %v546 = vadd.f32 %v474, %v518
        %v547 = vadd.f32 %v475, %v520
        %v548 = vadd.f32 %v476, %v522
        %v549 = vadd.f32 %v477, %v524
        %v550 = vadd.f32 %v478, %v526
        %v551 = vadd.f32 %v479, %v528
        %v552 = vadd.f32 %v480, %v530
        %v553 = vadd.f32 %v481, %v532
        %v554 = vadd.f32 %v482, %v534
        %s555 = scalar_lea.vmem [#allocation5], 4
        %v556 = vld [vmem:[%s555] sm:$0x1]
        %v558 = vlaneseq
        %v559 = vshrl.u32 %v558, 7
        %v560 = vsub.s32 0, %v559
        %v561 = vrot.slane %v556, %v560
        %v563 = vmul.f32 %v312, %v561
        %v564 = vmul.f32 %v313, %v561
        %v565 = vmul.f32 %v314, %v561
        %v566 = vmul.f32 %v315, %v561
        %v567 = vmul.f32 %v316, %v561
        %v568 = vmul.f32 %v317, %v561
        %v569 = vmul.f32 %v318, %v561
        %v570 = vmul.f32 %v319, %v561
        %v571 = vmul.f32 %v320, %v561
        %v572 = vmul.f32 %v338, %v561
        %v573 = vmul.f32 %v483, %v561
        %vm585 = vcmask 1044480
        %v586 = vrot.slane %v563, 3
        %v587 = vrot.slane %v564, 3
        %v588 = vsel %vm585, %v586, %v587
        %v589 = vrot.slane %v565, 3
        %v590 = vsel %vm585, %v587, %v589
        %v591 = vrot.slane %v566, 3
        %v592 = vsel %vm585, %v589, %v591
        %v593 = vrot.slane %v567, 3
        %v594 = vsel %vm585, %v591, %v593
        %v595 = vrot.slane %v568, 3
        %v596 = vsel %vm585, %v593, %v595
        %v597 = vrot.slane %v569, 3
        %v598 = vsel %vm585, %v595, %v597
        %v599 = vrot.slane %v570, 3
        %v600 = vsel %vm585, %v597, %v599
        %v601 = vrot.slane %v571, 3
        %v602 = vsel %vm585, %v599, %v601
        %v603 = vrot.slane %v572, 3
        %v604 = vsel %vm585, %v601, %v603
        %v605 = vrot.slane %v573, 3
        %v606 = vsel %vm585, %v603, %v605
        %v617 = vadd.f32 %v545, %v588
        %v618 = vadd.f32 %v546, %v590
        %v619 = vadd.f32 %v547, %v592
        %v620 = vadd.f32 %v548, %v594
        %v621 = vadd.f32 %v549, %v596
        %v622 = vadd.f32 %v550, %v598
        %v623 = vadd.f32 %v551, %v600
        %v624 = vadd.f32 %v552, %v602
        %v625 = vadd.f32 %v553, %v604
        %v626 = vadd.f32 %v554, %v606
        %s627 = scalar_lea.vmem [#allocation5], 5
        %v628 = vld [vmem:[%s627] sm:$0x1]
        %v630 = vlaneseq
        %v631 = vshrl.u32 %v630, 7
        %v632 = vsub.s32 0, %v631
        %v633 = vrot.slane %v628, %v632
        %v635 = vmul.f32 %v312, %v633
        %v636 = vmul.f32 %v313, %v633
        %v637 = vmul.f32 %v314, %v633
        %v638 = vmul.f32 %v315, %v633
        %v639 = vmul.f32 %v316, %v633
        %v640 = vmul.f32 %v317, %v633
        %v641 = vmul.f32 %v318, %v633
        %v642 = vmul.f32 %v319, %v633
        %v643 = vmul.f32 %v320, %v633
        %v644 = vmul.f32 %v338, %v633
        %v645 = vmul.f32 %v483, %v633
        %vm657 = vcmask 1043456
        %v658 = vrot.slane %v635, 4
        %v659 = vrot.slane %v636, 4
        %v660 = vsel %vm657, %v658, %v659
        %v661 = vrot.slane %v637, 4
        %v662 = vsel %vm657, %v659, %v661
        %v663 = vrot.slane %v638, 4
        %v664 = vsel %vm657, %v661, %v663
        %v665 = vrot.slane %v639, 4
        %v666 = vsel %vm657, %v663, %v665
        %v667 = vrot.slane %v640, 4
        %v668 = vsel %vm657, %v665, %v667
        %v669 = vrot.slane %v641, 4
        %v670 = vsel %vm657, %v667, %v669
        %v671 = vrot.slane %v642, 4
        %v672 = vsel %vm657, %v669, %v671
        %v673 = vrot.slane %v643, 4
        %v674 = vsel %vm657, %v671, %v673
        %v675 = vrot.slane %v644, 4
        %v676 = vsel %vm657, %v673, %v675
        %v677 = vrot.slane %v645, 4
        %v678 = vsel %vm657, %v675, %v677
        %v689 = vadd.f32 %v617, %v660
        %v690 = vadd.f32 %v618, %v662
        %v691 = vadd.f32 %v619, %v664
        %v692 = vadd.f32 %v620, %v666
        %v693 = vadd.f32 %v621, %v668
        %v694 = vadd.f32 %v622, %v670
        %v695 = vadd.f32 %v623, %v672
        %v696 = vadd.f32 %v624, %v674
        %v697 = vadd.f32 %v625, %v676
        %v698 = vadd.f32 %v626, %v678
        %v699 = vunpack.c.l.bf16 %v310
        %s700 = scalar_lea.vmem [#allocation5], 6
        %v701 = vld [vmem:[%s700] sm:$0x1]
        %v703 = vlaneseq
        %v704 = vshrl.u32 %v703, 7
        %v705 = vsub.s32 0, %v704
        %v706 = vrot.slane %v701, %v705
        %v708 = vmul.f32 %v313, %v706
        %v709 = vmul.f32 %v314, %v706
        %v710 = vmul.f32 %v315, %v706
        %v711 = vmul.f32 %v316, %v706
        %v712 = vmul.f32 %v317, %v706
        %v713 = vmul.f32 %v318, %v706
        %v714 = vmul.f32 %v319, %v706
        %v715 = vmul.f32 %v320, %v706
        %v716 = vmul.f32 %v338, %v706
        %v717 = vmul.f32 %v483, %v706
        %v718 = vmul.f32 %v699, %v706
        %v730 = vrot.slane %v708, 4
        %v731 = vrot.slane %v709, 4
        %v732 = vsel %vm657, %v730, %v731
        %v733 = vrot.slane %v710, 4
        %v734 = vsel %vm657, %v731, %v733
        %v735 = vrot.slane %v711, 4
        %v736 = vsel %vm657, %v733, %v735
        %v737 = vrot.slane %v712, 4
        %v738 = vsel %vm657, %v735, %v737
        %v739 = vrot.slane %v713, 4
        %v740 = vsel %vm657, %v737, %v739
        %v741 = vrot.slane %v714, 4
        %v742 = vsel %vm657, %v739, %v741
        %v743 = vrot.slane %v715, 4
        %v744 = vsel %vm657, %v741, %v743
        %v745 = vrot.slane %v716, 4
        %v746 = vsel %vm657, %v743, %v745
        %v747 = vrot.slane %v717, 4
        %v748 = vsel %vm657, %v745, %v747
        %v749 = vrot.slane %v718, 4
        %v750 = vsel %vm657, %v747, %v749
        %v761 = vadd.f32 %v689, %v732
        %v762 = vadd.f32 %v690, %v734
        %v763 = vadd.f32 %v691, %v736
        %v764 = vadd.f32 %v692, %v738
        %v765 = vadd.f32 %v693, %v740
        %v766 = vadd.f32 %v694, %v742
        %v767 = vadd.f32 %v695, %v744
        %v768 = vadd.f32 %v696, %v746
        %v769 = vadd.f32 %v697, %v748
        %v770 = vadd.f32 %v698, %v750
        %s771 = scalar_lea.vmem [#allocation5], 7
        %v772 = vld [vmem:[%s771] sm:$0x1]
        %v774 = vlaneseq
        %v775 = vshrl.u32 %v774, 7
        %v776 = vsub.s32 0, %v775
        %v777 = vrot.slane %v772, %v776
        %v779 = vmul.f32 %v313, %v777
        %v780 = vmul.f32 %v314, %v777
        %v781 = vmul.f32 %v315, %v777
        %v782 = vmul.f32 %v316, %v777
        %v783 = vmul.f32 %v317, %v777
        %v784 = vmul.f32 %v318, %v777
        %v785 = vmul.f32 %v319, %v777
        %v786 = vmul.f32 %v320, %v777
        %v787 = vmul.f32 %v338, %v777
        %v788 = vmul.f32 %v483, %v777
        %v789 = vmul.f32 %v699, %v777
        %vm801 = vcmask 1042432
        %v802 = vrot.slane %v779, 5
        %v803 = vrot.slane %v780, 5
        %v804 = vsel %vm801, %v802, %v803
        %v805 = vrot.slane %v781, 5
        %v806 = vsel %vm801, %v803, %v805
        %v807 = vrot.slane %v782, 5
        %v808 = vsel %vm801, %v805, %v807
        %v809 = vrot.slane %v783, 5
        %v810 = vsel %vm801, %v807, %v809
        %v811 = vrot.slane %v784, 5
        %v812 = vsel %vm801, %v809, %v811
        %v813 = vrot.slane %v785, 5
        %v814 = vsel %vm801, %v811, %v813
        %v815 = vrot.slane %v786, 5
        %v816 = vsel %vm801, %v813, %v815
        %v817 = vrot.slane %v787, 5
        %v818 = vsel %vm801, %v815, %v817
        %v819 = vrot.slane %v788, 5
        %v820 = vsel %vm801, %v817, %v819
        %v821 = vrot.slane %v789, 5
        %v822 = vsel %vm801, %v819, %v821
        %v833 = vadd.f32 %v761, %v804
        %v834 = vadd.f32 %v762, %v806
        %v835 = vadd.f32 %v763, %v808
        %v836 = vadd.f32 %v764, %v810
        %v837 = vadd.f32 %v765, %v812
        %v838 = vadd.f32 %v766, %v814
        %v839 = vadd.f32 %v767, %v816
        %v840 = vadd.f32 %v768, %v818
        %v841 = vadd.f32 %v769, %v820
        %v842 = vadd.f32 %v770, %v822
        %s843 = scalar_lea.vmem [#allocation5], 8
        %v844 = vld [vmem:[%s843] sm:$0x1]
        %v846 = vlaneseq
        %v847 = vshrl.u32 %v846, 7
        %v848 = vsub.s32 0, %v847
        %v849 = vrot.slane %v844, %v848
        %v851 = vmul.f32 %v313, %v849
        %v852 = vmul.f32 %v314, %v849
        %v853 = vmul.f32 %v315, %v849
        %v854 = vmul.f32 %v316, %v849
        %v855 = vmul.f32 %v317, %v849
        %v856 = vmul.f32 %v318, %v849
        %v857 = vmul.f32 %v319, %v849
        %v858 = vmul.f32 %v320, %v849
        %v859 = vmul.f32 %v338, %v849
        %v860 = vmul.f32 %v483, %v849
        %v861 = vmul.f32 %v699, %v849
        %vm873 = vcmask 1041408
        %v874 = vrot.slane %v851, 6
        %v875 = vrot.slane %v852, 6
        %v876 = vsel %vm873, %v874, %v875
        %v877 = vrot.slane %v853, 6
        %v878 = vsel %vm873, %v875, %v877
        %v879 = vrot.slane %v854, 6
        %v880 = vsel %vm873, %v877, %v879
        %v881 = vrot.slane %v855, 6
        %v882 = vsel %vm873, %v879, %v881
        %v883 = vrot.slane %v856, 6
        %v884 = vsel %vm873, %v881, %v883
        %v885 = vrot.slane %v857, 6
        %v886 = vsel %vm873, %v883, %v885
        %v887 = vrot.slane %v858, 6
        %v888 = vsel %vm873, %v885, %v887
        %v889 = vrot.slane %v859, 6
        %v890 = vsel %vm873, %v887, %v889
        %v891 = vrot.slane %v860, 6
        %v892 = vsel %vm873, %v889, %v891
        %v893 = vrot.slane %v861, 6
        %v894 = vsel %vm873, %v891, %v893
        %v905 = vadd.f32 %v833, %v876
        %v906 = vadd.f32 %v834, %v878
        %v907 = vadd.f32 %v835, %v880
        %v908 = vadd.f32 %v836, %v882
        %v909 = vadd.f32 %v837, %v884
        %v910 = vadd.f32 %v838, %v886
        %v911 = vadd.f32 %v839, %v888
        %v912 = vadd.f32 %v840, %v890
        %v913 = vadd.f32 %v841, %v892
        %v914 = vadd.f32 %v842, %v894
        %v915 = vld [vmem:[#allocation7] sm:$0x1]
        %v917 = vlaneseq
        %v918 = vshrl.u32 %v917, 7
        %v919 = vsub.s32 0, %v918
        %v920 = vrot.slane %v915, %v919
        %v922 = vadd.f32 %v905, %v920
        %v923 = vadd.f32 %v906, %v920
        %v924 = vadd.f32 %v907, %v920
        %v925 = vadd.f32 %v908, %v920
        %v926 = vadd.f32 %v909, %v920
        %v927 = vadd.f32 %v910, %v920
        %v928 = vadd.f32 %v911, %v920
        %v929 = vadd.f32 %v912, %v920
        %v930 = vadd.f32 %v913, %v920
        %v931 = vadd.f32 %v914, %v920
        %v932 = vmax.f32 %v922, 0.0
        %v933 = vmax.f32 %v923, 0.0
        %v934 = vmax.f32 %v924, 0.0
        %v935 = vmax.f32 %v925, 0.0
        %v936 = vmax.f32 %v926, 0.0
        %v937 = vmax.f32 %v927, 0.0
        %v938 = vmax.f32 %v928, 0.0
        %v939 = vmax.f32 %v929, 0.0
        %v940 = vmax.f32 %v930, 0.0
        %v941 = vmax.f32 %v931, 0.0
        %v942 = vmin.f32 %v932, 6.0
        %v943 = vmin.f32 %v933, 6.0
        %v944 = vmin.f32 %v934, 6.0
        %v945 = vmin.f32 %v935, 6.0
        %v946 = vmin.f32 %v936, 6.0
        %v947 = vmin.f32 %v937, 6.0
        %v948 = vmin.f32 %v938, 6.0
        %v949 = vmin.f32 %v939, 6.0
        %v950 = vmin.f32 %v940, 6.0
        %v951 = vmin.f32 %v941, 6.0
        %v952 = vpack.c.bf16 %v943, %v942
        %v953 = vpack.c.bf16 %v945, %v944
        %v954 = vpack.c.bf16 %v947, %v946
        %v955 = vpack.c.bf16 %v949, %v948
        %v956 = vpack.c.bf16 %v951, %v950
        %v957 = vld [vmem:[#allocation8] sm:$0xf]
        %v958 = vld [vmem:[#allocation8 + $0x4] sm:$0xf]
        %v959 = vld [vmem:[#allocation8 + $0x8] sm:$0xf]
        %v960 = vld [vmem:[#allocation8 + $0xc] sm:$0xf]
        %v961 = vld [vmem:[#allocation8 + $0x10] sm:$0xf]
        %v962 = vld [vmem:[#allocation8 + $0x14] sm:$0xf]
        %v963 = vld [vmem:[#allocation8 + $0x18] sm:$0xf]
        %v964 = vld [vmem:[#allocation8 + $0x1c] sm:$0xf]
        %v965 = vld [vmem:[#allocation8 + $0x20] sm:$0xf]
        %v966 = vld [vmem:[#allocation8 + $0x24] sm:$0xf]
        %v967 = vld [vmem:[#allocation8 + $0x28] sm:$0xf]
        %v968 = vld [vmem:[#allocation8 + $0x2c] sm:$0xf]
        %v969 = vld [vmem:[#allocation8 + $0x30] sm:$0xf]
        %v970 = vld [vmem:[#allocation8 + $0x34] sm:$0xf]
        %v971 = vld [vmem:[#allocation8 + $0x38] sm:$0xf]
        %v972 = vld [vmem:[#allocation8 + $0x3c] sm:$0xf]
        %v973 = vld [vmem:[#allocation10] sm:$0x1]
        %v975 = vlaneseq
        %v976 = vshrl.u32 %v975, 7
        %v977 = vsub.s32 0, %v976
        %v978 = vrot.slane %v973, %v977
        %v996 = vunpack.c.l.b16 %v957
        %v997 = vunpack.c.l.b16 %v958
        %v998 = vunpack.c.l.b16 %v959
        %v999 = vunpack.c.l.b16 %v960
        %v1000 = vunpack.c.l.b16 %v961
        %v1001 = vunpack.c.l.b16 %v962
        %v1002 = vunpack.c.l.b16 %v963
        %v1003 = vunpack.c.l.b16 %v964
        %v1004 = vunpack.c.l.b16 %v965
        %v1005 = vunpack.c.l.b16 %v966
        %v1006 = vunpack.c.l.b16 %v967
        %v1007 = vunpack.c.l.b16 %v968
        %v1008 = vunpack.c.l.b16 %v969
        %v1009 = vunpack.c.l.b16 %v970
        %v1010 = vunpack.c.l.b16 %v971
        %v1011 = vunpack.c.l.b16 %v972
        %v1012 = vpack.c.b16 %v997, %v996
        %v1013 = vpack.c.b16 %v999, %v998
        %v1014 = vpack.c.b16 %v1001, %v1000
        %v1015 = vpack.c.b16 %v1003, %v1002
        %v1016 = vpack.c.b16 %v1005, %v1004
        %v1017 = vpack.c.b16 %v1007, %v1006
        %v1018 = vpack.c.b16 %v1009, %v1008
        %v1019 = vpack.c.b16 %v1011, %v1010
        %1028 = vmatprep.subr.bf16.mxu0 0
        %1029 = vmatpush1.bf16.msra.mxu0 %v1012
        %1030 = vmatprep.subr.bf16.mxu0 0
        %1031 = vmatpush1.bf16.msra.mxu0 %v1013
        %1032 = vmatprep.subr.bf16.mxu0 0
        %1033 = vmatpush1.bf16.msra.mxu0 %v1014
        %1034 = vmatprep.subr.bf16.mxu0 0
        %1035 = vmatpush1.bf16.msra.mxu0 %v1015
        %1036 = vmatprep.subr.bf16.mxu0 0
        %1037 = vmatpush1.bf16.msra.mxu0 %v1016
        %1038 = vmatprep.subr.bf16.mxu0 0
        %1039 = vmatpush1.bf16.msra.mxu0 %v1017
        %1040 = vmatprep.subr.bf16.mxu0 0
        %1041 = vmatpush1.bf16.msra.mxu0 %v1018
        %1042 = vmatprep.subr.bf16.mxu0 0
        %1043 = vmatpush1.bf16.msra.mxu0 %v1019
        %1044 = vmatprep.subr.bf16.mxu0 0
        %1045 = vmatpush1.bf16.msra.mxu0 0
        %1046 = vmatprep.subr.bf16.mxu0 0
        %1047 = vmatpush1.bf16.msra.mxu0 0
        %1048 = vmatprep.subr.bf16.mxu0 0
        %1049 = vmatpush1.bf16.msra.mxu0 0
        %1050 = vmatprep.subr.bf16.mxu0 0
        %1051 = vmatpush1.bf16.msra.mxu0 0
        %1052 = vmatprep.subr.bf16.mxu0 0
        %1053 = vmatpush1.bf16.msra.mxu0 0
        %1054 = vmatprep.subr.bf16.mxu0 0
        %1055 = vmatpush1.bf16.msra.mxu0 0
        %1056 = vmatprep.subr.bf16.mxu0 0
        %1057 = vmatpush1.bf16.msra.mxu0 0
        %1058 = vmatprep.subr.bf16.mxu0 0
        %1059 = vmatpush1.bf16.msra.mxu0 0
        %1060 = vmatprep.mubr.bf16.mxu0 0
        %1061 = vmatmul.mubr.bf16.gmra.mrb[0].mxu0 %v952
        %v1062 = vpop.f32.mrb[0].mxu0
        %v1063 = vadd.f32 %v978, %v1062
        %v1064 = vpop.f32.mrb[0].mxu0
        %v1065 = vpop.f32.mrb[0].mxu0
        %v1066 = vadd.f32 %v978, %v1065
        %v1067 = vpop.f32.mrb[0].mxu0
        %1068 = vmatprep.mubr.bf16.mxu0 0
        %1069 = vmatmul.mubr.bf16.gmra.mrb[0].mxu0 %v953
        %v1070 = vpop.f32.mrb[0].mxu0
        %v1071 = vadd.f32 %v978, %v1070
        %v1072 = vpop.f32.mrb[0].mxu0
        %v1073 = vpop.f32.mrb[0].mxu0
        %v1074 = vadd.f32 %v978, %v1073
        %v1075 = vpop.f32.mrb[0].mxu0
        %1076 = vmatprep.mubr.bf16.mxu0 0
        %1077 = vmatmul.mubr.bf16.gmra.mrb[0].mxu0 %v954
        %v1078 = vpop.f32.mrb[0].mxu0
        %v1079 = vadd.f32 %v978, %v1078
        %v1080 = vpop.f32.mrb[0].mxu0
        %v1081 = vpop.f32.mrb[0].mxu0
        %v1082 = vadd.f32 %v978, %v1081
        %v1083 = vpop.f32.mrb[0].mxu0
        %1084 = vmatprep.mubr.bf16.mxu0 0
        %1085 = vmatmul.mubr.bf16.gmra.mrb[0].mxu0 %v955
        %v1086 = vpop.f32.mrb[0].mxu0
        %v1087 = vadd.f32 %v978, %v1086
        %v1088 = vpop.f32.mrb[0].mxu0
        %v1089 = vpop.f32.mrb[0].mxu0
        %v1090 = vadd.f32 %v978, %v1089
        %v1091 = vpop.f32.mrb[0].mxu0
        %1092 = vmatprep.mubr.bf16.mxu0 0
        %1093 = vmatmul.mubr.bf16.gmra.mrb[0].mxu0 %v956
        %v1094 = vpop.f32.mrb[0].mxu0
        %v1095 = vadd.f32 %v978, %v1094
        %v1096 = vpop.f32.mrb[0].mxu0
        %v1097 = vpop.f32.mrb[0].mxu0
        %v1098 = vadd.f32 %v978, %v1097
        %v1099 = vpop.f32.mrb[0].mxu0
        %1100 = vdwg.mxu0
        %v1101 = vmax.f32 %v1063, 0.0
        %v1102 = vmax.f32 %v1066, 0.0
        %v1103 = vmax.f32 %v1071, 0.0
        %v1104 = vmax.f32 %v1074, 0.0
        %v1105 = vmax.f32 %v1079, 0.0
        %v1106 = vmax.f32 %v1082, 0.0
        %v1107 = vmax.f32 %v1087, 0.0
        %v1108 = vmax.f32 %v1090, 0.0
        %v1109 = vmax.f32 %v1095, 0.0
        %v1110 = vmax.f32 %v1098, 0.0
        %v1111 = vmin.f32 %v1101, 6.0
        %v1112 = vmin.f32 %v1102, 6.0
        %v1113 = vmin.f32 %v1103, 6.0
        %v1114 = vmin.f32 %v1104, 6.0
        %v1115 = vmin.f32 %v1105, 6.0
        %v1116 = vmin.f32 %v1106, 6.0
        %v1117 = vmin.f32 %v1107, 6.0
        %v1118 = vmin.f32 %v1108, 6.0
        %v1119 = vmin.f32 %v1109, 6.0
        %v1120 = vmin.f32 %v1110, 6.0
        %v1121 = vpack.c.bf16 %v1112, %v1111
        %v1122 = vpack.c.bf16 %v1114, %v1113
        %v1123 = vpack.c.bf16 %v1116, %v1115
        %v1124 = vpack.c.bf16 %v1118, %v1117
        %v1125 = vpack.c.bf16 %v1120, %v1119
        %v1131 = vunpack.c.l.b16 %v1121
        %v1132 = vunpack.c.h.b16 %v1121
        %v1133 = vunpack.c.l.b16 %v1122
        %v1134 = vunpack.c.h.b16 %v1122
        %v1135 = vunpack.c.l.b16 %v1123
        %v1136 = vunpack.c.h.b16 %v1123
        %v1137 = vunpack.c.l.b16 %v1124
        %v1138 = vunpack.c.h.b16 %v1124
        %v1139 = vunpack.c.l.b16 %v1125
        %v1140 = vunpack.c.h.b16 %v1125
        %v1141 = vpack.c.b16 %v1131, %v1131
        %v1142 = vpack.c.b16 %v1132, %v1132
        %v1143 = vpack.c.b16 %v1133, %v1133
        %v1144 = vpack.c.b16 %v1134, %v1134
        %v1145 = vpack.c.b16 %v1135, %v1135
        %v1146 = vpack.c.b16 %v1136, %v1136
        %v1147 = vpack.c.b16 %v1137, %v1137
        %v1148 = vpack.c.b16 %v1138, %v1138
        %v1149 = vpack.c.b16 %v1139, %v1139
        %v1150 = vpack.c.b16 %v1140, %v1140
        %1161 = vst [vmem:[%s296] sm:$0xf] %v1141
        %1162 = vst [vmem:[%s296 + $0x4] sm:$0xf] %v1142
        %1163 = vst [vmem:[%s296 + $0x8] sm:$0xf] %v1143
        %1164 = vst [vmem:[%s296 + $0xc] sm:$0xf] %v1144
        %1165 = vst [vmem:[%s296 + $0x10] sm:$0xf] %v1145
        %1166 = vst [vmem:[%s296 + $0x14] sm:$0xf] %v1146
        %1167 = vst [vmem:[%s296 + $0x18] sm:$0xf] %v1147
        %1168 = vst [vmem:[%s296 + $0x1c] sm:$0xf] %v1148
        %1169 = vst [vmem:[%s296 + $0x20] sm:$0xf] %v1149
        %1170 = vst [vmem:[%s296 + $0x24] sm:$0xf] %v1150
        %s1171 = sand.u32 %s142, 1
        %s1172 = scalar_lea.sflag [#allocation4], %s1171
        %s1173 = sand.u32 %s142, 1
        %s1174 = smul.addr %s1173, 40
        %s1175 = scalar_lea.vmem [#allocation11], %s1174
        // Predicated region
        $region61: #{mobilenet_v1_forward.18} parent=39 // pred_check
          %p1176 = pneg %p152
        $region62: #{mobilenet_v1_forward.18} parent=39 // pred_check_branch
          %1178 = sbr.rel (%p1176) target = $region64
        $region63: #{mobilenet_v1_forward.18} parent=39 // pred_region
          %s1180 = ssub.s32 640, 640
          %1181 = vsyncadd %s1172, %s1180
          %s1182 = smul.addr %s24, 10
          %s1183 = smul.addr %s1182, 64
          %s1184 = scalar_lea.hbm %s5, %s1183
          %s1185 = sshll.u32 %s1175, 4
          %s1186 = int_to_ptr.vmem [resolvable:$true] %s1185
          %1191 = dma.vmem_to_hbm [thread:$0]  %s1186, 640, %s1184, %s1172, 64, 64, 4
        $region64: #{mobilenet_v1_forward.18} parent=39 // pred_fallthru
          _
      $region40: #{mobilenet_v1_forward.18} parent=5 // pred_fallthru
        _
      %p1192 = scmp.le.s32.totalorder 2, %s19
      // Predicated region
      $region65: #{mobilenet_v1_forward.18} parent=5 // pred_check
        %p1193 = pneg %p1192
      $region66: #{mobilenet_v1_forward.18} parent=5 // pred_check_branch
        %1195 = sbr.rel (%p1193) target = $region68
      $region67: #{mobilenet_v1_forward.18} parent=5 // pred_region
        %s1196 = ssub.s32 %s19, 2
        // Predicated region
        $region69: #{mobilenet_v1_forward.18} parent=67 // pred_check
          %p1197 = pneg %p158
        $region70: #{mobilenet_v1_forward.18} parent=67 // pred_check_branch
          %1199 = sbr.rel (%p1197) target = $region72
        $region71: #{mobilenet_v1_forward.18} parent=67 // pred_region
          %s1200 = sand.u32 %s143, 1
          %s1201 = scalar_lea.sflag [#allocation4], %s1200
          %s1202 = sand.u32 %s143, 1
          %s1203 = smul.addr %s1202, 40
          %s1204 = scalar_lea.vmem [#allocation11], %s1203
          %1205 = dma.done %s1201, 640
        $region72: #{mobilenet_v1_forward.18} parent=67 // pred_fallthru
          _
      $region68: #{mobilenet_v1_forward.18} parent=5 // pred_fallthru
        _
    $region6: #{mobilenet_v1_forward.18} parent=1 // loop_footer
      %s23 = sadd.s32 1, %s19
    $region7: #{mobilenet_v1_forward.18} parent=1 // loop_footer_branch
      %18 = sbr.rel target = $region3
    $region8: #{mobilenet_v1_forward.18} parent=1 // loop_exit
      _
    %1206 = vsyncpa [#allocation3], 1
    %s1207 = scalar_lea.sflag [#allocation3], 1
    %1208 = vsyncpa %s1207, 1
    %1209 = vsyncpa [#allocation6], 1
    %1210 = vsyncpa [#allocation9], 1
    %1211 = vsyncpa [#allocation4], 1
    %s1212 = scalar_lea.sflag [#allocation4], 1
    %1213 = vsyncpa %s1212, 1

// kernel: mobilenet_v1_forward.19
$region0: #{mobilenet_v1_forward.19}
  #allocation0 [shape = 'u32[]', space=smem, size = 0x4, offset = 0x4, fixed_abs, tag = 'smem constant byte address 0x4 - core index']
  #allocation1 [shape = 'u32[144,128]{1,0:T(1,128)}', space=vmem, size = 0x12000, scoped, tag = 'internal scratch']
  %s0 = inlined_call_operand.hbm [shape: bf16[9,32,128], index: 0, kind: input, shape index: {}]
  %s1 = inlined_call_operand.hbm [shape: f32[9,1,128], index: 1, kind: input, shape index: {}]
  %s2 = inlined_call_operand.hbm [shape: f32[1,128], index: 2, kind: input, shape index: {}]
  %s3 = inlined_call_operand.hbm [shape: bf16[128,128], index: 3, kind: input, shape index: {}]
  %s4 = inlined_call_operand.hbm [shape: f32[1,128], index: 4, kind: input, shape index: {}]
  %s5 = inlined_call_operand.hbm [shape: bf16[32,128], index: 5, kind: output, shape index: {}]
  %s6 = sld [smem:[#allocation0]]
  $region50: #{mobilenet_v1_forward.19} parent=0
    _
  %s8 = ssub.s32 1, %s6
  %s9 = scalar_select 0, %s8, %s6
  $region1: #{mobilenet_v1_forward.19} parent=0
    #allocation2 [shape = 'u8[73728]{0}', space=vmem, size = 0x12000, scoped, tag = 'input window, operand 0, single buffered']
    #allocation3 [shape = 's32[1]{0}', space=sflag, size = 0x4, scoped, tag = 'scoped memory for mobilenet_v1_forward.19']
    #allocation4 [shape = 's32[1]{0}', space=sflag, size = 0x4, scoped, tag = 'scoped memory for mobilenet_v1_forward.19']
    #allocation5 [shape = 'u8[4608]{0}', space=vmem, size = 0x1400, scoped, tag = 'input window, operand 1, single buffered']
    #allocation6 [shape = 's32[1]{0}', space=sflag, size = 0x4, scoped, tag = 'scoped memory for mobilenet_v1_forward.19']
    #allocation7 [shape = 'u8[512]{0}', space=vmem, size = 0x400, scoped, tag = 'input window, operand 2, single buffered']
    #allocation8 [shape = 'u8[32768]{0}', space=vmem, size = 0x8000, scoped, tag = 'input window, operand 3, single buffered']
    #allocation9 [shape = 's32[1]{0}', space=sflag, size = 0x4, scoped, tag = 'scoped memory for mobilenet_v1_forward.19']
    #allocation10 [shape = 'u8[512]{0}', space=vmem, size = 0x400, scoped, tag = 'input window, operand 4, single buffered']
    #allocation11 [shape = 'u8[8192]{0}', space=vmem, size = 0x2000, scoped, tag = 'output window, operand 0, single buffered']
    %10 = vsyncpa [#allocation3], 0
    %11 = vsyncpa [#allocation6], 0
    %12 = vsyncpa [#allocation9], 0
    %13 = vsyncpa [#allocation4], 0
    // Predicated region
    $region2: #{mobilenet_v1_forward.19} parent=1 // pred_check
      _
    $region3: #{mobilenet_v1_forward.19} parent=1 // pred_check_branch
      %15 = sbr.rel (0) target = $region5
    $region4: #{mobilenet_v1_forward.19} parent=1 // pred_region
      %s17 = ssub.s32 2304, 2304
      %18 = vsyncadd [#allocation3], %s17
      %s19 = sshll.u32 [#allocation2], 4
      %s20 = int_to_ptr.vmem [resolvable:$true] %s19
      %25 = dma.hbm_to_vmem [thread:$0]  %s0, 2304, %s20, [#allocation3], 64, 64, 4
    $region5: #{mobilenet_v1_forward.19} parent=1 // pred_fallthru
      _
    // Predicated region
    $region6: #{mobilenet_v1_forward.19} parent=1 // pred_check
      _
    $region7: #{mobilenet_v1_forward.19} parent=1 // pred_check_branch
      %27 = sbr.rel (0) target = $region9
    $region8: #{mobilenet_v1_forward.19} parent=1 // pred_region
      %s29 = ssub.s32 144, 144
      %30 = vsyncadd [#allocation6], %s29
      %s31 = sshll.u32 [#allocation5], 4
      %s32 = int_to_ptr.vmem [resolvable:$true] %s31
      %37 = dma.hbm_to_vmem [thread:$0]  %s1, 144, %s32, [#allocation6], 16, 16, 1
    $region9: #{mobilenet_v1_forward.19} parent=1 // pred_fallthru
      _
    // Predicated region
    $region10: #{mobilenet_v1_forward.19} parent=1 // pred_check
      _
    $region11: #{mobilenet_v1_forward.19} parent=1 // pred_check_branch
      %39 = sbr.rel (0) target = $region13
    $region12: #{mobilenet_v1_forward.19} parent=1 // pred_region
      %s41 = ssub.s32 16, 16
      %42 = vsyncadd [#allocation6], %s41
      %s44 = sshll.u32 [#allocation7], 4
      %s45 = int_to_ptr.vmem [resolvable:$true] %s44
      %47 = dma.hbm_to_vmem [thread:$0]  %s2, 16, %s45, [#allocation6]
    $region13: #{mobilenet_v1_forward.19} parent=1 // pred_fallthru
      _
    // Predicated region
    $region14: #{mobilenet_v1_forward.19} parent=1 // pred_check
      _
    $region15: #{mobilenet_v1_forward.19} parent=1 // pred_check_branch
      %49 = sbr.rel (0) target = $region17
    $region16: #{mobilenet_v1_forward.19} parent=1 // pred_region
      %s51 = ssub.s32 1024, 1024
      %52 = vsyncadd [#allocation9], %s51
      %s53 = sshll.u32 [#allocation8], 4
      %s54 = int_to_ptr.vmem [resolvable:$true] %s53
      %59 = dma.hbm_to_vmem [thread:$0]  %s3, 1024, %s54, [#allocation9], 64, 64, 4
    $region17: #{mobilenet_v1_forward.19} parent=1 // pred_fallthru
      _
    // Predicated region
    $region18: #{mobilenet_v1_forward.19} parent=1 // pred_check
      _
    $region19: #{mobilenet_v1_forward.19} parent=1 // pred_check_branch
      %61 = sbr.rel (0) target = $region21
    $region20: #{mobilenet_v1_forward.19} parent=1 // pred_region
      %s63 = ssub.s32 16, 16
      %64 = vsyncadd [#allocation9], %s63
      %s66 = sshll.u32 [#allocation10], 4
      %s67 = int_to_ptr.vmem [resolvable:$true] %s66
      %69 = dma.hbm_to_vmem [thread:$0]  %s4, 16, %s67, [#allocation9]
    $region21: #{mobilenet_v1_forward.19} parent=1 // pred_fallthru
      _
    // Predicated region
    $region22: #{mobilenet_v1_forward.19} parent=1 // pred_check
      _
    $region23: #{mobilenet_v1_forward.19} parent=1 // pred_check_branch
      %71 = sbr.rel (0) target = $region25
    $region24: #{mobilenet_v1_forward.19} parent=1 // pred_region
      %72 = dma.done [#allocation3], 2304
    $region25: #{mobilenet_v1_forward.19} parent=1 // pred_fallthru
      _
    // Predicated region
    $region26: #{mobilenet_v1_forward.19} parent=1 // pred_check
      _
    $region27: #{mobilenet_v1_forward.19} parent=1 // pred_check_branch
      %74 = sbr.rel (0) target = $region29
    $region28: #{mobilenet_v1_forward.19} parent=1 // pred_region
      %75 = dma.done [#allocation6], 144
    $region29: #{mobilenet_v1_forward.19} parent=1 // pred_fallthru
      _
    // Predicated region
    $region30: #{mobilenet_v1_forward.19} parent=1 // pred_check
      _
    $region31: #{mobilenet_v1_forward.19} parent=1 // pred_check_branch
      %77 = sbr.rel (0) target = $region33
    $region32: #{mobilenet_v1_forward.19} parent=1 // pred_region
      %78 = dma.done [#allocation6], 16
    $region33: #{mobilenet_v1_forward.19} parent=1 // pred_fallthru
      _
    // Predicated region
    $region34: #{mobilenet_v1_forward.19} parent=1 // pred_check
      _
    $region35: #{mobilenet_v1_forward.19} parent=1 // pred_check_branch
      %80 = sbr.rel (0) target = $region37
    $region36: #{mobilenet_v1_forward.19} parent=1 // pred_region
      %81 = dma.done [#allocation9], 1024
    $region37: #{mobilenet_v1_forward.19} parent=1 // pred_fallthru
      _
    // Predicated region
    $region38: #{mobilenet_v1_forward.19} parent=1 // pred_check
      _
    $region39: #{mobilenet_v1_forward.19} parent=1 // pred_check_branch
      %83 = sbr.rel (0) target = $region41
    $region40: #{mobilenet_v1_forward.19} parent=1 // pred_region
      %84 = dma.done [#allocation9], 16
    $region41: #{mobilenet_v1_forward.19} parent=1 // pred_fallthru
      _
    %v86 = vld [vmem:[#allocation2] sm:$0xf]
    %v87 = vld [vmem:[#allocation2 + $0x4] sm:$0xf]
    %v88 = vld [vmem:[#allocation2 + $0x8] sm:$0xf]
    %v89 = vld [vmem:[#allocation2 + $0xc] sm:$0xf]
    %v90 = vunpack.c.l.bf16 %v86
    %v91 = vunpack.c.l.bf16 %v87
    %v92 = vunpack.c.l.bf16 %v88
    %v93 = vunpack.c.l.bf16 %v89
    %v94 = vld [vmem:[#allocation5] sm:$0x1]
    %v96 = vlaneseq
    %v97 = vshrl.u32 %v96, 7
    %v98 = vsub.s32 0, %v97
    %v99 = vrot.slane %v94, %v98
    %v101 = vmul.f32 %v90, %v99
    %v102 = vmul.f32 %v91, %v99
    %v103 = vmul.f32 %v92, %v99
    %v104 = vmul.f32 %v93, %v99
    %s105 = scalar_lea.vmem [#allocation2], 16
    %v106 = vld [vmem:[%s105] sm:$0xf]
    %v107 = vld [vmem:[%s105 + $0x4] sm:$0xf]
    %v108 = vld [vmem:[%s105 + $0x8] sm:$0xf]
    %v109 = vld [vmem:[%s105 + $0xc] sm:$0xf]
    %v110 = vunpack.c.l.bf16 %v106
    %v111 = vunpack.c.l.bf16 %v107
    %v112 = vunpack.c.l.bf16 %v108
    %v113 = vunpack.c.l.bf16 %v109
    %s114 = scalar_lea.vmem [#allocation5], 1
    %v115 = vld [vmem:[%s114] sm:$0x1]
    %v117 = vlaneseq
    %v118 = vshrl.u32 %v117, 7
    %v119 = vsub.s32 0, %v118
    %v120 = vrot.slane %v115, %v119
    %v122 = vmul.f32 %v110, %v120
    %v123 = vmul.f32 %v111, %v120
    %v124 = vmul.f32 %v112, %v120
    %v125 = vmul.f32 %v113, %v120
    %v126 = vadd.f32 %v101, %v122
    %v127 = vadd.f32 %v102, %v123
    %v128 = vadd.f32 %v103, %v124
    %v129 = vadd.f32 %v104, %v125
    %s130 = scalar_lea.vmem [#allocation2], 32
    %v131 = vld [vmem:[%s130] sm:$0xf]
    %v132 = vld [vmem:[%s130 + $0x4] sm:$0xf]
    %v133 = vld [vmem:[%s130 + $0x8] sm:$0xf]
    %v134 = vld [vmem:[%s130 + $0xc] sm:$0xf]
    %v135 = vunpack.c.l.bf16 %v131
    %v136 = vunpack.c.l.bf16 %v132
    %v137 = vunpack.c.l.bf16 %v133
    %v138 = vunpack.c.l.bf16 %v134
    %s139 = scalar_lea.vmem [#allocation5], 2
    %v140 = vld [vmem:[%s139] sm:$0x1]
    %v142 = vlaneseq
    %v143 = vshrl.u32 %v142, 7
    %v144 = vsub.s32 0, %v143
    %v145 = vrot.slane %v140, %v144
    %v147 = vmul.f32 %v135, %v145
    %v148 = vmul.f32 %v136, %v145
    %v149 = vmul.f32 %v137, %v145
    %v150 = vmul.f32 %v138, %v145
    %v151 = vadd.f32 %v126, %v147
    %v152 = vadd.f32 %v127, %v148
    %v153 = vadd.f32 %v128, %v149
    %v154 = vadd.f32 %v129, %v150
    %s155 = scalar_lea.vmem [#allocation2], 48
    %v156 = vld [vmem:[%s155] sm:$0xf]
    %v157 = vld [vmem:[%s155 + $0x4] sm:$0xf]
    %v158 = vld [vmem:[%s155 + $0x8] sm:$0xf]
    %v159 = vld [vmem:[%s155 + $0xc] sm:$0xf]
    %v160 = vunpack.c.l.bf16 %v156
    %v161 = vunpack.c.l.bf16 %v157
    %v162 = vunpack.c.l.bf16 %v158
    %v163 = vunpack.c.l.bf16 %v159
    %s164 = scalar_lea.vmem [#allocation5], 3
    %v165 = vld [vmem:[%s164] sm:$0x1]
    %v167 = vlaneseq
    %v168 = vshrl.u32 %v167, 7
    %v169 = vsub.s32 0, %v168
    %v170 = vrot.slane %v165, %v169
    %v172 = vmul.f32 %v160, %v170
    %v173 = vmul.f32 %v161, %v170
    %v174 = vmul.f32 %v162, %v170
    %v175 = vmul.f32 %v163, %v170
    %v176 = vadd.f32 %v151, %v172
    %v177 = vadd.f32 %v152, %v173
    %v178 = vadd.f32 %v153, %v174
    %v179 = vadd.f32 %v154, %v175
    %s180 = scalar_lea.vmem [#allocation2], 64
    %v181 = vld [vmem:[%s180] sm:$0xf]
    %v182 = vld [vmem:[%s180 + $0x4] sm:$0xf]
    %v183 = vld [vmem:[%s180 + $0x8] sm:$0xf]
    %v184 = vld [vmem:[%s180 + $0xc] sm:$0xf]
    %v185 = vunpack.c.l.bf16 %v181
    %v186 = vunpack.c.l.bf16 %v182
    %v187 = vunpack.c.l.bf16 %v183
    %v188 = vunpack.c.l.bf16 %v184
    %s189 = scalar_lea.vmem [#allocation5], 4
    %v190 = vld [vmem:[%s189] sm:$0x1]
    %v192 = vlaneseq
    %v193 = vshrl.u32 %v192, 7
    %v194 = vsub.s32 0, %v193
    %v195 = vrot.slane %v190, %v194
    %v197 = vmul.f32 %v185, %v195
    %v198 = vmul.f32 %v186, %v195
    %v199 = vmul.f32 %v187, %v195
    %v200 = vmul.f32 %v188, %v195
    %v201 = vadd.f32 %v176, %v197
    %v202 = vadd.f32 %v177, %v198
    %v203 = vadd.f32 %v178, %v199
    %v204 = vadd.f32 %v179, %v200
    %s205 = scalar_lea.vmem [#allocation2], 80
    %v206 = vld [vmem:[%s205] sm:$0xf]
    %v207 = vld [vmem:[%s205 + $0x4] sm:$0xf]
    %v208 = vld [vmem:[%s205 + $0x8] sm:$0xf]
    %v209 = vld [vmem:[%s205 + $0xc] sm:$0xf]
    %v210 = vunpack.c.l.bf16 %v206
    %v211 = vunpack.c.l.bf16 %v207
    %v212 = vunpack.c.l.bf16 %v208
    %v213 = vunpack.c.l.bf16 %v209
    %s214 = scalar_lea.vmem [#allocation5], 5
    %v215 = vld [vmem:[%s214] sm:$0x1]
    %v217 = vlaneseq
    %v218 = vshrl.u32 %v217, 7
    %v219 = vsub.s32 0, %v218
    %v220 = vrot.slane %v215, %v219
    %v222 = vmul.f32 %v210, %v220
    %v223 = vmul.f32 %v211, %v220
    %v224 = vmul.f32 %v212, %v220
    %v225 = vmul.f32 %v213, %v220
    %v226 = vadd.f32 %v201, %v222
    %v227 = vadd.f32 %v202, %v223
    %v228 = vadd.f32 %v203, %v224
    %v229 = vadd.f32 %v204, %v225
    %s230 = scalar_lea.vmem [#allocation2], 96
    %v231 = vld [vmem:[%s230] sm:$0xf]
    %v232 = vld [vmem:[%s230 + $0x4] sm:$0xf]
    %v233 = vld [vmem:[%s230 + $0x8] sm:$0xf]
    %v234 = vld [vmem:[%s230 + $0xc] sm:$0xf]
    %v235 = vunpack.c.l.bf16 %v231
    %v236 = vunpack.c.l.bf16 %v232
    %v237 = vunpack.c.l.bf16 %v233
    %v238 = vunpack.c.l.bf16 %v234
    %s239 = scalar_lea.vmem [#allocation5], 6
    %v240 = vld [vmem:[%s239] sm:$0x1]
    %v242 = vlaneseq
    %v243 = vshrl.u32 %v242, 7
    %v244 = vsub.s32 0, %v243
    %v245 = vrot.slane %v240, %v244
    %v247 = vmul.f32 %v235, %v245
    %v248 = vmul.f32 %v236, %v245
    %v249 = vmul.f32 %v237, %v245
    %v250 = vmul.f32 %v238, %v245
    %v251 = vadd.f32 %v226, %v247
    %v252 = vadd.f32 %v227, %v248
    %v253 = vadd.f32 %v228, %v249
    %v254 = vadd.f32 %v229, %v250
    %s255 = scalar_lea.vmem [#allocation2], 112
    %v256 = vld [vmem:[%s255] sm:$0xf]
    %v257 = vld [vmem:[%s255 + $0x4] sm:$0xf]
    %v258 = vld [vmem:[%s255 + $0x8] sm:$0xf]
    %v259 = vld [vmem:[%s255 + $0xc] sm:$0xf]
    %v260 = vunpack.c.l.bf16 %v256
    %v261 = vunpack.c.l.bf16 %v257
    %v262 = vunpack.c.l.bf16 %v258
    %v263 = vunpack.c.l.bf16 %v259
    %s264 = scalar_lea.vmem [#allocation5], 7
    %v265 = vld [vmem:[%s264] sm:$0x1]
    %v267 = vlaneseq
    %v268 = vshrl.u32 %v267, 7
    %v269 = vsub.s32 0, %v268
    %v270 = vrot.slane %v265, %v269
    %v272 = vmul.f32 %v260, %v270
    %v273 = vmul.f32 %v261, %v270
    %v274 = vmul.f32 %v262, %v270
    %v275 = vmul.f32 %v263, %v270
    %v276 = vadd.f32 %v251, %v272
    %v277 = vadd.f32 %v252, %v273
    %v278 = vadd.f32 %v253, %v274
    %v279 = vadd.f32 %v254, %v275
    %s280 = scalar_lea.vmem [#allocation2], 128
    %v281 = vld [vmem:[%s280] sm:$0xf]
    %v282 = vld [vmem:[%s280 + $0x4] sm:$0xf]
    %v283 = vld [vmem:[%s280 + $0x8] sm:$0xf]
    %v284 = vld [vmem:[%s280 + $0xc] sm:$0xf]
    %v285 = vunpack.c.l.bf16 %v281
    %v286 = vunpack.c.l.bf16 %v282
    %v287 = vunpack.c.l.bf16 %v283
    %v288 = vunpack.c.l.bf16 %v284
    %s289 = scalar_lea.vmem [#allocation5], 8
    %v290 = vld [vmem:[%s289] sm:$0x1]
    %v292 = vlaneseq
    %v293 = vshrl.u32 %v292, 7
    %v294 = vsub.s32 0, %v293
    %v295 = vrot.slane %v290, %v294
    %v297 = vmul.f32 %v285, %v295
    %v298 = vmul.f32 %v286, %v295
    %v299 = vmul.f32 %v287, %v295
    %v300 = vmul.f32 %v288, %v295
    %v301 = vadd.f32 %v276, %v297
    %v302 = vadd.f32 %v277, %v298
    %v303 = vadd.f32 %v278, %v299
    %v304 = vadd.f32 %v279, %v300
    %v305 = vld [vmem:[#allocation7] sm:$0x1]
    %v307 = vlaneseq
    %v308 = vshrl.u32 %v307, 7
    %v309 = vsub.s32 0, %v308
    %v310 = vrot.slane %v305, %v309
    %v312 = vadd.f32 %v301, %v310
    %v313 = vadd.f32 %v302, %v310
    %v314 = vadd.f32 %v303, %v310
    %v315 = vadd.f32 %v304, %v310
    %v316 = vmax.f32 %v312, 0.0
    %v317 = vmax.f32 %v313, 0.0
    %v318 = vmax.f32 %v314, 0.0
    %v319 = vmax.f32 %v315, 0.0
    %v320 = vmin.f32 %v316, 6.0
    %v321 = vmin.f32 %v317, 6.0
    %v322 = vmin.f32 %v318, 6.0
    %v323 = vmin.f32 %v319, 6.0
    %v324 = vpack.c.bf16 %v321, %v320
    %v325 = vpack.c.bf16 %v323, %v322
    %v326 = vld [vmem:[#allocation8] sm:$0xf]
    %v327 = vld [vmem:[#allocation8 + $0x4] sm:$0xf]
    %v328 = vld [vmem:[#allocation8 + $0x8] sm:$0xf]
    %v329 = vld [vmem:[#allocation8 + $0xc] sm:$0xf]
    %v330 = vld [vmem:[#allocation8 + $0x10] sm:$0xf]
    %v331 = vld [vmem:[#allocation8 + $0x14] sm:$0xf]
    %v332 = vld [vmem:[#allocation8 + $0x18] sm:$0xf]
    %v333 = vld [vmem:[#allocation8 + $0x1c] sm:$0xf]
    %v334 = vld [vmem:[#allocation8 + $0x20] sm:$0xf]
    %v335 = vld [vmem:[#allocation8 + $0x24] sm:$0xf]
    %v336 = vld [vmem:[#allocation8 + $0x28] sm:$0xf]
    %v337 = vld [vmem:[#allocation8 + $0x2c] sm:$0xf]
    %v338 = vld [vmem:[#allocation8 + $0x30] sm:$0xf]
    %v339 = vld [vmem:[#allocation8 + $0x34] sm:$0xf]
    %v340 = vld [vmem:[#allocation8 + $0x38] sm:$0xf]
    %v341 = vld [vmem:[#allocation8 + $0x3c] sm:$0xf]
    %v342 = vld [vmem:[#allocation10] sm:$0x1]
    %v344 = vlaneseq
    %v345 = vshrl.u32 %v344, 7
    %v346 = vsub.s32 0, %v345
    %v347 = vrot.slane %v342, %v346
    %v365 = vunpack.c.l.b16 %v326
    %v366 = vunpack.c.l.b16 %v327
    %v367 = vunpack.c.l.b16 %v328
    %v368 = vunpack.c.l.b16 %v329
    %v369 = vunpack.c.l.b16 %v330
    %v370 = vunpack.c.l.b16 %v331
    %v371 = vunpack.c.l.b16 %v332
    %v372 = vunpack.c.l.b16 %v333
    %v373 = vunpack.c.l.b16 %v334
    %v374 = vunpack.c.l.b16 %v335
    %v375 = vunpack.c.l.b16 %v336
    %v376 = vunpack.c.l.b16 %v337
    %v377 = vunpack.c.l.b16 %v338
    %v378 = vunpack.c.l.b16 %v339
    %v379 = vunpack.c.l.b16 %v340
    %v380 = vunpack.c.l.b16 %v341
    %v381 = vpack.c.b16 %v366, %v365
    %v382 = vpack.c.b16 %v368, %v367
    %v383 = vpack.c.b16 %v370, %v369
    %v384 = vpack.c.b16 %v372, %v371
    %v385 = vpack.c.b16 %v374, %v373
    %v386 = vpack.c.b16 %v376, %v375
    %v387 = vpack.c.b16 %v378, %v377
    %v388 = vpack.c.b16 %v380, %v379
    %397 = vmatprep.subr.bf16.mxu0 0
    %398 = vmatpush1.bf16.msra.mxu0 %v381
    %399 = vmatprep.subr.bf16.mxu0 0
    %400 = vmatpush1.bf16.msra.mxu0 %v382
    %401 = vmatprep.subr.bf16.mxu0 0
    %402 = vmatpush1.bf16.msra.mxu0 %v383
    %403 = vmatprep.subr.bf16.mxu0 0
    %404 = vmatpush1.bf16.msra.mxu0 %v384
    %405 = vmatprep.subr.bf16.mxu0 0
    %406 = vmatpush1.bf16.msra.mxu0 %v385
    %407 = vmatprep.subr.bf16.mxu0 0
    %408 = vmatpush1.bf16.msra.mxu0 %v386
    %409 = vmatprep.subr.bf16.mxu0 0
    %410 = vmatpush1.bf16.msra.mxu0 %v387
    %411 = vmatprep.subr.bf16.mxu0 0
    %412 = vmatpush1.bf16.msra.mxu0 %v388
    %413 = vmatprep.subr.bf16.mxu0 0
    %414 = vmatpush1.bf16.msra.mxu0 0
    %415 = vmatprep.subr.bf16.mxu0 0
    %416 = vmatpush1.bf16.msra.mxu0 0
    %417 = vmatprep.subr.bf16.mxu0 0
    %418 = vmatpush1.bf16.msra.mxu0 0
    %419 = vmatprep.subr.bf16.mxu0 0
    %420 = vmatpush1.bf16.msra.mxu0 0
    %421 = vmatprep.subr.bf16.mxu0 0
    %422 = vmatpush1.bf16.msra.mxu0 0
    %423 = vmatprep.subr.bf16.mxu0 0
    %424 = vmatpush1.bf16.msra.mxu0 0
    %425 = vmatprep.subr.bf16.mxu0 0
    %426 = vmatpush1.bf16.msra.mxu0 0
    %427 = vmatprep.subr.bf16.mxu0 0
    %428 = vmatpush1.bf16.msra.mxu0 0
    %429 = vmatprep.mubr.bf16.mxu0 0
    %430 = vmatmul.mubr.bf16.gmra.mrb[0].mxu0 %v324
    %v431 = vpop.f32.mrb[0].mxu0
    %v432 = vadd.f32 %v347, %v431
    %v433 = vpop.f32.mrb[0].mxu0
    %v434 = vpop.f32.mrb[0].mxu0
    %v435 = vadd.f32 %v347, %v434
    %v436 = vpop.f32.mrb[0].mxu0
    %437 = vmatprep.mubr.bf16.mxu0 0
    %438 = vmatmul.mubr.bf16.gmra.mrb[0].mxu0 %v325
    %v439 = vpop.f32.mrb[0].mxu0
    %v440 = vadd.f32 %v347, %v439
    %v441 = vpop.f32.mrb[0].mxu0
    %v442 = vpop.f32.mrb[0].mxu0
    %v443 = vadd.f32 %v347, %v442
    %v444 = vpop.f32.mrb[0].mxu0
    %445 = vdwg.mxu0
    %v446 = vmax.f32 %v432, 0.0
    %v447 = vmax.f32 %v435, 0.0
    %v448 = vmax.f32 %v440, 0.0
    %v449 = vmax.f32 %v443, 0.0
    %v450 = vmin.f32 %v446, 6.0
    %v451 = vmin.f32 %v447, 6.0
    %v452 = vmin.f32 %v448, 6.0
    %v453 = vmin.f32 %v449, 6.0
    %v454 = vpack.c.bf16 %v451, %v450
    %v455 = vpack.c.bf16 %v453, %v452
    %v458 = vunpack.c.l.b16 %v454
    %v459 = vunpack.c.h.b16 %v454
    %v460 = vunpack.c.l.b16 %v455
    %v461 = vunpack.c.h.b16 %v455
    %v462 = vpack.c.b16 %v458, %v458
    %v463 = vpack.c.b16 %v459, %v459
    %v464 = vpack.c.b16 %v460, %v460
    %v465 = vpack.c.b16 %v461, %v461
    %470 = vst [vmem:[#allocation11] sm:$0xf] %v462
    %471 = vst [vmem:[#allocation11 + $0x4] sm:$0xf] %v463
    %472 = vst [vmem:[#allocation11 + $0x8] sm:$0xf] %v464
    %473 = vst [vmem:[#allocation11 + $0xc] sm:$0xf] %v465
    // Predicated region
    $region42: #{mobilenet_v1_forward.19} parent=1 // pred_check
      _
    $region43: #{mobilenet_v1_forward.19} parent=1 // pred_check_branch
      %475 = sbr.rel (0) target = $region45
    $region44: #{mobilenet_v1_forward.19} parent=1 // pred_region
      %s477 = ssub.s32 256, 256
      %478 = vsyncadd [#allocation4], %s477
      %s479 = sshll.u32 [#allocation11], 4
      %s480 = int_to_ptr.vmem [resolvable:$true] %s479
      %485 = dma.vmem_to_hbm [thread:$0]  %s480, 256, %s5, [#allocation4], 64, 64, 4
    $region45: #{mobilenet_v1_forward.19} parent=1 // pred_fallthru
      _
    // Predicated region
    $region46: #{mobilenet_v1_forward.19} parent=1 // pred_check
      _
    $region47: #{mobilenet_v1_forward.19} parent=1 // pred_check_branch
      %487 = sbr.rel (0) target = $region49
    $region48: #{mobilenet_v1_forward.19} parent=1 // pred_region
      %488 = dma.done [#allocation4], 256
    $region49: #{mobilenet_v1_forward.19} parent=1 // pred_fallthru
      _
    %489 = vsyncpa [#allocation3], 1
    %490 = vsyncpa [#allocation6], 1
    %491 = vsyncpa [#allocation9], 1
    %492 = vsyncpa [#allocation4], 1

// kernel: mobilenet_v1_forward.20
$region0: #{mobilenet_v1_forward.20}
  #allocation0 [shape = 'u32[]', space=smem, size = 0x4, offset = 0x4, fixed_abs, tag = 'smem constant byte address 0x4 - core index']
  #allocation1 [shape = 'u32[144,128]{1,0:T(1,128)}', space=vmem, size = 0x12000, scoped, tag = 'internal scratch']
  %s0 = inlined_call_operand.hbm [shape: bf16[2,40,128], index: 0, kind: input, shape index: {}]
  %s1 = inlined_call_operand.hbm [shape: f32[9,1,128], index: 1, kind: input, shape index: {}]
  %s2 = inlined_call_operand.hbm [shape: f32[1,128], index: 2, kind: input, shape index: {}]
  %s3 = inlined_call_operand.hbm [shape: bf16[128,128], index: 3, kind: input, shape index: {}]
  %s4 = inlined_call_operand.hbm [shape: f32[1,128], index: 4, kind: input, shape index: {}]
  %s5 = inlined_call_operand.hbm [shape: bf16[2,24,128], index: 5, kind: output, shape index: {}]
  %s6 = sld [smem:[#allocation0]]
  $region73: #{mobilenet_v1_forward.20} parent=0
    _
  %s8 = ssub.s32 1, %s6
  %s9 = scalar_select 0, %s8, %s6
  $region1: #{mobilenet_v1_forward.20} parent=0
    #allocation2 [shape = 'u8[20480]{0}', space=vmem, size = 0x5000, scoped, tag = 'input window, operand 0']
    #allocation3 [shape = 's32[2]{0}', space=sflag, size = 0x8, scoped, tag = 'scoped memory for mobilenet_v1_forward.20']
    #allocation4 [shape = 's32[2]{0}', space=sflag, size = 0x8, scoped, tag = 'scoped memory for mobilenet_v1_forward.20']
    #allocation5 [shape = 'u8[4608]{0}', space=vmem, size = 0x1400, scoped, tag = 'input window, operand 1, single buffered']
    #allocation6 [shape = 's32[1]{0}', space=sflag, size = 0x4, scoped, tag = 'scoped memory for mobilenet_v1_forward.20']
    #allocation7 [shape = 'u8[512]{0}', space=vmem, size = 0x400, scoped, tag = 'input window, operand 2, single buffered']
    #allocation8 [shape = 'u8[32768]{0}', space=vmem, size = 0x8000, scoped, tag = 'input window, operand 3, single buffered']
    #allocation9 [shape = 's32[1]{0}', space=sflag, size = 0x4, scoped, tag = 'scoped memory for mobilenet_v1_forward.20']
    #allocation10 [shape = 'u8[512]{0}', space=vmem, size = 0x400, scoped, tag = 'input window, operand 4, single buffered']
    #allocation11 [shape = 'u8[12288]{0}', space=vmem, size = 0x3000, scoped, tag = 'output window, operand 0']
    %10 = vsyncpa [#allocation3], 0
    %s11 = scalar_lea.sflag [#allocation3], 1
    %12 = vsyncpa %s11, 0
    %13 = vsyncpa [#allocation6], 0
    %14 = vsyncpa [#allocation9], 0
    %15 = vsyncpa [#allocation4], 0
    %s16 = scalar_lea.sflag [#allocation4], 1
    %17 = vsyncpa %s16, 0
    loop: start=0, step=1, limit=4
    $region2: #{mobilenet_v1_forward.20} parent=1 // loop_pre_header
      _
    $region3: #{mobilenet_v1_forward.20} parent=1 // loop_header
      %s19 = sphi 0, %s23
      %p20 = scmp.ge.s32.totalorder %s19, 4
      %s29 = sphi 0, %s31
      %s32 = sphi 0, %s29
      %s33 = sphi 0, %s32
      %s49 = sphi 0, %s33
      %s53 = sphi 0, %s53
      %s55 = sphi 0, %s53
      %s56 = sphi 0, %s55
      %s70 = sphi 0, %s56
      %s74 = sphi 0, %s74
      %s76 = sphi 0, %s74
      %s77 = sphi 0, %s76
      %s91 = sphi 0, %s77
      %s95 = sphi 0, %s95
      %s97 = sphi 0, %s95
      %s98 = sphi 0, %s97
      %s112 = sphi 0, %s98
      %s116 = sphi 0, %s116
      %s118 = sphi 0, %s116
      %s119 = sphi 0, %s118
      %s133 = sphi 0, %s119
      %s139 = sphi 0, %s141
      %s142 = sphi 0, %s139
      %s143 = sphi 0, %s142
      %s159 = sphi 0, %s143
    $region4: #{mobilenet_v1_forward.20} parent=1 // loop_header_branch
      %22 = sbr.rel (%p20) target = $region8
    $region5: #{mobilenet_v1_forward.20} parent=1 // loop_body
      %s24 = ssub.s32 %s19, 1
      %s25 = ssub.s32 %s19, 2
      %s26 = sadd.s32 %s19, 1
      %s27 = ssub.s32 %s19, %s26
      %p28 = scmp.eq.s32.totalorder %s27, 0
      %s30 = sadd.s32 %s29, 1
      %s31 = scalar_select %p28, %s29, %s30
      %p34 = pneg %p28
      %p35 = scmp.eq.s32.totalorder %s19, 1
      %p36 = por %p34, %p35
      %p37 = scmp.ne.s32.totalorder %s29, %s32
      %p38 = scmp.eq.s32.totalorder %s19, 0
      %p39 = por %p37, %p38
      %p40 = scmp.ne.s32.totalorder %s29, %s32
      %p41 = scmp.eq.s32.totalorder %s24, 1
      %p42 = por %p40, %p41
      %p43 = scmp.ne.s32.totalorder %s32, %s33
      %p44 = scmp.eq.s32.totalorder %s24, 0
      %p45 = por %p43, %p44
      %p46 = scmp.ne.s32.totalorder %s32, %s33
      %p47 = scmp.eq.s32.totalorder %s25, 1
      %p48 = por %p46, %p47
      %p50 = scmp.ne.s32.totalorder %s33, %s49
      %p51 = scmp.eq.s32.totalorder %s25, 0
      %p52 = por %p50, %p51
      %s54 = sadd.s32 %s53, 1
      %p57 = scmp.eq.s32.totalorder %s19, 1
      %p58 = scmp.ne.s32.totalorder %s53, %s55
      %p59 = scmp.eq.s32.totalorder %s19, 0
      %p60 = por %p58, %p59
      %p61 = scmp.ne.s32.totalorder %s53, %s55
      %p62 = scmp.eq.s32.totalorder %s24, 1
      %p63 = por %p61, %p62
      %p64 = scmp.ne.s32.totalorder %s55, %s56
      %p65 = scmp.eq.s32.totalorder %s24, 0
      %p66 = por %p64, %p65
      %p67 = scmp.ne.s32.totalorder %s55, %s56
      %p68 = scmp.eq.s32.totalorder %s25, 1
      %p69 = por %p67, %p68
      %p71 = scmp.ne.s32.totalorder %s56, %s70
      %p72 = scmp.eq.s32.totalorder %s25, 0
      %p73 = por %p71, %p72
      %s75 = sadd.s32 %s74, 1
      %p78 = scmp.eq.s32.totalorder %s19, 1
      %p79 = scmp.ne.s32.totalorder %s74, %s76
      %p80 = scmp.eq.s32.totalorder %s19, 0
      %p81 = por %p79, %p80
      %p82 = scmp.ne.s32.totalorder %s74, %s76
      %p83 = scmp.eq.s32.totalorder %s24, 1
      %p84 = por %p82, %p83
      %p85 = scmp.ne.s32.totalorder %s76, %s77
      %p86 = scmp.eq.s32.totalorder %s24, 0
      %p87 = por %p85, %p86
      %p88 = scmp.ne.s32.totalorder %s76, %s77
      %p89 = scmp.eq.s32.totalorder %s25, 1
      %p90 = por %p88, %p89
      %p92 = scmp.ne.s32.totalorder %s77, %s91
      %p93 = scmp.eq.s32.totalorder %s25, 0
      %p94 = por %p92, %p93
      %s96 = sadd.s32 %s95, 1
      %p99 = scmp.eq.s32.totalorder %s19, 1
      %p100 = scmp.ne.s32.totalorder %s95, %s97
      %p101 = scmp.eq.s32.totalorder %s19, 0
      %p102 = por %p100, %p101
      %p103 = scmp.ne.s32.totalorder %s95, %s97
      %p104 = scmp.eq.s32.totalorder %s24, 1
      %p105 = por %p103, %p104
      %p106 = scmp.ne.s32.totalorder %s97, %s98
      %p107 = scmp.eq.s32.totalorder %s24, 0
      %p108 = por %p106, %p107
      %p109 = scmp.ne.s32.totalorder %s97, %s98
      %p110 = scmp.eq.s32.totalorder %s25, 1
      %p111 = por %p109, %p110
      %p113 = scmp.ne.s32.totalorder %s98, %s112
      %p114 = scmp.eq.s32.totalorder %s25, 0
      %p115 = por %p113, %p114
      %s117 = sadd.s32 %s116, 1
      %p120 = scmp.eq.s32.totalorder %s19, 1
      %p121 = scmp.ne.s32.totalorder %s116, %s118
      %p122 = scmp.eq.s32.totalorder %s19, 0
      %p123 = por %p121, %p122
      %p124 = scmp.ne.s32.totalorder %s116, %s118
      %p125 = scmp.eq.s32.totalorder %s24, 1
      %p126 = por %p124, %p125
      %p127 = scmp.ne.s32.totalorder %s118, %s119
      %p128 = scmp.eq.s32.totalorder %s24, 0
      %p129 = por %p127, %p128
      %p130 = scmp.ne.s32.totalorder %s118, %s119
      %p131 = scmp.eq.s32.totalorder %s25, 1
      %p132 = por %p130, %p131
      %p134 = scmp.ne.s32.totalorder %s119, %s133
      %p135 = scmp.eq.s32.totalorder %s25, 0
      %p136 = por %p134, %p135
      %s137 = ssub.s32 %s19, %s26
      %p138 = scmp.eq.s32.totalorder %s137, 0
      %s140 = sadd.s32 %s139, 1
      %s141 = scalar_select %p138, %s139, %s140
      %p144 = pneg %p138
      %p145 = scmp.eq.s32.totalorder %s19, 1
      %p146 = por %p144, %p145
      %p147 = scmp.ne.s32.totalorder %s139, %s142
      %p148 = scmp.eq.s32.totalorder %s19, 0
      %p149 = por %p147, %p148
      %p150 = scmp.ne.s32.totalorder %s139, %s142
      %p151 = scmp.eq.s32.totalorder %s24, 1
      %p152 = por %p150, %p151
      %p153 = scmp.ne.s32.totalorder %s142, %s143
      %p154 = scmp.eq.s32.totalorder %s24, 0
      %p155 = por %p153, %p154
      %p156 = scmp.ne.s32.totalorder %s142, %s143
      %p157 = scmp.eq.s32.totalorder %s25, 1
      %p158 = por %p156, %p157
      %p160 = scmp.ne.s32.totalorder %s143, %s159
      %p161 = scmp.eq.s32.totalorder %s25, 0
      %p162 = por %p160, %p161
      %p163 = scmp.le.s32.totalorder 1, %s19
      %p164 = scmp.lt.s32.totalorder %s19, 3
      %p165 = pnand %p163, %p164
      %p166 = pneg %p165
      // Predicated region
      $region9: #{mobilenet_v1_forward.20} parent=5 // pred_check
        _
      $region10: #{mobilenet_v1_forward.20} parent=5 // pred_check_branch
        %168 = sbr.rel (%p165) target = $region12
      $region11: #{mobilenet_v1_forward.20} parent=5 // pred_region
        %s169 = ssub.s32 %s19, 1
        // Predicated region
        $region13: #{mobilenet_v1_forward.20} parent=11 // pred_check
          %p170 = pneg %p66
        $region14: #{mobilenet_v1_forward.20} parent=11 // pred_check_branch
          %172 = sbr.rel (%p170) target = $region16
        $region15: #{mobilenet_v1_forward.20} parent=11 // pred_region
          %s174 = ssub.s32 144, 144
          %175 = vsyncadd [#allocation6], %s174
          %s176 = sshll.u32 [#allocation5], 4
          %s177 = int_to_ptr.vmem [resolvable:$true] %s176
          %182 = dma.hbm_to_vmem [thread:$0]  %s1, 144, %s177, [#allocation6], 16, 16, 1
        $region16: #{mobilenet_v1_forward.20} parent=11 // pred_fallthru
          _
        // Predicated region
        $region17: #{mobilenet_v1_forward.20} parent=11 // pred_check
          %p183 = pneg %p87
        $region18: #{mobilenet_v1_forward.20} parent=11 // pred_check_branch
          %185 = sbr.rel (%p183) target = $region20
        $region19: #{mobilenet_v1_forward.20} parent=11 // pred_region
          %s187 = ssub.s32 16, 16
          %188 = vsyncadd [#allocation6], %s187
          %s190 = sshll.u32 [#allocation7], 4
          %s191 = int_to_ptr.vmem [resolvable:$true] %s190
          %193 = dma.hbm_to_vmem [thread:$0]  %s2, 16, %s191, [#allocation6]
        $region20: #{mobilenet_v1_forward.20} parent=11 // pred_fallthru
          _
        // Predicated region
        $region21: #{mobilenet_v1_forward.20} parent=11 // pred_check
          %p194 = pneg %p108
        $region22: #{mobilenet_v1_forward.20} parent=11 // pred_check_branch
          %196 = sbr.rel (%p194) target = $region24
        $region23: #{mobilenet_v1_forward.20} parent=11 // pred_region
          %s198 = ssub.s32 1024, 1024
          %199 = vsyncadd [#allocation9], %s198
          %s200 = sshll.u32 [#allocation8], 4
          %s201 = int_to_ptr.vmem [resolvable:$true] %s200
          %206 = dma.hbm_to_vmem [thread:$0]  %s3, 1024, %s201, [#allocation9], 64, 64, 4
        $region24: #{mobilenet_v1_forward.20} parent=11 // pred_fallthru
          _
        // Predicated region
        $region25: #{mobilenet_v1_forward.20} parent=11 // pred_check
          %p207 = pneg %p129
        $region26: #{mobilenet_v1_forward.20} parent=11 // pred_check_branch
          %209 = sbr.rel (%p207) target = $region28
        $region27: #{mobilenet_v1_forward.20} parent=11 // pred_region
          %s211 = ssub.s32 16, 16
          %212 = vsyncadd [#allocation9], %s211
          %s214 = sshll.u32 [#allocation10], 4
          %s215 = int_to_ptr.vmem [resolvable:$true] %s214
          %217 = dma.hbm_to_vmem [thread:$0]  %s4, 16, %s215, [#allocation9]
        $region28: #{mobilenet_v1_forward.20} parent=11 // pred_fallthru
          _
      $region12: #{mobilenet_v1_forward.20} parent=5 // pred_fallthru
        _
      %p218 = scmp.lt.s32.totalorder %s19, 2
      // Predicated region
      $region29: #{mobilenet_v1_forward.20} parent=5 // pred_check
        %p219 = pneg %p218
      $region30: #{mobilenet_v1_forward.20} parent=5 // pred_check_branch
        %221 = sbr.rel (%p219) target = $region32
      $region31: #{mobilenet_v1_forward.20} parent=5 // pred_region
        // Predicated region
        $region33: #{mobilenet_v1_forward.20} parent=31 // pred_check
          %p222 = pneg %p39
        $region34: #{mobilenet_v1_forward.20} parent=31 // pred_check_branch
          %224 = sbr.rel (%p222) target = $region36
        $region35: #{mobilenet_v1_forward.20} parent=31 // pred_region
          %s225 = sand.u32 %s29, 1
          %s226 = scalar_lea.sflag [#allocation3], %s225
          %s227 = sand.u32 %s29, 1
          %s228 = smul.addr %s227, 20
          %s229 = scalar_lea.vmem [#allocation2], %s228
          %s231 = ssub.s32 320, 320
          %232 = vsyncadd %s226, %s231
          %s233 = smul.addr %s19, 5
          %s234 = smul.addr %s233, 64
          %s235 = scalar_lea.hbm %s0, %s234
          %s236 = sshll.u32 %s229, 4
          %s237 = int_to_ptr.vmem [resolvable:$true] %s236
          %242 = dma.hbm_to_vmem [thread:$0]  %s235, 320, %s237, %s226, 64, 64, 4
        $region36: #{mobilenet_v1_forward.20} parent=31 // pred_fallthru
          _
      $region32: #{mobilenet_v1_forward.20} parent=5 // pred_fallthru
        _
      %p243 = scmp.le.s32.totalorder 1, %s19
      %p244 = scmp.lt.s32.totalorder %s19, 3
      %p245 = pnand %p243, %p244
      %p246 = pneg %p245
      // Predicated region
      $region37: #{mobilenet_v1_forward.20} parent=5 // pred_check
        _
      $region38: #{mobilenet_v1_forward.20} parent=5 // pred_check_branch
        %248 = sbr.rel (%p245) target = $region40
      $region39: #{mobilenet_v1_forward.20} parent=5 // pred_region
        %s249 = ssub.s32 %s19, 1
        %s250 = sand.u32 %s32, 1
        %s251 = scalar_lea.sflag [#allocation3], %s250
        %s252 = sand.u32 %s32, 1
        %s253 = smul.addr %s252, 20
        %s254 = scalar_lea.vmem [#allocation2], %s253
        // Predicated region
        $region41: #{mobilenet_v1_forward.20} parent=39 // pred_check
          %p255 = pneg %p45
        $region42: #{mobilenet_v1_forward.20} parent=39 // pred_check_branch
          %257 = sbr.rel (%p255) target = $region44
        $region43: #{mobilenet_v1_forward.20} parent=39 // pred_region
          %258 = dma.done %s251, 320
        $region44: #{mobilenet_v1_forward.20} parent=39 // pred_fallthru
          _
        // Predicated region
        $region45: #{mobilenet_v1_forward.20} parent=39 // pred_check
          %p259 = pneg %p66
        $region46: #{mobilenet_v1_forward.20} parent=39 // pred_check_branch
          %261 = sbr.rel (%p259) target = $region48
        $region47: #{mobilenet_v1_forward.20} parent=39 // pred_region
          %262 = dma.done [#allocation6], 144
        $region48: #{mobilenet_v1_forward.20} parent=39 // pred_fallthru
          _
        // Predicated region
        $region49: #{mobilenet_v1_forward.20} parent=39 // pred_check
          %p263 = pneg %p87
        $region50: #{mobilenet_v1_forward.20} parent=39 // pred_check_branch
          %265 = sbr.rel (%p263) target = $region52
        $region51: #{mobilenet_v1_forward.20} parent=39 // pred_region
          %266 = dma.done [#allocation6], 16
        $region52: #{mobilenet_v1_forward.20} parent=39 // pred_fallthru
          _
        // Predicated region
        $region53: #{mobilenet_v1_forward.20} parent=39 // pred_check
          %p267 = pneg %p108
        $region54: #{mobilenet_v1_forward.20} parent=39 // pred_check_branch
          %269 = sbr.rel (%p267) target = $region56
        $region55: #{mobilenet_v1_forward.20} parent=39 // pred_region
          %270 = dma.done [#allocation9], 1024
        $region56: #{mobilenet_v1_forward.20} parent=39 // pred_fallthru
          _
        // Predicated region
        $region57: #{mobilenet_v1_forward.20} parent=39 // pred_check
          %p271 = pneg %p129
        $region58: #{mobilenet_v1_forward.20} parent=39 // pred_check_branch
          %273 = sbr.rel (%p271) target = $region60
        $region59: #{mobilenet_v1_forward.20} parent=39 // pred_region
          %274 = dma.done [#allocation9], 16
        $region60: #{mobilenet_v1_forward.20} parent=39 // pred_fallthru
          _
        %s275 = sand.u32 %s32, 1
        %s276 = scalar_lea.sflag [#allocation3], %s275
        %s277 = sand.u32 %s32, 1
        %s278 = smul.addr %s277, 20
        %s279 = scalar_lea.vmem [#allocation2], %s278
        %p280 = pneg %p45
        %p281 = pneg %p42
        %p282 = pneg %p66
        %p283 = pneg %p63
        %p284 = pneg %p87
        %p285 = pneg %p84
        %p286 = pneg %p108
        %p287 = pneg %p105
        %p288 = pneg %p129
        %p289 = pneg %p126
        %p290 = pneg %p155
        %p291 = pneg %p152
        %s292 = sand.u32 %s142, 1
        %s293 = scalar_lea.sflag [#allocation4], %s292
        %s294 = sand.u32 %s142, 1
        %s295 = smul.addr %s294, 12
        %s296 = scalar_lea.vmem [#allocation11], %s295
        %v298 = vld [vmem:[%s254] sm:$0xf]
        %v299 = vld [vmem:[%s254 + $0x4] sm:$0xf]
        %v300 = vld [vmem:[%s254 + $0x8] sm:$0xf]
        %v301 = vld [vmem:[%s254 + $0xc] sm:$0xf]
        %v302 = vld [vmem:[%s254 + $0x10] sm:$0xf]
        %v303 = vunpack.c.l.bf16 %v298
        %v304 = vunpack.c.l.bf16 %v299
        %v305 = vunpack.c.l.bf16 %v300
        %v306 = vld [vmem:[#allocation5] sm:$0x1]
        %v308 = vlaneseq
        %v309 = vshrl.u32 %v308, 7
        %v310 = vsub.s32 0, %v309
        %v311 = vrot.slane %v306, %v310
        %v313 = vmul.f32 %v303, %v311
        %v314 = vmul.f32 %v304, %v311
        %v315 = vmul.f32 %v305, %v311
        %v316 = vunpack.c.l.bf16 %v301
        %s317 = scalar_lea.vmem [#allocation5], 1
        %v318 = vld [vmem:[%s317] sm:$0x1]
        %v320 = vlaneseq
        %v321 = vshrl.u32 %v320, 7
        %v322 = vsub.s32 0, %v321
        %v323 = vrot.slane %v318, %v322
        %v325 = vmul.f32 %v303, %v323
        %v326 = vmul.f32 %v304, %v323
        %v327 = vmul.f32 %v305, %v323
        %v328 = vmul.f32 %v316, %v323
        %vm333 = vcmask 1046528
        %v334 = vrot.slane %v325, 1
        %v335 = vrot.slane %v326, 1
        %v336 = vsel %vm333, %v334, %v335
        %v337 = vrot.slane %v327, 1
        %v338 = vsel %vm333, %v335, %v337
        %v339 = vrot.slane %v328, 1
        %v340 = vsel %vm333, %v337, %v339
        %v344 = vadd.f32 %v313, %v336
        %v345 = vadd.f32 %v314, %v338
        %v346 = vadd.f32 %v315, %v340
        %s347 = scalar_lea.vmem [#allocation5], 2
        %v348 = vld [vmem:[%s347] sm:$0x1]
        %v350 = vlaneseq
        %v351 = vshrl.u32 %v350, 7
        %v352 = vsub.s32 0, %v351
        %v353 = vrot.slane %v348, %v352
        %v355 = vmul.f32 %v303, %v353
        %v356 = vmul.f32 %v304, %v353
        %v357 = vmul.f32 %v305, %v353
        %v358 = vmul.f32 %v316, %v353
        %vm363 = vcmask 1045504
        %v364 = vrot.slane %v355, 2
        %v365 = vrot.slane %v356, 2
        %v366 = vsel %vm363, %v364, %v365
        %v367 = vrot.slane %v357, 2
        %v368 = vsel %vm363, %v365, %v367
        %v369 = vrot.slane %v358, 2
        %v370 = vsel %vm363, %v367, %v369
        %v374 = vadd.f32 %v344, %v366
        %v375 = vadd.f32 %v345, %v368
        %v376 = vadd.f32 %v346, %v370
        %s377 = scalar_lea.vmem [#allocation5], 3
        %v378 = vld [vmem:[%s377] sm:$0x1]
        %v380 = vlaneseq
        %v381 = vshrl.u32 %v380, 7
        %v382 = vsub.s32 0, %v381
        %v383 = vrot.slane %v378, %v382
        %v385 = vmul.f32 %v303, %v383
        %v386 = vmul.f32 %v304, %v383
        %v387 = vmul.f32 %v305, %v383
        %v388 = vmul.f32 %v316, %v383
        %vm393 = vcmask 1041408
        %v394 = vrot.slane %v385, 6
        %v395 = vrot.slane %v386, 6
        %v396 = vsel %vm393, %v394, %v395
        %v397 = vrot.slane %v387, 6
        %v398 = vsel %vm393, %v395, %v397
        %v399 = vrot.slane %v388, 6
        %v400 = vsel %vm393, %v397, %v399
        %v404 = vadd.f32 %v374, %v396
        %v405 = vadd.f32 %v375, %v398
        %v406 = vadd.f32 %v376, %v400
        %s407 = scalar_lea.vmem [#allocation5], 4
        %v408 = vld [vmem:[%s407] sm:$0x1]
        %v410 = vlaneseq
        %v411 = vshrl.u32 %v410, 7
        %v412 = vsub.s32 0, %v411
        %v413 = vrot.slane %v408, %v412
        %v415 = vmul.f32 %v303, %v413
        %v416 = vmul.f32 %v304, %v413
        %v417 = vmul.f32 %v305, %v413
        %v418 = vmul.f32 %v316, %v413
        %vm423 = vcmask 1040384
        %v424 = vrot.slane %v415, 7
        %v425 = vrot.slane %v416, 7
        %v426 = vsel %vm423, %v424, %v425
        %v427 = vrot.slane %v417, 7
        %v428 = vsel %vm423, %v425, %v427
        %v429 = vrot.slane %v418, 7
        %v430 = vsel %vm423, %v427, %v429
        %v434 = vadd.f32 %v404, %v426
        %v435 = vadd.f32 %v405, %v428
        %v436 = vadd.f32 %v406, %v430
        %s437 = scalar_lea.vmem [#allocation5], 5
        %v438 = vld [vmem:[%s437] sm:$0x1]
        %v440 = vlaneseq
        %v441 = vshrl.u32 %v440, 7
        %v442 = vsub.s32 0, %v441
        %v443 = vrot.slane %v438, %v442
        %v445 = vmul.f32 %v304, %v443
        %v446 = vmul.f32 %v305, %v443
        %v447 = vmul.f32 %v316, %v443
        %v448 = vadd.f32 %v434, %v445
        %v449 = vadd.f32 %v435, %v446
        %v450 = vadd.f32 %v436, %v447
        %v451 = vunpack.c.l.bf16 %v302
        %s452 = scalar_lea.vmem [#allocation5], 6
        %v453 = vld [vmem:[%s452] sm:$0x1]
        %v455 = vlaneseq
        %v456 = vshrl.u32 %v455, 7
        %v457 = vsub.s32 0, %v456
        %v458 = vrot.slane %v453, %v457
        %v460 = vmul.f32 %v304, %v458
        %v461 = vmul.f32 %v305, %v458
        %v462 = vmul.f32 %v316, %v458
        %v463 = vmul.f32 %v451, %v458
        %vm468 = vcmask 1043456
        %v469 = vrot.slane %v460, 4
        %v470 = vrot.slane %v461, 4
        %v471 = vsel %vm468, %v469, %v470
        %v472 = vrot.slane %v462, 4
        %v473 = vsel %vm468, %v470, %v472
        %v474 = vrot.slane %v463, 4
        %v475 = vsel %vm468, %v472, %v474
        %v479 = vadd.f32 %v448, %v471
        %v480 = vadd.f32 %v449, %v473
        %v481 = vadd.f32 %v450, %v475
        %s482 = scalar_lea.vmem [#allocation5], 7
        %v483 = vld [vmem:[%s482] sm:$0x1]
        %v485 = vlaneseq
        %v486 = vshrl.u32 %v485, 7
        %v487 = vsub.s32 0, %v486
        %v488 = vrot.slane %v483, %v487
        %v490 = vmul.f32 %v304, %v488
        %v491 = vmul.f32 %v305, %v488
        %v492 = vmul.f32 %v316, %v488
        %v493 = vmul.f32 %v451, %v488
        %vm498 = vcmask 1042432
        %v499 = vrot.slane %v490, 5
        %v500 = vrot.slane %v491, 5
        %v501 = vsel %vm498, %v499, %v500
        %v502 = vrot.slane %v492, 5
        %v503 = vsel %vm498, %v500, %v502
        %v504 = vrot.slane %v493, 5
        %v505 = vsel %vm498, %v502, %v504
        %v509 = vadd.f32 %v479, %v501
        %v510 = vadd.f32 %v480, %v503
        %v511 = vadd.f32 %v481, %v505
        %s512 = scalar_lea.vmem [#allocation5], 8
        %v513 = vld [vmem:[%s512] sm:$0x1]
        %v515 = vlaneseq
        %v516 = vshrl.u32 %v515, 7
        %v517 = vsub.s32 0, %v516
        %v518 = vrot.slane %v513, %v517
        %v520 = vmul.f32 %v304, %v518
        %v521 = vmul.f32 %v305, %v518
        %v522 = vmul.f32 %v316, %v518
        %v523 = vmul.f32 %v451, %v518
        %v528 = vrot.slane %v520, 6
        %v529 = vrot.slane %v521, 6
        %v530 = vsel %vm393, %v528, %v529
        %v531 = vrot.slane %v522, 6
        %v532 = vsel %vm393, %v529, %v531
        %v533 = vrot.slane %v523, 6
        %v534 = vsel %vm393, %v531, %v533
        %v538 = vadd.f32 %v509, %v530
        %v539 = vadd.f32 %v510, %v532
        %v540 = vadd.f32 %v511, %v534
        %v541 = vld [vmem:[#allocation7] sm:$0x1]
        %v543 = vlaneseq
        %v544 = vshrl.u32 %v543, 7
        %v545 = vsub.s32 0, %v544
        %v546 = vrot.slane %v541, %v545
        %v548 = vadd.f32 %v538, %v546
        %v549 = vadd.f32 %v539, %v546
        %v550 = vadd.f32 %v540, %v546
        %v551 = vmax.f32 %v548, 0.0
        %v552 = vmax.f32 %v549, 0.0
        %v553 = vmax.f32 %v550, 0.0
        %v554 = vmin.f32 %v551, 6.0
        %v555 = vmin.f32 %v552, 6.0
        %v556 = vmin.f32 %v553, 6.0
        %v557 = vpack.c.bf16 %v555, %v554
        %v558 = vpack.c.bf16 %v556, %v556
        %v559 = vld [vmem:[#allocation8] sm:$0xf]
        %v560 = vld [vmem:[#allocation8 + $0x4] sm:$0xf]
        %v561 = vld [vmem:[#allocation8 + $0x8] sm:$0xf]
        %v562 = vld [vmem:[#allocation8 + $0xc] sm:$0xf]
        %v563 = vld [vmem:[#allocation8 + $0x10] sm:$0xf]
        %v564 = vld [vmem:[#allocation8 + $0x14] sm:$0xf]
        %v565 = vld [vmem:[#allocation8 + $0x18] sm:$0xf]
        %v566 = vld [vmem:[#allocation8 + $0x1c] sm:$0xf]
        %v567 = vld [vmem:[#allocation8 + $0x20] sm:$0xf]
        %v568 = vld [vmem:[#allocation8 + $0x24] sm:$0xf]
        %v569 = vld [vmem:[#allocation8 + $0x28] sm:$0xf]
        %v570 = vld [vmem:[#allocation8 + $0x2c] sm:$0xf]
        %v571 = vld [vmem:[#allocation8 + $0x30] sm:$0xf]
        %v572 = vld [vmem:[#allocation8 + $0x34] sm:$0xf]
        %v573 = vld [vmem:[#allocation8 + $0x38] sm:$0xf]
        %v574 = vld [vmem:[#allocation8 + $0x3c] sm:$0xf]
        %v575 = vld [vmem:[#allocation10] sm:$0x1]
        %v577 = vlaneseq
        %v578 = vshrl.u32 %v577, 7
        %v579 = vsub.s32 0, %v578
        %v580 = vrot.slane %v575, %v579
        %v598 = vunpack.c.l.b16 %v559
        %v599 = vunpack.c.l.b16 %v560
        %v600 = vunpack.c.l.b16 %v561
        %v601 = vunpack.c.l.b16 %v562
        %v602 = vunpack.c.l.b16 %v563
        %v603 = vunpack.c.l.b16 %v564
        %v604 = vunpack.c.l.b16 %v565
        %v605 = vunpack.c.l.b16 %v566
        %v606 = vunpack.c.l.b16 %v567
        %v607 = vunpack.c.l.b16 %v568
        %v608 = vunpack.c.l.b16 %v569
        %v609 = vunpack.c.l.b16 %v570
        %v610 = vunpack.c.l.b16 %v571
        %v611 = vunpack.c.l.b16 %v572
        %v612 = vunpack.c.l.b16 %v573
        %v613 = vunpack.c.l.b16 %v574
        %v614 = vpack.c.b16 %v599, %v598
        %v615 = vpack.c.b16 %v601, %v600
        %v616 = vpack.c.b16 %v603, %v602
        %v617 = vpack.c.b16 %v605, %v604
        %v618 = vpack.c.b16 %v607, %v606
        %v619 = vpack.c.b16 %v609, %v608
        %v620 = vpack.c.b16 %v611, %v610
        %v621 = vpack.c.b16 %v613, %v612
        %630 = vmatprep.subr.bf16.mxu0 0
        %631 = vmatpush1.bf16.msra.mxu0 %v614
        %632 = vmatprep.subr.bf16.mxu0 0
        %633 = vmatpush1.bf16.msra.mxu0 %v615
        %634 = vmatprep.subr.bf16.mxu0 0
        %635 = vmatpush1.bf16.msra.mxu0 %v616
        %636 = vmatprep.subr.bf16.mxu0 0
        %637 = vmatpush1.bf16.msra.mxu0 %v617
        %638 = vmatprep.subr.bf16.mxu0 0
        %639 = vmatpush1.bf16.msra.mxu0 %v618
        %640 = vmatprep.subr.bf16.mxu0 0
        %641 = vmatpush1.bf16.msra.mxu0 %v619
        %642 = vmatprep.subr.bf16.mxu0 0
        %643 = vmatpush1.bf16.msra.mxu0 %v620
        %644 = vmatprep.subr.bf16.mxu0 0
        %645 = vmatpush1.bf16.msra.mxu0 %v621
        %646 = vmatprep.subr.bf16.mxu0 0
        %647 = vmatpush1.bf16.msra.mxu0 0
        %648 = vmatprep.subr.bf16.mxu0 0
        %649 = vmatpush1.bf16.msra.mxu0 0
        %650 = vmatprep.subr.bf16.mxu0 0
        %651 = vmatpush1.bf16.msra.mxu0 0
        %652 = vmatprep.subr.bf16.mxu0 0
        %653 = vmatpush1.bf16.msra.mxu0 0
        %654 = vmatprep.subr.bf16.mxu0 0
        %655 = vmatpush1.bf16.msra.mxu0 0
        %656 = vmatprep.subr.bf16.mxu0 0
        %657 = vmatpush1.bf16.msra.mxu0 0
        %658 = vmatprep.subr.bf16.mxu0 0
        %659 = vmatpush1.bf16.msra.mxu0 0
        %660 = vmatprep.subr.bf16.mxu0 0
        %661 = vmatpush1.bf16.msra.mxu0 0
        %662 = vmatprep.mubr.bf16.mxu0 0
        %663 = vmatmul.mubr.bf16.gmra.mrb[0].mxu0 %v557
        %v664 = vpop.f32.mrb[0].mxu0
        %v665 = vadd.f32 %v580, %v664
        %v666 = vpop.f32.mrb[0].mxu0
        %v667 = vpop.f32.mrb[0].mxu0
        %v668 = vadd.f32 %v580, %v667
        %v669 = vpop.f32.mrb[0].mxu0
        %670 = vmatprep.mubr.bf16.mxu0 0
        %671 = vmatmul.mubr.bf16.gmra.mrb[0].mxu0 %v558
        %v672 = vpop.f32.mrb[0].mxu0
        %v673 = vadd.f32 %v580, %v672
        %v674 = vpop.f32.mrb[0].mxu0
        %v675 = vpop.f32.mrb[0].mxu0
        %v676 = vpop.f32.mrb[0].mxu0
        %677 = vdwg.mxu0
        %v678 = vmax.f32 %v665, 0.0
        %v679 = vmax.f32 %v668, 0.0
        %v680 = vmax.f32 %v673, 0.0
        %v681 = vmin.f32 %v678, 6.0
        %v682 = vmin.f32 %v679, 6.0
        %v683 = vmin.f32 %v680, 6.0
        %v684 = vpack.c.bf16 %v682, %v681
        %v685 = vpack.c.bf16 %v683, %v683
        %v688 = vunpack.c.l.b16 %v684
        %v689 = vunpack.c.h.b16 %v684
        %v690 = vunpack.c.l.b16 %v685
        %v691 = vpack.c.b16 %v688, %v688
        %v692 = vpack.c.b16 %v689, %v689
        %v693 = vpack.c.b16 %v690, %v690
        %697 = vst [vmem:[%s296] sm:$0xf] %v691
        %698 = vst [vmem:[%s296 + $0x4] sm:$0xf] %v692
        %699 = vst [vmem:[%s296 + $0x8] sm:$0xf] %v693
        %s700 = sand.u32 %s142, 1
        %s701 = scalar_lea.sflag [#allocation4], %s700
        %s702 = sand.u32 %s142, 1
        %s703 = smul.addr %s702, 12
        %s704 = scalar_lea.vmem [#allocation11], %s703
        // Predicated region
        $region61: #{mobilenet_v1_forward.20} parent=39 // pred_check
          %p705 = pneg %p152
        $region62: #{mobilenet_v1_forward.20} parent=39 // pred_check_branch
          %707 = sbr.rel (%p705) target = $region64
        $region63: #{mobilenet_v1_forward.20} parent=39 // pred_region
          %s709 = ssub.s32 192, 192
          %710 = vsyncadd %s701, %s709
          %s711 = smul.addr %s24, 3
          %s712 = smul.addr %s711, 64
          %s713 = scalar_lea.hbm %s5, %s712
          %s714 = sshll.u32 %s704, 4
          %s715 = int_to_ptr.vmem [resolvable:$true] %s714
          %720 = dma.vmem_to_hbm [thread:$0]  %s715, 192, %s713, %s701, 64, 64, 4
        $region64: #{mobilenet_v1_forward.20} parent=39 // pred_fallthru
          _
      $region40: #{mobilenet_v1_forward.20} parent=5 // pred_fallthru
        _
      %p721 = scmp.le.s32.totalorder 2, %s19
      // Predicated region
      $region65: #{mobilenet_v1_forward.20} parent=5 // pred_check
        %p722 = pneg %p721
      $region66: #{mobilenet_v1_forward.20} parent=5 // pred_check_branch
        %724 = sbr.rel (%p722) target = $region68
      $region67: #{mobilenet_v1_forward.20} parent=5 // pred_region
        %s725 = ssub.s32 %s19, 2
        // Predicated region
        $region69: #{mobilenet_v1_forward.20} parent=67 // pred_check
          %p726 = pneg %p158
        $region70: #{mobilenet_v1_forward.20} parent=67 // pred_check_branch
          %728 = sbr.rel (%p726) target = $region72
        $region71: #{mobilenet_v1_forward.20} parent=67 // pred_region
          %s729 = sand.u32 %s143, 1
          %s730 = scalar_lea.sflag [#allocation4], %s729
          %s731 = sand.u32 %s143, 1
          %s732 = smul.addr %s731, 12
          %s733 = scalar_lea.vmem [#allocation11], %s732
          %734 = dma.done %s730, 192
        $region72: #{mobilenet_v1_forward.20} parent=67 // pred_fallthru
          _
      $region68: #{mobilenet_v1_forward.20} parent=5 // pred_fallthru
        _
    $region6: #{mobilenet_v1_forward.20} parent=1 // loop_footer
      %s23 = sadd.s32 1, %s19
    $region7: #{mobilenet_v1_forward.20} parent=1 // loop_footer_branch
      %18 = sbr.rel target = $region3
    $region8: #{mobilenet_v1_forward.20} parent=1 // loop_exit
      _
    %735 = vsyncpa [#allocation3], 1
    %s736 = scalar_lea.sflag [#allocation3], 1
    %737 = vsyncpa %s736, 1
    %738 = vsyncpa [#allocation6], 1
    %739 = vsyncpa [#allocation9], 1
    %740 = vsyncpa [#allocation4], 1
    %s741 = scalar_lea.sflag [#allocation4], 1
    %742 = vsyncpa %s741, 1

// kernel: mobilenet_v1_forward.21
$region0: #{mobilenet_v1_forward.21}
  #allocation0 [shape = 'u32[]', space=smem, size = 0x4, offset = 0x4, fixed_abs, tag = 'smem constant byte address 0x4 - core index']
  #allocation1 [shape = 'u32[144,128]{1,0:T(1,128)}', space=vmem, size = 0x12000, scoped, tag = 'internal scratch']
  %s0 = inlined_call_operand.hbm [shape: bf16[9,8,128], index: 0, kind: input, shape index: {}]
  %s1 = inlined_call_operand.hbm [shape: f32[9,1,128], index: 1, kind: input, shape index: {}]
  %s2 = inlined_call_operand.hbm [shape: f32[1,128], index: 2, kind: input, shape index: {}]
  %s3 = inlined_call_operand.hbm [shape: bf16[128,128], index: 3, kind: input, shape index: {}]
  %s4 = inlined_call_operand.hbm [shape: f32[1,128], index: 4, kind: input, shape index: {}]
  %s5 = inlined_call_operand.hbm [shape: bf16[8,128], index: 5, kind: output, shape index: {}]
  %s6 = sld [smem:[#allocation0]]
  $region50: #{mobilenet_v1_forward.21} parent=0
    _
  %s8 = ssub.s32 1, %s6
  %s9 = scalar_select 0, %s8, %s6
  $region1: #{mobilenet_v1_forward.21} parent=0
    #allocation2 [shape = 'u8[18432]{0}', space=vmem, size = 0x4800, scoped, tag = 'input window, operand 0, single buffered']
    #allocation3 [shape = 's32[1]{0}', space=sflag, size = 0x4, scoped, tag = 'scoped memory for mobilenet_v1_forward.21']
    #allocation4 [shape = 's32[1]{0}', space=sflag, size = 0x4, scoped, tag = 'scoped memory for mobilenet_v1_forward.21']
    #allocation5 [shape = 'u8[4608]{0}', space=vmem, size = 0x1400, scoped, tag = 'input window, operand 1, single buffered']
    #allocation6 [shape = 's32[1]{0}', space=sflag, size = 0x4, scoped, tag = 'scoped memory for mobilenet_v1_forward.21']
    #allocation7 [shape = 'u8[512]{0}', space=vmem, size = 0x400, scoped, tag = 'input window, operand 2, single buffered']
    #allocation8 [shape = 'u8[32768]{0}', space=vmem, size = 0x8000, scoped, tag = 'input window, operand 3, single buffered']
    #allocation9 [shape = 's32[1]{0}', space=sflag, size = 0x4, scoped, tag = 'scoped memory for mobilenet_v1_forward.21']
    #allocation10 [shape = 'u8[512]{0}', space=vmem, size = 0x400, scoped, tag = 'input window, operand 4, single buffered']
    #allocation11 [shape = 'u8[2048]{0}', space=vmem, size = 0x800, scoped, tag = 'output window, operand 0, single buffered']
    %10 = vsyncpa [#allocation3], 0
    %11 = vsyncpa [#allocation6], 0
    %12 = vsyncpa [#allocation9], 0
    %13 = vsyncpa [#allocation4], 0
    // Predicated region
    $region2: #{mobilenet_v1_forward.21} parent=1 // pred_check
      _
    $region3: #{mobilenet_v1_forward.21} parent=1 // pred_check_branch
      %15 = sbr.rel (0) target = $region5
    $region4: #{mobilenet_v1_forward.21} parent=1 // pred_region
      %s17 = ssub.s32 576, 576
      %18 = vsyncadd [#allocation3], %s17
      %s19 = sshll.u32 [#allocation2], 4
      %s20 = int_to_ptr.vmem [resolvable:$true] %s19
      %25 = dma.hbm_to_vmem [thread:$0]  %s0, 576, %s20, [#allocation3], 64, 64, 4
    $region5: #{mobilenet_v1_forward.21} parent=1 // pred_fallthru
      _
    // Predicated region
    $region6: #{mobilenet_v1_forward.21} parent=1 // pred_check
      _
    $region7: #{mobilenet_v1_forward.21} parent=1 // pred_check_branch
      %27 = sbr.rel (0) target = $region9
    $region8: #{mobilenet_v1_forward.21} parent=1 // pred_region
      %s29 = ssub.s32 144, 144
      %30 = vsyncadd [#allocation6], %s29
      %s31 = sshll.u32 [#allocation5], 4
      %s32 = int_to_ptr.vmem [resolvable:$true] %s31
      %37 = dma.hbm_to_vmem [thread:$0]  %s1, 144, %s32, [#allocation6], 16, 16, 1
    $region9: #{mobilenet_v1_forward.21} parent=1 // pred_fallthru
      _
    // Predicated region
    $region10: #{mobilenet_v1_forward.21} parent=1 // pred_check
      _
    $region11: #{mobilenet_v1_forward.21} parent=1 // pred_check_branch
      %39 = sbr.rel (0) target = $region13
    $region12: #{mobilenet_v1_forward.21} parent=1 // pred_region
      %s41 = ssub.s32 16, 16
      %42 = vsyncadd [#allocation6], %s41
      %s44 = sshll.u32 [#allocation7], 4
      %s45 = int_to_ptr.vmem [resolvable:$true] %s44
      %47 = dma.hbm_to_vmem [thread:$0]  %s2, 16, %s45, [#allocation6]
    $region13: #{mobilenet_v1_forward.21} parent=1 // pred_fallthru
      _
    // Predicated region
    $region14: #{mobilenet_v1_forward.21} parent=1 // pred_check
      _
    $region15: #{mobilenet_v1_forward.21} parent=1 // pred_check_branch
      %49 = sbr.rel (0) target = $region17
    $region16: #{mobilenet_v1_forward.21} parent=1 // pred_region
      %s51 = ssub.s32 1024, 1024
      %52 = vsyncadd [#allocation9], %s51
      %s53 = sshll.u32 [#allocation8], 4
      %s54 = int_to_ptr.vmem [resolvable:$true] %s53
      %59 = dma.hbm_to_vmem [thread:$0]  %s3, 1024, %s54, [#allocation9], 64, 64, 4
    $region17: #{mobilenet_v1_forward.21} parent=1 // pred_fallthru
      _
    // Predicated region
    $region18: #{mobilenet_v1_forward.21} parent=1 // pred_check
      _
    $region19: #{mobilenet_v1_forward.21} parent=1 // pred_check_branch
      %61 = sbr.rel (0) target = $region21
    $region20: #{mobilenet_v1_forward.21} parent=1 // pred_region
      %s63 = ssub.s32 16, 16
      %64 = vsyncadd [#allocation9], %s63
      %s66 = sshll.u32 [#allocation10], 4
      %s67 = int_to_ptr.vmem [resolvable:$true] %s66
      %69 = dma.hbm_to_vmem [thread:$0]  %s4, 16, %s67, [#allocation9]
    $region21: #{mobilenet_v1_forward.21} parent=1 // pred_fallthru
      _
    // Predicated region
    $region22: #{mobilenet_v1_forward.21} parent=1 // pred_check
      _
    $region23: #{mobilenet_v1_forward.21} parent=1 // pred_check_branch
      %71 = sbr.rel (0) target = $region25
    $region24: #{mobilenet_v1_forward.21} parent=1 // pred_region
      %72 = dma.done [#allocation3], 576
    $region25: #{mobilenet_v1_forward.21} parent=1 // pred_fallthru
      _
    // Predicated region
    $region26: #{mobilenet_v1_forward.21} parent=1 // pred_check
      _
    $region27: #{mobilenet_v1_forward.21} parent=1 // pred_check_branch
      %74 = sbr.rel (0) target = $region29
    $region28: #{mobilenet_v1_forward.21} parent=1 // pred_region
      %75 = dma.done [#allocation6], 144
    $region29: #{mobilenet_v1_forward.21} parent=1 // pred_fallthru
      _
    // Predicated region
    $region30: #{mobilenet_v1_forward.21} parent=1 // pred_check
      _
    $region31: #{mobilenet_v1_forward.21} parent=1 // pred_check_branch
      %77 = sbr.rel (0) target = $region33
    $region32: #{mobilenet_v1_forward.21} parent=1 // pred_region
      %78 = dma.done [#allocation6], 16
    $region33: #{mobilenet_v1_forward.21} parent=1 // pred_fallthru
      _
    // Predicated region
    $region34: #{mobilenet_v1_forward.21} parent=1 // pred_check
      _
    $region35: #{mobilenet_v1_forward.21} parent=1 // pred_check_branch
      %80 = sbr.rel (0) target = $region37
    $region36: #{mobilenet_v1_forward.21} parent=1 // pred_region
      %81 = dma.done [#allocation9], 1024
    $region37: #{mobilenet_v1_forward.21} parent=1 // pred_fallthru
      _
    // Predicated region
    $region38: #{mobilenet_v1_forward.21} parent=1 // pred_check
      _
    $region39: #{mobilenet_v1_forward.21} parent=1 // pred_check_branch
      %83 = sbr.rel (0) target = $region41
    $region40: #{mobilenet_v1_forward.21} parent=1 // pred_region
      %84 = dma.done [#allocation9], 16
    $region41: #{mobilenet_v1_forward.21} parent=1 // pred_fallthru
      _
    %v86 = vld [vmem:[#allocation2] sm:$0xf]
    %v87 = vunpack.c.l.bf16 %v86
    %v88 = vld [vmem:[#allocation5] sm:$0x1]
    %v90 = vlaneseq
    %v91 = vshrl.u32 %v90, 7
    %v92 = vsub.s32 0, %v91
    %v93 = vrot.slane %v88, %v92
    %v95 = vmul.f32 %v87, %v93
    %s96 = scalar_lea.vmem [#allocation2], 4
    %v97 = vld [vmem:[%s96] sm:$0xf]
    %v98 = vunpack.c.l.bf16 %v97
    %s99 = scalar_lea.vmem [#allocation5], 1
    %v100 = vld [vmem:[%s99] sm:$0x1]
    %v102 = vlaneseq
    %v103 = vshrl.u32 %v102, 7
    %v104 = vsub.s32 0, %v103
    %v105 = vrot.slane %v100, %v104
    %v107 = vmul.f32 %v98, %v105
    %v108 = vadd.f32 %v95, %v107
    %s109 = scalar_lea.vmem [#allocation2], 8
    %v110 = vld [vmem:[%s109] sm:$0xf]
    %v111 = vunpack.c.l.bf16 %v110
    %s112 = scalar_lea.vmem [#allocation5], 2
    %v113 = vld [vmem:[%s112] sm:$0x1]
    %v115 = vlaneseq
    %v116 = vshrl.u32 %v115, 7
    %v117 = vsub.s32 0, %v116
    %v118 = vrot.slane %v113, %v117
    %v120 = vmul.f32 %v111, %v118
    %v121 = vadd.f32 %v108, %v120
    %s122 = scalar_lea.vmem [#allocation2], 12
    %v123 = vld [vmem:[%s122] sm:$0xf]
    %v124 = vunpack.c.l.bf16 %v123
    %s125 = scalar_lea.vmem [#allocation5], 3
    %v126 = vld [vmem:[%s125] sm:$0x1]
    %v128 = vlaneseq
    %v129 = vshrl.u32 %v128, 7
    %v130 = vsub.s32 0, %v129
    %v131 = vrot.slane %v126, %v130
    %v133 = vmul.f32 %v124, %v131
    %v134 = vadd.f32 %v121, %v133
    %s135 = scalar_lea.vmem [#allocation2], 16
    %v136 = vld [vmem:[%s135] sm:$0xf]
    %v137 = vunpack.c.l.bf16 %v136
    %s138 = scalar_lea.vmem [#allocation5], 4
    %v139 = vld [vmem:[%s138] sm:$0x1]
    %v141 = vlaneseq
    %v142 = vshrl.u32 %v141, 7
    %v143 = vsub.s32 0, %v142
    %v144 = vrot.slane %v139, %v143
    %v146 = vmul.f32 %v137, %v144
    %v147 = vadd.f32 %v134, %v146
    %s148 = scalar_lea.vmem [#allocation2], 20
    %v149 = vld [vmem:[%s148] sm:$0xf]
    %v150 = vunpack.c.l.bf16 %v149
    %s151 = scalar_lea.vmem [#allocation5], 5
    %v152 = vld [vmem:[%s151] sm:$0x1]
    %v154 = vlaneseq
    %v155 = vshrl.u32 %v154, 7
    %v156 = vsub.s32 0, %v155
    %v157 = vrot.slane %v152, %v156
    %v159 = vmul.f32 %v150, %v157
    %v160 = vadd.f32 %v147, %v159
    %s161 = scalar_lea.vmem [#allocation2], 24
    %v162 = vld [vmem:[%s161] sm:$0xf]
    %v163 = vunpack.c.l.bf16 %v162
    %s164 = scalar_lea.vmem [#allocation5], 6
    %v165 = vld [vmem:[%s164] sm:$0x1]
    %v167 = vlaneseq
    %v168 = vshrl.u32 %v167, 7
    %v169 = vsub.s32 0, %v168
    %v170 = vrot.slane %v165, %v169
    %v172 = vmul.f32 %v163, %v170
    %v173 = vadd.f32 %v160, %v172
    %s174 = scalar_lea.vmem [#allocation2], 28
    %v175 = vld [vmem:[%s174] sm:$0xf]
    %v176 = vunpack.c.l.bf16 %v175
    %s177 = scalar_lea.vmem [#allocation5], 7
    %v178 = vld [vmem:[%s177] sm:$0x1]
    %v180 = vlaneseq
    %v181 = vshrl.u32 %v180, 7
    %v182 = vsub.s32 0, %v181
    %v183 = vrot.slane %v178, %v182
    %v185 = vmul.f32 %v176, %v183
    %v186 = vadd.f32 %v173, %v185
    %s187 = scalar_lea.vmem [#allocation2], 32
    %v188 = vld [vmem:[%s187] sm:$0xf]
    %v189 = vunpack.c.l.bf16 %v188
    %s190 = scalar_lea.vmem [#allocation5], 8
    %v191 = vld [vmem:[%s190] sm:$0x1]
    %v193 = vlaneseq
    %v194 = vshrl.u32 %v193, 7
    %v195 = vsub.s32 0, %v194
    %v196 = vrot.slane %v191, %v195
    %v198 = vmul.f32 %v189, %v196
    %v199 = vadd.f32 %v186, %v198
    %v200 = vld [vmem:[#allocation7] sm:$0x1]
    %v202 = vlaneseq
    %v203 = vshrl.u32 %v202, 7
    %v204 = vsub.s32 0, %v203
    %v205 = vrot.slane %v200, %v204
    %v207 = vadd.f32 %v199, %v205
    %v208 = vmax.f32 %v207, 0.0
    %v209 = vmin.f32 %v208, 6.0
    %v210 = vpack.c.bf16 %v209, %v209
    %v211 = vld [vmem:[#allocation8] sm:$0xf]
    %v212 = vld [vmem:[#allocation8 + $0x4] sm:$0xf]
    %v213 = vld [vmem:[#allocation8 + $0x8] sm:$0xf]
    %v214 = vld [vmem:[#allocation8 + $0xc] sm:$0xf]
    %v215 = vld [vmem:[#allocation8 + $0x10] sm:$0xf]
    %v216 = vld [vmem:[#allocation8 + $0x14] sm:$0xf]
    %v217 = vld [vmem:[#allocation8 + $0x18] sm:$0xf]
    %v218 = vld [vmem:[#allocation8 + $0x1c] sm:$0xf]
    %v219 = vld [vmem:[#allocation8 + $0x20] sm:$0xf]
    %v220 = vld [vmem:[#allocation8 + $0x24] sm:$0xf]
    %v221 = vld [vmem:[#allocation8 + $0x28] sm:$0xf]
    %v222 = vld [vmem:[#allocation8 + $0x2c] sm:$0xf]
    %v223 = vld [vmem:[#allocation8 + $0x30] sm:$0xf]
    %v224 = vld [vmem:[#allocation8 + $0x34] sm:$0xf]
    %v225 = vld [vmem:[#allocation8 + $0x38] sm:$0xf]
    %v226 = vld [vmem:[#allocation8 + $0x3c] sm:$0xf]
    %v227 = vld [vmem:[#allocation10] sm:$0x1]
    %v229 = vlaneseq
    %v230 = vshrl.u32 %v229, 7
    %v231 = vsub.s32 0, %v230
    %v232 = vrot.slane %v227, %v231
    %v250 = vunpack.c.l.b16 %v211
    %v251 = vunpack.c.l.b16 %v212
    %v252 = vunpack.c.l.b16 %v213
    %v253 = vunpack.c.l.b16 %v214
    %v254 = vunpack.c.l.b16 %v215
    %v255 = vunpack.c.l.b16 %v216
    %v256 = vunpack.c.l.b16 %v217
    %v257 = vunpack.c.l.b16 %v218
    %v258 = vunpack.c.l.b16 %v219
    %v259 = vunpack.c.l.b16 %v220
    %v260 = vunpack.c.l.b16 %v221
    %v261 = vunpack.c.l.b16 %v222
    %v262 = vunpack.c.l.b16 %v223
    %v263 = vunpack.c.l.b16 %v224
    %v264 = vunpack.c.l.b16 %v225
    %v265 = vunpack.c.l.b16 %v226
    %v266 = vpack.c.b16 %v251, %v250
    %v267 = vpack.c.b16 %v253, %v252
    %v268 = vpack.c.b16 %v255, %v254
    %v269 = vpack.c.b16 %v257, %v256
    %v270 = vpack.c.b16 %v259, %v258
    %v271 = vpack.c.b16 %v261, %v260
    %v272 = vpack.c.b16 %v263, %v262
    %v273 = vpack.c.b16 %v265, %v264
    %282 = vmatprep.subr.bf16.mxu0 0
    %283 = vmatpush1.bf16.msra.mxu0 %v266
    %284 = vmatprep.subr.bf16.mxu0 0
    %285 = vmatpush1.bf16.msra.mxu0 %v267
    %286 = vmatprep.subr.bf16.mxu0 0
    %287 = vmatpush1.bf16.msra.mxu0 %v268
    %288 = vmatprep.subr.bf16.mxu0 0
    %289 = vmatpush1.bf16.msra.mxu0 %v269
    %290 = vmatprep.subr.bf16.mxu0 0
    %291 = vmatpush1.bf16.msra.mxu0 %v270
    %292 = vmatprep.subr.bf16.mxu0 0
    %293 = vmatpush1.bf16.msra.mxu0 %v271
    %294 = vmatprep.subr.bf16.mxu0 0
    %295 = vmatpush1.bf16.msra.mxu0 %v272
    %296 = vmatprep.subr.bf16.mxu0 0
    %297 = vmatpush1.bf16.msra.mxu0 %v273
    %298 = vmatprep.subr.bf16.mxu0 0
    %299 = vmatpush1.bf16.msra.mxu0 0
    %300 = vmatprep.subr.bf16.mxu0 0
    %301 = vmatpush1.bf16.msra.mxu0 0
    %302 = vmatprep.subr.bf16.mxu0 0
    %303 = vmatpush1.bf16.msra.mxu0 0
    %304 = vmatprep.subr.bf16.mxu0 0
    %305 = vmatpush1.bf16.msra.mxu0 0
    %306 = vmatprep.subr.bf16.mxu0 0
    %307 = vmatpush1.bf16.msra.mxu0 0
    %308 = vmatprep.subr.bf16.mxu0 0
    %309 = vmatpush1.bf16.msra.mxu0 0
    %310 = vmatprep.subr.bf16.mxu0 0
    %311 = vmatpush1.bf16.msra.mxu0 0
    %312 = vmatprep.subr.bf16.mxu0 0
    %313 = vmatpush1.bf16.msra.mxu0 0
    %314 = vmatprep.mubr.bf16.mxu0 0
    %315 = vmatmul.mubr.bf16.gmra.mrb[0].mxu0 %v210
    %v316 = vpop.f32.mrb[0].mxu0
    %v317 = vadd.f32 %v232, %v316
    %v318 = vpop.f32.mrb[0].mxu0
    %v319 = vpop.f32.mrb[0].mxu0
    %v320 = vpop.f32.mrb[0].mxu0
    %321 = vdwg.mxu0
    %v322 = vmax.f32 %v317, 0.0
    %v323 = vmin.f32 %v322, 6.0
    %v324 = vpack.c.bf16 %v323, %v323
    %325 = vst [vmem:[#allocation11] sm:$0xf] %v324
    // Predicated region
    $region42: #{mobilenet_v1_forward.21} parent=1 // pred_check
      _
    $region43: #{mobilenet_v1_forward.21} parent=1 // pred_check_branch
      %327 = sbr.rel (0) target = $region45
    $region44: #{mobilenet_v1_forward.21} parent=1 // pred_region
      %s329 = ssub.s32 64, 64
      %330 = vsyncadd [#allocation4], %s329
      %s332 = sshll.u32 [#allocation11], 4
      %s333 = int_to_ptr.vmem [resolvable:$true] %s332
      %335 = dma.vmem_to_hbm [thread:$0]  %s333, 64, %s5, [#allocation4]
    $region45: #{mobilenet_v1_forward.21} parent=1 // pred_fallthru
      _
    // Predicated region
    $region46: #{mobilenet_v1_forward.21} parent=1 // pred_check
      _
    $region47: #{mobilenet_v1_forward.21} parent=1 // pred_check_branch
      %337 = sbr.rel (0) target = $region49
    $region48: #{mobilenet_v1_forward.21} parent=1 // pred_region
      %338 = dma.done [#allocation4], 64
    $region49: #{mobilenet_v1_forward.21} parent=1 // pred_fallthru
      _
    %339 = vsyncpa [#allocation3], 1
    %340 = vsyncpa [#allocation6], 1
    %341 = vsyncpa [#allocation9], 1
    %342 = vsyncpa [#allocation4], 1

// kernel: mobilenet_v1_forward.22
$region0: #{mobilenet_v1_forward.22}
  #allocation0 [shape = 'u32[]', space=smem, size = 0x4, offset = 0x4, fixed_abs, tag = 'smem constant byte address 0x4 - core index']
  #allocation1 [shape = 'u32[144,128]{1,0:T(1,128)}', space=vmem, size = 0x12000, scoped, tag = 'internal scratch']
  %s0 = inlined_call_operand.hbm [shape: bf16[2,24,128], index: 0, kind: input, shape index: {}]
  %s1 = inlined_call_operand.hbm [shape: f32[9,1,128], index: 1, kind: input, shape index: {}]
  %s2 = inlined_call_operand.hbm [shape: f32[1,128], index: 2, kind: input, shape index: {}]
  %s3 = inlined_call_operand.hbm [shape: bf16[128,128], index: 3, kind: input, shape index: {}]
  %s4 = inlined_call_operand.hbm [shape: f32[1,128], index: 4, kind: input, shape index: {}]
  %s5 = inlined_call_operand.hbm [shape: bf16[2,8,128], index: 5, kind: output, shape index: {}]
  %s6 = sld [smem:[#allocation0]]
  $region73: #{mobilenet_v1_forward.22} parent=0
    _
  %s8 = ssub.s32 1, %s6
  %s9 = scalar_select 0, %s8, %s6
  $region1: #{mobilenet_v1_forward.22} parent=0
    #allocation2 [shape = 'u8[12288]{0}', space=vmem, size = 0x3000, scoped, tag = 'input window, operand 0']
    #allocation3 [shape = 's32[2]{0}', space=sflag, size = 0x8, scoped, tag = 'scoped memory for mobilenet_v1_forward.22']
    #allocation4 [shape = 's32[2]{0}', space=sflag, size = 0x8, scoped, tag = 'scoped memory for mobilenet_v1_forward.22']
    #allocation5 [shape = 'u8[4608]{0}', space=vmem, size = 0x1400, scoped, tag = 'input window, operand 1, single buffered']
    #allocation6 [shape = 's32[1]{0}', space=sflag, size = 0x4, scoped, tag = 'scoped memory for mobilenet_v1_forward.22']
    #allocation7 [shape = 'u8[512]{0}', space=vmem, size = 0x400, scoped, tag = 'input window, operand 2, single buffered']
    #allocation8 [shape = 'u8[32768]{0}', space=vmem, size = 0x8000, scoped, tag = 'input window, operand 3, single buffered']
    #allocation9 [shape = 's32[1]{0}', space=sflag, size = 0x4, scoped, tag = 'scoped memory for mobilenet_v1_forward.22']
    #allocation10 [shape = 'u8[512]{0}', space=vmem, size = 0x400, scoped, tag = 'input window, operand 4, single buffered']
    #allocation11 [shape = 'u8[4096]{0}', space=vmem, size = 0x1000, scoped, tag = 'output window, operand 0']
    %10 = vsyncpa [#allocation3], 0
    %s11 = scalar_lea.sflag [#allocation3], 1
    %12 = vsyncpa %s11, 0
    %13 = vsyncpa [#allocation6], 0
    %14 = vsyncpa [#allocation9], 0
    %15 = vsyncpa [#allocation4], 0
    %s16 = scalar_lea.sflag [#allocation4], 1
    %17 = vsyncpa %s16, 0
    loop: start=0, step=1, limit=4
    $region2: #{mobilenet_v1_forward.22} parent=1 // loop_pre_header
      _
    $region3: #{mobilenet_v1_forward.22} parent=1 // loop_header
      %s19 = sphi 0, %s23
      %p20 = scmp.ge.s32.totalorder %s19, 4
      %s29 = sphi 0, %s31
      %s32 = sphi 0, %s29
      %s33 = sphi 0, %s32
      %s49 = sphi 0, %s33
      %s53 = sphi 0, %s53
      %s55 = sphi 0, %s53
      %s56 = sphi 0, %s55
      %s70 = sphi 0, %s56
      %s74 = sphi 0, %s74
      %s76 = sphi 0, %s74
      %s77 = sphi 0, %s76
      %s91 = sphi 0, %s77
      %s95 = sphi 0, %s95
      %s97 = sphi 0, %s95
      %s98 = sphi 0, %s97
      %s112 = sphi 0, %s98
      %s116 = sphi 0, %s116
      %s118 = sphi 0, %s116
      %s119 = sphi 0, %s118
      %s133 = sphi 0, %s119
      %s139 = sphi 0, %s141
      %s142 = sphi 0, %s139
      %s143 = sphi 0, %s142
      %s159 = sphi 0, %s143
    $region4: #{mobilenet_v1_forward.22} parent=1 // loop_header_branch
      %22 = sbr.rel (%p20) target = $region8
    $region5: #{mobilenet_v1_forward.22} parent=1 // loop_body
      %s24 = ssub.s32 %s19, 1
      %s25 = ssub.s32 %s19, 2
      %s26 = sadd.s32 %s19, 1
      %s27 = ssub.s32 %s19, %s26
      %p28 = scmp.eq.s32.totalorder %s27, 0
      %s30 = sadd.s32 %s29, 1
      %s31 = scalar_select %p28, %s29, %s30
      %p34 = pneg %p28
      %p35 = scmp.eq.s32.totalorder %s19, 1
      %p36 = por %p34, %p35
      %p37 = scmp.ne.s32.totalorder %s29, %s32
      %p38 = scmp.eq.s32.totalorder %s19, 0
      %p39 = por %p37, %p38
      %p40 = scmp.ne.s32.totalorder %s29, %s32
      %p41 = scmp.eq.s32.totalorder %s24, 1
      %p42 = por %p40, %p41
      %p43 = scmp.ne.s32.totalorder %s32, %s33
      %p44 = scmp.eq.s32.totalorder %s24, 0
      %p45 = por %p43, %p44
      %p46 = scmp.ne.s32.totalorder %s32, %s33
      %p47 = scmp.eq.s32.totalorder %s25, 1
      %p48 = por %p46, %p47
      %p50 = scmp.ne.s32.totalorder %s33, %s49
      %p51 = scmp.eq.s32.totalorder %s25, 0
      %p52 = por %p50, %p51
      %s54 = sadd.s32 %s53, 1
      %p57 = scmp.eq.s32.totalorder %s19, 1
      %p58 = scmp.ne.s32.totalorder %s53, %s55
      %p59 = scmp.eq.s32.totalorder %s19, 0
      %p60 = por %p58, %p59
      %p61 = scmp.ne.s32.totalorder %s53, %s55
      %p62 = scmp.eq.s32.totalorder %s24, 1
      %p63 = por %p61, %p62
      %p64 = scmp.ne.s32.totalorder %s55, %s56
      %p65 = scmp.eq.s32.totalorder %s24, 0
      %p66 = por %p64, %p65
      %p67 = scmp.ne.s32.totalorder %s55, %s56
      %p68 = scmp.eq.s32.totalorder %s25, 1
      %p69 = por %p67, %p68
      %p71 = scmp.ne.s32.totalorder %s56, %s70
      %p72 = scmp.eq.s32.totalorder %s25, 0
      %p73 = por %p71, %p72
      %s75 = sadd.s32 %s74, 1
      %p78 = scmp.eq.s32.totalorder %s19, 1
      %p79 = scmp.ne.s32.totalorder %s74, %s76
      %p80 = scmp.eq.s32.totalorder %s19, 0
      %p81 = por %p79, %p80
      %p82 = scmp.ne.s32.totalorder %s74, %s76
      %p83 = scmp.eq.s32.totalorder %s24, 1
      %p84 = por %p82, %p83
      %p85 = scmp.ne.s32.totalorder %s76, %s77
      %p86 = scmp.eq.s32.totalorder %s24, 0
      %p87 = por %p85, %p86
      %p88 = scmp.ne.s32.totalorder %s76, %s77
      %p89 = scmp.eq.s32.totalorder %s25, 1
      %p90 = por %p88, %p89
      %p92 = scmp.ne.s32.totalorder %s77, %s91
      %p93 = scmp.eq.s32.totalorder %s25, 0
      %p94 = por %p92, %p93
      %s96 = sadd.s32 %s95, 1
      %p99 = scmp.eq.s32.totalorder %s19, 1
      %p100 = scmp.ne.s32.totalorder %s95, %s97
      %p101 = scmp.eq.s32.totalorder %s19, 0
      %p102 = por %p100, %p101
      %p103 = scmp.ne.s32.totalorder %s95, %s97
      %p104 = scmp.eq.s32.totalorder %s24, 1
      %p105 = por %p103, %p104
      %p106 = scmp.ne.s32.totalorder %s97, %s98
      %p107 = scmp.eq.s32.totalorder %s24, 0
      %p108 = por %p106, %p107
      %p109 = scmp.ne.s32.totalorder %s97, %s98
      %p110 = scmp.eq.s32.totalorder %s25, 1
      %p111 = por %p109, %p110
      %p113 = scmp.ne.s32.totalorder %s98, %s112
      %p114 = scmp.eq.s32.totalorder %s25, 0
      %p115 = por %p113, %p114
      %s117 = sadd.s32 %s116, 1
      %p120 = scmp.eq.s32.totalorder %s19, 1
      %p121 = scmp.ne.s32.totalorder %s116, %s118
      %p122 = scmp.eq.s32.totalorder %s19, 0
      %p123 = por %p121, %p122
      %p124 = scmp.ne.s32.totalorder %s116, %s118
      %p125 = scmp.eq.s32.totalorder %s24, 1
      %p126 = por %p124, %p125
      %p127 = scmp.ne.s32.totalorder %s118, %s119
      %p128 = scmp.eq.s32.totalorder %s24, 0
      %p129 = por %p127, %p128
      %p130 = scmp.ne.s32.totalorder %s118, %s119
      %p131 = scmp.eq.s32.totalorder %s25, 1
      %p132 = por %p130, %p131
      %p134 = scmp.ne.s32.totalorder %s119, %s133
      %p135 = scmp.eq.s32.totalorder %s25, 0
      %p136 = por %p134, %p135
      %s137 = ssub.s32 %s19, %s26
      %p138 = scmp.eq.s32.totalorder %s137, 0
      %s140 = sadd.s32 %s139, 1
      %s141 = scalar_select %p138, %s139, %s140
      %p144 = pneg %p138
      %p145 = scmp.eq.s32.totalorder %s19, 1
      %p146 = por %p144, %p145
      %p147 = scmp.ne.s32.totalorder %s139, %s142
      %p148 = scmp.eq.s32.totalorder %s19, 0
      %p149 = por %p147, %p148
      %p150 = scmp.ne.s32.totalorder %s139, %s142
      %p151 = scmp.eq.s32.totalorder %s24, 1
      %p152 = por %p150, %p151
      %p153 = scmp.ne.s32.totalorder %s142, %s143
      %p154 = scmp.eq.s32.totalorder %s24, 0
      %p155 = por %p153, %p154
      %p156 = scmp.ne.s32.totalorder %s142, %s143
      %p157 = scmp.eq.s32.totalorder %s25, 1
      %p158 = por %p156, %p157
      %p160 = scmp.ne.s32.totalorder %s143, %s159
      %p161 = scmp.eq.s32.totalorder %s25, 0
      %p162 = por %p160, %p161
      %p163 = scmp.le.s32.totalorder 1, %s19
      %p164 = scmp.lt.s32.totalorder %s19, 3
      %p165 = pnand %p163, %p164
      %p166 = pneg %p165
      // Predicated region
      $region9: #{mobilenet_v1_forward.22} parent=5 // pred_check
        _
      $region10: #{mobilenet_v1_forward.22} parent=5 // pred_check_branch
        %168 = sbr.rel (%p165) target = $region12
      $region11: #{mobilenet_v1_forward.22} parent=5 // pred_region
        %s169 = ssub.s32 %s19, 1
        // Predicated region
        $region13: #{mobilenet_v1_forward.22} parent=11 // pred_check
          %p170 = pneg %p66
        $region14: #{mobilenet_v1_forward.22} parent=11 // pred_check_branch
          %172 = sbr.rel (%p170) target = $region16
        $region15: #{mobilenet_v1_forward.22} parent=11 // pred_region
          %s174 = ssub.s32 144, 144
          %175 = vsyncadd [#allocation6], %s174
          %s176 = sshll.u32 [#allocation5], 4
          %s177 = int_to_ptr.vmem [resolvable:$true] %s176
          %182 = dma.hbm_to_vmem [thread:$0]  %s1, 144, %s177, [#allocation6], 16, 16, 1
        $region16: #{mobilenet_v1_forward.22} parent=11 // pred_fallthru
          _
        // Predicated region
        $region17: #{mobilenet_v1_forward.22} parent=11 // pred_check
          %p183 = pneg %p87
        $region18: #{mobilenet_v1_forward.22} parent=11 // pred_check_branch
          %185 = sbr.rel (%p183) target = $region20
        $region19: #{mobilenet_v1_forward.22} parent=11 // pred_region
          %s187 = ssub.s32 16, 16
          %188 = vsyncadd [#allocation6], %s187
          %s190 = sshll.u32 [#allocation7], 4
          %s191 = int_to_ptr.vmem [resolvable:$true] %s190
          %193 = dma.hbm_to_vmem [thread:$0]  %s2, 16, %s191, [#allocation6]
        $region20: #{mobilenet_v1_forward.22} parent=11 // pred_fallthru
          _
        // Predicated region
        $region21: #{mobilenet_v1_forward.22} parent=11 // pred_check
          %p194 = pneg %p108
        $region22: #{mobilenet_v1_forward.22} parent=11 // pred_check_branch
          %196 = sbr.rel (%p194) target = $region24
        $region23: #{mobilenet_v1_forward.22} parent=11 // pred_region
          %s198 = ssub.s32 1024, 1024
          %199 = vsyncadd [#allocation9], %s198
          %s200 = sshll.u32 [#allocation8], 4
          %s201 = int_to_ptr.vmem [resolvable:$true] %s200
          %206 = dma.hbm_to_vmem [thread:$0]  %s3, 1024, %s201, [#allocation9], 64, 64, 4
        $region24: #{mobilenet_v1_forward.22} parent=11 // pred_fallthru
          _
        // Predicated region
        $region25: #{mobilenet_v1_forward.22} parent=11 // pred_check
          %p207 = pneg %p129
        $region26: #{mobilenet_v1_forward.22} parent=11 // pred_check_branch
          %209 = sbr.rel (%p207) target = $region28
        $region27: #{mobilenet_v1_forward.22} parent=11 // pred_region
          %s211 = ssub.s32 16, 16
          %212 = vsyncadd [#allocation9], %s211
          %s214 = sshll.u32 [#allocation10], 4
          %s215 = int_to_ptr.vmem [resolvable:$true] %s214
          %217 = dma.hbm_to_vmem [thread:$0]  %s4, 16, %s215, [#allocation9]
        $region28: #{mobilenet_v1_forward.22} parent=11 // pred_fallthru
          _
      $region12: #{mobilenet_v1_forward.22} parent=5 // pred_fallthru
        _
      %p218 = scmp.lt.s32.totalorder %s19, 2
      // Predicated region
      $region29: #{mobilenet_v1_forward.22} parent=5 // pred_check
        %p219 = pneg %p218
      $region30: #{mobilenet_v1_forward.22} parent=5 // pred_check_branch
        %221 = sbr.rel (%p219) target = $region32
      $region31: #{mobilenet_v1_forward.22} parent=5 // pred_region
        // Predicated region
        $region33: #{mobilenet_v1_forward.22} parent=31 // pred_check
          %p222 = pneg %p39
        $region34: #{mobilenet_v1_forward.22} parent=31 // pred_check_branch
          %224 = sbr.rel (%p222) target = $region36
        $region35: #{mobilenet_v1_forward.22} parent=31 // pred_region
          %s225 = sand.u32 %s29, 1
          %s226 = scalar_lea.sflag [#allocation3], %s225
          %s227 = sand.u32 %s29, 1
          %s228 = smul.addr %s227, 12
          %s229 = scalar_lea.vmem [#allocation2], %s228
          %s231 = ssub.s32 192, 192
          %232 = vsyncadd %s226, %s231
          %s233 = smul.addr %s19, 3
          %s234 = smul.addr %s233, 64
          %s235 = scalar_lea.hbm %s0, %s234
          %s236 = sshll.u32 %s229, 4
          %s237 = int_to_ptr.vmem [resolvable:$true] %s236
          %242 = dma.hbm_to_vmem [thread:$0]  %s235, 192, %s237, %s226, 64, 64, 4
        $region36: #{mobilenet_v1_forward.22} parent=31 // pred_fallthru
          _
      $region32: #{mobilenet_v1_forward.22} parent=5 // pred_fallthru
        _
      %p243 = scmp.le.s32.totalorder 1, %s19
      %p244 = scmp.lt.s32.totalorder %s19, 3
      %p245 = pnand %p243, %p244
      %p246 = pneg %p245
      // Predicated region
      $region37: #{mobilenet_v1_forward.22} parent=5 // pred_check
        _
      $region38: #{mobilenet_v1_forward.22} parent=5 // pred_check_branch
        %248 = sbr.rel (%p245) target = $region40
      $region39: #{mobilenet_v1_forward.22} parent=5 // pred_region
        %s249 = ssub.s32 %s19, 1
        %s250 = sand.u32 %s32, 1
        %s251 = scalar_lea.sflag [#allocation3], %s250
        %s252 = sand.u32 %s32, 1
        %s253 = smul.addr %s252, 12
        %s254 = scalar_lea.vmem [#allocation2], %s253
        // Predicated region
        $region41: #{mobilenet_v1_forward.22} parent=39 // pred_check
          %p255 = pneg %p45
        $region42: #{mobilenet_v1_forward.22} parent=39 // pred_check_branch
          %257 = sbr.rel (%p255) target = $region44
        $region43: #{mobilenet_v1_forward.22} parent=39 // pred_region
          %258 = dma.done %s251, 192
        $region44: #{mobilenet_v1_forward.22} parent=39 // pred_fallthru
          _
        // Predicated region
        $region45: #{mobilenet_v1_forward.22} parent=39 // pred_check
          %p259 = pneg %p66
        $region46: #{mobilenet_v1_forward.22} parent=39 // pred_check_branch
          %261 = sbr.rel (%p259) target = $region48
        $region47: #{mobilenet_v1_forward.22} parent=39 // pred_region
          %262 = dma.done [#allocation6], 144
        $region48: #{mobilenet_v1_forward.22} parent=39 // pred_fallthru
          _
        // Predicated region
        $region49: #{mobilenet_v1_forward.22} parent=39 // pred_check
          %p263 = pneg %p87
        $region50: #{mobilenet_v1_forward.22} parent=39 // pred_check_branch
          %265 = sbr.rel (%p263) target = $region52
        $region51: #{mobilenet_v1_forward.22} parent=39 // pred_region
          %266 = dma.done [#allocation6], 16
        $region52: #{mobilenet_v1_forward.22} parent=39 // pred_fallthru
          _
        // Predicated region
        $region53: #{mobilenet_v1_forward.22} parent=39 // pred_check
          %p267 = pneg %p108
        $region54: #{mobilenet_v1_forward.22} parent=39 // pred_check_branch
          %269 = sbr.rel (%p267) target = $region56
        $region55: #{mobilenet_v1_forward.22} parent=39 // pred_region
          %270 = dma.done [#allocation9], 1024
        $region56: #{mobilenet_v1_forward.22} parent=39 // pred_fallthru
          _
        // Predicated region
        $region57: #{mobilenet_v1_forward.22} parent=39 // pred_check
          %p271 = pneg %p129
        $region58: #{mobilenet_v1_forward.22} parent=39 // pred_check_branch
          %273 = sbr.rel (%p271) target = $region60
        $region59: #{mobilenet_v1_forward.22} parent=39 // pred_region
          %274 = dma.done [#allocation9], 16
        $region60: #{mobilenet_v1_forward.22} parent=39 // pred_fallthru
          _
        %s275 = sand.u32 %s32, 1
        %s276 = scalar_lea.sflag [#allocation3], %s275
        %s277 = sand.u32 %s32, 1
        %s278 = smul.addr %s277, 12
        %s279 = scalar_lea.vmem [#allocation2], %s278
        %p280 = pneg %p45
        %p281 = pneg %p42
        %p282 = pneg %p66
        %p283 = pneg %p63
        %p284 = pneg %p87
        %p285 = pneg %p84
        %p286 = pneg %p108
        %p287 = pneg %p105
        %p288 = pneg %p129
        %p289 = pneg %p126
        %p290 = pneg %p155
        %p291 = pneg %p152
        %s292 = sand.u32 %s142, 1
        %s293 = scalar_lea.sflag [#allocation4], %s292
        %s294 = sand.u32 %s142, 1
        %s295 = smul.addr %s294, 4
        %s296 = scalar_lea.vmem [#allocation11], %s295
        %v298 = vld [vmem:[%s254] sm:$0xf]
        %v299 = vld [vmem:[%s254 + $0x4] sm:$0xf]
        %v300 = vld [vmem:[%s254 + $0x8] sm:$0xf]
        %v301 = vunpack.c.l.bf16 %v298
        %v302 = vld [vmem:[#allocation5] sm:$0x1]
        %v304 = vlaneseq
        %v305 = vshrl.u32 %v304, 7
        %v306 = vsub.s32 0, %v305
        %v307 = vrot.slane %v302, %v306
        %v309 = vmul.f32 %v301, %v307
        %v310 = vunpack.c.l.bf16 %v299
        %s311 = scalar_lea.vmem [#allocation5], 1
        %v312 = vld [vmem:[%s311] sm:$0x1]
        %v314 = vlaneseq
        %v315 = vshrl.u32 %v314, 7
        %v316 = vsub.s32 0, %v315
        %v317 = vrot.slane %v312, %v316
        %v319 = vmul.f32 %v301, %v317
        %v320 = vmul.f32 %v310, %v317
        %vm323 = vcmask 1046528
        %v324 = vrot.slane %v319, 1
        %v325 = vrot.slane %v320, 1
        %v326 = vsel %vm323, %v324, %v325
        %v328 = vadd.f32 %v309, %v326
        %s329 = scalar_lea.vmem [#allocation5], 2
        %v330 = vld [vmem:[%s329] sm:$0x1]
        %v332 = vlaneseq
        %v333 = vshrl.u32 %v332, 7
        %v334 = vsub.s32 0, %v333
        %v335 = vrot.slane %v330, %v334
        %v337 = vmul.f32 %v301, %v335
        %v338 = vmul.f32 %v310, %v335
        %vm341 = vcmask 1045504
        %v342 = vrot.slane %v337, 2
        %v343 = vrot.slane %v338, 2
        %v344 = vsel %vm341, %v342, %v343
        %v346 = vadd.f32 %v328, %v344
        %s347 = scalar_lea.vmem [#allocation5], 3
        %v348 = vld [vmem:[%s347] sm:$0x1]
        %v350 = vlaneseq
        %v351 = vshrl.u32 %v350, 7
        %v352 = vsub.s32 0, %v351
        %v353 = vrot.slane %v348, %v352
        %v355 = vmul.f32 %v301, %v353
        %v356 = vmul.f32 %v310, %v353
        %vm359 = vcmask 1043456
        %v360 = vrot.slane %v355, 4
        %v361 = vrot.slane %v356, 4
        %v362 = vsel %vm359, %v360, %v361
        %v364 = vadd.f32 %v346, %v362
        %s365 = scalar_lea.vmem [#allocation5], 4
        %v366 = vld [vmem:[%s365] sm:$0x1]
        %v368 = vlaneseq
        %v369 = vshrl.u32 %v368, 7
        %v370 = vsub.s32 0, %v369
        %v371 = vrot.slane %v366, %v370
        %v373 = vmul.f32 %v301, %v371
        %v374 = vmul.f32 %v310, %v371
        %vm377 = vcmask 1042432
        %v378 = vrot.slane %v373, 5
        %v379 = vrot.slane %v374, 5
        %v380 = vsel %vm377, %v378, %v379
        %v382 = vadd.f32 %v364, %v380
        %s383 = scalar_lea.vmem [#allocation5], 5
        %v384 = vld [vmem:[%s383] sm:$0x1]
        %v386 = vlaneseq
        %v387 = vshrl.u32 %v386, 7
        %v388 = vsub.s32 0, %v387
        %v389 = vrot.slane %v384, %v388
        %v391 = vmul.f32 %v301, %v389
        %v392 = vmul.f32 %v310, %v389
        %vm395 = vcmask 1041408
        %v396 = vrot.slane %v391, 6
        %v397 = vrot.slane %v392, 6
        %v398 = vsel %vm395, %v396, %v397
        %v400 = vadd.f32 %v382, %v398
        %s401 = scalar_lea.vmem [#allocation5], 6
        %v402 = vld [vmem:[%s401] sm:$0x1]
        %v404 = vlaneseq
        %v405 = vshrl.u32 %v404, 7
        %v406 = vsub.s32 0, %v405
        %v407 = vrot.slane %v402, %v406
        %v409 = vmul.f32 %v310, %v407
        %v410 = vadd.f32 %v400, %v409
        %v411 = vunpack.c.l.bf16 %v300
        %s412 = scalar_lea.vmem [#allocation5], 7
        %v413 = vld [vmem:[%s412] sm:$0x1]
        %v415 = vlaneseq
        %v416 = vshrl.u32 %v415, 7
        %v417 = vsub.s32 0, %v416
        %v418 = vrot.slane %v413, %v417
        %v420 = vmul.f32 %v310, %v418
        %v421 = vmul.f32 %v411, %v418
        %v424 = vrot.slane %v420, 1
        %v425 = vrot.slane %v421, 1
        %v426 = vsel %vm323, %v424, %v425
        %v428 = vadd.f32 %v410, %v426
        %s429 = scalar_lea.vmem [#allocation5], 8
        %v430 = vld [vmem:[%s429] sm:$0x1]
        %v432 = vlaneseq
        %v433 = vshrl.u32 %v432, 7
        %v434 = vsub.s32 0, %v433
        %v435 = vrot.slane %v430, %v434
        %v437 = vmul.f32 %v310, %v435
        %v438 = vmul.f32 %v411, %v435
        %v441 = vrot.slane %v437, 2
        %v442 = vrot.slane %v438, 2
        %v443 = vsel %vm341, %v441, %v442
        %v445 = vadd.f32 %v428, %v443
        %v446 = vld [vmem:[#allocation7] sm:$0x1]
        %v448 = vlaneseq
        %v449 = vshrl.u32 %v448, 7
        %v450 = vsub.s32 0, %v449
        %v451 = vrot.slane %v446, %v450
        %v453 = vadd.f32 %v445, %v451
        %v454 = vmax.f32 %v453, 0.0
        %v455 = vmin.f32 %v454, 6.0
        %v456 = vpack.c.bf16 %v455, %v455
        %v457 = vld [vmem:[#allocation8] sm:$0xf]
        %v458 = vld [vmem:[#allocation8 + $0x4] sm:$0xf]
        %v459 = vld [vmem:[#allocation8 + $0x8] sm:$0xf]
        %v460 = vld [vmem:[#allocation8 + $0xc] sm:$0xf]
        %v461 = vld [vmem:[#allocation8 + $0x10] sm:$0xf]
        %v462 = vld [vmem:[#allocation8 + $0x14] sm:$0xf]
        %v463 = vld [vmem:[#allocation8 + $0x18] sm:$0xf]
        %v464 = vld [vmem:[#allocation8 + $0x1c] sm:$0xf]
        %v465 = vld [vmem:[#allocation8 + $0x20] sm:$0xf]
        %v466 = vld [vmem:[#allocation8 + $0x24] sm:$0xf]
        %v467 = vld [vmem:[#allocation8 + $0x28] sm:$0xf]
        %v468 = vld [vmem:[#allocation8 + $0x2c] sm:$0xf]
        %v469 = vld [vmem:[#allocation8 + $0x30] sm:$0xf]
        %v470 = vld [vmem:[#allocation8 + $0x34] sm:$0xf]
        %v471 = vld [vmem:[#allocation8 + $0x38] sm:$0xf]
        %v472 = vld [vmem:[#allocation8 + $0x3c] sm:$0xf]
        %v473 = vld [vmem:[#allocation10] sm:$0x1]
        %v475 = vlaneseq
        %v476 = vshrl.u32 %v475, 7
        %v477 = vsub.s32 0, %v476
        %v478 = vrot.slane %v473, %v477
        %v496 = vunpack.c.l.b16 %v457
        %v497 = vunpack.c.l.b16 %v458
        %v498 = vunpack.c.l.b16 %v459
        %v499 = vunpack.c.l.b16 %v460
        %v500 = vunpack.c.l.b16 %v461
        %v501 = vunpack.c.l.b16 %v462
        %v502 = vunpack.c.l.b16 %v463
        %v503 = vunpack.c.l.b16 %v464
        %v504 = vunpack.c.l.b16 %v465
        %v505 = vunpack.c.l.b16 %v466
        %v506 = vunpack.c.l.b16 %v467
        %v507 = vunpack.c.l.b16 %v468
        %v508 = vunpack.c.l.b16 %v469
        %v509 = vunpack.c.l.b16 %v470
        %v510 = vunpack.c.l.b16 %v471
        %v511 = vunpack.c.l.b16 %v472
        %v512 = vpack.c.b16 %v497, %v496
        %v513 = vpack.c.b16 %v499, %v498
        %v514 = vpack.c.b16 %v501, %v500
        %v515 = vpack.c.b16 %v503, %v502
        %v516 = vpack.c.b16 %v505, %v504
        %v517 = vpack.c.b16 %v507, %v506
        %v518 = vpack.c.b16 %v509, %v508
        %v519 = vpack.c.b16 %v511, %v510
        %528 = vmatprep.subr.bf16.mxu0 0
        %529 = vmatpush1.bf16.msra.mxu0 %v512
        %530 = vmatprep.subr.bf16.mxu0 0
        %531 = vmatpush1.bf16.msra.mxu0 %v513
        %532 = vmatprep.subr.bf16.mxu0 0
        %533 = vmatpush1.bf16.msra.mxu0 %v514
        %534 = vmatprep.subr.bf16.mxu0 0
        %535 = vmatpush1.bf16.msra.mxu0 %v515
        %536 = vmatprep.subr.bf16.mxu0 0
        %537 = vmatpush1.bf16.msra.mxu0 %v516
        %538 = vmatprep.subr.bf16.mxu0 0
        %539 = vmatpush1.bf16.msra.mxu0 %v517
        %540 = vmatprep.subr.bf16.mxu0 0
        %541 = vmatpush1.bf16.msra.mxu0 %v518
        %542 = vmatprep.subr.bf16.mxu0 0
        %543 = vmatpush1.bf16.msra.mxu0 %v519
        %544 = vmatprep.subr.bf16.mxu0 0
        %545 = vmatpush1.bf16.msra.mxu0 0
        %546 = vmatprep.subr.bf16.mxu0 0
        %547 = vmatpush1.bf16.msra.mxu0 0
        %548 = vmatprep.subr.bf16.mxu0 0
        %549 = vmatpush1.bf16.msra.mxu0 0
        %550 = vmatprep.subr.bf16.mxu0 0
        %551 = vmatpush1.bf16.msra.mxu0 0
        %552 = vmatprep.subr.bf16.mxu0 0
        %553 = vmatpush1.bf16.msra.mxu0 0
        %554 = vmatprep.subr.bf16.mxu0 0
        %555 = vmatpush1.bf16.msra.mxu0 0
        %556 = vmatprep.subr.bf16.mxu0 0
        %557 = vmatpush1.bf16.msra.mxu0 0
        %558 = vmatprep.subr.bf16.mxu0 0
        %559 = vmatpush1.bf16.msra.mxu0 0
        %560 = vmatprep.mubr.bf16.mxu0 0
        %561 = vmatmul.mubr.bf16.gmra.mrb[0].mxu0 %v456
        %v562 = vpop.f32.mrb[0].mxu0
        %v563 = vadd.f32 %v478, %v562
        %v564 = vpop.f32.mrb[0].mxu0
        %v565 = vpop.f32.mrb[0].mxu0
        %v566 = vpop.f32.mrb[0].mxu0
        %567 = vdwg.mxu0
        %v568 = vmax.f32 %v563, 0.0
        %v569 = vmin.f32 %v568, 6.0
        %v570 = vpack.c.bf16 %v569, %v569
        %571 = vst [vmem:[%s296] sm:$0xf] %v570
        %s572 = sand.u32 %s142, 1
        %s573 = scalar_lea.sflag [#allocation4], %s572
        %s574 = sand.u32 %s142, 1
        %s575 = smul.addr %s574, 4
        %s576 = scalar_lea.vmem [#allocation11], %s575
        // Predicated region
        $region61: #{mobilenet_v1_forward.22} parent=39 // pred_check
          %p577 = pneg %p152
        $region62: #{mobilenet_v1_forward.22} parent=39 // pred_check_branch
          %579 = sbr.rel (%p577) target = $region64
        $region63: #{mobilenet_v1_forward.22} parent=39 // pred_region
          %s581 = ssub.s32 64, 64
          %582 = vsyncadd %s573, %s581
          %s583 = smul.addr %s24, 64
          %s584 = scalar_lea.hbm %s5, %s583
          %s586 = sshll.u32 %s576, 4
          %s587 = int_to_ptr.vmem [resolvable:$true] %s586
          %589 = dma.vmem_to_hbm [thread:$0]  %s587, 64, %s584, %s573
        $region64: #{mobilenet_v1_forward.22} parent=39 // pred_fallthru
          _
      $region40: #{mobilenet_v1_forward.22} parent=5 // pred_fallthru
        _
      %p590 = scmp.le.s32.totalorder 2, %s19
      // Predicated region
      $region65: #{mobilenet_v1_forward.22} parent=5 // pred_check
        %p591 = pneg %p590
      $region66: #{mobilenet_v1_forward.22} parent=5 // pred_check_branch
        %593 = sbr.rel (%p591) target = $region68
      $region67: #{mobilenet_v1_forward.22} parent=5 // pred_region
        %s594 = ssub.s32 %s19, 2
        // Predicated region
        $region69: #{mobilenet_v1_forward.22} parent=67 // pred_check
          %p595 = pneg %p158
        $region70: #{mobilenet_v1_forward.22} parent=67 // pred_check_branch
          %597 = sbr.rel (%p595) target = $region72
        $region71: #{mobilenet_v1_forward.22} parent=67 // pred_region
          %s598 = sand.u32 %s143, 1
          %s599 = scalar_lea.sflag [#allocation4], %s598
          %s600 = sand.u32 %s143, 1
          %s601 = smul.addr %s600, 4
          %s602 = scalar_lea.vmem [#allocation11], %s601
          %603 = dma.done %s599, 64
        $region72: #{mobilenet_v1_forward.22} parent=67 // pred_fallthru
          _
      $region68: #{mobilenet_v1_forward.22} parent=5 // pred_fallthru
        _
    $region6: #{mobilenet_v1_forward.22} parent=1 // loop_footer
      %s23 = sadd.s32 1, %s19
    $region7: #{mobilenet_v1_forward.22} parent=1 // loop_footer_branch
      %18 = sbr.rel target = $region3
    $region8: #{mobilenet_v1_forward.22} parent=1 // loop_exit
      _
    %604 = vsyncpa [#allocation3], 1
    %s605 = scalar_lea.sflag [#allocation3], 1
    %606 = vsyncpa %s605, 1
    %607 = vsyncpa [#allocation6], 1
    %608 = vsyncpa [#allocation9], 1
    %609 = vsyncpa [#allocation4], 1
    %s610 = scalar_lea.sflag [#allocation4], 1
    %611 = vsyncpa %s610, 1

// kernel: mobilenet_v1_forward.29
$region0: #{mobilenet_v1_forward.29}
  #allocation0 [shape = 'u32[]', space=smem, size = 0x4, offset = 0x4, fixed_abs, tag = 'smem constant byte address 0x4 - core index']
  #allocation1 [shape = 'u32[144,128]{1,0:T(1,128)}', space=vmem, size = 0x12000, scoped, tag = 'internal scratch']
  %s0 = inlined_call_operand.vmem [shape: bf16[2,1,128], index: 0, kind: input, shape index: {}]
  %s1 = inlined_call_operand.hbm [shape: bf16[128,128], index: 1, kind: input, shape index: {}]
  %s2 = inlined_call_operand.vmem [shape: f32[1,128], index: 2, kind: input, shape index: {}]
  %s3 = inlined_call_operand.hbm [shape: f32[2,128], index: 3, kind: output, shape index: {}]
  %s4 = sld [smem:[#allocation0]]
  $region26: #{mobilenet_v1_forward.29} parent=0
    _
  %s6 = ssub.s32 1, %s4
  %s7 = scalar_select 0, %s6, %s4
  $region1: #{mobilenet_v1_forward.29} parent=0
    #allocation2 [shape = 'u8[32768]{0}', space=vmem, size = 0x8000, scoped, tag = 'input window, operand 1, single buffered']
    #allocation3 [shape = 's32[1]{0}', space=sflag, size = 0x4, scoped, tag = 'scoped memory for mobilenet_v1_forward.29']
    #allocation4 [shape = 's32[1]{0}', space=sflag, size = 0x4, scoped, tag = 'scoped memory for mobilenet_v1_forward.29']
    #allocation5 [shape = 'u8[1024]{0}', space=vmem, size = 0x400, scoped, tag = 'output window, operand 0, single buffered']
    %8 = vsyncpa [#allocation3], 0
    %9 = vsyncpa [#allocation4], 0
    // Predicated region
    $region2: #{mobilenet_v1_forward.29} parent=1 // pred_check
      _
    $region3: #{mobilenet_v1_forward.29} parent=1 // pred_check_branch
      %11 = sbr.rel (0) target = $region5
    $region4: #{mobilenet_v1_forward.29} parent=1 // pred_region
      _
    $region5: #{mobilenet_v1_forward.29} parent=1 // pred_fallthru
      _
    // Predicated region
    $region6: #{mobilenet_v1_forward.29} parent=1 // pred_check
      _
    $region7: #{mobilenet_v1_forward.29} parent=1 // pred_check_branch
      %13 = sbr.rel (0) target = $region9
    $region8: #{mobilenet_v1_forward.29} parent=1 // pred_region
      %s15 = ssub.s32 1024, 1024
      %16 = vsyncadd [#allocation3], %s15
      %s17 = sshll.u32 [#allocation2], 4
      %s18 = int_to_ptr.vmem [resolvable:$true] %s17
      %23 = dma.hbm_to_vmem [thread:$0]  %s1, 1024, %s18, [#allocation3], 64, 64, 4
    $region9: #{mobilenet_v1_forward.29} parent=1 // pred_fallthru
      _
    // Predicated region
    $region10: #{mobilenet_v1_forward.29} parent=1 // pred_check
      _
    $region11: #{mobilenet_v1_forward.29} parent=1 // pred_check_branch
      %25 = sbr.rel (0) target = $region13
    $region12: #{mobilenet_v1_forward.29} parent=1 // pred_region
      _
    $region13: #{mobilenet_v1_forward.29} parent=1 // pred_fallthru
      _
    // Predicated region
    $region14: #{mobilenet_v1_forward.29} parent=1 // pred_check
      _
    $region15: #{mobilenet_v1_forward.29} parent=1 // pred_check_branch
      %27 = sbr.rel (0) target = $region17
    $region16: #{mobilenet_v1_forward.29} parent=1 // pred_region
      %28 = dma.done [#allocation3], 1024
    $region17: #{mobilenet_v1_forward.29} parent=1 // pred_fallthru
      _
    %v30 = vld [vmem:[%s0] sm:$0x1]
    %v31 = vld [vmem:[%s0 + $0x1] sm:$0x1]
    %v32 = vunpack.c.l.bf16 %v30
    %v33 = vunpack.c.l.bf16 %v31
    %v34 = vadd.f32 %v32, 0.0
    %v35 = vadd.f32 %v33, 0.0
    %v36 = vpack.c.bf16 %v34, %v34
    %v37 = vpack.c.bf16 %v35, %v35
    %v38 = vld [vmem:[#allocation2] sm:$0xf]
    %v39 = vld [vmem:[#allocation2 + $0x4] sm:$0xf]
    %v40 = vld [vmem:[#allocation2 + $0x8] sm:$0xf]
    %v41 = vld [vmem:[#allocation2 + $0xc] sm:$0xf]
    %v42 = vld [vmem:[#allocation2 + $0x10] sm:$0xf]
    %v43 = vld [vmem:[#allocation2 + $0x14] sm:$0xf]
    %v44 = vld [vmem:[#allocation2 + $0x18] sm:$0xf]
    %v45 = vld [vmem:[#allocation2 + $0x1c] sm:$0xf]
    %v46 = vld [vmem:[#allocation2 + $0x20] sm:$0xf]
    %v47 = vld [vmem:[#allocation2 + $0x24] sm:$0xf]
    %v48 = vld [vmem:[#allocation2 + $0x28] sm:$0xf]
    %v49 = vld [vmem:[#allocation2 + $0x2c] sm:$0xf]
    %v50 = vld [vmem:[#allocation2 + $0x30] sm:$0xf]
    %v51 = vld [vmem:[#allocation2 + $0x34] sm:$0xf]
    %v52 = vld [vmem:[#allocation2 + $0x38] sm:$0xf]
    %v53 = vld [vmem:[#allocation2 + $0x3c] sm:$0xf]
    %v54 = vld [vmem:[%s2] sm:$0x1]
    %v56 = vlaneseq
    %v57 = vshrl.u32 %v56, 7
    %v58 = vsub.s32 0, %v57
    %v59 = vrot.slane %v54, %v58
    %v63 = vunpack.c.l.b16 %v36
    %v64 = vunpack.c.l.b16 %v37
    %v65 = vrot.slane %v64, 7
    %vm66 = vcmask 1041409
    %v67 = vsel %vm66, %v65, %v63
    %v68 = vpack.c.b16 %v67, %v67
    %v86 = vunpack.c.l.b16 %v38
    %v87 = vunpack.c.l.b16 %v39
    %v88 = vunpack.c.l.b16 %v40
    %v89 = vunpack.c.l.b16 %v41
    %v90 = vunpack.c.l.b16 %v42
    %v91 = vunpack.c.l.b16 %v43
    %v92 = vunpack.c.l.b16 %v44
    %v93 = vunpack.c.l.b16 %v45
    %v94 = vunpack.c.l.b16 %v46
    %v95 = vunpack.c.l.b16 %v47
    %v96 = vunpack.c.l.b16 %v48
    %v97 = vunpack.c.l.b16 %v49
    %v98 = vunpack.c.l.b16 %v50
    %v99 = vunpack.c.l.b16 %v51
    %v100 = vunpack.c.l.b16 %v52
    %v101 = vunpack.c.l.b16 %v53
    %v102 = vpack.c.b16 %v87, %v86
    %v103 = vpack.c.b16 %v89, %v88
    %v104 = vpack.c.b16 %v91, %v90
    %v105 = vpack.c.b16 %v93, %v92
    %v106 = vpack.c.b16 %v95, %v94
    %v107 = vpack.c.b16 %v97, %v96
    %v108 = vpack.c.b16 %v99, %v98
    %v109 = vpack.c.b16 %v101, %v100
    %118 = vmatprep.subr.bf16.mxu0 0
    %119 = vmatpush1.bf16.msra.mxu0 %v102
    %120 = vmatprep.subr.bf16.mxu0 0
    %121 = vmatpush1.bf16.msra.mxu0 %v103
    %122 = vmatprep.subr.bf16.mxu0 0
    %123 = vmatpush1.bf16.msra.mxu0 %v104
    %124 = vmatprep.subr.bf16.mxu0 0
    %125 = vmatpush1.bf16.msra.mxu0 %v105
    %126 = vmatprep.subr.bf16.mxu0 0
    %127 = vmatpush1.bf16.msra.mxu0 %v106
    %128 = vmatprep.subr.bf16.mxu0 0
    %129 = vmatpush1.bf16.msra.mxu0 %v107
    %130 = vmatprep.subr.bf16.mxu0 0
    %131 = vmatpush1.bf16.msra.mxu0 %v108
    %132 = vmatprep.subr.bf16.mxu0 0
    %133 = vmatpush1.bf16.msra.mxu0 %v109
    %134 = vmatprep.subr.bf16.mxu0 0
    %135 = vmatpush1.bf16.msra.mxu0 0
    %136 = vmatprep.subr.bf16.mxu0 0
    %137 = vmatpush1.bf16.msra.mxu0 0
    %138 = vmatprep.subr.bf16.mxu0 0
    %139 = vmatpush1.bf16.msra.mxu0 0
    %140 = vmatprep.subr.bf16.mxu0 0
    %141 = vmatpush1.bf16.msra.mxu0 0
    %142 = vmatprep.subr.bf16.mxu0 0
    %143 = vmatpush1.bf16.msra.mxu0 0
    %144 = vmatprep.subr.bf16.mxu0 0
    %145 = vmatpush1.bf16.msra.mxu0 0
    %146 = vmatprep.subr.bf16.mxu0 0
    %147 = vmatpush1.bf16.msra.mxu0 0
    %148 = vmatprep.subr.bf16.mxu0 0
    %149 = vmatpush1.bf16.msra.mxu0 0
    %150 = vmatprep.mubr.bf16.mxu0 0
    %151 = vmatmul.mubr.bf16.gmra.mrb[0].mxu0 %v68
    %v152 = vpop.f32.mrb[0].mxu0
    %v153 = vadd.f32 %v59, %v152
    %v154 = vpop.f32.mrb[0].mxu0
    %v155 = vpop.f32.mrb[0].mxu0
    %v156 = vpop.f32.mrb[0].mxu0
    %157 = vdwg.mxu0
    %158 = vst [vmem:[#allocation5] sm:$0x3] %v153
    // Predicated region
    $region18: #{mobilenet_v1_forward.29} parent=1 // pred_check
      _
    $region19: #{mobilenet_v1_forward.29} parent=1 // pred_check_branch
      %160 = sbr.rel (0) target = $region21
    $region20: #{mobilenet_v1_forward.29} parent=1 // pred_region
      %s162 = ssub.s32 32, 32
      %163 = vsyncadd [#allocation4], %s162
      %s165 = sshll.u32 [#allocation5], 4
      %s166 = int_to_ptr.vmem [resolvable:$true] %s165
      %168 = dma.vmem_to_hbm [thread:$0]  %s166, 32, %s3, [#allocation4]
    $region21: #{mobilenet_v1_forward.29} parent=1 // pred_fallthru
      _
    // Predicated region
    $region22: #{mobilenet_v1_forward.29} parent=1 // pred_check
      _
    $region23: #{mobilenet_v1_forward.29} parent=1 // pred_check_branch
      %170 = sbr.rel (0) target = $region25
    $region24: #{mobilenet_v1_forward.29} parent=1 // pred_region
      %171 = dma.done [#allocation4], 32
    $region25: #{mobilenet_v1_forward.29} parent=1 // pred_fallthru
      _
    %172 = vsyncpa [#allocation3], 1
    %173 = vsyncpa [#allocation4], 1

</llo_original>
